<compile_context>
chip_gen: v5e
topology: v5e:2x2
jax: 0.10.0
libtpu: 0.0.40
codegen_flags: <defaults>
</compile_context>

<pallas_src>
import jax
import jax.numpy as jnp
from jax.experimental import pallas as pl
from jax.experimental.pallas import tpu as pltpu

# ------------------------------------------------------------------ #
# KAN (efficient-KAN KANLinear) hyperparameters — defaults of KAN([...])
# ------------------------------------------------------------------ #
GRID_SIZE = 5
SPLINE_ORDER = 3
GRID_RANGE = (-1.0, 1.0)
N_COEFF = GRID_SIZE + SPLINE_ORDER            # 8 cubic B-spline coefficients / input feature
N_FUSED = N_COEFF + 1                         # + the SiLU/base branch
N_INTERVALS = N_COEFF + SPLINE_ORDER          # 11 knot intervals with nonzero basis

_H = (GRID_RANGE[1] - GRID_RANGE[0]) / GRID_SIZE
KNOTS = tuple(
    float(GRID_RANGE[0] + j * _H) for j in range(-SPLINE_ORDER, GRID_SIZE + SPLINE_ORDER + 1)
)                                             # 12 uniform knots: -2.2 .. 2.2
_G0 = KNOTS[0]
_INV_H = 1.0 / _H
_ONE_SIXTH = 1.0 / 6.0


def _round_up(x, m):
    return (x + m - 1) // m * m


def _vmem_limit_bytes():
    """Per-chip VMEM budget: ~3/4 of physical (96 MiB on v5e/v6e, 48 MiB on v7x)."""
    try:
        cap = int(pltpu.get_tpu_info().vmem_capacity_bytes)
    except Exception:
        cap = 64 * 1024 * 1024
    return (cap * 3) // 4


# ------------------------------------------------------------------ #
# In-kernel helpers
# ------------------------------------------------------------------ #
def _fused_kan_activations(x):
    """Return bf16 (B, 9*F): [SiLU(x) | B_0(x) | ... | B_7(x)] concatenated along lanes."""
    x = x.astype(jnp.float32)

    # SiLU: exp + approximate reciprocal ride the EUP slot.
    sig = pl.reciprocal(1.0 + jnp.exp(-x), approx=True)
    silu = x * sig

    # Closed-form uniform cubic B-spline pieces (equivalent to Cox-de Boor on the uniform
    # knot vector). x must stay f32 so that m is an exact integer-valued float.
    t = (x - _G0) * _INV_H            # knot-parameter coordinate; interval m = floor(t)
    m = jnp.floor(t)
    u = t - m
    u2 = u * u
    u3 = u2 * u
    q0 = u3 * _ONE_SIXTH                                          # basis c where m == c
    q1 = (((3.0 - 3.0 * u) * u + 3.0) * u + 1.0) * _ONE_SIXTH     # m == c + 1
    q2 = ((3.0 * u - 6.0) * u2 + 4.0) * _ONE_SIXTH                # m == c + 2
    omu = 1.0 - u
    q3 = omu * omu * omu * _ONE_SIXTH                             # m == c + 3

    # 11 compares done once; each coefficient is 4 mask-madds (no 4-deep select chains).
    eq = [(m == float(j)).astype(jnp.float32) for j in range(N_INTERVALS)]
    pieces = [silu]
    for c in range(N_COEFF):
        b = eq[c] * q0 + eq[c + 1] * q1 + eq[c + 2] * q2 + eq[c + 3] * q3
        pieces.append(b)

    return jnp.concatenate(pieces, axis=-1).astype(jnp.bfloat16)


def _kan_layer(x, w2d):
    """One KANLinear with pre-flattened fused weight w2d (9*F_in, F_out) bf16."""
    a = _fused_kan_activations(x)                               # (B, 9*F_in) bf16
    return jnp.dot(a, w2d, preferred_element_type=jnp.float32)  # (B, F_out) f32


# ------------------------------------------------------------------ #
# The fused 4-layer kernel (grid = (nk,) over the d_in reduction only)
# ------------------------------------------------------------------ #
def _esm2_kan_kernel(x_ref, w1_ref, w2_ref, w3_ref, w4_ref, out_ref, acc_ref):
    k = pl.program_id(0)
    nk = pl.num_programs(0)

    @pl.when(k == 0)
    def _():
        acc_ref[...] = jnp.zeros(acc_ref.shape, acc_ref.dtype)

    # ---- Layer 1, K-tile k: single fused base+spline matmul over this slice of d_in ----
    a = _fused_kan_activations(x_ref[...])                      # (B, 9*tk) bf16
    acc_ref[...] += jnp.dot(a, w1_ref[...], preferred_element_type=jnp.float32)

    # ---- Last K step: layers 2-4 on VMEM-resident activations, then write output ----
    @pl.when(k == nk - 1)
    def _():
        h = acc_ref[...]                                        # (B, N_pad) f32
        h = _kan_layer(h, w2_ref[...])                          # (B, Dout_pad)
        h = _kan_layer(h, w3_ref[...])                          # (B, N_pad)
        h = _kan_layer(h, w4_ref[...])                          # (B, Dout_pad)
        out_ref[...] = h.astype(out_ref.dtype)


# ------------------------------------------------------------------ #
# Parameter construction (deterministic, synthetic — mirrors KANLinear shapes)
# ------------------------------------------------------------------ #
def init_kan_fused(key, in_f, out_f):
    """Fused f32 weight (C+1, in_f, out_f): slot 0 = base_weight^T,
    slots 1..C = (spline_weight * spline_scaler)^T per coefficient."""
    k1, k2, k3 = jax.random.split(key, 3)
    base_w = jax.random.uniform(k1, (out_f, in_f), jnp.float32, -1.0, 1.0) / jnp.sqrt(float(in_f))
    spline_w = jax.random.uniform(k2, (out_f, in_f, N_COEFF), jnp.float32, -1.0, 1.0) * (
        0.1 / GRID_SIZE)
    scaler = jax.random.uniform(k3, (out_f, in_f), jnp.float32, -1.0, 1.0) / jnp.sqrt(float(in_f))
    scaled = spline_w * scaler[..., None]                       # (out, in, C)
    fused = jnp.concatenate(
        [base_w.T[None, :, :], jnp.transpose(scaled, (2, 1, 0))], axis=0)  # (C+1, in, out)
    return fused


def _pad_and_flatten(w, in_pad, out_pad, tk=None):
    """Zero-pad (9, in, out) -> (9, in_pad, out_pad), cast bf16, flatten to 2D.

    If tk is given, interleave per K-tile so row-slab k (height 9*tk) is exactly the
    coefficient-major / feature-minor layout the kernel's A tile expects:
        (nk*9*tk, out_pad)  with slab k = w[:, k*tk:(k+1)*tk, :].reshape(9*tk, out_pad).
    Otherwise a plain coefficient-major flatten: (9*in_pad, out_pad)."""
    c1, fi, fo = w.shape
    wp = jnp.zeros((c1, in_pad, out_pad), jnp.float32).at[:, :fi, :fo].set(w)
    if tk is None:
        w2d = wp.reshape(c1 * in_pad, out_pad)
    else:
        nk = in_pad // tk
        w2d = wp.reshape(c1, nk, tk, out_pad).transpose(1, 0, 2, 3).reshape(
            nk * c1 * tk, out_pad)
    return w2d.astype(jnp.bfloat16)


def build_esm2_kan_params(key, d_in, num_neurons, d_out, *, tk=None):
    if tk is None:
        # 2048 on 64 MiB-VMEM chips (v7x), 4096 on 128 MiB chips (v5e/v6e).
        tk = 4096 if _vmem_limit_bytes() >= 80 * 1024 * 1024 else 2048
    assert tk % 128 == 0
    dims = [(d_in, num_neurons), (num_neurons, d_out), (d_out, num_neurons),
            (num_neurons, d_out)]
    keys = jax.random.split(key, 4)
    fused = [init_kan_fused(kk, fi, fo) for kk, (fi, fo) in zip(keys, dims)]

    tk_eff = min(tk, _round_up(d_in, 128))
    fi1_pad = _round_up(d_in, tk_eff)
    n_pad = _round_up(num_neurons, 128)
    dout_pad = _round_up(d_out, 128)

    w1 = _pad_and_flatten(fused[0], fi1_pad, n_pad, tk=tk_eff)   # (nk*9*tk, n_pad)
    w2 = _pad_and_flatten(fused[1], n_pad, dout_pad)             # (9*n_pad, dout_pad)
    w3 = _pad_and_flatten(fused[2], dout_pad, n_pad)             # (9*dout_pad, n_pad)
    w4 = _pad_and_flatten(fused[3], n_pad, dout_pad)             # (9*n_pad, dout_pad)

    return dict(w=[w1, w2, w3, w4], fused_f32=fused, dims=dims, tk=tk_eff,
                fi1_pad=fi1_pad, n_pad=n_pad, dout_pad=dout_pad, d_in=d_in, d_out=d_out)


# ------------------------------------------------------------------ #
# Full esm2_KAN forward (glue)
# ------------------------------------------------------------------ #
def esm2_kan_forward(embeddings, params, batch_size, num_label_types, pred_len):
    # `embeddings` stands in for esm2_model(**x).last_hidden_state
    B = embeddings.shape[0]
    x = embeddings.reshape(B, -1).astype(jnp.float32)           # nn.Flatten()

    tk = params["tk"]
    fi1_pad = params["fi1_pad"]
    n_pad = params["n_pad"]
    dout_pad = params["dout_pad"]
    w1, w2, w3, w4 = params["w"]

    # Whole batch as ONE resident tile (no batch grid axis): layer-1's weight streams from
    # HBM exactly once. Pad to a multiple of 16 rows so bf16 A vregs are fully packed.
    # NOTE: padded rows produce garbage (spline basis at x=0 is nonzero) and are sliced off
    # below — never feed them into any later reduction.
    b_pad = max(16, _round_up(B, 16))
    x_pad = jnp.zeros((b_pad, fi1_pad), jnp.float32).at[:B, :x.shape[1]].set(x)

    nk = fi1_pad // tk
    vmem_limit = _vmem_limit_bytes()

    flops = 2 * b_pad * N_FUSED * (fi1_pad * n_pad + 3 * n_pad * dout_pad)
    transcendentals = b_pad * (fi1_pad + 2 * n_pad + dout_pad)
    bytes_accessed = (int(x_pad.size) * 4
                      + sum(int(w.size) * 2 for w in (w1, w2, w3, w4))
                      + b_pad * dout_pad * 4)

    def make_call(single_buffer_resident):
        # Resident (constant-index) small weights want a single VMEM buffer.
        res_kw = dict(pipeline_mode=pl.Buffered(1)) if single_buffer_resident else {}
        return pl.pallas_call(
            _esm2_kan_kernel,
            out_shape=jax.ShapeDtypeStruct((b_pad, dout_pad), jnp.float32),
            grid=(nk,),
            in_specs=[
                pl.BlockSpec((b_pad, tk), lambda k: (0, k)),                  # x   (K-tiled)
                pl.BlockSpec((N_FUSED * tk, n_pad), lambda k: (k, 0)),        # w1  (K-tiled slab)
                pl.BlockSpec((N_FUSED * n_pad, dout_pad), lambda k: (0, 0), **res_kw),   # w2
                pl.BlockSpec((N_FUSED * dout_pad, n_pad), lambda k: (0, 0), **res_kw),   # w3
                pl.BlockSpec((N_FUSED * n_pad, dout_pad), lambda k: (0, 0), **res_kw),   # w4
            ],
            out_specs=pl.BlockSpec((b_pad, dout_pad), lambda k: (0, 0)),
            scratch_shapes=[pltpu.VMEM((b_pad, n_pad), jnp.float32)],         # layer-1 acc
            compiler_params=pltpu.CompilerParams(
                dimension_semantics=("arbitrary",),
                vmem_limit_bytes=vmem_limit,
            ),
            cost_estimate=pl.CostEstimate(
                flops=flops,
                transcendentals=transcendentals,
                bytes_accessed=bytes_accessed,
            ),
        )

    try:
        out_pad = make_call(True)(x_pad, w1, w2, w3, w4)
    except Exception:
        # pipeline_mode=pl.Buffered(1) unsupported on this jax version — run without it.
        out_pad = make_call(False)(x_pad, w1, w2, w3, w4)

    out = out_pad[:B, :params["d_out"]]
    return out.reshape(batch_size, num_label_types, pred_len)


# ------------------------------------------------------------------ #
# Pure-JAX reference (Cox-de Boor recursion, same bf16 weight/activation policy)
# ------------------------------------------------------------------ #
def kan_layer_ref(x, fused_w_f32):
    grid = jnp.asarray(KNOTS, jnp.float32)
    silu = x * jax.nn.sigmoid(x)
    xb = x[..., None]
    bases = ((xb >= grid[:-1]) & (xb < grid[1:])).astype(jnp.float32)
    for k in range(1, SPLINE_ORDER + 1):
        bases = (
            (xb - grid[: -(k + 1)]) / (grid[k:-1] - grid[: -(k + 1)]) * bases[..., :-1]
            + (grid[k + 1:] - xb) / (grid[k + 1:] - grid[1:-k]) * bases[..., 1:]
        )
    a = jnp.concatenate([silu[..., None], bases], axis=-1)       # (B, F_in, 9)
    a = a.astype(jnp.bfloat16).astype(jnp.float32)               # mirror kernel's bf16 operands
    return jnp.einsum("bfc,cfo->bo", a, fused_w_f32)


# ------------------------------------------------------------------ #
if __name__ == "__main__":
    # Small-shape analogue of the original config:
    #   hidden=32, seq=8  -> d_in = 256   (orig: 320*553)
    #   numNeurons = 16   (orig: 70)
    #   peptide_len=5, protein_len=10 -> predLen = 16 (orig: 551)
    #   numLabelTypes = 3 -> d_out = 48
    #   batch = 4         (orig: 20)
    hidden, seq = 32, 8
    d_in = hidden * seq
    num_neurons = 16
    num_label_types = 3
    peptide_len, protein_len = 5, 10
    pred_len = protein_len + peptide_len + 1
    d_out = pred_len * num_label_types
    batch = 4

    key = jax.random.PRNGKey(0)
    k_emb, k_par = jax.random.split(key)
    embeddings = jax.random.normal(k_emb, (batch, seq, hidden), jnp.float32)

    # tk=128 -> 2 K-tiles over d_in in the demo (exercises the accumulator + slab layout).
    params = build_esm2_kan_params(k_par, d_in, num_neurons, d_out, tk=128)

    out = esm2_kan_forward(embeddings, params, batch, num_label_types, pred_len)
    out = jax.block_until_ready(out)
    assert out.shape == (batch, num_label_types, pred_len), out.shape

    # Correctness check against a pure-JAX reference (recursion-based basis,
    # same bf16-rounded weights / bf16 matmul operands, f32 accumulation).
    x = embeddings.reshape(batch, -1).astype(jnp.float32)
    for w_f32 in params["fused_f32"]:
        w_q = w_f32.astype(jnp.bfloat16).astype(jnp.float32)     # mirror kernel's bf16 weights
        x = kan_layer_ref(x, w_q)
    ref = x.reshape(batch, num_label_types, pred_len)
    max_err = float(jnp.max(jnp.abs(out - ref)))
    assert jnp.allclose(out, ref, rtol=2e-2, atol=2e-2), f"mismatch: max abs err {max_err}"

    print("KERNEL_OK")
</pallas_src>

<mosaic_0001>
module attributes {stable_mosaic.version = 11 : i64} {
  func.func @_esm2_kan_kernel(%arg0: i32, %arg1: memref<16x128xf32, #tpu.memory_space<vmem>>, %arg2: memref<1152x128xbf16, #tpu.memory_space<vmem>>, %arg3: memref<1152x128xbf16, #tpu.memory_space<vmem>>, %arg4: memref<1152x128xbf16, #tpu.memory_space<vmem>>, %arg5: memref<1152x128xbf16, #tpu.memory_space<vmem>>, %arg6: memref<16x128xf32, #tpu.memory_space<vmem>>, %arg7: memref<16x128xf32, #tpu.memory_space<vmem>>) attributes {dimension_semantics = [#tpu.dimension_semantics<arbitrary>], iteration_bounds = array<i64: 2>, scalar_prefetch = 0 : i64, scratch_operands = 1 : i64, tpu.core_type = #tpu.core_type<tc>, window_params = [{transform_indices = @transform_0, window_bounds = array<i64: 16, 128>}, {transform_indices = @transform_1, window_bounds = array<i64: 1152, 128>}, {pipeline_mode = #tpu.pipeline_mode<synchronous>, transform_indices = @transform_2, window_bounds = array<i64: 1152, 128>}, {pipeline_mode = #tpu.pipeline_mode<synchronous>, transform_indices = @transform_3, window_bounds = array<i64: 1152, 128>}, {pipeline_mode = #tpu.pipeline_mode<synchronous>, transform_indices = @transform_4, window_bounds = array<i64: 1152, 128>}, {pipeline_mode = #tpu.pipeline_mode<synchronous>, transform_indices = @transform_5, window_bounds = array<i64: 16, 128>}]} {
    %c0_i32 = arith.constant 0 : i32
    %0 = arith.cmpi eq, %arg0, %c0_i32 : i32
    %1 = arith.extui %0 : i1 to i32
    %c0_i32_0 = arith.constant 0 : i32
    %2 = arith.cmpi ne, %1, %c0_i32_0 : i32
    scf.if %2 {
      %cst_36 = arith.constant 0.000000e+00 : f32
      %158 = vector.broadcast %cst_36 : f32 to vector<16x128xf32>
      %c0_37 = arith.constant 0 : index
      %c0_38 = arith.constant 0 : index
      %159 = vector.load %arg7[%c0_37, %c0_38] : memref<16x128xf32, #tpu.memory_space<vmem>>, vector<16x128xf32>
      tpu.vector_store %arg7[%c0_37, %c0_38], %158 {strides = array<i32>} : memref<16x128xf32, #tpu.memory_space<vmem>>, vector<16x128xf32>,
    } else {
    }
    %c0 = arith.constant 0 : index
    %c0_1 = arith.constant 0 : index
    %3 = vector.load %arg1[%c0, %c0_1] : memref<16x128xf32, #tpu.memory_space<vmem>>, vector<16x128xf32>
    %cst = arith.constant 0.000000e+00 : f32
    %4 = vector.broadcast %cst : f32 to vector<16x128xf32>
    %5 = arith.subf %4, %3 : vector<16x128xf32>
    %6 = math.exp %5 : vector<16x128xf32>
    %cst_2 = arith.constant 1.000000e+00 : f32
    %7 = vector.broadcast %cst_2 : f32 to vector<16x128xf32>
    %8 = arith.addf %7, %6 : vector<16x128xf32>
    %9 = tpu.reciprocal %8 {approx = true} : vector<16x128xf32> -> vector<16x128xf32>
    %10 = arith.mulf %3, %9 : vector<16x128xf32>
    %cst_3 = arith.constant -2.200000e+00 : f32
    %11 = vector.broadcast %cst_3 : f32 to vector<16x128xf32>
    %12 = arith.subf %3, %11 : vector<16x128xf32>
    %cst_4 = arith.constant 2.500000e+00 : f32
    %13 = vector.broadcast %cst_4 : f32 to vector<16x128xf32>
    %14 = arith.mulf %12, %13 : vector<16x128xf32>
    %15 = math.floor %14 : vector<16x128xf32>
    %16 = arith.subf %14, %15 : vector<16x128xf32>
    %17 = arith.mulf %16, %16 : vector<16x128xf32>
    %18 = arith.mulf %17, %16 : vector<16x128xf32>
    %cst_5 = arith.constant 0.166666672 : f32
    %19 = vector.broadcast %cst_5 : f32 to vector<16x128xf32>
    %20 = arith.mulf %18, %19 : vector<16x128xf32>
    %cst_6 = arith.constant 3.000000e+00 : f32
    %21 = vector.broadcast %cst_6 : f32 to vector<16x128xf32>
    %22 = arith.mulf %21, %16 : vector<16x128xf32>
    %cst_7 = arith.constant 3.000000e+00 : f32
    %23 = vector.broadcast %cst_7 : f32 to vector<16x128xf32>
    %24 = arith.subf %23, %22 : vector<16x128xf32>
    %25 = arith.mulf %24, %16 : vector<16x128xf32>
    %cst_8 = arith.constant 3.000000e+00 : f32
    %26 = vector.broadcast %cst_8 : f32 to vector<16x128xf32>
    %27 = arith.addf %25, %26 : vector<16x128xf32>
    %28 = arith.mulf %27, %16 : vector<16x128xf32>
    %cst_9 = arith.constant 1.000000e+00 : f32
    %29 = vector.broadcast %cst_9 : f32 to vector<16x128xf32>
    %30 = arith.addf %28, %29 : vector<16x128xf32>
    %cst_10 = arith.constant 0.166666672 : f32
    %31 = vector.broadcast %cst_10 : f32 to vector<16x128xf32>
    %32 = arith.mulf %30, %31 : vector<16x128xf32>
    %cst_11 = arith.constant 3.000000e+00 : f32
    %33 = vector.broadcast %cst_11 : f32 to vector<16x128xf32>
    %34 = arith.mulf %33, %16 : vector<16x128xf32>
    %cst_12 = arith.constant 6.000000e+00 : f32
    %35 = vector.broadcast %cst_12 : f32 to vector<16x128xf32>
    %36 = arith.subf %34, %35 : vector<16x128xf32>
    %37 = arith.mulf %36, %17 : vector<16x128xf32>
    %cst_13 = arith.constant 4.000000e+00 : f32
    %38 = vector.broadcast %cst_13 : f32 to vector<16x128xf32>
    %39 = arith.addf %37, %38 : vector<16x128xf32>
    %cst_14 = arith.constant 0.166666672 : f32
    %40 = vector.broadcast %cst_14 : f32 to vector<16x128xf32>
    %41 = arith.mulf %39, %40 : vector<16x128xf32>
    %cst_15 = arith.constant 1.000000e+00 : f32
    %42 = vector.broadcast %cst_15 : f32 to vector<16x128xf32>
    %43 = arith.subf %42, %16 : vector<16x128xf32>
    %44 = arith.mulf %43, %43 : vector<16x128xf32>
    %45 = arith.mulf %44, %43 : vector<16x128xf32>
    %cst_16 = arith.constant 0.166666672 : f32
    %46 = vector.broadcast %cst_16 : f32 to vector<16x128xf32>
    %47 = arith.mulf %45, %46 : vector<16x128xf32>
    %cst_17 = arith.constant 0.000000e+00 : f32
    %48 = vector.broadcast %cst_17 : f32 to vector<16x128xf32>
    %49 = arith.cmpf oeq, %15, %48 : vector<16x128xf32>
    %50 = arith.extui %49 : vector<16x128xi1> to vector<16x128xi32>
    %51 = arith.sitofp %50 : vector<16x128xi32> to vector<16x128xf32>
    %cst_18 = arith.constant 1.000000e+00 : f32
    %52 = vector.broadcast %cst_18 : f32 to vector<16x128xf32>
    %53 = arith.cmpf oeq, %15, %52 : vector<16x128xf32>
    %54 = arith.extui %53 : vector<16x128xi1> to vector<16x128xi32>
    %55 = arith.sitofp %54 : vector<16x128xi32> to vector<16x128xf32>
    %cst_19 = arith.constant 2.000000e+00 : f32
    %56 = vector.broadcast %cst_19 : f32 to vector<16x128xf32>
    %57 = arith.cmpf oeq, %15, %56 : vector<16x128xf32>
    %58 = arith.extui %57 : vector<16x128xi1> to vector<16x128xi32>
    %59 = arith.sitofp %58 : vector<16x128xi32> to vector<16x128xf32>
    %cst_20 = arith.constant 3.000000e+00 : f32
    %60 = vector.broadcast %cst_20 : f32 to vector<16x128xf32>
    %61 = arith.cmpf oeq, %15, %60 : vector<16x128xf32>
    %62 = arith.extui %61 : vector<16x128xi1> to vector<16x128xi32>
    %63 = arith.sitofp %62 : vector<16x128xi32> to vector<16x128xf32>
    %cst_21 = arith.constant 4.000000e+00 : f32
    %64 = vector.broadcast %cst_21 : f32 to vector<16x128xf32>
    %65 = arith.cmpf oeq, %15, %64 : vector<16x128xf32>
    %66 = arith.extui %65 : vector<16x128xi1> to vector<16x128xi32>
    %67 = arith.sitofp %66 : vector<16x128xi32> to vector<16x128xf32>
    %cst_22 = arith.constant 5.000000e+00 : f32
    %68 = vector.broadcast %cst_22 : f32 to vector<16x128xf32>
    %69 = arith.cmpf oeq, %15, %68 : vector<16x128xf32>
    %70 = arith.extui %69 : vector<16x128xi1> to vector<16x128xi32>
    %71 = arith.sitofp %70 : vector<16x128xi32> to vector<16x128xf32>
    %cst_23 = arith.constant 6.000000e+00 : f32
    %72 = vector.broadcast %cst_23 : f32 to vector<16x128xf32>
    %73 = arith.cmpf oeq, %15, %72 : vector<16x128xf32>
    %74 = arith.extui %73 : vector<16x128xi1> to vector<16x128xi32>
    %75 = arith.sitofp %74 : vector<16x128xi32> to vector<16x128xf32>
    %cst_24 = arith.constant 7.000000e+00 : f32
    %76 = vector.broadcast %cst_24 : f32 to vector<16x128xf32>
    %77 = arith.cmpf oeq, %15, %76 : vector<16x128xf32>
    %78 = arith.extui %77 : vector<16x128xi1> to vector<16x128xi32>
    %79 = arith.sitofp %78 : vector<16x128xi32> to vector<16x128xf32>
    %cst_25 = arith.constant 8.000000e+00 : f32
    %80 = vector.broadcast %cst_25 : f32 to vector<16x128xf32>
    %81 = arith.cmpf oeq, %15, %80 : vector<16x128xf32>
    %82 = arith.extui %81 : vector<16x128xi1> to vector<16x128xi32>
    %83 = arith.sitofp %82 : vector<16x128xi32> to vector<16x128xf32>
    %cst_26 = arith.constant 9.000000e+00 : f32
    %84 = vector.broadcast %cst_26 : f32 to vector<16x128xf32>
    %85 = arith.cmpf oeq, %15, %84 : vector<16x128xf32>
    %86 = arith.extui %85 : vector<16x128xi1> to vector<16x128xi32>
    %87 = arith.sitofp %86 : vector<16x128xi32> to vector<16x128xf32>
    %cst_27 = arith.constant 1.000000e+01 : f32
    %88 = vector.broadcast %cst_27 : f32 to vector<16x128xf32>
    %89 = arith.cmpf oeq, %15, %88 : vector<16x128xf32>
    %90 = arith.extui %89 : vector<16x128xi1> to vector<16x128xi32>
    %91 = arith.sitofp %90 : vector<16x128xi32> to vector<16x128xf32>
    %92 = arith.mulf %51, %20 : vector<16x128xf32>
    %93 = arith.mulf %55, %32 : vector<16x128xf32>
    %94 = arith.addf %92, %93 : vector<16x128xf32>
    %95 = arith.mulf %59, %41 : vector<16x128xf32>
    %96 = arith.addf %94, %95 : vector<16x128xf32>
    %97 = arith.mulf %63, %47 : vector<16x128xf32>
    %98 = arith.addf %96, %97 : vector<16x128xf32>
    %99 = arith.mulf %55, %20 : vector<16x128xf32>
    %100 = arith.mulf %59, %32 : vector<16x128xf32>
    %101 = arith.addf %99, %100 : vector<16x128xf32>
    %102 = arith.mulf %63, %41 : vector<16x128xf32>
    %103 = arith.addf %101, %102 : vector<16x128xf32>
    %104 = arith.mulf %67, %47 : vector<16x128xf32>
    %105 = arith.addf %103, %104 : vector<16x128xf32>
    %106 = arith.mulf %59, %20 : vector<16x128xf32>
    %107 = arith.mulf %63, %32 : vector<16x128xf32>
    %108 = arith.addf %106, %107 : vector<16x128xf32>
    %109 = arith.mulf %67, %41 : vector<16x128xf32>
    %110 = arith.addf %108, %109 : vector<16x128xf32>
    %111 = arith.mulf %71, %47 : vector<16x128xf32>
    %112 = arith.addf %110, %111 : vector<16x128xf32>
    %113 = arith.mulf %63, %20 : vector<16x128xf32>
    %114 = arith.mulf %67, %32 : vector<16x128xf32>
    %115 = arith.addf %113, %114 : vector<16x128xf32>
    %116 = arith.mulf %71, %41 : vector<16x128xf32>
    %117 = arith.addf %115, %116 : vector<16x128xf32>
    %118 = arith.mulf %75, %47 : vector<16x128xf32>
    %119 = arith.addf %117, %118 : vector<16x128xf32>
    %120 = arith.mulf %67, %20 : vector<16x128xf32>
    %121 = arith.mulf %71, %32 : vector<16x128xf32>
    %122 = arith.addf %120, %121 : vector<16x128xf32>
    %123 = arith.mulf %75, %41 : vector<16x128xf32>
    %124 = arith.addf %122, %123 : vector<16x128xf32>
    %125 = arith.mulf %79, %47 : vector<16x128xf32>
    %126 = arith.addf %124, %125 : vector<16x128xf32>
    %127 = arith.mulf %71, %20 : vector<16x128xf32>
    %128 = arith.mulf %75, %32 : vector<16x128xf32>
    %129 = arith.addf %127, %128 : vector<16x128xf32>
    %130 = arith.mulf %79, %41 : vector<16x128xf32>
    %131 = arith.addf %129, %130 : vector<16x128xf32>
    %132 = arith.mulf %83, %47 : vector<16x128xf32>
    %133 = arith.addf %131, %132 : vector<16x128xf32>
    %134 = arith.mulf %75, %20 : vector<16x128xf32>
    %135 = arith.mulf %79, %32 : vector<16x128xf32>
    %136 = arith.addf %134, %135 : vector<16x128xf32>
    %137 = arith.mulf %83, %41 : vector<16x128xf32>
    %138 = arith.addf %136, %137 : vector<16x128xf32>
    %139 = arith.mulf %87, %47 : vector<16x128xf32>
    %140 = arith.addf %138, %139 : vector<16x128xf32>
    %141 = arith.mulf %79, %20 : vector<16x128xf32>
    %142 = arith.mulf %83, %32 : vector<16x128xf32>
    %143 = arith.addf %141, %142 : vector<16x128xf32>
    %144 = arith.mulf %87, %41 : vector<16x128xf32>
    %145 = arith.addf %143, %144 : vector<16x128xf32>
    %146 = arith.mulf %91, %47 : vector<16x128xf32>
    %147 = arith.addf %145, %146 : vector<16x128xf32>
    %148 = tpu.concatenate %10, %98, %105, %112, %119, %126, %133, %140, %147 in 1 : vector<16x128xf32>, vector<16x128xf32>, vector<16x128xf32>, vector<16x128xf32>, vector<16x128xf32>, vector<16x128xf32>, vector<16x128xf32>, vector<16x128xf32>, vector<16x128xf32> -> vector<16x1152xf32>
    %149 = arith.truncf %148 : vector<16x1152xf32> to vector<16x1152xbf16>
    %c0_28 = arith.constant 0 : index
    %c0_29 = arith.constant 0 : index
    %150 = vector.load %arg7[%c0_28, %c0_29] : memref<16x128xf32, #tpu.memory_space<vmem>>, vector<16x128xf32>
    %c0_30 = arith.constant 0 : index
    %c0_31 = arith.constant 0 : index
    %151 = vector.load %arg2[%c0_30, %c0_31] : memref<1152x128xbf16, #tpu.memory_space<vmem>>, vector<1152x128xbf16>
    %cst_32 = arith.constant dense<0.000000e+00> : vector<16x128xf32>
    %152 = tpu.matmul %149, %151, %cst_32 {dimension_numbers = #tpu.dot_dimension_numbers<[1], [0], [0], [1], [0, 0, 1, 1], [], []>} : vector<16x1152xbf16>, vector<1152x128xbf16>, vector<16x128xf32> -> vector<16x128xf32>
    %153 = arith.addf %150, %152 : vector<16x128xf32>
    %c0_33 = arith.constant 0 : index
    %c0_34 = arith.constant 0 : index
    %154 = vector.load %arg7[%c0_33, %c0_34] : memref<16x128xf32, #tpu.memory_space<vmem>>, vector<16x128xf32>
    tpu.vector_store %arg7[%c0_33, %c0_34], %153 {strides = array<i32>} : memref<16x128xf32, #tpu.memory_space<vmem>>, vector<16x128xf32>,
    %c1_i32 = arith.constant 1 : i32
    %155 = arith.cmpi eq, %arg0, %c1_i32 : i32
    %156 = arith.extui %155 : i1 to i32
    %c0_i32_35 = arith.constant 0 : i32
    %157 = arith.cmpi ne, %156, %c0_i32_35 : i32
    scf.if %157 {
      %c0_36 = arith.constant 0 : index
      %c0_37 = arith.constant 0 : index
      %158 = vector.load %arg7[%c0_36, %c0_37] : memref<16x128xf32, #tpu.memory_space<vmem>>, vector<16x128xf32>
      %c0_38 = arith.constant 0 : index
      %c0_39 = arith.constant 0 : index
      %159 = vector.load %arg3[%c0_38, %c0_39] : memref<1152x128xbf16, #tpu.memory_space<vmem>>, vector<1152x128xbf16>
      %cst_40 = arith.constant 0.000000e+00 : f32
      %160 = vector.broadcast %cst_40 : f32 to vector<16x128xf32>
      %161 = arith.subf %160, %158 : vector<16x128xf32>
      %162 = math.exp %161 : vector<16x128xf32>
      %cst_41 = arith.constant 1.000000e+00 : f32
      %163 = vector.broadcast %cst_41 : f32 to vector<16x128xf32>
      %164 = arith.addf %163, %162 : vector<16x128xf32>
      %165 = tpu.reciprocal %164 {approx = true} : vector<16x128xf32> -> vector<16x128xf32>
      %166 = arith.mulf %158, %165 : vector<16x128xf32>
      %cst_42 = arith.constant -2.200000e+00 : f32
      %167 = vector.broadcast %cst_42 : f32 to vector<16x128xf32>
      %168 = arith.subf %158, %167 : vector<16x128xf32>
      %cst_43 = arith.constant 2.500000e+00 : f32
      %169 = vector.broadcast %cst_43 : f32 to vector<16x128xf32>
      %170 = arith.mulf %168, %169 : vector<16x128xf32>
      %171 = math.floor %170 : vector<16x128xf32>
      %172 = arith.subf %170, %171 : vector<16x128xf32>
      %173 = arith.mulf %172, %172 : vector<16x128xf32>
      %174 = arith.mulf %173, %172 : vector<16x128xf32>
      %cst_44 = arith.constant 0.166666672 : f32
      %175 = vector.broadcast %cst_44 : f32 to vector<16x128xf32>
      %176 = arith.mulf %174, %175 : vector<16x128xf32>
      %cst_45 = arith.constant 3.000000e+00 : f32
      %177 = vector.broadcast %cst_45 : f32 to vector<16x128xf32>
      %178 = arith.mulf %177, %172 : vector<16x128xf32>
      %cst_46 = arith.constant 3.000000e+00 : f32
      %179 = vector.broadcast %cst_46 : f32 to vector<16x128xf32>
      %180 = arith.subf %179, %178 : vector<16x128xf32>
      %181 = arith.mulf %180, %172 : vector<16x128xf32>
      %cst_47 = arith.constant 3.000000e+00 : f32
      %182 = vector.broadcast %cst_47 : f32 to vector<16x128xf32>
      %183 = arith.addf %181, %182 : vector<16x128xf32>
      %184 = arith.mulf %183, %172 : vector<16x128xf32>
      %cst_48 = arith.constant 1.000000e+00 : f32
      %185 = vector.broadcast %cst_48 : f32 to vector<16x128xf32>
      %186 = arith.addf %184, %185 : vector<16x128xf32>
      %cst_49 = arith.constant 0.166666672 : f32
      %187 = vector.broadcast %cst_49 : f32 to vector<16x128xf32>
      %188 = arith.mulf %186, %187 : vector<16x128xf32>
      %cst_50 = arith.constant 3.000000e+00 : f32
      %189 = vector.broadcast %cst_50 : f32 to vector<16x128xf32>
      %190 = arith.mulf %189, %172 : vector<16x128xf32>
      %cst_51 = arith.constant 6.000000e+00 : f32
      %191 = vector.broadcast %cst_51 : f32 to vector<16x128xf32>
      %192 = arith.subf %190, %191 : vector<16x128xf32>
      %193 = arith.mulf %192, %173 : vector<16x128xf32>
      %cst_52 = arith.constant 4.000000e+00 : f32
      %194 = vector.broadcast %cst_52 : f32 to vector<16x128xf32>
      %195 = arith.addf %193, %194 : vector<16x128xf32>
      %cst_53 = arith.constant 0.166666672 : f32
      %196 = vector.broadcast %cst_53 : f32 to vector<16x128xf32>
      %197 = arith.mulf %195, %196 : vector<16x128xf32>
      %cst_54 = arith.constant 1.000000e+00 : f32
      %198 = vector.broadcast %cst_54 : f32 to vector<16x128xf32>
      %199 = arith.subf %198, %172 : vector<16x128xf32>
      %200 = arith.mulf %199, %199 : vector<16x128xf32>
      %201 = arith.mulf %200, %199 : vector<16x128xf32>
      %cst_55 = arith.constant 0.166666672 : f32
      %202 = vector.broadcast %cst_55 : f32 to vector<16x128xf32>
      %203 = arith.mulf %201, %202 : vector<16x128xf32>
      %cst_56 = arith.constant 0.000000e+00 : f32
      %204 = vector.broadcast %cst_56 : f32 to vector<16x128xf32>
      %205 = arith.cmpf oeq, %171, %204 : vector<16x128xf32>
      %206 = arith.extui %205 : vector<16x128xi1> to vector<16x128xi32>
      %207 = arith.sitofp %206 : vector<16x128xi32> to vector<16x128xf32>
      %cst_57 = arith.constant 1.000000e+00 : f32
      %208 = vector.broadcast %cst_57 : f32 to vector<16x128xf32>
      %209 = arith.cmpf oeq, %171, %208 : vector<16x128xf32>
      %210 = arith.extui %209 : vector<16x128xi1> to vector<16x128xi32>
      %211 = arith.sitofp %210 : vector<16x128xi32> to vector<16x128xf32>
      %cst_58 = arith.constant 2.000000e+00 : f32
      %212 = vector.broadcast %cst_58 : f32 to vector<16x128xf32>
      %213 = arith.cmpf oeq, %171, %212 : vector<16x128xf32>
      %214 = arith.extui %213 : vector<16x128xi1> to vector<16x128xi32>
      %215 = arith.sitofp %214 : vector<16x128xi32> to vector<16x128xf32>
      %cst_59 = arith.constant 3.000000e+00 : f32
      %216 = vector.broadcast %cst_59 : f32 to vector<16x128xf32>
      %217 = arith.cmpf oeq, %171, %216 : vector<16x128xf32>
      %218 = arith.extui %217 : vector<16x128xi1> to vector<16x128xi32>
      %219 = arith.sitofp %218 : vector<16x128xi32> to vector<16x128xf32>
      %cst_60 = arith.constant 4.000000e+00 : f32
      %220 = vector.broadcast %cst_60 : f32 to vector<16x128xf32>
      %221 = arith.cmpf oeq, %171, %220 : vector<16x128xf32>
      %222 = arith.extui %221 : vector<16x128xi1> to vector<16x128xi32>
      %223 = arith.sitofp %222 : vector<16x128xi32> to vector<16x128xf32>
      %cst_61 = arith.constant 5.000000e+00 : f32
      %224 = vector.broadcast %cst_61 : f32 to vector<16x128xf32>
      %225 = arith.cmpf oeq, %171, %224 : vector<16x128xf32>
      %226 = arith.extui %225 : vector<16x128xi1> to vector<16x128xi32>
      %227 = arith.sitofp %226 : vector<16x128xi32> to vector<16x128xf32>
      %cst_62 = arith.constant 6.000000e+00 : f32
      %228 = vector.broadcast %cst_62 : f32 to vector<16x128xf32>
      %229 = arith.cmpf oeq, %171, %228 : vector<16x128xf32>
      %230 = arith.extui %229 : vector<16x128xi1> to vector<16x128xi32>
      %231 = arith.sitofp %230 : vector<16x128xi32> to vector<16x128xf32>
      %cst_63 = arith.constant 7.000000e+00 : f32
      %232 = vector.broadcast %cst_63 : f32 to vector<16x128xf32>
      %233 = arith.cmpf oeq, %171, %232 : vector<16x128xf32>
      %234 = arith.extui %233 : vector<16x128xi1> to vector<16x128xi32>
      %235 = arith.sitofp %234 : vector<16x128xi32> to vector<16x128xf32>
      %cst_64 = arith.constant 8.000000e+00 : f32
      %236 = vector.broadcast %cst_64 : f32 to vector<16x128xf32>
      %237 = arith.cmpf oeq, %171, %236 : vector<16x128xf32>
      %238 = arith.extui %237 : vector<16x128xi1> to vector<16x128xi32>
      %239 = arith.sitofp %238 : vector<16x128xi32> to vector<16x128xf32>
      %cst_65 = arith.constant 9.000000e+00 : f32
      %240 = vector.broadcast %cst_65 : f32 to vector<16x128xf32>
      %241 = arith.cmpf oeq, %171, %240 : vector<16x128xf32>
      %242 = arith.extui %241 : vector<16x128xi1> to vector<16x128xi32>
      %243 = arith.sitofp %242 : vector<16x128xi32> to vector<16x128xf32>
      %cst_66 = arith.constant 1.000000e+01 : f32
      %244 = vector.broadcast %cst_66 : f32 to vector<16x128xf32>
      %245 = arith.cmpf oeq, %171, %244 : vector<16x128xf32>
      %246 = arith.extui %245 : vector<16x128xi1> to vector<16x128xi32>
      %247 = arith.sitofp %246 : vector<16x128xi32> to vector<16x128xf32>
      %248 = arith.mulf %207, %176 : vector<16x128xf32>
      %249 = arith.mulf %211, %188 : vector<16x128xf32>
      %250 = arith.addf %248, %249 : vector<16x128xf32>
      %251 = arith.mulf %215, %197 : vector<16x128xf32>
      %252 = arith.addf %250, %251 : vector<16x128xf32>
      %253 = arith.mulf %219, %203 : vector<16x128xf32>
      %254 = arith.addf %252, %253 : vector<16x128xf32>
      %255 = arith.mulf %211, %176 : vector<16x128xf32>
      %256 = arith.mulf %215, %188 : vector<16x128xf32>
      %257 = arith.addf %255, %256 : vector<16x128xf32>
      %258 = arith.mulf %219, %197 : vector<16x128xf32>
      %259 = arith.addf %257, %258 : vector<16x128xf32>
      %260 = arith.mulf %223, %203 : vector<16x128xf32>
      %261 = arith.addf %259, %260 : vector<16x128xf32>
      %262 = arith.mulf %215, %176 : vector<16x128xf32>
      %263 = arith.mulf %219, %188 : vector<16x128xf32>
      %264 = arith.addf %262, %263 : vector<16x128xf32>
      %265 = arith.mulf %223, %197 : vector<16x128xf32>
      %266 = arith.addf %264, %265 : vector<16x128xf32>
      %267 = arith.mulf %227, %203 : vector<16x128xf32>
      %268 = arith.addf %266, %267 : vector<16x128xf32>
      %269 = arith.mulf %219, %176 : vector<16x128xf32>
      %270 = arith.mulf %223, %188 : vector<16x128xf32>
      %271 = arith.addf %269, %270 : vector<16x128xf32>
      %272 = arith.mulf %227, %197 : vector<16x128xf32>
      %273 = arith.addf %271, %272 : vector<16x128xf32>
      %274 = arith.mulf %231, %203 : vector<16x128xf32>
      %275 = arith.addf %273, %274 : vector<16x128xf32>
      %276 = arith.mulf %223, %176 : vector<16x128xf32>
      %277 = arith.mulf %227, %188 : vector<16x128xf32>
      %278 = arith.addf %276, %277 : vector<16x128xf32>
      %279 = arith.mulf %231, %197 : vector<16x128xf32>
      %280 = arith.addf %278, %279 : vector<16x128xf32>
      %281 = arith.mulf %235, %203 : vector<16x128xf32>
      %282 = arith.addf %280, %281 : vector<16x128xf32>
      %283 = arith.mulf %227, %176 : vector<16x128xf32>
      %284 = arith.mulf %231, %188 : vector<16x128xf32>
      %285 = arith.addf %283, %284 : vector<16x128xf32>
      %286 = arith.mulf %235, %197 : vector<16x128xf32>
      %287 = arith.addf %285, %286 : vector<16x128xf32>
      %288 = arith.mulf %239, %203 : vector<16x128xf32>
      %289 = arith.addf %287, %288 : vector<16x128xf32>
      %290 = arith.mulf %231, %176 : vector<16x128xf32>
      %291 = arith.mulf %235, %188 : vector<16x128xf32>
      %292 = arith.addf %290, %291 : vector<16x128xf32>
      %293 = arith.mulf %239, %197 : vector<16x128xf32>
      %294 = arith.addf %292, %293 : vector<16x128xf32>
      %295 = arith.mulf %243, %203 : vector<16x128xf32>
      %296 = arith.addf %294, %295 : vector<16x128xf32>
      %297 = arith.mulf %235, %176 : vector<16x128xf32>
      %298 = arith.mulf %239, %188 : vector<16x128xf32>
      %299 = arith.addf %297, %298 : vector<16x128xf32>
      %300 = arith.mulf %243, %197 : vector<16x128xf32>
      %301 = arith.addf %299, %300 : vector<16x128xf32>
      %302 = arith.mulf %247, %203 : vector<16x128xf32>
      %303 = arith.addf %301, %302 : vector<16x128xf32>
      %304 = tpu.concatenate %166, %254, %261, %268, %275, %282, %289, %296, %303 in 1 : vector<16x128xf32>, vector<16x128xf32>, vector<16x128xf32>, vector<16x128xf32>, vector<16x128xf32>, vector<16x128xf32>, vector<16x128xf32>, vector<16x128xf32>, vector<16x128xf32> -> vector<16x1152xf32>
      %305 = arith.truncf %304 : vector<16x1152xf32> to vector<16x1152xbf16>
      %cst_67 = arith.constant dense<0.000000e+00> : vector<16x128xf32>
      %306 = tpu.matmul %305, %159, %cst_67 {dimension_numbers = #tpu.dot_dimension_numbers<[1], [0], [0], [1], [0, 0, 1, 1], [], []>} : vector<16x1152xbf16>, vector<1152x128xbf16>, vector<16x128xf32> -> vector<16x128xf32>
      %c0_68 = arith.constant 0 : index
      %c0_69 = arith.constant 0 : index
      %307 = vector.load %arg4[%c0_68, %c0_69] : memref<1152x128xbf16, #tpu.memory_space<vmem>>, vector<1152x128xbf16>
      %cst_70 = arith.constant 0.000000e+00 : f32
      %308 = vector.broadcast %cst_70 : f32 to vector<16x128xf32>
      %309 = arith.subf %308, %306 : vector<16x128xf32>
      %310 = math.exp %309 : vector<16x128xf32>
      %cst_71 = arith.constant 1.000000e+00 : f32
      %311 = vector.broadcast %cst_71 : f32 to vector<16x128xf32>
      %312 = arith.addf %311, %310 : vector<16x128xf32>
      %313 = tpu.reciprocal %312 {approx = true} : vector<16x128xf32> -> vector<16x128xf32>
      %314 = arith.mulf %306, %313 : vector<16x128xf32>
      %cst_72 = arith.constant -2.200000e+00 : f32
      %315 = vector.broadcast %cst_72 : f32 to vector<16x128xf32>
      %316 = arith.subf %306, %315 : vector<16x128xf32>
      %cst_73 = arith.constant 2.500000e+00 : f32
      %317 = vector.broadcast %cst_73 : f32 to vector<16x128xf32>
      %318 = arith.mulf %316, %317 : vector<16x128xf32>
      %319 = math.floor %318 : vector<16x128xf32>
      %320 = arith.subf %318, %319 : vector<16x128xf32>
      %321 = arith.mulf %320, %320 : vector<16x128xf32>
      %322 = arith.mulf %321, %320 : vector<16x128xf32>
      %cst_74 = arith.constant 0.166666672 : f32
      %323 = vector.broadcast %cst_74 : f32 to vector<16x128xf32>
      %324 = arith.mulf %322, %323 : vector<16x128xf32>
      %cst_75 = arith.constant 3.000000e+00 : f32
      %325 = vector.broadcast %cst_75 : f32 to vector<16x128xf32>
      %326 = arith.mulf %325, %320 : vector<16x128xf32>
      %cst_76 = arith.constant 3.000000e+00 : f32
      %327 = vector.broadcast %cst_76 : f32 to vector<16x128xf32>
      %328 = arith.subf %327, %326 : vector<16x128xf32>
      %329 = arith.mulf %328, %320 : vector<16x128xf32>
      %cst_77 = arith.constant 3.000000e+00 : f32
      %330 = vector.broadcast %cst_77 : f32 to vector<16x128xf32>
      %331 = arith.addf %329, %330 : vector<16x128xf32>
      %332 = arith.mulf %331, %320 : vector<16x128xf32>
      %cst_78 = arith.constant 1.000000e+00 : f32
      %333 = vector.broadcast %cst_78 : f32 to vector<16x128xf32>
      %334 = arith.addf %332, %333 : vector<16x128xf32>
      %cst_79 = arith.constant 0.166666672 : f32
      %335 = vector.broadcast %cst_79 : f32 to vector<16x128xf32>
      %336 = arith.mulf %334, %335 : vector<16x128xf32>
      %cst_80 = arith.constant 3.000000e+00 : f32
      %337 = vector.broadcast %cst_80 : f32 to vector<16x128xf32>
      %338 = arith.mulf %337, %320 : vector<16x128xf32>
      %cst_81 = arith.constant 6.000000e+00 : f32
      %339 = vector.broadcast %cst_81 : f32 to vector<16x128xf32>
      %340 = arith.subf %338, %339 : vector<16x128xf32>
      %341 = arith.mulf %340, %321 : vector<16x128xf32>
      %cst_82 = arith.constant 4.000000e+00 : f32
      %342 = vector.broadcast %cst_82 : f32 to vector<16x128xf32>
      %343 = arith.addf %341, %342 : vector<16x128xf32>
      %cst_83 = arith.constant 0.166666672 : f32
      %344 = vector.broadcast %cst_83 : f32 to vector<16x128xf32>
      %345 = arith.mulf %343, %344 : vector<16x128xf32>
      %cst_84 = arith.constant 1.000000e+00 : f32
      %346 = vector.broadcast %cst_84 : f32 to vector<16x128xf32>
      %347 = arith.subf %346, %320 : vector<16x128xf32>
      %348 = arith.mulf %347, %347 : vector<16x128xf32>
      %349 = arith.mulf %348, %347 : vector<16x128xf32>
      %cst_85 = arith.constant 0.166666672 : f32
      %350 = vector.broadcast %cst_85 : f32 to vector<16x128xf32>
      %351 = arith.mulf %349, %350 : vector<16x128xf32>
      %cst_86 = arith.constant 0.000000e+00 : f32
      %352 = vector.broadcast %cst_86 : f32 to vector<16x128xf32>
      %353 = arith.cmpf oeq, %319, %352 : vector<16x128xf32>
      %354 = arith.extui %353 : vector<16x128xi1> to vector<16x128xi32>
      %355 = arith.sitofp %354 : vector<16x128xi32> to vector<16x128xf32>
      %cst_87 = arith.constant 1.000000e+00 : f32
      %356 = vector.broadcast %cst_87 : f32 to vector<16x128xf32>
      %357 = arith.cmpf oeq, %319, %356 : vector<16x128xf32>
      %358 = arith.extui %357 : vector<16x128xi1> to vector<16x128xi32>
      %359 = arith.sitofp %358 : vector<16x128xi32> to vector<16x128xf32>
      %cst_88 = arith.constant 2.000000e+00 : f32
      %360 = vector.broadcast %cst_88 : f32 to vector<16x128xf32>
      %361 = arith.cmpf oeq, %319, %360 : vector<16x128xf32>
      %362 = arith.extui %361 : vector<16x128xi1> to vector<16x128xi32>
      %363 = arith.sitofp %362 : vector<16x128xi32> to vector<16x128xf32>
      %cst_89 = arith.constant 3.000000e+00 : f32
      %364 = vector.broadcast %cst_89 : f32 to vector<16x128xf32>
      %365 = arith.cmpf oeq, %319, %364 : vector<16x128xf32>
      %366 = arith.extui %365 : vector<16x128xi1> to vector<16x128xi32>
      %367 = arith.sitofp %366 : vector<16x128xi32> to vector<16x128xf32>
      %cst_90 = arith.constant 4.000000e+00 : f32
      %368 = vector.broadcast %cst_90 : f32 to vector<16x128xf32>
      %369 = arith.cmpf oeq, %319, %368 : vector<16x128xf32>
      %370 = arith.extui %369 : vector<16x128xi1> to vector<16x128xi32>
      %371 = arith.sitofp %370 : vector<16x128xi32> to vector<16x128xf32>
      %cst_91 = arith.constant 5.000000e+00 : f32
      %372 = vector.broadcast %cst_91 : f32 to vector<16x128xf32>
      %373 = arith.cmpf oeq, %319, %372 : vector<16x128xf32>
      %374 = arith.extui %373 : vector<16x128xi1> to vector<16x128xi32>
      %375 = arith.sitofp %374 : vector<16x128xi32> to vector<16x128xf32>
      %cst_92 = arith.constant 6.000000e+00 : f32
      %376 = vector.broadcast %cst_92 : f32 to vector<16x128xf32>
      %377 = arith.cmpf oeq, %319, %376 : vector<16x128xf32>
      %378 = arith.extui %377 : vector<16x128xi1> to vector<16x128xi32>
      %379 = arith.sitofp %378 : vector<16x128xi32> to vector<16x128xf32>
      %cst_93 = arith.constant 7.000000e+00 : f32
      %380 = vector.broadcast %cst_93 : f32 to vector<16x128xf32>
      %381 = arith.cmpf oeq, %319, %380 : vector<16x128xf32>
      %382 = arith.extui %381 : vector<16x128xi1> to vector<16x128xi32>
      %383 = arith.sitofp %382 : vector<16x128xi32> to vector<16x128xf32>
      %cst_94 = arith.constant 8.000000e+00 : f32
      %384 = vector.broadcast %cst_94 : f32 to vector<16x128xf32>
      %385 = arith.cmpf oeq, %319, %384 : vector<16x128xf32>
      %386 = arith.extui %385 : vector<16x128xi1> to vector<16x128xi32>
      %387 = arith.sitofp %386 : vector<16x128xi32> to vector<16x128xf32>
      %cst_95 = arith.constant 9.000000e+00 : f32
      %388 = vector.broadcast %cst_95 : f32 to vector<16x128xf32>
      %389 = arith.cmpf oeq, %319, %388 : vector<16x128xf32>
      %390 = arith.extui %389 : vector<16x128xi1> to vector<16x128xi32>
      %391 = arith.sitofp %390 : vector<16x128xi32> to vector<16x128xf32>
      %cst_96 = arith.constant 1.000000e+01 : f32
      %392 = vector.broadcast %cst_96 : f32 to vector<16x128xf32>
      %393 = arith.cmpf oeq, %319, %392 : vector<16x128xf32>
      %394 = arith.extui %393 : vector<16x128xi1> to vector<16x128xi32>
      %395 = arith.sitofp %394 : vector<16x128xi32> to vector<16x128xf32>
      %396 = arith.mulf %355, %324 : vector<16x128xf32>
      %397 = arith.mulf %359, %336 : vector<16x128xf32>
      %398 = arith.addf %396, %397 : vector<16x128xf32>
      %399 = arith.mulf %363, %345 : vector<16x128xf32>
      %400 = arith.addf %398, %399 : vector<16x128xf32>
      %401 = arith.mulf %367, %351 : vector<16x128xf32>
      %402 = arith.addf %400, %401 : vector<16x128xf32>
      %403 = arith.mulf %359, %324 : vector<16x128xf32>
      %404 = arith.mulf %363, %336 : vector<16x128xf32>
      %405 = arith.addf %403, %404 : vector<16x128xf32>
      %406 = arith.mulf %367, %345 : vector<16x128xf32>
      %407 = arith.addf %405, %406 : vector<16x128xf32>
      %408 = arith.mulf %371, %351 : vector<16x128xf32>
      %409 = arith.addf %407, %408 : vector<16x128xf32>
      %410 = arith.mulf %363, %324 : vector<16x128xf32>
      %411 = arith.mulf %367, %336 : vector<16x128xf32>
      %412 = arith.addf %410, %411 : vector<16x128xf32>
      %413 = arith.mulf %371, %345 : vector<16x128xf32>
      %414 = arith.addf %412, %413 : vector<16x128xf32>
      %415 = arith.mulf %375, %351 : vector<16x128xf32>
      %416 = arith.addf %414, %415 : vector<16x128xf32>
      %417 = arith.mulf %367, %324 : vector<16x128xf32>
      %418 = arith.mulf %371, %336 : vector<16x128xf32>
      %419 = arith.addf %417, %418 : vector<16x128xf32>
      %420 = arith.mulf %375, %345 : vector<16x128xf32>
      %421 = arith.addf %419, %420 : vector<16x128xf32>
      %422 = arith.mulf %379, %351 : vector<16x128xf32>
      %423 = arith.addf %421, %422 : vector<16x128xf32>
      %424 = arith.mulf %371, %324 : vector<16x128xf32>
      %425 = arith.mulf %375, %336 : vector<16x128xf32>
      %426 = arith.addf %424, %425 : vector<16x128xf32>
      %427 = arith.mulf %379, %345 : vector<16x128xf32>
      %428 = arith.addf %426, %427 : vector<16x128xf32>
      %429 = arith.mulf %383, %351 : vector<16x128xf32>
      %430 = arith.addf %428, %429 : vector<16x128xf32>
      %431 = arith.mulf %375, %324 : vector<16x128xf32>
      %432 = arith.mulf %379, %336 : vector<16x128xf32>
      %433 = arith.addf %431, %432 : vector<16x128xf32>
      %434 = arith.mulf %383, %345 : vector<16x128xf32>
      %435 = arith.addf %433, %434 : vector<16x128xf32>
      %436 = arith.mulf %387, %351 : vector<16x128xf32>
      %437 = arith.addf %435, %436 : vector<16x128xf32>
      %438 = arith.mulf %379, %324 : vector<16x128xf32>
      %439 = arith.mulf %383, %336 : vector<16x128xf32>
      %440 = arith.addf %438, %439 : vector<16x128xf32>
      %441 = arith.mulf %387, %345 : vector<16x128xf32>
      %442 = arith.addf %440, %441 : vector<16x128xf32>
      %443 = arith.mulf %391, %351 : vector<16x128xf32>
      %444 = arith.addf %442, %443 : vector<16x128xf32>
      %445 = arith.mulf %383, %324 : vector<16x128xf32>
      %446 = arith.mulf %387, %336 : vector<16x128xf32>
      %447 = arith.addf %445, %446 : vector<16x128xf32>
      %448 = arith.mulf %391, %345 : vector<16x128xf32>
      %449 = arith.addf %447, %448 : vector<16x128xf32>
      %450 = arith.mulf %395, %351 : vector<16x128xf32>
      %451 = arith.addf %449, %450 : vector<16x128xf32>
      %452 = tpu.concatenate %314, %402, %409, %416, %423, %430, %437, %444, %451 in 1 : vector<16x128xf32>, vector<16x128xf32>, vector<16x128xf32>, vector<16x128xf32>, vector<16x128xf32>, vector<16x128xf32>, vector<16x128xf32>, vector<16x128xf32>, vector<16x128xf32> -> vector<16x1152xf32>
      %453 = arith.truncf %452 : vector<16x1152xf32> to vector<16x1152xbf16>
      %cst_97 = arith.constant dense<0.000000e+00> : vector<16x128xf32>
      %454 = tpu.matmul %453, %307, %cst_97 {dimension_numbers = #tpu.dot_dimension_numbers<[1], [0], [0], [1], [0, 0, 1, 1], [], []>} : vector<16x1152xbf16>, vector<1152x128xbf16>, vector<16x128xf32> -> vector<16x128xf32>
      %c0_98 = arith.constant 0 : index
      %c0_99 = arith.constant 0 : index
      %455 = vector.load %arg5[%c0_98, %c0_99] : memref<1152x128xbf16, #tpu.memory_space<vmem>>, vector<1152x128xbf16>
      %cst_100 = arith.constant 0.000000e+00 : f32
      %456 = vector.broadcast %cst_100 : f32 to vector<16x128xf32>
      %457 = arith.subf %456, %454 : vector<16x128xf32>
      %458 = math.exp %457 : vector<16x128xf32>
      %cst_101 = arith.constant 1.000000e+00 : f32
      %459 = vector.broadcast %cst_101 : f32 to vector<16x128xf32>
      %460 = arith.addf %459, %458 : vector<16x128xf32>
      %461 = tpu.reciprocal %460 {approx = true} : vector<16x128xf32> -> vector<16x128xf32>
      %462 = arith.mulf %454, %461 : vector<16x128xf32>
      %cst_102 = arith.constant -2.200000e+00 : f32
      %463 = vector.broadcast %cst_102 : f32 to vector<16x128xf32>
      %464 = arith.subf %454, %463 : vector<16x128xf32>
      %cst_103 = arith.constant 2.500000e+00 : f32
      %465 = vector.broadcast %cst_103 : f32 to vector<16x128xf32>
      %466 = arith.mulf %464, %465 : vector<16x128xf32>
      %467 = math.floor %466 : vector<16x128xf32>
      %468 = arith.subf %466, %467 : vector<16x128xf32>
      %469 = arith.mulf %468, %468 : vector<16x128xf32>
      %470 = arith.mulf %469, %468 : vector<16x128xf32>
      %cst_104 = arith.constant 0.166666672 : f32
      %471 = vector.broadcast %cst_104 : f32 to vector<16x128xf32>
      %472 = arith.mulf %470, %471 : vector<16x128xf32>
      %cst_105 = arith.constant 3.000000e+00 : f32
      %473 = vector.broadcast %cst_105 : f32 to vector<16x128xf32>
      %474 = arith.mulf %473, %468 : vector<16x128xf32>
      %cst_106 = arith.constant 3.000000e+00 : f32
      %475 = vector.broadcast %cst_106 : f32 to vector<16x128xf32>
      %476 = arith.subf %475, %474 : vector<16x128xf32>
      %477 = arith.mulf %476, %468 : vector<16x128xf32>
      %cst_107 = arith.constant 3.000000e+00 : f32
      %478 = vector.broadcast %cst_107 : f32 to vector<16x128xf32>
      %479 = arith.addf %477, %478 : vector<16x128xf32>
      %480 = arith.mulf %479, %468 : vector<16x128xf32>
      %cst_108 = arith.constant 1.000000e+00 : f32
      %481 = vector.broadcast %cst_108 : f32 to vector<16x128xf32>
      %482 = arith.addf %480, %481 : vector<16x128xf32>
      %cst_109 = arith.constant 0.166666672 : f32
      %483 = vector.broadcast %cst_109 : f32 to vector<16x128xf32>
      %484 = arith.mulf %482, %483 : vector<16x128xf32>
      %cst_110 = arith.constant 3.000000e+00 : f32
      %485 = vector.broadcast %cst_110 : f32 to vector<16x128xf32>
      %486 = arith.mulf %485, %468 : vector<16x128xf32>
      %cst_111 = arith.constant 6.000000e+00 : f32
      %487 = vector.broadcast %cst_111 : f32 to vector<16x128xf32>
      %488 = arith.subf %486, %487 : vector<16x128xf32>
      %489 = arith.mulf %488, %469 : vector<16x128xf32>
      %cst_112 = arith.constant 4.000000e+00 : f32
      %490 = vector.broadcast %cst_112 : f32 to vector<16x128xf32>
      %491 = arith.addf %489, %490 : vector<16x128xf32>
      %cst_113 = arith.constant 0.166666672 : f32
      %492 = vector.broadcast %cst_113 : f32 to vector<16x128xf32>
      %493 = arith.mulf %491, %492 : vector<16x128xf32>
      %cst_114 = arith.constant 1.000000e+00 : f32
      %494 = vector.broadcast %cst_114 : f32 to vector<16x128xf32>
      %495 = arith.subf %494, %468 : vector<16x128xf32>
      %496 = arith.mulf %495, %495 : vector<16x128xf32>
      %497 = arith.mulf %496, %495 : vector<16x128xf32>
      %cst_115 = arith.constant 0.166666672 : f32
      %498 = vector.broadcast %cst_115 : f32 to vector<16x128xf32>
      %499 = arith.mulf %497, %498 : vector<16x128xf32>
      %cst_116 = arith.constant 0.000000e+00 : f32
      %500 = vector.broadcast %cst_116 : f32 to vector<16x128xf32>
      %501 = arith.cmpf oeq, %467, %500 : vector<16x128xf32>
      %502 = arith.extui %501 : vector<16x128xi1> to vector<16x128xi32>
      %503 = arith.sitofp %502 : vector<16x128xi32> to vector<16x128xf32>
      %cst_117 = arith.constant 1.000000e+00 : f32
      %504 = vector.broadcast %cst_117 : f32 to vector<16x128xf32>
      %505 = arith.cmpf oeq, %467, %504 : vector<16x128xf32>
      %506 = arith.extui %505 : vector<16x128xi1> to vector<16x128xi32>
      %507 = arith.sitofp %506 : vector<16x128xi32> to vector<16x128xf32>
      %cst_118 = arith.constant 2.000000e+00 : f32
      %508 = vector.broadcast %cst_118 : f32 to vector<16x128xf32>
      %509 = arith.cmpf oeq, %467, %508 : vector<16x128xf32>
      %510 = arith.extui %509 : vector<16x128xi1> to vector<16x128xi32>
      %511 = arith.sitofp %510 : vector<16x128xi32> to vector<16x128xf32>
      %cst_119 = arith.constant 3.000000e+00 : f32
      %512 = vector.broadcast %cst_119 : f32 to vector<16x128xf32>
      %513 = arith.cmpf oeq, %467, %512 : vector<16x128xf32>
      %514 = arith.extui %513 : vector<16x128xi1> to vector<16x128xi32>
      %515 = arith.sitofp %514 : vector<16x128xi32> to vector<16x128xf32>
      %cst_120 = arith.constant 4.000000e+00 : f32
      %516 = vector.broadcast %cst_120 : f32 to vector<16x128xf32>
      %517 = arith.cmpf oeq, %467, %516 : vector<16x128xf32>
      %518 = arith.extui %517 : vector<16x128xi1> to vector<16x128xi32>
      %519 = arith.sitofp %518 : vector<16x128xi32> to vector<16x128xf32>
      %cst_121 = arith.constant 5.000000e+00 : f32
      %520 = vector.broadcast %cst_121 : f32 to vector<16x128xf32>
      %521 = arith.cmpf oeq, %467, %520 : vector<16x128xf32>
      %522 = arith.extui %521 : vector<16x128xi1> to vector<16x128xi32>
      %523 = arith.sitofp %522 : vector<16x128xi32> to vector<16x128xf32>
      %cst_122 = arith.constant 6.000000e+00 : f32
      %524 = vector.broadcast %cst_122 : f32 to vector<16x128xf32>
      %525 = arith.cmpf oeq, %467, %524 : vector<16x128xf32>
      %526 = arith.extui %525 : vector<16x128xi1> to vector<16x128xi32>
      %527 = arith.sitofp %526 : vector<16x128xi32> to vector<16x128xf32>
      %cst_123 = arith.constant 7.000000e+00 : f32
      %528 = vector.broadcast %cst_123 : f32 to vector<16x128xf32>
      %529 = arith.cmpf oeq, %467, %528 : vector<16x128xf32>
      %530 = arith.extui %529 : vector<16x128xi1> to vector<16x128xi32>
      %531 = arith.sitofp %530 : vector<16x128xi32> to vector<16x128xf32>
      %cst_124 = arith.constant 8.000000e+00 : f32
      %532 = vector.broadcast %cst_124 : f32 to vector<16x128xf32>
      %533 = arith.cmpf oeq, %467, %532 : vector<16x128xf32>
      %534 = arith.extui %533 : vector<16x128xi1> to vector<16x128xi32>
      %535 = arith.sitofp %534 : vector<16x128xi32> to vector<16x128xf32>
      %cst_125 = arith.constant 9.000000e+00 : f32
      %536 = vector.broadcast %cst_125 : f32 to vector<16x128xf32>
      %537 = arith.cmpf oeq, %467, %536 : vector<16x128xf32>
      %538 = arith.extui %537 : vector<16x128xi1> to vector<16x128xi32>
      %539 = arith.sitofp %538 : vector<16x128xi32> to vector<16x128xf32>
      %cst_126 = arith.constant 1.000000e+01 : f32
      %540 = vector.broadcast %cst_126 : f32 to vector<16x128xf32>
      %541 = arith.cmpf oeq, %467, %540 : vector<16x128xf32>
      %542 = arith.extui %541 : vector<16x128xi1> to vector<16x128xi32>
      %543 = arith.sitofp %542 : vector<16x128xi32> to vector<16x128xf32>
      %544 = arith.mulf %503, %472 : vector<16x128xf32>
      %545 = arith.mulf %507, %484 : vector<16x128xf32>
      %546 = arith.addf %544, %545 : vector<16x128xf32>
      %547 = arith.mulf %511, %493 : vector<16x128xf32>
      %548 = arith.addf %546, %547 : vector<16x128xf32>
      %549 = arith.mulf %515, %499 : vector<16x128xf32>
      %550 = arith.addf %548, %549 : vector<16x128xf32>
      %551 = arith.mulf %507, %472 : vector<16x128xf32>
      %552 = arith.mulf %511, %484 : vector<16x128xf32>
      %553 = arith.addf %551, %552 : vector<16x128xf32>
      %554 = arith.mulf %515, %493 : vector<16x128xf32>
      %555 = arith.addf %553, %554 : vector<16x128xf32>
      %556 = arith.mulf %519, %499 : vector<16x128xf32>
      %557 = arith.addf %555, %556 : vector<16x128xf32>
      %558 = arith.mulf %511, %472 : vector<16x128xf32>
      %559 = arith.mulf %515, %484 : vector<16x128xf32>
      %560 = arith.addf %558, %559 : vector<16x128xf32>
      %561 = arith.mulf %519, %493 : vector<16x128xf32>
      %562 = arith.addf %560, %561 : vector<16x128xf32>
      %563 = arith.mulf %523, %499 : vector<16x128xf32>
      %564 = arith.addf %562, %563 : vector<16x128xf32>
      %565 = arith.mulf %515, %472 : vector<16x128xf32>
      %566 = arith.mulf %519, %484 : vector<16x128xf32>
      %567 = arith.addf %565, %566 : vector<16x128xf32>
      %568 = arith.mulf %523, %493 : vector<16x128xf32>
      %569 = arith.addf %567, %568 : vector<16x128xf32>
      %570 = arith.mulf %527, %499 : vector<16x128xf32>
      %571 = arith.addf %569, %570 : vector<16x128xf32>
      %572 = arith.mulf %519, %472 : vector<16x128xf32>
      %573 = arith.mulf %523, %484 : vector<16x128xf32>
      %574 = arith.addf %572, %573 : vector<16x128xf32>
      %575 = arith.mulf %527, %493 : vector<16x128xf32>
      %576 = arith.addf %574, %575 : vector<16x128xf32>
      %577 = arith.mulf %531, %499 : vector<16x128xf32>
      %578 = arith.addf %576, %577 : vector<16x128xf32>
      %579 = arith.mulf %523, %472 : vector<16x128xf32>
      %580 = arith.mulf %527, %484 : vector<16x128xf32>
      %581 = arith.addf %579, %580 : vector<16x128xf32>
      %582 = arith.mulf %531, %493 : vector<16x128xf32>
      %583 = arith.addf %581, %582 : vector<16x128xf32>
      %584 = arith.mulf %535, %499 : vector<16x128xf32>
      %585 = arith.addf %583, %584 : vector<16x128xf32>
      %586 = arith.mulf %527, %472 : vector<16x128xf32>
      %587 = arith.mulf %531, %484 : vector<16x128xf32>
      %588 = arith.addf %586, %587 : vector<16x128xf32>
      %589 = arith.mulf %535, %493 : vector<16x128xf32>
      %590 = arith.addf %588, %589 : vector<16x128xf32>
      %591 = arith.mulf %539, %499 : vector<16x128xf32>
      %592 = arith.addf %590, %591 : vector<16x128xf32>
      %593 = arith.mulf %531, %472 : vector<16x128xf32>
      %594 = arith.mulf %535, %484 : vector<16x128xf32>
      %595 = arith.addf %593, %594 : vector<16x128xf32>
      %596 = arith.mulf %539, %493 : vector<16x128xf32>
      %597 = arith.addf %595, %596 : vector<16x128xf32>
      %598 = arith.mulf %543, %499 : vector<16x128xf32>
      %599 = arith.addf %597, %598 : vector<16x128xf32>
      %600 = tpu.concatenate %462, %550, %557, %564, %571, %578, %585, %592, %599 in 1 : vector<16x128xf32>, vector<16x128xf32>, vector<16x128xf32>, vector<16x128xf32>, vector<16x128xf32>, vector<16x128xf32>, vector<16x128xf32>, vector<16x128xf32>, vector<16x128xf32> -> vector<16x1152xf32>
      %601 = arith.truncf %600 : vector<16x1152xf32> to vector<16x1152xbf16>
      %cst_127 = arith.constant dense<0.000000e+00> : vector<16x128xf32>
      %602 = tpu.matmul %601, %455, %cst_127 {dimension_numbers = #tpu.dot_dimension_numbers<[1], [0], [0], [1], [0, 0, 1, 1], [], []>} : vector<16x1152xbf16>, vector<1152x128xbf16>, vector<16x128xf32> -> vector<16x128xf32>
      %c0_128 = arith.constant 0 : index
      %c0_129 = arith.constant 0 : index
      %603 = vector.load %arg6[%c0_128, %c0_129] : memref<16x128xf32, #tpu.memory_space<vmem>>, vector<16x128xf32>
      tpu.vector_store %arg6[%c0_128, %c0_129], %602 {strides = array<i32>} : memref<16x128xf32, #tpu.memory_space<vmem>>, vector<16x128xf32>,
    } else {
    }
    return
  }
  func.func @transform_0(%arg0: i32) -> (i32, i32) {
    %c0_i32 = arith.constant 0 : i32
    %c0_i32_0 = arith.constant 0 : i32
    return %c0_i32, %arg0 : i32, i32
  }
  func.func @transform_1(%arg0: i32) -> (i32, i32) {
    %c0_i32 = arith.constant 0 : i32
    %c0_i32_0 = arith.constant 0 : i32
    return %arg0, %c0_i32 : i32, i32
  }
  func.func @transform_2(%arg0: i32) -> (i32, i32) {
    %c0_i32 = arith.constant 0 : i32
    %c0_i32_0 = arith.constant 0 : i32
    %c0_i32_1 = arith.constant 0 : i32
    return %c0_i32, %c0_i32_0 : i32, i32
  }
  func.func @transform_3(%arg0: i32) -> (i32, i32) {
    %c0_i32 = arith.constant 0 : i32
    %c0_i32_0 = arith.constant 0 : i32
    %c0_i32_1 = arith.constant 0 : i32
    return %c0_i32, %c0_i32_0 : i32, i32
  }
  func.func @transform_4(%arg0: i32) -> (i32, i32) {
    %c0_i32 = arith.constant 0 : i32
    %c0_i32_0 = arith.constant 0 : i32
    %c0_i32_1 = arith.constant 0 : i32
    return %c0_i32, %c0_i32_0 : i32, i32
  }
  func.func @transform_5(%arg0: i32) -> (i32, i32) {
    %c0_i32 = arith.constant 0 : i32
    %c0_i32_0 = arith.constant 0 : i32
    %c0_i32_1 = arith.constant 0 : i32
    return %c0_i32, %c0_i32_0 : i32, i32
  }
}

module attributes {stable_mosaic.version = 11 : i64} {
  func.func @_esm2_kan_kernel(%arg0: i32, %arg1: memref<16x128xf32, #tpu.memory_space<vmem>>, %arg2: memref<1152x128xbf16, #tpu.memory_space<vmem>>, %arg3: memref<1152x128xbf16, #tpu.memory_space<vmem>>, %arg4: memref<1152x128xbf16, #tpu.memory_space<vmem>>, %arg5: memref<1152x128xbf16, #tpu.memory_space<vmem>>, %arg6: memref<16x128xf32, #tpu.memory_space<vmem>>, %arg7: memref<16x128xf32, #tpu.memory_space<vmem>>) attributes {dimension_semantics = [#tpu.dimension_semantics<arbitrary>], iteration_bounds = array<i64: 2>, scalar_prefetch = 0 : i64, scratch_operands = 1 : i64, tpu.core_type = #tpu.core_type<tc>, window_params = [{transform_indices = @transform_0, window_bounds = array<i64: 16, 128>}, {transform_indices = @transform_1, window_bounds = array<i64: 1152, 128>}, {pipeline_mode = #tpu.pipeline_mode<synchronous>, transform_indices = @transform_2, window_bounds = array<i64: 1152, 128>}, {pipeline_mode = #tpu.pipeline_mode<synchronous>, transform_indices = @transform_3, window_bounds = array<i64: 1152, 128>}, {pipeline_mode = #tpu.pipeline_mode<synchronous>, transform_indices = @transform_4, window_bounds = array<i64: 1152, 128>}, {pipeline_mode = #tpu.pipeline_mode<synchronous>, transform_indices = @transform_5, window_bounds = array<i64: 16, 128>}]} {
    %c0_i32 = arith.constant 0 : i32
    %0 = arith.cmpi eq, %arg0, %c0_i32 : i32
    %1 = arith.extui %0 : i1 to i32
    %c0_i32_0 = arith.constant 0 : i32
    %2 = arith.cmpi ne, %1, %c0_i32_0 : i32
    scf.if %2 {
      %cst_36 = arith.constant 0.000000e+00 : f32
      %158 = vector.broadcast %cst_36 : f32 to vector<16x128xf32>
      %c0_37 = arith.constant 0 : index
      %c0_38 = arith.constant 0 : index
      %159 = vector.load %arg7[%c0_37, %c0_38] : memref<16x128xf32, #tpu.memory_space<vmem>>, vector<16x128xf32>
      tpu.vector_store %arg7[%c0_37, %c0_38], %158 {strides = array<i32>} : memref<16x128xf32, #tpu.memory_space<vmem>>, vector<16x128xf32>,
    } else {
    }
    %c0 = arith.constant 0 : index
    %c0_1 = arith.constant 0 : index
    %3 = vector.load %arg1[%c0, %c0_1] : memref<16x128xf32, #tpu.memory_space<vmem>>, vector<16x128xf32>
    %cst = arith.constant 0.000000e+00 : f32
    %4 = vector.broadcast %cst : f32 to vector<16x128xf32>
    %5 = arith.subf %4, %3 : vector<16x128xf32>
    %6 = math.exp %5 : vector<16x128xf32>
    %cst_2 = arith.constant 1.000000e+00 : f32
    %7 = vector.broadcast %cst_2 : f32 to vector<16x128xf32>
    %8 = arith.addf %7, %6 : vector<16x128xf32>
    %9 = tpu.reciprocal %8 {approx = true} : vector<16x128xf32> -> vector<16x128xf32>
    %10 = arith.mulf %3, %9 : vector<16x128xf32>
    %cst_3 = arith.constant -2.200000e+00 : f32
    %11 = vector.broadcast %cst_3 : f32 to vector<16x128xf32>
    %12 = arith.subf %3, %11 : vector<16x128xf32>
    %cst_4 = arith.constant 2.500000e+00 : f32
    %13 = vector.broadcast %cst_4 : f32 to vector<16x128xf32>
    %14 = arith.mulf %12, %13 : vector<16x128xf32>
    %15 = math.floor %14 : vector<16x128xf32>
    %16 = arith.subf %14, %15 : vector<16x128xf32>
    %17 = arith.mulf %16, %16 : vector<16x128xf32>
    %18 = arith.mulf %17, %16 : vector<16x128xf32>
    %cst_5 = arith.constant 0.166666672 : f32
    %19 = vector.broadcast %cst_5 : f32 to vector<16x128xf32>
    %20 = arith.mulf %18, %19 : vector<16x128xf32>
    %cst_6 = arith.constant 3.000000e+00 : f32
    %21 = vector.broadcast %cst_6 : f32 to vector<16x128xf32>
    %22 = arith.mulf %21, %16 : vector<16x128xf32>
    %cst_7 = arith.constant 3.000000e+00 : f32
    %23 = vector.broadcast %cst_7 : f32 to vector<16x128xf32>
    %24 = arith.subf %23, %22 : vector<16x128xf32>
    %25 = arith.mulf %24, %16 : vector<16x128xf32>
    %cst_8 = arith.constant 3.000000e+00 : f32
    %26 = vector.broadcast %cst_8 : f32 to vector<16x128xf32>
    %27 = arith.addf %25, %26 : vector<16x128xf32>
    %28 = arith.mulf %27, %16 : vector<16x128xf32>
    %cst_9 = arith.constant 1.000000e+00 : f32
    %29 = vector.broadcast %cst_9 : f32 to vector<16x128xf32>
    %30 = arith.addf %28, %29 : vector<16x128xf32>
    %cst_10 = arith.constant 0.166666672 : f32
    %31 = vector.broadcast %cst_10 : f32 to vector<16x128xf32>
    %32 = arith.mulf %30, %31 : vector<16x128xf32>
    %cst_11 = arith.constant 3.000000e+00 : f32
    %33 = vector.broadcast %cst_11 : f32 to vector<16x128xf32>
    %34 = arith.mulf %33, %16 : vector<16x128xf32>
    %cst_12 = arith.constant 6.000000e+00 : f32
    %35 = vector.broadcast %cst_12 : f32 to vector<16x128xf32>
    %36 = arith.subf %34, %35 : vector<16x128xf32>
    %37 = arith.mulf %36, %17 : vector<16x128xf32>
    %cst_13 = arith.constant 4.000000e+00 : f32
    %38 = vector.broadcast %cst_13 : f32 to vector<16x128xf32>
    %39 = arith.addf %37, %38 : vector<16x128xf32>
    %cst_14 = arith.constant 0.166666672 : f32
    %40 = vector.broadcast %cst_14 : f32 to vector<16x128xf32>
    %41 = arith.mulf %39, %40 : vector<16x128xf32>
    %cst_15 = arith.constant 1.000000e+00 : f32
    %42 = vector.broadcast %cst_15 : f32 to vector<16x128xf32>
    %43 = arith.subf %42, %16 : vector<16x128xf32>
    %44 = arith.mulf %43, %43 : vector<16x128xf32>
    %45 = arith.mulf %44, %43 : vector<16x128xf32>
    %cst_16 = arith.constant 0.166666672 : f32
    %46 = vector.broadcast %cst_16 : f32 to vector<16x128xf32>
    %47 = arith.mulf %45, %46 : vector<16x128xf32>
    %cst_17 = arith.constant 0.000000e+00 : f32
    %48 = vector.broadcast %cst_17 : f32 to vector<16x128xf32>
    %49 = arith.cmpf oeq, %15, %48 : vector<16x128xf32>
    %50 = arith.extui %49 : vector<16x128xi1> to vector<16x128xi32>
    %51 = arith.sitofp %50 : vector<16x128xi32> to vector<16x128xf32>
    %cst_18 = arith.constant 1.000000e+00 : f32
    %52 = vector.broadcast %cst_18 : f32 to vector<16x128xf32>
    %53 = arith.cmpf oeq, %15, %52 : vector<16x128xf32>
    %54 = arith.extui %53 : vector<16x128xi1> to vector<16x128xi32>
    %55 = arith.sitofp %54 : vector<16x128xi32> to vector<16x128xf32>
    %cst_19 = arith.constant 2.000000e+00 : f32
    %56 = vector.broadcast %cst_19 : f32 to vector<16x128xf32>
    %57 = arith.cmpf oeq, %15, %56 : vector<16x128xf32>
    %58 = arith.extui %57 : vector<16x128xi1> to vector<16x128xi32>
    %59 = arith.sitofp %58 : vector<16x128xi32> to vector<16x128xf32>
    %cst_20 = arith.constant 3.000000e+00 : f32
    %60 = vector.broadcast %cst_20 : f32 to vector<16x128xf32>
    %61 = arith.cmpf oeq, %15, %60 : vector<16x128xf32>
    %62 = arith.extui %61 : vector<16x128xi1> to vector<16x128xi32>
    %63 = arith.sitofp %62 : vector<16x128xi32> to vector<16x128xf32>
    %cst_21 = arith.constant 4.000000e+00 : f32
    %64 = vector.broadcast %cst_21 : f32 to vector<16x128xf32>
    %65 = arith.cmpf oeq, %15, %64 : vector<16x128xf32>
    %66 = arith.extui %65 : vector<16x128xi1> to vector<16x128xi32>
    %67 = arith.sitofp %66 : vector<16x128xi32> to vector<16x128xf32>
    %cst_22 = arith.constant 5.000000e+00 : f32
    %68 = vector.broadcast %cst_22 : f32 to vector<16x128xf32>
    %69 = arith.cmpf oeq, %15, %68 : vector<16x128xf32>
    %70 = arith.extui %69 : vector<16x128xi1> to vector<16x128xi32>
    %71 = arith.sitofp %70 : vector<16x128xi32> to vector<16x128xf32>
    %cst_23 = arith.constant 6.000000e+00 : f32
    %72 = vector.broadcast %cst_23 : f32 to vector<16x128xf32>
    %73 = arith.cmpf oeq, %15, %72 : vector<16x128xf32>
    %74 = arith.extui %73 : vector<16x128xi1> to vector<16x128xi32>
    %75 = arith.sitofp %74 : vector<16x128xi32> to vector<16x128xf32>
    %cst_24 = arith.constant 7.000000e+00 : f32
    %76 = vector.broadcast %cst_24 : f32 to vector<16x128xf32>
    %77 = arith.cmpf oeq, %15, %76 : vector<16x128xf32>
    %78 = arith.extui %77 : vector<16x128xi1> to vector<16x128xi32>
    %79 = arith.sitofp %78 : vector<16x128xi32> to vector<16x128xf32>
    %cst_25 = arith.constant 8.000000e+00 : f32
    %80 = vector.broadcast %cst_25 : f32 to vector<16x128xf32>
    %81 = arith.cmpf oeq, %15, %80 : vector<16x128xf32>
    %82 = arith.extui %81 : vector<16x128xi1> to vector<16x128xi32>
    %83 = arith.sitofp %82 : vector<16x128xi32> to vector<16x128xf32>
    %cst_26 = arith.constant 9.000000e+00 : f32
    %84 = vector.broadcast %cst_26 : f32 to vector<16x128xf32>
    %85 = arith.cmpf oeq, %15, %84 : vector<16x128xf32>
    %86 = arith.extui %85 : vector<16x128xi1> to vector<16x128xi32>
    %87 = arith.sitofp %86 : vector<16x128xi32> to vector<16x128xf32>
    %cst_27 = arith.constant 1.000000e+01 : f32
    %88 = vector.broadcast %cst_27 : f32 to vector<16x128xf32>
    %89 = arith.cmpf oeq, %15, %88 : vector<16x128xf32>
    %90 = arith.extui %89 : vector<16x128xi1> to vector<16x128xi32>
    %91 = arith.sitofp %90 : vector<16x128xi32> to vector<16x128xf32>
    %92 = arith.mulf %51, %20 : vector<16x128xf32>
    %93 = arith.mulf %55, %32 : vector<16x128xf32>
    %94 = arith.addf %92, %93 : vector<16x128xf32>
    %95 = arith.mulf %59, %41 : vector<16x128xf32>
    %96 = arith.addf %94, %95 : vector<16x128xf32>
    %97 = arith.mulf %63, %47 : vector<16x128xf32>
    %98 = arith.addf %96, %97 : vector<16x128xf32>
    %99 = arith.mulf %55, %20 : vector<16x128xf32>
    %100 = arith.mulf %59, %32 : vector<16x128xf32>
    %101 = arith.addf %99, %100 : vector<16x128xf32>
    %102 = arith.mulf %63, %41 : vector<16x128xf32>
    %103 = arith.addf %101, %102 : vector<16x128xf32>
    %104 = arith.mulf %67, %47 : vector<16x128xf32>
    %105 = arith.addf %103, %104 : vector<16x128xf32>
    %106 = arith.mulf %59, %20 : vector<16x128xf32>
    %107 = arith.mulf %63, %32 : vector<16x128xf32>
    %108 = arith.addf %106, %107 : vector<16x128xf32>
    %109 = arith.mulf %67, %41 : vector<16x128xf32>
    %110 = arith.addf %108, %109 : vector<16x128xf32>
    %111 = arith.mulf %71, %47 : vector<16x128xf32>
    %112 = arith.addf %110, %111 : vector<16x128xf32>
    %113 = arith.mulf %63, %20 : vector<16x128xf32>
    %114 = arith.mulf %67, %32 : vector<16x128xf32>
    %115 = arith.addf %113, %114 : vector<16x128xf32>
    %116 = arith.mulf %71, %41 : vector<16x128xf32>
    %117 = arith.addf %115, %116 : vector<16x128xf32>
    %118 = arith.mulf %75, %47 : vector<16x128xf32>
    %119 = arith.addf %117, %118 : vector<16x128xf32>
    %120 = arith.mulf %67, %20 : vector<16x128xf32>
    %121 = arith.mulf %71, %32 : vector<16x128xf32>
    %122 = arith.addf %120, %121 : vector<16x128xf32>
    %123 = arith.mulf %75, %41 : vector<16x128xf32>
    %124 = arith.addf %122, %123 : vector<16x128xf32>
    %125 = arith.mulf %79, %47 : vector<16x128xf32>
    %126 = arith.addf %124, %125 : vector<16x128xf32>
    %127 = arith.mulf %71, %20 : vector<16x128xf32>
    %128 = arith.mulf %75, %32 : vector<16x128xf32>
    %129 = arith.addf %127, %128 : vector<16x128xf32>
    %130 = arith.mulf %79, %41 : vector<16x128xf32>
    %131 = arith.addf %129, %130 : vector<16x128xf32>
    %132 = arith.mulf %83, %47 : vector<16x128xf32>
    %133 = arith.addf %131, %132 : vector<16x128xf32>
    %134 = arith.mulf %75, %20 : vector<16x128xf32>
    %135 = arith.mulf %79, %32 : vector<16x128xf32>
    %136 = arith.addf %134, %135 : vector<16x128xf32>
    %137 = arith.mulf %83, %41 : vector<16x128xf32>
    %138 = arith.addf %136, %137 : vector<16x128xf32>
    %139 = arith.mulf %87, %47 : vector<16x128xf32>
    %140 = arith.addf %138, %139 : vector<16x128xf32>
    %141 = arith.mulf %79, %20 : vector<16x128xf32>
    %142 = arith.mulf %83, %32 : vector<16x128xf32>
    %143 = arith.addf %141, %142 : vector<16x128xf32>
    %144 = arith.mulf %87, %41 : vector<16x128xf32>
    %145 = arith.addf %143, %144 : vector<16x128xf32>
    %146 = arith.mulf %91, %47 : vector<16x128xf32>
    %147 = arith.addf %145, %146 : vector<16x128xf32>
    %148 = tpu.concatenate %10, %98, %105, %112, %119, %126, %133, %140, %147 in 1 : vector<16x128xf32>, vector<16x128xf32>, vector<16x128xf32>, vector<16x128xf32>, vector<16x128xf32>, vector<16x128xf32>, vector<16x128xf32>, vector<16x128xf32>, vector<16x128xf32> -> vector<16x1152xf32>
    %149 = arith.truncf %148 : vector<16x1152xf32> to vector<16x1152xbf16>
    %c0_28 = arith.constant 0 : index
    %c0_29 = arith.constant 0 : index
    %150 = vector.load %arg7[%c0_28, %c0_29] : memref<16x128xf32, #tpu.memory_space<vmem>>, vector<16x128xf32>
    %c0_30 = arith.constant 0 : index
    %c0_31 = arith.constant 0 : index
    %151 = vector.load %arg2[%c0_30, %c0_31] : memref<1152x128xbf16, #tpu.memory_space<vmem>>, vector<1152x128xbf16>
    %cst_32 = arith.constant dense<0.000000e+00> : vector<16x128xf32>
    %152 = tpu.matmul %149, %151, %cst_32 {dimension_numbers = #tpu.dot_dimension_numbers<[1], [0], [0], [1], [0, 0, 1, 1], [], []>} : vector<16x1152xbf16>, vector<1152x128xbf16>, vector<16x128xf32> -> vector<16x128xf32>
    %153 = arith.addf %150, %152 : vector<16x128xf32>
    %c0_33 = arith.constant 0 : index
    %c0_34 = arith.constant 0 : index
    %154 = vector.load %arg7[%c0_33, %c0_34] : memref<16x128xf32, #tpu.memory_space<vmem>>, vector<16x128xf32>
    tpu.vector_store %arg7[%c0_33, %c0_34], %153 {strides = array<i32>} : memref<16x128xf32, #tpu.memory_space<vmem>>, vector<16x128xf32>,
    %c1_i32 = arith.constant 1 : i32
    %155 = arith.cmpi eq, %arg0, %c1_i32 : i32
    %156 = arith.extui %155 : i1 to i32
    %c0_i32_35 = arith.constant 0 : i32
    %157 = arith.cmpi ne, %156, %c0_i32_35 : i32
    scf.if %157 {
      %c0_36 = arith.constant 0 : index
      %c0_37 = arith.constant 0 : index
      %158 = vector.load %arg7[%c0_36, %c0_37] : memref<16x128xf32, #tpu.memory_space<vmem>>, vector<16x128xf32>
      %c0_38 = arith.constant 0 : index
      %c0_39 = arith.constant 0 : index
      %159 = vector.load %arg3[%c0_38, %c0_39] : memref<1152x128xbf16, #tpu.memory_space<vmem>>, vector<1152x128xbf16>
      %cst_40 = arith.constant 0.000000e+00 : f32
      %160 = vector.broadcast %cst_40 : f32 to vector<16x128xf32>
      %161 = arith.subf %160, %158 : vector<16x128xf32>
      %162 = math.exp %161 : vector<16x128xf32>
      %cst_41 = arith.constant 1.000000e+00 : f32
      %163 = vector.broadcast %cst_41 : f32 to vector<16x128xf32>
      %164 = arith.addf %163, %162 : vector<16x128xf32>
      %165 = tpu.reciprocal %164 {approx = true} : vector<16x128xf32> -> vector<16x128xf32>
      %166 = arith.mulf %158, %165 : vector<16x128xf32>
      %cst_42 = arith.constant -2.200000e+00 : f32
      %167 = vector.broadcast %cst_42 : f32 to vector<16x128xf32>
      %168 = arith.subf %158, %167 : vector<16x128xf32>
      %cst_43 = arith.constant 2.500000e+00 : f32
      %169 = vector.broadcast %cst_43 : f32 to vector<16x128xf32>
      %170 = arith.mulf %168, %169 : vector<16x128xf32>
      %171 = math.floor %170 : vector<16x128xf32>
      %172 = arith.subf %170, %171 : vector<16x128xf32>
      %173 = arith.mulf %172, %172 : vector<16x128xf32>
      %174 = arith.mulf %173, %172 : vector<16x128xf32>
      %cst_44 = arith.constant 0.166666672 : f32
      %175 = vector.broadcast %cst_44 : f32 to vector<16x128xf32>
      %176 = arith.mulf %174, %175 : vector<16x128xf32>
      %cst_45 = arith.constant 3.000000e+00 : f32
      %177 = vector.broadcast %cst_45 : f32 to vector<16x128xf32>
      %178 = arith.mulf %177, %172 : vector<16x128xf32>
      %cst_46 = arith.constant 3.000000e+00 : f32
      %179 = vector.broadcast %cst_46 : f32 to vector<16x128xf32>
      %180 = arith.subf %179, %178 : vector<16x128xf32>
      %181 = arith.mulf %180, %172 : vector<16x128xf32>
      %cst_47 = arith.constant 3.000000e+00 : f32
      %182 = vector.broadcast %cst_47 : f32 to vector<16x128xf32>
      %183 = arith.addf %181, %182 : vector<16x128xf32>
      %184 = arith.mulf %183, %172 : vector<16x128xf32>
      %cst_48 = arith.constant 1.000000e+00 : f32
      %185 = vector.broadcast %cst_48 : f32 to vector<16x128xf32>
      %186 = arith.addf %184, %185 : vector<16x128xf32>
      %cst_49 = arith.constant 0.166666672 : f32
      %187 = vector.broadcast %cst_49 : f32 to vector<16x128xf32>
      %188 = arith.mulf %186, %187 : vector<16x128xf32>
      %cst_50 = arith.constant 3.000000e+00 : f32
      %189 = vector.broadcast %cst_50 : f32 to vector<16x128xf32>
      %190 = arith.mulf %189, %172 : vector<16x128xf32>
      %cst_51 = arith.constant 6.000000e+00 : f32
      %191 = vector.broadcast %cst_51 : f32 to vector<16x128xf32>
      %192 = arith.subf %190, %191 : vector<16x128xf32>
      %193 = arith.mulf %192, %173 : vector<16x128xf32>
      %cst_52 = arith.constant 4.000000e+00 : f32
      %194 = vector.broadcast %cst_52 : f32 to vector<16x128xf32>
      %195 = arith.addf %193, %194 : vector<16x128xf32>
      %cst_53 = arith.constant 0.166666672 : f32
      %196 = vector.broadcast %cst_53 : f32 to vector<16x128xf32>
      %197 = arith.mulf %195, %196 : vector<16x128xf32>
      %cst_54 = arith.constant 1.000000e+00 : f32
      %198 = vector.broadcast %cst_54 : f32 to vector<16x128xf32>
      %199 = arith.subf %198, %172 : vector<16x128xf32>
      %200 = arith.mulf %199, %199 : vector<16x128xf32>
      %201 = arith.mulf %200, %199 : vector<16x128xf32>
      %cst_55 = arith.constant 0.166666672 : f32
      %202 = vector.broadcast %cst_55 : f32 to vector<16x128xf32>
      %203 = arith.mulf %201, %202 : vector<16x128xf32>
      %cst_56 = arith.constant 0.000000e+00 : f32
      %204 = vector.broadcast %cst_56 : f32 to vector<16x128xf32>
      %205 = arith.cmpf oeq, %171, %204 : vector<16x128xf32>
      %206 = arith.extui %205 : vector<16x128xi1> to vector<16x128xi32>
      %207 = arith.sitofp %206 : vector<16x128xi32> to vector<16x128xf32>
      %cst_57 = arith.constant 1.000000e+00 : f32
      %208 = vector.broadcast %cst_57 : f32 to vector<16x128xf32>
      %209 = arith.cmpf oeq, %171, %208 : vector<16x128xf32>
      %210 = arith.extui %209 : vector<16x128xi1> to vector<16x128xi32>
      %211 = arith.sitofp %210 : vector<16x128xi32> to vector<16x128xf32>
      %cst_58 = arith.constant 2.000000e+00 : f32
      %212 = vector.broadcast %cst_58 : f32 to vector<16x128xf32>
      %213 = arith.cmpf oeq, %171, %212 : vector<16x128xf32>
      %214 = arith.extui %213 : vector<16x128xi1> to vector<16x128xi32>
      %215 = arith.sitofp %214 : vector<16x128xi32> to vector<16x128xf32>
      %cst_59 = arith.constant 3.000000e+00 : f32
      %216 = vector.broadcast %cst_59 : f32 to vector<16x128xf32>
      %217 = arith.cmpf oeq, %171, %216 : vector<16x128xf32>
      %218 = arith.extui %217 : vector<16x128xi1> to vector<16x128xi32>
      %219 = arith.sitofp %218 : vector<16x128xi32> to vector<16x128xf32>
      %cst_60 = arith.constant 4.000000e+00 : f32
      %220 = vector.broadcast %cst_60 : f32 to vector<16x128xf32>
      %221 = arith.cmpf oeq, %171, %220 : vector<16x128xf32>
      %222 = arith.extui %221 : vector<16x128xi1> to vector<16x128xi32>
      %223 = arith.sitofp %222 : vector<16x128xi32> to vector<16x128xf32>
      %cst_61 = arith.constant 5.000000e+00 : f32
      %224 = vector.broadcast %cst_61 : f32 to vector<16x128xf32>
      %225 = arith.cmpf oeq, %171, %224 : vector<16x128xf32>
      %226 = arith.extui %225 : vector<16x128xi1> to vector<16x128xi32>
      %227 = arith.sitofp %226 : vector<16x128xi32> to vector<16x128xf32>
      %cst_62 = arith.constant 6.000000e+00 : f32
      %228 = vector.broadcast %cst_62 : f32 to vector<16x128xf32>
      %229 = arith.cmpf oeq, %171, %228 : vector<16x128xf32>
      %230 = arith.extui %229 : vector<16x128xi1> to vector<16x128xi32>
      %231 = arith.sitofp %230 : vector<16x128xi32> to vector<16x128xf32>
      %cst_63 = arith.constant 7.000000e+00 : f32
      %232 = vector.broadcast %cst_63 : f32 to vector<16x128xf32>
      %233 = arith.cmpf oeq, %171, %232 : vector<16x128xf32>
      %234 = arith.extui %233 : vector<16x128xi1> to vector<16x128xi32>
      %235 = arith.sitofp %234 : vector<16x128xi32> to vector<16x128xf32>
      %cst_64 = arith.constant 8.000000e+00 : f32
      %236 = vector.broadcast %cst_64 : f32 to vector<16x128xf32>
      %237 = arith.cmpf oeq, %171, %236 : vector<16x128xf32>
      %238 = arith.extui %237 : vector<16x128xi1> to vector<16x128xi32>
      %239 = arith.sitofp %238 : vector<16x128xi32> to vector<16x128xf32>
      %cst_65 = arith.constant 9.000000e+00 : f32
      %240 = vector.broadcast %cst_65 : f32 to vector<16x128xf32>
      %241 = arith.cmpf oeq, %171, %240 : vector<16x128xf32>
      %242 = arith.extui %241 : vector<16x128xi1> to vector<16x128xi32>
      %243 = arith.sitofp %242 : vector<16x128xi32> to vector<16x128xf32>
      %cst_66 = arith.constant 1.000000e+01 : f32
      %244 = vector.broadcast %cst_66 : f32 to vector<16x128xf32>
      %245 = arith.cmpf oeq, %171, %244 : vector<16x128xf32>
      %246 = arith.extui %245 : vector<16x128xi1> to vector<16x128xi32>
      %247 = arith.sitofp %246 : vector<16x128xi32> to vector<16x128xf32>
      %248 = arith.mulf %207, %176 : vector<16x128xf32>
      %249 = arith.mulf %211, %188 : vector<16x128xf32>
      %250 = arith.addf %248, %249 : vector<16x128xf32>
      %251 = arith.mulf %215, %197 : vector<16x128xf32>
      %252 = arith.addf %250, %251 : vector<16x128xf32>
      %253 = arith.mulf %219, %203 : vector<16x128xf32>
      %254 = arith.addf %252, %253 : vector<16x128xf32>
      %255 = arith.mulf %211, %176 : vector<16x128xf32>
      %256 = arith.mulf %215, %188 : vector<16x128xf32>
      %257 = arith.addf %255, %256 : vector<16x128xf32>
      %258 = arith.mulf %219, %197 : vector<16x128xf32>
      %259 = arith.addf %257, %258 : vector<16x128xf32>
      %260 = arith.mulf %223, %203 : vector<16x128xf32>
      %261 = arith.addf %259, %260 : vector<16x128xf32>
      %262 = arith.mulf %215, %176 : vector<16x128xf32>
      %263 = arith.mulf %219, %188 : vector<16x128xf32>
      %264 = arith.addf %262, %263 : vector<16x128xf32>
      %265 = arith.mulf %223, %197 : vector<16x128xf32>
      %266 = arith.addf %264, %265 : vector<16x128xf32>
      %267 = arith.mulf %227, %203 : vector<16x128xf32>
      %268 = arith.addf %266, %267 : vector<16x128xf32>
      %269 = arith.mulf %219, %176 : vector<16x128xf32>
      %270 = arith.mulf %223, %188 : vector<16x128xf32>
      %271 = arith.addf %269, %270 : vector<16x128xf32>
      %272 = arith.mulf %227, %197 : vector<16x128xf32>
      %273 = arith.addf %271, %272 : vector<16x128xf32>
      %274 = arith.mulf %231, %203 : vector<16x128xf32>
      %275 = arith.addf %273, %274 : vector<16x128xf32>
      %276 = arith.mulf %223, %176 : vector<16x128xf32>
      %277 = arith.mulf %227, %188 : vector<16x128xf32>
      %278 = arith.addf %276, %277 : vector<16x128xf32>
      %279 = arith.mulf %231, %197 : vector<16x128xf32>
      %280 = arith.addf %278, %279 : vector<16x128xf32>
      %281 = arith.mulf %235, %203 : vector<16x128xf32>
      %282 = arith.addf %280, %281 : vector<16x128xf32>
      %283 = arith.mulf %227, %176 : vector<16x128xf32>
      %284 = arith.mulf %231, %188 : vector<16x128xf32>
      %285 = arith.addf %283, %284 : vector<16x128xf32>
      %286 = arith.mulf %235, %197 : vector<16x128xf32>
      %287 = arith.addf %285, %286 : vector<16x128xf32>
      %288 = arith.mulf %239, %203 : vector<16x128xf32>
      %289 = arith.addf %287, %288 : vector<16x128xf32>
      %290 = arith.mulf %231, %176 : vector<16x128xf32>
      %291 = arith.mulf %235, %188 : vector<16x128xf32>
      %292 = arith.addf %290, %291 : vector<16x128xf32>
      %293 = arith.mulf %239, %197 : vector<16x128xf32>
      %294 = arith.addf %292, %293 : vector<16x128xf32>
      %295 = arith.mulf %243, %203 : vector<16x128xf32>
      %296 = arith.addf %294, %295 : vector<16x128xf32>
      %297 = arith.mulf %235, %176 : vector<16x128xf32>
      %298 = arith.mulf %239, %188 : vector<16x128xf32>
      %299 = arith.addf %297, %298 : vector<16x128xf32>
      %300 = arith.mulf %243, %197 : vector<16x128xf32>
      %301 = arith.addf %299, %300 : vector<16x128xf32>
      %302 = arith.mulf %247, %203 : vector<16x128xf32>
      %303 = arith.addf %301, %302 : vector<16x128xf32>
      %304 = tpu.concatenate %166, %254, %261, %268, %275, %282, %289, %296, %303 in 1 : vector<16x128xf32>, vector<16x128xf32>, vector<16x128xf32>, vector<16x128xf32>, vector<16x128xf32>, vector<16x128xf32>, vector<16x128xf32>, vector<16x128xf32>, vector<16x128xf32> -> vector<16x1152xf32>
      %305 = arith.truncf %304 : vector<16x1152xf32> to vector<16x1152xbf16>
      %cst_67 = arith.constant dense<0.000000e+00> : vector<16x128xf32>
      %306 = tpu.matmul %305, %159, %cst_67 {dimension_numbers = #tpu.dot_dimension_numbers<[1], [0], [0], [1], [0, 0, 1, 1], [], []>} : vector<16x1152xbf16>, vector<1152x128xbf16>, vector<16x128xf32> -> vector<16x128xf32>
      %c0_68 = arith.constant 0 : index
      %c0_69 = arith.constant 0 : index
      %307 = vector.load %arg4[%c0_68, %c0_69] : memref<1152x128xbf16, #tpu.memory_space<vmem>>, vector<1152x128xbf16>
      %cst_70 = arith.constant 0.000000e+00 : f32
      %308 = vector.broadcast %cst_70 : f32 to vector<16x128xf32>
      %309 = arith.subf %308, %306 : vector<16x128xf32>
      %310 = math.exp %309 : vector<16x128xf32>
      %cst_71 = arith.constant 1.000000e+00 : f32
      %311 = vector.broadcast %cst_71 : f32 to vector<16x128xf32>
      %312 = arith.addf %311, %310 : vector<16x128xf32>
      %313 = tpu.reciprocal %312 {approx = true} : vector<16x128xf32> -> vector<16x128xf32>
      %314 = arith.mulf %306, %313 : vector<16x128xf32>
      %cst_72 = arith.constant -2.200000e+00 : f32
      %315 = vector.broadcast %cst_72 : f32 to vector<16x128xf32>
      %316 = arith.subf %306, %315 : vector<16x128xf32>
      %cst_73 = arith.constant 2.500000e+00 : f32
      %317 = vector.broadcast %cst_73 : f32 to vector<16x128xf32>
      %318 = arith.mulf %316, %317 : vector<16x128xf32>
      %319 = math.floor %318 : vector<16x128xf32>
      %320 = arith.subf %318, %319 : vector<16x128xf32>
      %321 = arith.mulf %320, %320 : vector<16x128xf32>
      %322 = arith.mulf %321, %320 : vector<16x128xf32>
      %cst_74 = arith.constant 0.166666672 : f32
      %323 = vector.broadcast %cst_74 : f32 to vector<16x128xf32>
      %324 = arith.mulf %322, %323 : vector<16x128xf32>
      %cst_75 = arith.constant 3.000000e+00 : f32
      %325 = vector.broadcast %cst_75 : f32 to vector<16x128xf32>
      %326 = arith.mulf %325, %320 : vector<16x128xf32>
      %cst_76 = arith.constant 3.000000e+00 : f32
      %327 = vector.broadcast %cst_76 : f32 to vector<16x128xf32>
      %328 = arith.subf %327, %326 : vector<16x128xf32>
      %329 = arith.mulf %328, %320 : vector<16x128xf32>
      %cst_77 = arith.constant 3.000000e+00 : f32
      %330 = vector.broadcast %cst_77 : f32 to vector<16x128xf32>
      %331 = arith.addf %329, %330 : vector<16x128xf32>
      %332 = arith.mulf %331, %320 : vector<16x128xf32>
      %cst_78 = arith.constant 1.000000e+00 : f32
      %333 = vector.broadcast %cst_78 : f32 to vector<16x128xf32>
      %334 = arith.addf %332, %333 : vector<16x128xf32>
      %cst_79 = arith.constant 0.166666672 : f32
      %335 = vector.broadcast %cst_79 : f32 to vector<16x128xf32>
      %336 = arith.mulf %334, %335 : vector<16x128xf32>
      %cst_80 = arith.constant 3.000000e+00 : f32
      %337 = vector.broadcast %cst_80 : f32 to vector<16x128xf32>
      %338 = arith.mulf %337, %320 : vector<16x128xf32>
      %cst_81 = arith.constant 6.000000e+00 : f32
      %339 = vector.broadcast %cst_81 : f32 to vector<16x128xf32>
      %340 = arith.subf %338, %339 : vector<16x128xf32>
      %341 = arith.mulf %340, %321 : vector<16x128xf32>
      %cst_82 = arith.constant 4.000000e+00 : f32
      %342 = vector.broadcast %cst_82 : f32 to vector<16x128xf32>
      %343 = arith.addf %341, %342 : vector<16x128xf32>
      %cst_83 = arith.constant 0.166666672 : f32
      %344 = vector.broadcast %cst_83 : f32 to vector<16x128xf32>
      %345 = arith.mulf %343, %344 : vector<16x128xf32>
      %cst_84 = arith.constant 1.000000e+00 : f32
      %346 = vector.broadcast %cst_84 : f32 to vector<16x128xf32>
      %347 = arith.subf %346, %320 : vector<16x128xf32>
      %348 = arith.mulf %347, %347 : vector<16x128xf32>
      %349 = arith.mulf %348, %347 : vector<16x128xf32>
      %cst_85 = arith.constant 0.166666672 : f32
      %350 = vector.broadcast %cst_85 : f32 to vector<16x128xf32>
      %351 = arith.mulf %349, %350 : vector<16x128xf32>
      %cst_86 = arith.constant 0.000000e+00 : f32
      %352 = vector.broadcast %cst_86 : f32 to vector<16x128xf32>
      %353 = arith.cmpf oeq, %319, %352 : vector<16x128xf32>
      %354 = arith.extui %353 : vector<16x128xi1> to vector<16x128xi32>
      %355 = arith.sitofp %354 : vector<16x128xi32> to vector<16x128xf32>
      %cst_87 = arith.constant 1.000000e+00 : f32
      %356 = vector.broadcast %cst_87 : f32 to vector<16x128xf32>
      %357 = arith.cmpf oeq, %319, %356 : vector<16x128xf32>
      %358 = arith.extui %357 : vector<16x128xi1> to vector<16x128xi32>
      %359 = arith.sitofp %358 : vector<16x128xi32> to vector<16x128xf32>
      %cst_88 = arith.constant 2.000000e+00 : f32
      %360 = vector.broadcast %cst_88 : f32 to vector<16x128xf32>
      %361 = arith.cmpf oeq, %319, %360 : vector<16x128xf32>
      %362 = arith.extui %361 : vector<16x128xi1> to vector<16x128xi32>
      %363 = arith.sitofp %362 : vector<16x128xi32> to vector<16x128xf32>
      %cst_89 = arith.constant 3.000000e+00 : f32
      %364 = vector.broadcast %cst_89 : f32 to vector<16x128xf32>
      %365 = arith.cmpf oeq, %319, %364 : vector<16x128xf32>
      %366 = arith.extui %365 : vector<16x128xi1> to vector<16x128xi32>
      %367 = arith.sitofp %366 : vector<16x128xi32> to vector<16x128xf32>
      %cst_90 = arith.constant 4.000000e+00 : f32
      %368 = vector.broadcast %cst_90 : f32 to vector<16x128xf32>
      %369 = arith.cmpf oeq, %319, %368 : vector<16x128xf32>
      %370 = arith.extui %369 : vector<16x128xi1> to vector<16x128xi32>
      %371 = arith.sitofp %370 : vector<16x128xi32> to vector<16x128xf32>
      %cst_91 = arith.constant 5.000000e+00 : f32
      %372 = vector.broadcast %cst_91 : f32 to vector<16x128xf32>
      %373 = arith.cmpf oeq, %319, %372 : vector<16x128xf32>
      %374 = arith.extui %373 : vector<16x128xi1> to vector<16x128xi32>
      %375 = arith.sitofp %374 : vector<16x128xi32> to vector<16x128xf32>
      %cst_92 = arith.constant 6.000000e+00 : f32
      %376 = vector.broadcast %cst_92 : f32 to vector<16x128xf32>
      %377 = arith.cmpf oeq, %319, %376 : vector<16x128xf32>
      %378 = arith.extui %377 : vector<16x128xi1> to vector<16x128xi32>
      %379 = arith.sitofp %378 : vector<16x128xi32> to vector<16x128xf32>
      %cst_93 = arith.constant 7.000000e+00 : f32
      %380 = vector.broadcast %cst_93 : f32 to vector<16x128xf32>
      %381 = arith.cmpf oeq, %319, %380 : vector<16x128xf32>
      %382 = arith.extui %381 : vector<16x128xi1> to vector<16x128xi32>
      %383 = arith.sitofp %382 : vector<16x128xi32> to vector<16x128xf32>
      %cst_94 = arith.constant 8.000000e+00 : f32
      %384 = vector.broadcast %cst_94 : f32 to vector<16x128xf32>
      %385 = arith.cmpf oeq, %319, %384 : vector<16x128xf32>
      %386 = arith.extui %385 : vector<16x128xi1> to vector<16x128xi32>
      %387 = arith.sitofp %386 : vector<16x128xi32> to vector<16x128xf32>
      %cst_95 = arith.constant 9.000000e+00 : f32
      %388 = vector.broadcast %cst_95 : f32 to vector<16x128xf32>
      %389 = arith.cmpf oeq, %319, %388 : vector<16x128xf32>
      %390 = arith.extui %389 : vector<16x128xi1> to vector<16x128xi32>
      %391 = arith.sitofp %390 : vector<16x128xi32> to vector<16x128xf32>
      %cst_96 = arith.constant 1.000000e+01 : f32
      %392 = vector.broadcast %cst_96 : f32 to vector<16x128xf32>
      %393 = arith.cmpf oeq, %319, %392 : vector<16x128xf32>
      %394 = arith.extui %393 : vector<16x128xi1> to vector<16x128xi32>
      %395 = arith.sitofp %394 : vector<16x128xi32> to vector<16x128xf32>
      %396 = arith.mulf %355, %324 : vector<16x128xf32>
      %397 = arith.mulf %359, %336 : vector<16x128xf32>
      %398 = arith.addf %396, %397 : vector<16x128xf32>
      %399 = arith.mulf %363, %345 : vector<16x128xf32>
      %400 = arith.addf %398, %399 : vector<16x128xf32>
      %401 = arith.mulf %367, %351 : vector<16x128xf32>
      %402 = arith.addf %400, %401 : vector<16x128xf32>
      %403 = arith.mulf %359, %324 : vector<16x128xf32>
      %404 = arith.mulf %363, %336 : vector<16x128xf32>
      %405 = arith.addf %403, %404 : vector<16x128xf32>
      %406 = arith.mulf %367, %345 : vector<16x128xf32>
      %407 = arith.addf %405, %406 : vector<16x128xf32>
      %408 = arith.mulf %371, %351 : vector<16x128xf32>
      %409 = arith.addf %407, %408 : vector<16x128xf32>
      %410 = arith.mulf %363, %324 : vector<16x128xf32>
      %411 = arith.mulf %367, %336 : vector<16x128xf32>
      %412 = arith.addf %410, %411 : vector<16x128xf32>
      %413 = arith.mulf %371, %345 : vector<16x128xf32>
      %414 = arith.addf %412, %413 : vector<16x128xf32>
      %415 = arith.mulf %375, %351 : vector<16x128xf32>
      %416 = arith.addf %414, %415 : vector<16x128xf32>
      %417 = arith.mulf %367, %324 : vector<16x128xf32>
      %418 = arith.mulf %371, %336 : vector<16x128xf32>
      %419 = arith.addf %417, %418 : vector<16x128xf32>
      %420 = arith.mulf %375, %345 : vector<16x128xf32>
      %421 = arith.addf %419, %420 : vector<16x128xf32>
      %422 = arith.mulf %379, %351 : vector<16x128xf32>
      %423 = arith.addf %421, %422 : vector<16x128xf32>
      %424 = arith.mulf %371, %324 : vector<16x128xf32>
      %425 = arith.mulf %375, %336 : vector<16x128xf32>
      %426 = arith.addf %424, %425 : vector<16x128xf32>
      %427 = arith.mulf %379, %345 : vector<16x128xf32>
      %428 = arith.addf %426, %427 : vector<16x128xf32>
      %429 = arith.mulf %383, %351 : vector<16x128xf32>
      %430 = arith.addf %428, %429 : vector<16x128xf32>
      %431 = arith.mulf %375, %324 : vector<16x128xf32>
      %432 = arith.mulf %379, %336 : vector<16x128xf32>
      %433 = arith.addf %431, %432 : vector<16x128xf32>
      %434 = arith.mulf %383, %345 : vector<16x128xf32>
      %435 = arith.addf %433, %434 : vector<16x128xf32>
      %436 = arith.mulf %387, %351 : vector<16x128xf32>
      %437 = arith.addf %435, %436 : vector<16x128xf32>
      %438 = arith.mulf %379, %324 : vector<16x128xf32>
      %439 = arith.mulf %383, %336 : vector<16x128xf32>
      %440 = arith.addf %438, %439 : vector<16x128xf32>
      %441 = arith.mulf %387, %345 : vector<16x128xf32>
      %442 = arith.addf %440, %441 : vector<16x128xf32>
      %443 = arith.mulf %391, %351 : vector<16x128xf32>
      %444 = arith.addf %442, %443 : vector<16x128xf32>
      %445 = arith.mulf %383, %324 : vector<16x128xf32>
      %446 = arith.mulf %387, %336 : vector<16x128xf32>
      %447 = arith.addf %445, %446 : vector<16x128xf32>
      %448 = arith.mulf %391, %345 : vector<16x128xf32>
      %449 = arith.addf %447, %448 : vector<16x128xf32>
      %450 = arith.mulf %395, %351 : vector<16x128xf32>
      %451 = arith.addf %449, %450 : vector<16x128xf32>
      %452 = tpu.concatenate %314, %402, %409, %416, %423, %430, %437, %444, %451 in 1 : vector<16x128xf32>, vector<16x128xf32>, vector<16x128xf32>, vector<16x128xf32>, vector<16x128xf32>, vector<16x128xf32>, vector<16x128xf32>, vector<16x128xf32>, vector<16x128xf32> -> vector<16x1152xf32>
      %453 = arith.truncf %452 : vector<16x1152xf32> to vector<16x1152xbf16>
      %cst_97 = arith.constant dense<0.000000e+00> : vector<16x128xf32>
      %454 = tpu.matmul %453, %307, %cst_97 {dimension_numbers = #tpu.dot_dimension_numbers<[1], [0], [0], [1], [0, 0, 1, 1], [], []>} : vector<16x1152xbf16>, vector<1152x128xbf16>, vector<16x128xf32> -> vector<16x128xf32>
      %c0_98 = arith.constant 0 : index
      %c0_99 = arith.constant 0 : index
      %455 = vector.load %arg5[%c0_98, %c0_99] : memref<1152x128xbf16, #tpu.memory_space<vmem>>, vector<1152x128xbf16>
      %cst_100 = arith.constant 0.000000e+00 : f32
      %456 = vector.broadcast %cst_100 : f32 to vector<16x128xf32>
      %457 = arith.subf %456, %454 : vector<16x128xf32>
      %458 = math.exp %457 : vector<16x128xf32>
      %cst_101 = arith.constant 1.000000e+00 : f32
      %459 = vector.broadcast %cst_101 : f32 to vector<16x128xf32>
      %460 = arith.addf %459, %458 : vector<16x128xf32>
      %461 = tpu.reciprocal %460 {approx = true} : vector<16x128xf32> -> vector<16x128xf32>
      %462 = arith.mulf %454, %461 : vector<16x128xf32>
      %cst_102 = arith.constant -2.200000e+00 : f32
      %463 = vector.broadcast %cst_102 : f32 to vector<16x128xf32>
      %464 = arith.subf %454, %463 : vector<16x128xf32>
      %cst_103 = arith.constant 2.500000e+00 : f32
      %465 = vector.broadcast %cst_103 : f32 to vector<16x128xf32>
      %466 = arith.mulf %464, %465 : vector<16x128xf32>
      %467 = math.floor %466 : vector<16x128xf32>
      %468 = arith.subf %466, %467 : vector<16x128xf32>
      %469 = arith.mulf %468, %468 : vector<16x128xf32>
      %470 = arith.mulf %469, %468 : vector<16x128xf32>
      %cst_104 = arith.constant 0.166666672 : f32
      %471 = vector.broadcast %cst_104 : f32 to vector<16x128xf32>
      %472 = arith.mulf %470, %471 : vector<16x128xf32>
      %cst_105 = arith.constant 3.000000e+00 : f32
      %473 = vector.broadcast %cst_105 : f32 to vector<16x128xf32>
      %474 = arith.mulf %473, %468 : vector<16x128xf32>
      %cst_106 = arith.constant 3.000000e+00 : f32
      %475 = vector.broadcast %cst_106 : f32 to vector<16x128xf32>
      %476 = arith.subf %475, %474 : vector<16x128xf32>
      %477 = arith.mulf %476, %468 : vector<16x128xf32>
      %cst_107 = arith.constant 3.000000e+00 : f32
      %478 = vector.broadcast %cst_107 : f32 to vector<16x128xf32>
      %479 = arith.addf %477, %478 : vector<16x128xf32>
      %480 = arith.mulf %479, %468 : vector<16x128xf32>
      %cst_108 = arith.constant 1.000000e+00 : f32
      %481 = vector.broadcast %cst_108 : f32 to vector<16x128xf32>
      %482 = arith.addf %480, %481 : vector<16x128xf32>
      %cst_109 = arith.constant 0.166666672 : f32
      %483 = vector.broadcast %cst_109 : f32 to vector<16x128xf32>
      %484 = arith.mulf %482, %483 : vector<16x128xf32>
      %cst_110 = arith.constant 3.000000e+00 : f32
      %485 = vector.broadcast %cst_110 : f32 to vector<16x128xf32>
      %486 = arith.mulf %485, %468 : vector<16x128xf32>
      %cst_111 = arith.constant 6.000000e+00 : f32
      %487 = vector.broadcast %cst_111 : f32 to vector<16x128xf32>
      %488 = arith.subf %486, %487 : vector<16x128xf32>
      %489 = arith.mulf %488, %469 : vector<16x128xf32>
      %cst_112 = arith.constant 4.000000e+00 : f32
      %490 = vector.broadcast %cst_112 : f32 to vector<16x128xf32>
      %491 = arith.addf %489, %490 : vector<16x128xf32>
      %cst_113 = arith.constant 0.166666672 : f32
      %492 = vector.broadcast %cst_113 : f32 to vector<16x128xf32>
      %493 = arith.mulf %491, %492 : vector<16x128xf32>
      %cst_114 = arith.constant 1.000000e+00 : f32
      %494 = vector.broadcast %cst_114 : f32 to vector<16x128xf32>
      %495 = arith.subf %494, %468 : vector<16x128xf32>
      %496 = arith.mulf %495, %495 : vector<16x128xf32>
      %497 = arith.mulf %496, %495 : vector<16x128xf32>
      %cst_115 = arith.constant 0.166666672 : f32
      %498 = vector.broadcast %cst_115 : f32 to vector<16x128xf32>
      %499 = arith.mulf %497, %498 : vector<16x128xf32>
      %cst_116 = arith.constant 0.000000e+00 : f32
      %500 = vector.broadcast %cst_116 : f32 to vector<16x128xf32>
      %501 = arith.cmpf oeq, %467, %500 : vector<16x128xf32>
      %502 = arith.extui %501 : vector<16x128xi1> to vector<16x128xi32>
      %503 = arith.sitofp %502 : vector<16x128xi32> to vector<16x128xf32>
      %cst_117 = arith.constant 1.000000e+00 : f32
      %504 = vector.broadcast %cst_117 : f32 to vector<16x128xf32>
      %505 = arith.cmpf oeq, %467, %504 : vector<16x128xf32>
      %506 = arith.extui %505 : vector<16x128xi1> to vector<16x128xi32>
      %507 = arith.sitofp %506 : vector<16x128xi32> to vector<16x128xf32>
      %cst_118 = arith.constant 2.000000e+00 : f32
      %508 = vector.broadcast %cst_118 : f32 to vector<16x128xf32>
      %509 = arith.cmpf oeq, %467, %508 : vector<16x128xf32>
      %510 = arith.extui %509 : vector<16x128xi1> to vector<16x128xi32>
      %511 = arith.sitofp %510 : vector<16x128xi32> to vector<16x128xf32>
      %cst_119 = arith.constant 3.000000e+00 : f32
      %512 = vector.broadcast %cst_119 : f32 to vector<16x128xf32>
      %513 = arith.cmpf oeq, %467, %512 : vector<16x128xf32>
      %514 = arith.extui %513 : vector<16x128xi1> to vector<16x128xi32>
      %515 = arith.sitofp %514 : vector<16x128xi32> to vector<16x128xf32>
      %cst_120 = arith.constant 4.000000e+00 : f32
      %516 = vector.broadcast %cst_120 : f32 to vector<16x128xf32>
      %517 = arith.cmpf oeq, %467, %516 : vector<16x128xf32>
      %518 = arith.extui %517 : vector<16x128xi1> to vector<16x128xi32>
      %519 = arith.sitofp %518 : vector<16x128xi32> to vector<16x128xf32>
      %cst_121 = arith.constant 5.000000e+00 : f32
      %520 = vector.broadcast %cst_121 : f32 to vector<16x128xf32>
      %521 = arith.cmpf oeq, %467, %520 : vector<16x128xf32>
      %522 = arith.extui %521 : vector<16x128xi1> to vector<16x128xi32>
      %523 = arith.sitofp %522 : vector<16x128xi32> to vector<16x128xf32>
      %cst_122 = arith.constant 6.000000e+00 : f32
      %524 = vector.broadcast %cst_122 : f32 to vector<16x128xf32>
      %525 = arith.cmpf oeq, %467, %524 : vector<16x128xf32>
      %526 = arith.extui %525 : vector<16x128xi1> to vector<16x128xi32>
      %527 = arith.sitofp %526 : vector<16x128xi32> to vector<16x128xf32>
      %cst_123 = arith.constant 7.000000e+00 : f32
      %528 = vector.broadcast %cst_123 : f32 to vector<16x128xf32>
      %529 = arith.cmpf oeq, %467, %528 : vector<16x128xf32>
      %530 = arith.extui %529 : vector<16x128xi1> to vector<16x128xi32>
      %531 = arith.sitofp %530 : vector<16x128xi32> to vector<16x128xf32>
      %cst_124 = arith.constant 8.000000e+00 : f32
      %532 = vector.broadcast %cst_124 : f32 to vector<16x128xf32>
      %533 = arith.cmpf oeq, %467, %532 : vector<16x128xf32>
      %534 = arith.extui %533 : vector<16x128xi1> to vector<16x128xi32>
      %535 = arith.sitofp %534 : vector<16x128xi32> to vector<16x128xf32>
      %cst_125 = arith.constant 9.000000e+00 : f32
      %536 = vector.broadcast %cst_125 : f32 to vector<16x128xf32>
      %537 = arith.cmpf oeq, %467, %536 : vector<16x128xf32>
      %538 = arith.extui %537 : vector<16x128xi1> to vector<16x128xi32>
      %539 = arith.sitofp %538 : vector<16x128xi32> to vector<16x128xf32>
      %cst_126 = arith.constant 1.000000e+01 : f32
      %540 = vector.broadcast %cst_126 : f32 to vector<16x128xf32>
      %541 = arith.cmpf oeq, %467, %540 : vector<16x128xf32>
      %542 = arith.extui %541 : vector<16x128xi1> to vector<16x128xi32>
      %543 = arith.sitofp %542 : vector<16x128xi32> to vector<16x128xf32>
      %544 = arith.mulf %503, %472 : vector<16x128xf32>
      %545 = arith.mulf %507, %484 : vector<16x128xf32>
      %546 = arith.addf %544, %545 : vector<16x128xf32>
      %547 = arith.mulf %511, %493 : vector<16x128xf32>
      %548 = arith.addf %546, %547 : vector<16x128xf32>
      %549 = arith.mulf %515, %499 : vector<16x128xf32>
      %550 = arith.addf %548, %549 : vector<16x128xf32>
      %551 = arith.mulf %507, %472 : vector<16x128xf32>
      %552 = arith.mulf %511, %484 : vector<16x128xf32>
      %553 = arith.addf %551, %552 : vector<16x128xf32>
      %554 = arith.mulf %515, %493 : vector<16x128xf32>
      %555 = arith.addf %553, %554 : vector<16x128xf32>
      %556 = arith.mulf %519, %499 : vector<16x128xf32>
      %557 = arith.addf %555, %556 : vector<16x128xf32>
      %558 = arith.mulf %511, %472 : vector<16x128xf32>
      %559 = arith.mulf %515, %484 : vector<16x128xf32>
      %560 = arith.addf %558, %559 : vector<16x128xf32>
      %561 = arith.mulf %519, %493 : vector<16x128xf32>
      %562 = arith.addf %560, %561 : vector<16x128xf32>
      %563 = arith.mulf %523, %499 : vector<16x128xf32>
      %564 = arith.addf %562, %563 : vector<16x128xf32>
      %565 = arith.mulf %515, %472 : vector<16x128xf32>
      %566 = arith.mulf %519, %484 : vector<16x128xf32>
      %567 = arith.addf %565, %566 : vector<16x128xf32>
      %568 = arith.mulf %523, %493 : vector<16x128xf32>
      %569 = arith.addf %567, %568 : vector<16x128xf32>
      %570 = arith.mulf %527, %499 : vector<16x128xf32>
      %571 = arith.addf %569, %570 : vector<16x128xf32>
      %572 = arith.mulf %519, %472 : vector<16x128xf32>
      %573 = arith.mulf %523, %484 : vector<16x128xf32>
      %574 = arith.addf %572, %573 : vector<16x128xf32>
      %575 = arith.mulf %527, %493 : vector<16x128xf32>
      %576 = arith.addf %574, %575 : vector<16x128xf32>
      %577 = arith.mulf %531, %499 : vector<16x128xf32>
      %578 = arith.addf %576, %577 : vector<16x128xf32>
      %579 = arith.mulf %523, %472 : vector<16x128xf32>
      %580 = arith.mulf %527, %484 : vector<16x128xf32>
      %581 = arith.addf %579, %580 : vector<16x128xf32>
      %582 = arith.mulf %531, %493 : vector<16x128xf32>
      %583 = arith.addf %581, %582 : vector<16x128xf32>
      %584 = arith.mulf %535, %499 : vector<16x128xf32>
      %585 = arith.addf %583, %584 : vector<16x128xf32>
      %586 = arith.mulf %527, %472 : vector<16x128xf32>
      %587 = arith.mulf %531, %484 : vector<16x128xf32>
      %588 = arith.addf %586, %587 : vector<16x128xf32>
      %589 = arith.mulf %535, %493 : vector<16x128xf32>
      %590 = arith.addf %588, %589 : vector<16x128xf32>
      %591 = arith.mulf %539, %499 : vector<16x128xf32>
      %592 = arith.addf %590, %591 : vector<16x128xf32>
      %593 = arith.mulf %531, %472 : vector<16x128xf32>
      %594 = arith.mulf %535, %484 : vector<16x128xf32>
      %595 = arith.addf %593, %594 : vector<16x128xf32>
      %596 = arith.mulf %539, %493 : vector<16x128xf32>
      %597 = arith.addf %595, %596 : vector<16x128xf32>
      %598 = arith.mulf %543, %499 : vector<16x128xf32>
      %599 = arith.addf %597, %598 : vector<16x128xf32>
      %600 = tpu.concatenate %462, %550, %557, %564, %571, %578, %585, %592, %599 in 1 : vector<16x128xf32>, vector<16x128xf32>, vector<16x128xf32>, vector<16x128xf32>, vector<16x128xf32>, vector<16x128xf32>, vector<16x128xf32>, vector<16x128xf32>, vector<16x128xf32> -> vector<16x1152xf32>
      %601 = arith.truncf %600 : vector<16x1152xf32> to vector<16x1152xbf16>
      %cst_127 = arith.constant dense<0.000000e+00> : vector<16x128xf32>
      %602 = tpu.matmul %601, %455, %cst_127 {dimension_numbers = #tpu.dot_dimension_numbers<[1], [0], [0], [1], [0, 0, 1, 1], [], []>} : vector<16x1152xbf16>, vector<1152x128xbf16>, vector<16x128xf32> -> vector<16x128xf32>
      %c0_128 = arith.constant 0 : index
      %c0_129 = arith.constant 0 : index
      %603 = vector.load %arg6[%c0_128, %c0_129] : memref<16x128xf32, #tpu.memory_space<vmem>>, vector<16x128xf32>
      tpu.vector_store %arg6[%c0_128, %c0_129], %602 {strides = array<i32>} : memref<16x128xf32, #tpu.memory_space<vmem>>, vector<16x128xf32>,
    } else {
    }
    return
  }
  func.func @transform_0(%arg0: i32) -> (i32, i32) {
    %c0_i32 = arith.constant 0 : i32
    %c0_i32_0 = arith.constant 0 : i32
    return %c0_i32, %arg0 : i32, i32
  }
  func.func @transform_1(%arg0: i32) -> (i32, i32) {
    %c0_i32 = arith.constant 0 : i32
    %c0_i32_0 = arith.constant 0 : i32
    return %arg0, %c0_i32 : i32, i32
  }
  func.func @transform_2(%arg0: i32) -> (i32, i32) {
    %c0_i32 = arith.constant 0 : i32
    %c0_i32_0 = arith.constant 0 : i32
    %c0_i32_1 = arith.constant 0 : i32
    return %c0_i32, %c0_i32_0 : i32, i32
  }
  func.func @transform_3(%arg0: i32) -> (i32, i32) {
    %c0_i32 = arith.constant 0 : i32
    %c0_i32_0 = arith.constant 0 : i32
    %c0_i32_1 = arith.constant 0 : i32
    return %c0_i32, %c0_i32_0 : i32, i32
  }
  func.func @transform_4(%arg0: i32) -> (i32, i32) {
    %c0_i32 = arith.constant 0 : i32
    %c0_i32_0 = arith.constant 0 : i32
    %c0_i32_1 = arith.constant 0 : i32
    return %c0_i32, %c0_i32_0 : i32, i32
  }
  func.func @transform_5(%arg0: i32) -> (i32, i32) {
    %c0_i32 = arith.constant 0 : i32
    %c0_i32_0 = arith.constant 0 : i32
    %c0_i32_1 = arith.constant 0 : i32
    return %c0_i32, %c0_i32_0 : i32, i32
  }
}

</mosaic_0001>

<llo_original>
// kernel: tpu_custom_call.1
$region0: #{tpu_custom_call.1}
  #allocation0 [shape = 'u32[]', space=smem, size = 0x4, offset = 0x4, fixed_abs, tag = 'smem constant byte address 0x4 - core index']
  #allocation1 [shape = 'u32[72,128]{1,0:T(1,128)}', space=vmem, size = 0x9000, scoped, tag = 'internal scratch']
  #allocation2 [shape = 'f32[16,128]{1,0:T(8,128)}', space=vmem, size = 0x2000, scoped, tag = 'scratch operand']
  %s0 = inlined_call_operand.hbm [shape: f32[16,256], index: 0, kind: input, shape index: {}]
  %s1 = inlined_call_operand.hbm [shape: bf16[2304,128], index: 1, kind: input, shape index: {}]
  %s2 = inlined_call_operand.hbm [shape: bf16[1152,128], index: 2, kind: input, shape index: {}]
  %s3 = inlined_call_operand.hbm [shape: bf16[1152,128], index: 3, kind: input, shape index: {}]
  %s4 = inlined_call_operand.hbm [shape: bf16[1152,128], index: 4, kind: input, shape index: {}]
  %s5 = inlined_call_operand.hbm [shape: f32[16,128], index: 5, kind: output, shape index: {}]
  %s6 = sld [smem:[#allocation0]]
  $region81: #{tpu_custom_call.1} parent=0
    _
  %s8 = ssub.s32 1, %s6
  %s9 = scalar_select 0, %s8, %s6
  $region1: #{tpu_custom_call.1} parent=0
    #allocation3 [shape = 'u8[16384]{0}', space=vmem, size = 0x4000, scoped, tag = 'input window, operand 0']
    #allocation4 [shape = 's32[2]{0}', space=sflag, size = 0x8, scoped, tag = 'scoped memory for tpu_custom_call.1']
    #allocation5 [shape = 's32[2]{0}', space=sflag, size = 0x8, scoped, tag = 'scoped memory for tpu_custom_call.1']
    #allocation6 [shape = 'u8[589824]{0}', space=vmem, size = 0x90000, scoped, tag = 'input window, operand 1']
    #allocation7 [shape = 's32[2]{0}', space=sflag, size = 0x8, scoped, tag = 'scoped memory for tpu_custom_call.1']
    #allocation8 [shape = 'u8[294912]{0}', space=vmem, size = 0x48000, scoped, tag = 'input window, operand 2, single buffered']
    #allocation9 [shape = 'u8[294912]{0}', space=vmem, size = 0x48000, scoped, tag = 'input window, operand 3, single buffered']
    #allocation10 [shape = 's32[1]{0}', space=sflag, size = 0x4, scoped, tag = 'scoped memory for tpu_custom_call.1']
    #allocation11 [shape = 'u8[294912]{0}', space=vmem, size = 0x48000, scoped, tag = 'input window, operand 4, single buffered']
    #allocation12 [shape = 'u8[8192]{0}', space=vmem, size = 0x2000, scoped, tag = 'output window, operand 0, single buffered']
    %10 = vsyncpa [#allocation4], 0
    %s11 = scalar_lea.sflag [#allocation4], 1
    %12 = vsyncpa %s11, 0
    %13 = vsyncpa [#allocation7], 0
    %s14 = scalar_lea.sflag [#allocation7], 1
    %15 = vsyncpa %s14, 0
    %16 = vsyncpa [#allocation10], 0
    %17 = vsyncpa [#allocation5], 0
    loop: start=0, step=1, limit=4
    $region2: #{tpu_custom_call.1} parent=1 // loop_pre_header
      _
    $region3: #{tpu_custom_call.1} parent=1 // loop_header
      %s19 = sphi 0, %s23
      %p20 = scmp.ge.s32.totalorder %s19, 4
      %s29 = sphi 0, %s31
      %s32 = sphi 0, %s29
      %s33 = sphi 0, %s32
      %s49 = sphi 0, %s33
      %s55 = sphi 0, %s57
      %s58 = sphi 0, %s55
      %s59 = sphi 0, %s58
      %s75 = sphi 0, %s59
      %s79 = sphi 0, %s79
      %s81 = sphi 0, %s79
      %s82 = sphi 0, %s81
      %s96 = sphi 0, %s82
      %s100 = sphi 0, %s100
      %s102 = sphi 0, %s100
      %s103 = sphi 0, %s102
      %s117 = sphi 0, %s103
      %s121 = sphi 0, %s121
      %s123 = sphi 0, %s121
      %s124 = sphi 0, %s123
      %s138 = sphi 0, %s124
      %s142 = sphi 0, %s142
      %s144 = sphi 0, %s142
      %s145 = sphi 0, %s144
      %s159 = sphi 0, %s145
    $region4: #{tpu_custom_call.1} parent=1 // loop_header_branch
      %22 = sbr.rel (%p20) target = $region8
    $region5: #{tpu_custom_call.1} parent=1 // loop_body
      %s24 = ssub.s32 %s19, 1
      %s25 = ssub.s32 %s19, 2
      %s26 = sadd.s32 %s19, 1
      %s27 = ssub.s32 %s19, %s26
      %p28 = scmp.eq.s32.totalorder %s27, 0
      %s30 = sadd.s32 %s29, 1
      %s31 = scalar_select %p28, %s29, %s30
      %p34 = pneg %p28
      %p35 = scmp.eq.s32.totalorder %s19, 1
      %p36 = por %p34, %p35
      %p37 = scmp.ne.s32.totalorder %s29, %s32
      %p38 = scmp.eq.s32.totalorder %s19, 0
      %p39 = por %p37, %p38
      %p40 = scmp.ne.s32.totalorder %s29, %s32
      %p41 = scmp.eq.s32.totalorder %s24, 1
      %p42 = por %p40, %p41
      %p43 = scmp.ne.s32.totalorder %s32, %s33
      %p44 = scmp.eq.s32.totalorder %s24, 0
      %p45 = por %p43, %p44
      %p46 = scmp.ne.s32.totalorder %s32, %s33
      %p47 = scmp.eq.s32.totalorder %s25, 1
      %p48 = por %p46, %p47
      %p50 = scmp.ne.s32.totalorder %s33, %s49
      %p51 = scmp.eq.s32.totalorder %s25, 0
      %p52 = por %p50, %p51
      %s53 = ssub.s32 %s19, %s26
      %p54 = scmp.eq.s32.totalorder %s53, 0
      %s56 = sadd.s32 %s55, 1
      %s57 = scalar_select %p54, %s55, %s56
      %p60 = pneg %p54
      %p61 = scmp.eq.s32.totalorder %s19, 1
      %p62 = por %p60, %p61
      %p63 = scmp.ne.s32.totalorder %s55, %s58
      %p64 = scmp.eq.s32.totalorder %s19, 0
      %p65 = por %p63, %p64
      %p66 = scmp.ne.s32.totalorder %s55, %s58
      %p67 = scmp.eq.s32.totalorder %s24, 1
      %p68 = por %p66, %p67
      %p69 = scmp.ne.s32.totalorder %s58, %s59
      %p70 = scmp.eq.s32.totalorder %s24, 0
      %p71 = por %p69, %p70
      %p72 = scmp.ne.s32.totalorder %s58, %s59
      %p73 = scmp.eq.s32.totalorder %s25, 1
      %p74 = por %p72, %p73
      %p76 = scmp.ne.s32.totalorder %s59, %s75
      %p77 = scmp.eq.s32.totalorder %s25, 0
      %p78 = por %p76, %p77
      %s80 = sadd.s32 %s79, 1
      %p83 = scmp.eq.s32.totalorder %s19, 1
      %p84 = scmp.ne.s32.totalorder %s79, %s81
      %p85 = scmp.eq.s32.totalorder %s19, 0
      %p86 = por %p84, %p85
      %p87 = scmp.ne.s32.totalorder %s79, %s81
      %p88 = scmp.eq.s32.totalorder %s24, 1
      %p89 = por %p87, %p88
      %p90 = scmp.ne.s32.totalorder %s81, %s82
      %p91 = scmp.eq.s32.totalorder %s24, 0
      %p92 = por %p90, %p91
      %p93 = scmp.ne.s32.totalorder %s81, %s82
      %p94 = scmp.eq.s32.totalorder %s25, 1
      %p95 = por %p93, %p94
      %p97 = scmp.ne.s32.totalorder %s82, %s96
      %p98 = scmp.eq.s32.totalorder %s25, 0
      %p99 = por %p97, %p98
      %s101 = sadd.s32 %s100, 1
      %p104 = scmp.eq.s32.totalorder %s19, 1
      %p105 = scmp.ne.s32.totalorder %s100, %s102
      %p106 = scmp.eq.s32.totalorder %s19, 0
      %p107 = por %p105, %p106
      %p108 = scmp.ne.s32.totalorder %s100, %s102
      %p109 = scmp.eq.s32.totalorder %s24, 1
      %p110 = por %p108, %p109
      %p111 = scmp.ne.s32.totalorder %s102, %s103
      %p112 = scmp.eq.s32.totalorder %s24, 0
      %p113 = por %p111, %p112
      %p114 = scmp.ne.s32.totalorder %s102, %s103
      %p115 = scmp.eq.s32.totalorder %s25, 1
      %p116 = por %p114, %p115
      %p118 = scmp.ne.s32.totalorder %s103, %s117
      %p119 = scmp.eq.s32.totalorder %s25, 0
      %p120 = por %p118, %p119
      %s122 = sadd.s32 %s121, 1
      %p125 = scmp.eq.s32.totalorder %s19, 1
      %p126 = scmp.ne.s32.totalorder %s121, %s123
      %p127 = scmp.eq.s32.totalorder %s19, 0
      %p128 = por %p126, %p127
      %p129 = scmp.ne.s32.totalorder %s121, %s123
      %p130 = scmp.eq.s32.totalorder %s24, 1
      %p131 = por %p129, %p130
      %p132 = scmp.ne.s32.totalorder %s123, %s124
      %p133 = scmp.eq.s32.totalorder %s24, 0
      %p134 = por %p132, %p133
      %p135 = scmp.ne.s32.totalorder %s123, %s124
      %p136 = scmp.eq.s32.totalorder %s25, 1
      %p137 = por %p135, %p136
      %p139 = scmp.ne.s32.totalorder %s124, %s138
      %p140 = scmp.eq.s32.totalorder %s25, 0
      %p141 = por %p139, %p140
      %s143 = sadd.s32 %s142, 1
      %p146 = scmp.eq.s32.totalorder %s19, 1
      %p147 = scmp.ne.s32.totalorder %s142, %s144
      %p148 = scmp.eq.s32.totalorder %s19, 0
      %p149 = por %p147, %p148
      %p150 = scmp.ne.s32.totalorder %s142, %s144
      %p151 = scmp.eq.s32.totalorder %s24, 1
      %p152 = por %p150, %p151
      %p153 = scmp.ne.s32.totalorder %s144, %s145
      %p154 = scmp.eq.s32.totalorder %s24, 0
      %p155 = por %p153, %p154
      %p156 = scmp.ne.s32.totalorder %s144, %s145
      %p157 = scmp.eq.s32.totalorder %s25, 1
      %p158 = por %p156, %p157
      %p160 = scmp.ne.s32.totalorder %s145, %s159
      %p161 = scmp.eq.s32.totalorder %s25, 0
      %p162 = por %p160, %p161
      %p163 = scmp.le.s32.totalorder 1, %s19
      %p164 = scmp.lt.s32.totalorder %s19, 3
      %p165 = pnand %p163, %p164
      %p166 = pneg %p165
      // Predicated region
      $region9: #{tpu_custom_call.1} parent=5 // pred_check
        _
      $region10: #{tpu_custom_call.1} parent=5 // pred_check_branch
        %168 = sbr.rel (%p165) target = $region12
      $region11: #{tpu_custom_call.1} parent=5 // pred_region
        %s169 = ssub.s32 %s19, 1
        // Predicated region
        $region13: #{tpu_custom_call.1} parent=11 // pred_check
          %p170 = pneg %p92
        $region14: #{tpu_custom_call.1} parent=11 // pred_check_branch
          %172 = sbr.rel (%p170) target = $region16
        $region15: #{tpu_custom_call.1} parent=11 // pred_region
          %174 = vsyncadd [#allocation7], 0
          %s175 = sshll.u32 %s2, 4
          %s176 = int_to_ptr.hbm [resolvable:$true] %s175
          %s177 = sshll.u32 [#allocation8], 4
          %s178 = int_to_ptr.vmem [resolvable:$true] %s177
          %183 = dma.hbm_to_vmem [thread:$0]  %s176, 9216, %s178, [#allocation7], 64, 64, 4
        $region16: #{tpu_custom_call.1} parent=11 // pred_fallthru
          _
        // Predicated region
        $region17: #{tpu_custom_call.1} parent=11 // pred_check
          %p184 = pneg %p113
        $region18: #{tpu_custom_call.1} parent=11 // pred_check_branch
          %186 = sbr.rel (%p184) target = $region20
        $region19: #{tpu_custom_call.1} parent=11 // pred_region
          %188 = vsyncadd [#allocation10], 0
          %s189 = sshll.u32 %s3, 4
          %s190 = int_to_ptr.hbm [resolvable:$true] %s189
          %s191 = sshll.u32 [#allocation9], 4
          %s192 = int_to_ptr.vmem [resolvable:$true] %s191
          %197 = dma.hbm_to_vmem [thread:$0]  %s190, 9216, %s192, [#allocation10], 64, 64, 4
        $region20: #{tpu_custom_call.1} parent=11 // pred_fallthru
          _
        // Predicated region
        $region21: #{tpu_custom_call.1} parent=11 // pred_check
          %p198 = pneg %p134
        $region22: #{tpu_custom_call.1} parent=11 // pred_check_branch
          %200 = sbr.rel (%p198) target = $region24
        $region23: #{tpu_custom_call.1} parent=11 // pred_region
          %202 = vsyncadd [#allocation10], 0
          %s203 = sshll.u32 %s4, 4
          %s204 = int_to_ptr.hbm [resolvable:$true] %s203
          %s205 = sshll.u32 [#allocation11], 4
          %s206 = int_to_ptr.vmem [resolvable:$true] %s205
          %211 = dma.hbm_to_vmem [thread:$0]  %s204, 9216, %s206, [#allocation10], 64, 64, 4
        $region24: #{tpu_custom_call.1} parent=11 // pred_fallthru
          _
      $region12: #{tpu_custom_call.1} parent=5 // pred_fallthru
        _
      %p212 = scmp.lt.s32.totalorder %s19, 2
      // Predicated region
      $region25: #{tpu_custom_call.1} parent=5 // pred_check
        %p213 = pneg %p212
      $region26: #{tpu_custom_call.1} parent=5 // pred_check_branch
        %215 = sbr.rel (%p213) target = $region28
      $region27: #{tpu_custom_call.1} parent=5 // pred_region
        // Predicated region
        $region29: #{tpu_custom_call.1} parent=27 // pred_check
          %p216 = pneg %p39
        $region30: #{tpu_custom_call.1} parent=27 // pred_check_branch
          %218 = sbr.rel (%p216) target = $region32
        $region31: #{tpu_custom_call.1} parent=27 // pred_region
          %s219 = sand.u32 %s29, 1
          %s220 = scalar_lea.sflag [#allocation4], %s219
          %s221 = sand.u32 %s29, 1
          %s222 = smul.addr %s221, 16
          %s223 = scalar_lea.vmem [#allocation3], %s222
          %225 = vsyncadd %s220, 0
          %s226 = smul.addr %s19, 8
          %s227 = scalar_lea.hbm %s0, %s226
          %s228 = sshll.u32 %s227, 4
          %s229 = int_to_ptr.hbm [resolvable:$true] %s228
          %s230 = sshll.u32 %s223, 4
          %s231 = int_to_ptr.vmem [resolvable:$true] %s230
          %236 = dma.hbm_to_vmem [thread:$0]  %s229, 256, %s231, %s220, 256, 128, 8
        $region32: #{tpu_custom_call.1} parent=27 // pred_fallthru
          _
        // Predicated region
        $region33: #{tpu_custom_call.1} parent=27 // pred_check
          %p237 = pneg %p65
        $region34: #{tpu_custom_call.1} parent=27 // pred_check_branch
          %239 = sbr.rel (%p237) target = $region36
        $region35: #{tpu_custom_call.1} parent=27 // pred_region
          %s240 = sand.u32 %s19, 1
          %s241 = scalar_lea.sflag [#allocation7], %s240
          %s242 = sand.u32 %s55, 1
          %s243 = smul.addr %s242, 576
          %s244 = scalar_lea.vmem [#allocation6], %s243
          %s245 = smul.u32 144, %s19
          %247 = vsyncadd %s241, 0
          %s248 = smul.addr %s245, 4
          %s249 = scalar_lea.hbm %s1, %s248
          %s250 = sshll.u32 %s249, 4
          %s251 = int_to_ptr.hbm [resolvable:$true] %s250
          %s252 = sshll.u32 %s244, 4
          %s253 = int_to_ptr.vmem [resolvable:$true] %s252
          %258 = dma.hbm_to_vmem [thread:$0]  %s251, 9216, %s253, %s241, 64, 64, 4
        $region36: #{tpu_custom_call.1} parent=27 // pred_fallthru
          _
      $region28: #{tpu_custom_call.1} parent=5 // pred_fallthru
        _
      %p259 = scmp.le.s32.totalorder 1, %s19
      %p260 = scmp.lt.s32.totalorder %s19, 3
      %p261 = pnand %p259, %p260
      %p262 = pneg %p261
      // Predicated region
      $region37: #{tpu_custom_call.1} parent=5 // pred_check
        _
      $region38: #{tpu_custom_call.1} parent=5 // pred_check_branch
        %264 = sbr.rel (%p261) target = $region40
      $region39: #{tpu_custom_call.1} parent=5 // pred_region
        %s265 = ssub.s32 %s19, 1
        %s266 = sand.u32 %s32, 1
        %s267 = scalar_lea.sflag [#allocation4], %s266
        %s268 = sand.u32 %s32, 1
        %s269 = smul.addr %s268, 16
        %s270 = scalar_lea.vmem [#allocation3], %s269
        // Predicated region
        $region41: #{tpu_custom_call.1} parent=39 // pred_check
          %p271 = pneg %p45
        $region42: #{tpu_custom_call.1} parent=39 // pred_check_branch
          %273 = sbr.rel (%p271) target = $region44
        $region43: #{tpu_custom_call.1} parent=39 // pred_region
          %275 = dma.done %s267, 256
        $region44: #{tpu_custom_call.1} parent=39 // pred_fallthru
          _
        %s276 = sand.u32 %s24, 1
        %s277 = scalar_lea.sflag [#allocation7], %s276
        %s278 = sand.u32 %s58, 1
        %s279 = smul.addr %s278, 576
        %s280 = scalar_lea.vmem [#allocation6], %s279
        // Predicated region
        $region45: #{tpu_custom_call.1} parent=39 // pred_check
          %p281 = pneg %p71
        $region46: #{tpu_custom_call.1} parent=39 // pred_check_branch
          %283 = sbr.rel (%p281) target = $region48
        $region47: #{tpu_custom_call.1} parent=39 // pred_region
          %285 = dma.done %s277, 9216
        $region48: #{tpu_custom_call.1} parent=39 // pred_fallthru
          _
        // Predicated region
        $region49: #{tpu_custom_call.1} parent=39 // pred_check
          %p286 = pneg %p92
        $region50: #{tpu_custom_call.1} parent=39 // pred_check_branch
          %288 = sbr.rel (%p286) target = $region52
        $region51: #{tpu_custom_call.1} parent=39 // pred_region
          %290 = dma.done [#allocation7], 9216
        $region52: #{tpu_custom_call.1} parent=39 // pred_fallthru
          _
        // Predicated region
        $region53: #{tpu_custom_call.1} parent=39 // pred_check
          %p291 = pneg %p113
        $region54: #{tpu_custom_call.1} parent=39 // pred_check_branch
          %293 = sbr.rel (%p291) target = $region56
        $region55: #{tpu_custom_call.1} parent=39 // pred_region
          %295 = dma.done [#allocation10], 9216
        $region56: #{tpu_custom_call.1} parent=39 // pred_fallthru
          _
        // Predicated region
        $region57: #{tpu_custom_call.1} parent=39 // pred_check
          %p296 = pneg %p134
        $region58: #{tpu_custom_call.1} parent=39 // pred_check_branch
          %298 = sbr.rel (%p296) target = $region60
        $region59: #{tpu_custom_call.1} parent=39 // pred_region
          %300 = dma.done [#allocation10], 9216
        $region60: #{tpu_custom_call.1} parent=39 // pred_fallthru
          _
        %s301 = sand.u32 %s32, 1
        %s302 = scalar_lea.sflag [#allocation4], %s301
        %s303 = sand.u32 %s32, 1
        %s304 = smul.addr %s303, 16
        %s305 = scalar_lea.vmem [#allocation3], %s304
        %p306 = pneg %p45
        %p307 = pneg %p42
        %s308 = sand.u32 %s24, 1
        %s309 = scalar_lea.sflag [#allocation7], %s308
        %s310 = sand.u32 %s58, 1
        %s311 = smul.addr %s310, 576
        %s312 = scalar_lea.vmem [#allocation6], %s311
        %p313 = pneg %p71
        %p314 = pneg %p68
        %p315 = pneg %p92
        %p316 = pneg %p89
        %p317 = pneg %p113
        %p318 = pneg %p110
        %p319 = pneg %p134
        %p320 = pneg %p131
        %p321 = pneg %p155
        %p322 = pneg %p152
        %s323 = smul.u32 144, %s24
        %p324 = scmp.eq.s32.totalorder %s24, 0
        // Predicated region
        $region61: #{tpu_custom_call.1} parent=39 // pred_check
          %p325 = pneg %p324
        $region62: #{tpu_custom_call.1} parent=39 // pred_check_branch
          %327 = sbr.rel (%p325) target = $region64
        $region63: #{tpu_custom_call.1} parent=39 // pred_region
          %328 = vst [vmem:[#allocation2] sm:$0xff] 0.0
          %329 = vst [vmem:[#allocation2 + $0x8] sm:$0xff] 0.0
        $region64: #{tpu_custom_call.1} parent=39 // pred_fallthru
          _
        %v330 = vld [vmem:[%s270] sm:$0xff]
        %v331 = vld [vmem:[%s270 + $0x8] sm:$0xff]
        %v332 = vsub.f32 0.0, %v330
        %v333 = vsub.f32 0.0, %v331
        %v334 = vmul.f32 %v332, 1.442695
        %v335 = vpow.pop %v334
        %v336 = vmul.f32 %v333, 1.442695
        %v337 = vpow.pop %v336
        %v338 = vadd.f32 %v335, 1.0
        %v339 = vadd.f32 %v337, 1.0
        %v340 = vrcp.pop %v338
        %v341 = vrcp.pop %v339
        %v342 = vmul.f32 %v330, %v340
        %v343 = vmul.f32 %v331, %v341
        %v344 = vsub.f32 %v330, -2.2
        %v345 = vsub.f32 %v331, -2.2
        %v346 = vmul.f32 %v344, 2.5
        %v347 = vmul.f32 %v345, 2.5
        %v348 = vfloor.f32 %v346
        %v349 = vfloor.f32 %v347
        %v350 = vsub.f32 %v346, %v348
        %v351 = vsub.f32 %v347, %v349
        %v352 = vmul.f32 %v350, %v350
        %v353 = vmul.f32 %v351, %v351
        %v354 = vmul.f32 %v352, %v350
        %v355 = vmul.f32 %v353, %v351
        %v356 = vmul.f32 %v354, 0.16666667
        %v357 = vmul.f32 %v355, 0.16666667
        %v358 = vmul.f32 %v350, 3.0
        %v359 = vmul.f32 %v351, 3.0
        %v360 = vsub.f32 3.0, %v358
        %v361 = vsub.f32 3.0, %v359
        %v362 = vmul.f32 %v360, %v350
        %v363 = vmul.f32 %v361, %v351
        %v364 = vadd.f32 %v362, 3.0
        %v365 = vadd.f32 %v363, 3.0
        %v366 = vmul.f32 %v364, %v350
        %v367 = vmul.f32 %v365, %v351
        %v368 = vadd.f32 %v366, 1.0
        %v369 = vadd.f32 %v367, 1.0
        %v370 = vmul.f32 %v368, 0.16666667
        %v371 = vmul.f32 %v369, 0.16666667
        %v372 = vsub.f32 %v358, 6.0
        %v373 = vsub.f32 %v359, 6.0
        %v374 = vmul.f32 %v372, %v352
        %v375 = vmul.f32 %v373, %v353
        %v376 = vadd.f32 %v374, 4.0
        %v377 = vadd.f32 %v375, 4.0
        %v378 = vmul.f32 %v376, 0.16666667
        %v379 = vmul.f32 %v377, 0.16666667
        %v380 = vsub.f32 1.0, %v350
        %v381 = vsub.f32 1.0, %v351
        %v382 = vmul.f32 %v380, %v380
        %v383 = vmul.f32 %v381, %v381
        %v384 = vmul.f32 %v382, %v380
        %v385 = vmul.f32 %v383, %v381
        %v386 = vmul.f32 %v384, 0.16666667
        %v387 = vmul.f32 %v385, 0.16666667
        %vm388 = vcmp.eq.f32.partialorder %v348, 0.0
        %vm389 = vcmp.eq.f32.partialorder %v349, 0.0
        %v390 = vsel %vm388, 1, 0
        %v391 = vsel %vm389, 1, 0
        %v392 = vcvt.s32.f32 %v390
        %v393 = vcvt.s32.f32 %v391
        %vm394 = vcmp.eq.f32.partialorder %v348, 1.0
        %vm395 = vcmp.eq.f32.partialorder %v349, 1.0
        %v396 = vsel %vm394, 1, 0
        %v397 = vsel %vm395, 1, 0
        %v398 = vcvt.s32.f32 %v396
        %v399 = vcvt.s32.f32 %v397
        %vm400 = vcmp.eq.f32.partialorder %v348, 2.0
        %vm401 = vcmp.eq.f32.partialorder %v349, 2.0
        %v402 = vsel %vm400, 1, 0
        %v403 = vsel %vm401, 1, 0
        %v404 = vcvt.s32.f32 %v402
        %v405 = vcvt.s32.f32 %v403
        %vm406 = vcmp.eq.f32.partialorder %v348, 3.0
        %vm407 = vcmp.eq.f32.partialorder %v349, 3.0
        %v408 = vsel %vm406, 1, 0
        %v409 = vsel %vm407, 1, 0
        %v410 = vcvt.s32.f32 %v408
        %v411 = vcvt.s32.f32 %v409
        %vm412 = vcmp.eq.f32.partialorder %v348, 4.0
        %vm413 = vcmp.eq.f32.partialorder %v349, 4.0
        %v414 = vsel %vm412, 1, 0
        %v415 = vsel %vm413, 1, 0
        %v416 = vcvt.s32.f32 %v414
        %v417 = vcvt.s32.f32 %v415
        %vm418 = vcmp.eq.f32.partialorder %v348, 5.0
        %vm419 = vcmp.eq.f32.partialorder %v349, 5.0
        %v420 = vsel %vm418, 1, 0
        %v421 = vsel %vm419, 1, 0
        %v422 = vcvt.s32.f32 %v420
        %v423 = vcvt.s32.f32 %v421
        %vm424 = vcmp.eq.f32.partialorder %v348, 6.0
        %vm425 = vcmp.eq.f32.partialorder %v349, 6.0
        %v426 = vsel %vm424, 1, 0
        %v427 = vsel %vm425, 1, 0
        %v428 = vcvt.s32.f32 %v426
        %v429 = vcvt.s32.f32 %v427
        %vm430 = vcmp.eq.f32.partialorder %v348, 7.0
        %vm431 = vcmp.eq.f32.partialorder %v349, 7.0
        %v432 = vsel %vm430, 1, 0
        %v433 = vsel %vm431, 1, 0
        %v434 = vcvt.s32.f32 %v432
        %v435 = vcvt.s32.f32 %v433
        %vm436 = vcmp.eq.f32.partialorder %v348, 8.0
        %vm437 = vcmp.eq.f32.partialorder %v349, 8.0
        %v438 = vsel %vm436, 1, 0
        %v439 = vsel %vm437, 1, 0
        %v440 = vcvt.s32.f32 %v438
        %v441 = vcvt.s32.f32 %v439
        %vm442 = vcmp.eq.f32.partialorder %v348, 9.0
        %vm443 = vcmp.eq.f32.partialorder %v349, 9.0
        %v444 = vsel %vm442, 1, 0
        %v445 = vsel %vm443, 1, 0
        %v446 = vcvt.s32.f32 %v444
        %v447 = vcvt.s32.f32 %v445
        %vm448 = vcmp.eq.f32.partialorder %v348, 10.0
        %vm449 = vcmp.eq.f32.partialorder %v349, 10.0
        %v450 = vsel %vm448, 1, 0
        %v451 = vsel %vm449, 1, 0
        %v452 = vcvt.s32.f32 %v450
        %v453 = vcvt.s32.f32 %v451
        %v454 = vmul.f32 %v392, %v356
        %v455 = vmul.f32 %v393, %v357
        %v456 = vmul.f32 %v398, %v370
        %v457 = vmul.f32 %v399, %v371
        %v458 = vadd.f32 %v454, %v456
        %v459 = vadd.f32 %v455, %v457
        %v460 = vmul.f32 %v404, %v378
        %v461 = vmul.f32 %v405, %v379
        %v462 = vadd.f32 %v458, %v460
        %v463 = vadd.f32 %v459, %v461
        %v464 = vmul.f32 %v410, %v386
        %v465 = vmul.f32 %v411, %v387
        %v466 = vadd.f32 %v462, %v464
        %v467 = vadd.f32 %v463, %v465
        %v468 = vmul.f32 %v398, %v356
        %v469 = vmul.f32 %v399, %v357
        %v470 = vmul.f32 %v404, %v370
        %v471 = vmul.f32 %v405, %v371
        %v472 = vadd.f32 %v468, %v470
        %v473 = vadd.f32 %v469, %v471
        %v474 = vmul.f32 %v410, %v378
        %v475 = vmul.f32 %v411, %v379
        %v476 = vadd.f32 %v472, %v474
        %v477 = vadd.f32 %v473, %v475
        %v478 = vmul.f32 %v416, %v386
        %v479 = vmul.f32 %v417, %v387
        %v480 = vadd.f32 %v476, %v478
        %v481 = vadd.f32 %v477, %v479
        %v482 = vmul.f32 %v404, %v356
        %v483 = vmul.f32 %v405, %v357
        %v484 = vmul.f32 %v410, %v370
        %v485 = vmul.f32 %v411, %v371
        %v486 = vadd.f32 %v482, %v484
        %v487 = vadd.f32 %v483, %v485
        %v488 = vmul.f32 %v416, %v378
        %v489 = vmul.f32 %v417, %v379
        %v490 = vadd.f32 %v486, %v488
        %v491 = vadd.f32 %v487, %v489
        %v492 = vmul.f32 %v422, %v386
        %v493 = vmul.f32 %v423, %v387
        %v494 = vadd.f32 %v490, %v492
        %v495 = vadd.f32 %v491, %v493
        %v496 = vmul.f32 %v410, %v356
        %v497 = vmul.f32 %v411, %v357
        %v498 = vmul.f32 %v416, %v370
        %v499 = vmul.f32 %v417, %v371
        %v500 = vadd.f32 %v496, %v498
        %v501 = vadd.f32 %v497, %v499
        %v502 = vmul.f32 %v422, %v378
        %v503 = vmul.f32 %v423, %v379
        %v504 = vadd.f32 %v500, %v502
        %v505 = vadd.f32 %v501, %v503
        %v506 = vmul.f32 %v428, %v386
        %v507 = vmul.f32 %v429, %v387
        %v508 = vadd.f32 %v504, %v506
        %v509 = vadd.f32 %v505, %v507
        %v510 = vmul.f32 %v416, %v356
        %v511 = vmul.f32 %v417, %v357
        %v512 = vmul.f32 %v422, %v370
        %v513 = vmul.f32 %v423, %v371
        %v514 = vadd.f32 %v510, %v512
        %v515 = vadd.f32 %v511, %v513
        %v516 = vmul.f32 %v428, %v378
        %v517 = vmul.f32 %v429, %v379
        %v518 = vadd.f32 %v514, %v516
        %v519 = vadd.f32 %v515, %v517
        %v520 = vmul.f32 %v434, %v386
        %v521 = vmul.f32 %v435, %v387
        %v522 = vadd.f32 %v518, %v520
        %v523 = vadd.f32 %v519, %v521
        %v524 = vmul.f32 %v422, %v356
        %v525 = vmul.f32 %v423, %v357
        %v526 = vmul.f32 %v428, %v370
        %v527 = vmul.f32 %v429, %v371
        %v528 = vadd.f32 %v524, %v526
        %v529 = vadd.f32 %v525, %v527
        %v530 = vmul.f32 %v434, %v378
        %v531 = vmul.f32 %v435, %v379
        %v532 = vadd.f32 %v528, %v530
        %v533 = vadd.f32 %v529, %v531
        %v534 = vmul.f32 %v440, %v386
        %v535 = vmul.f32 %v441, %v387
        %v536 = vadd.f32 %v532, %v534
        %v537 = vadd.f32 %v533, %v535
        %v538 = vmul.f32 %v428, %v356
        %v539 = vmul.f32 %v429, %v357
        %v540 = vmul.f32 %v434, %v370
        %v541 = vmul.f32 %v435, %v371
        %v542 = vadd.f32 %v538, %v540
        %v543 = vadd.f32 %v539, %v541
        %v544 = vmul.f32 %v440, %v378
        %v545 = vmul.f32 %v441, %v379
        %v546 = vadd.f32 %v542, %v544
        %v547 = vadd.f32 %v543, %v545
        %v548 = vmul.f32 %v446, %v386
        %v549 = vmul.f32 %v447, %v387
        %v550 = vadd.f32 %v546, %v548
        %v551 = vadd.f32 %v547, %v549
        %v552 = vmul.f32 %v434, %v356
        %v553 = vmul.f32 %v435, %v357
        %v554 = vmul.f32 %v440, %v370
        %v555 = vmul.f32 %v441, %v371
        %v556 = vadd.f32 %v552, %v554
        %v557 = vadd.f32 %v553, %v555
        %v558 = vmul.f32 %v446, %v378
        %v559 = vmul.f32 %v447, %v379
        %v560 = vadd.f32 %v556, %v558
        %v561 = vadd.f32 %v557, %v559
        %v562 = vmul.f32 %v452, %v386
        %v563 = vmul.f32 %v453, %v387
        %v564 = vadd.f32 %v560, %v562
        %v565 = vadd.f32 %v561, %v563
        %v566 = vpack.c.bf16 %v343, %v342
        %v567 = vpack.c.bf16 %v467, %v466
        %v568 = vpack.c.bf16 %v481, %v480
        %v569 = vpack.c.bf16 %v495, %v494
        %v570 = vpack.c.bf16 %v509, %v508
        %v571 = vpack.c.bf16 %v523, %v522
        %v572 = vpack.c.bf16 %v537, %v536
        %v573 = vpack.c.bf16 %v551, %v550
        %v574 = vpack.c.bf16 %v565, %v564
        %v575 = vld [vmem:[#allocation2] sm:$0xff]
        %v576 = vld [vmem:[#allocation2 + $0x8] sm:$0xff]
        %v577 = vld [vmem:[%s280] sm:$0xf]
        %v578 = vld [vmem:[%s280 + $0x4] sm:$0xf]
        %v579 = vld [vmem:[%s280 + $0x8] sm:$0xf]
        %v580 = vld [vmem:[%s280 + $0xc] sm:$0xf]
        %v581 = vld [vmem:[%s280 + $0x10] sm:$0xf]
        %v582 = vld [vmem:[%s280 + $0x14] sm:$0xf]
        %v583 = vld [vmem:[%s280 + $0x18] sm:$0xf]
        %v584 = vld [vmem:[%s280 + $0x1c] sm:$0xf]
        %v585 = vld [vmem:[%s280 + $0x20] sm:$0xf]
        %v586 = vld [vmem:[%s280 + $0x24] sm:$0xf]
        %v587 = vld [vmem:[%s280 + $0x28] sm:$0xf]
        %v588 = vld [vmem:[%s280 + $0x2c] sm:$0xf]
        %v589 = vld [vmem:[%s280 + $0x30] sm:$0xf]
        %v590 = vld [vmem:[%s280 + $0x34] sm:$0xf]
        %v591 = vld [vmem:[%s280 + $0x38] sm:$0xf]
        %v592 = vld [vmem:[%s280 + $0x3c] sm:$0xf]
        %v593 = vld [vmem:[%s280 + $0x40] sm:$0xf]
        %v594 = vld [vmem:[%s280 + $0x44] sm:$0xf]
        %v595 = vld [vmem:[%s280 + $0x48] sm:$0xf]
        %v596 = vld [vmem:[%s280 + $0x4c] sm:$0xf]
        %v597 = vld [vmem:[%s280 + $0x50] sm:$0xf]
        %v598 = vld [vmem:[%s280 + $0x54] sm:$0xf]
        %v599 = vld [vmem:[%s280 + $0x58] sm:$0xf]
        %v600 = vld [vmem:[%s280 + $0x5c] sm:$0xf]
        %v601 = vld [vmem:[%s280 + $0x60] sm:$0xf]
        %v602 = vld [vmem:[%s280 + $0x64] sm:$0xf]
        %v603 = vld [vmem:[%s280 + $0x68] sm:$0xf]
        %v604 = vld [vmem:[%s280 + $0x6c] sm:$0xf]
        %v605 = vld [vmem:[%s280 + $0x70] sm:$0xf]
        %v606 = vld [vmem:[%s280 + $0x74] sm:$0xf]
        %v607 = vld [vmem:[%s280 + $0x78] sm:$0xf]
        %v608 = vld [vmem:[%s280 + $0x7c] sm:$0xf]
        %v609 = vld [vmem:[%s280 + $0x80] sm:$0xf]
        %v610 = vld [vmem:[%s280 + $0x84] sm:$0xf]
        %v611 = vld [vmem:[%s280 + $0x88] sm:$0xf]
        %v612 = vld [vmem:[%s280 + $0x8c] sm:$0xf]
        %v613 = vld [vmem:[%s280 + $0x90] sm:$0xf]
        %v614 = vld [vmem:[%s280 + $0x94] sm:$0xf]
        %v615 = vld [vmem:[%s280 + $0x98] sm:$0xf]
        %v616 = vld [vmem:[%s280 + $0x9c] sm:$0xf]
        %v617 = vld [vmem:[%s280 + $0xa0] sm:$0xf]
        %v618 = vld [vmem:[%s280 + $0xa4] sm:$0xf]
        %v619 = vld [vmem:[%s280 + $0xa8] sm:$0xf]
        %v620 = vld [vmem:[%s280 + $0xac] sm:$0xf]
        %v621 = vld [vmem:[%s280 + $0xb0] sm:$0xf]
        %v622 = vld [vmem:[%s280 + $0xb4] sm:$0xf]
        %v623 = vld [vmem:[%s280 + $0xb8] sm:$0xf]
        %v624 = vld [vmem:[%s280 + $0xbc] sm:$0xf]
        %v625 = vld [vmem:[%s280 + $0xc0] sm:$0xf]
        %v626 = vld [vmem:[%s280 + $0xc4] sm:$0xf]
        %v627 = vld [vmem:[%s280 + $0xc8] sm:$0xf]
        %v628 = vld [vmem:[%s280 + $0xcc] sm:$0xf]
        %v629 = vld [vmem:[%s280 + $0xd0] sm:$0xf]
        %v630 = vld [vmem:[%s280 + $0xd4] sm:$0xf]
        %v631 = vld [vmem:[%s280 + $0xd8] sm:$0xf]
        %v632 = vld [vmem:[%s280 + $0xdc] sm:$0xf]
        %v633 = vld [vmem:[%s280 + $0xe0] sm:$0xf]
        %v634 = vld [vmem:[%s280 + $0xe4] sm:$0xf]
        %v635 = vld [vmem:[%s280 + $0xe8] sm:$0xf]
        %v636 = vld [vmem:[%s280 + $0xec] sm:$0xf]
        %v637 = vld [vmem:[%s280 + $0xf0] sm:$0xf]
        %v638 = vld [vmem:[%s280 + $0xf4] sm:$0xf]
        %v639 = vld [vmem:[%s280 + $0xf8] sm:$0xf]
        %v640 = vld [vmem:[%s280 + $0xfc] sm:$0xf]
        %v641 = vld [vmem:[%s280 + $0x100] sm:$0xf]
        %v642 = vld [vmem:[%s280 + $0x104] sm:$0xf]
        %v643 = vld [vmem:[%s280 + $0x108] sm:$0xf]
        %v644 = vld [vmem:[%s280 + $0x10c] sm:$0xf]
        %v645 = vld [vmem:[%s280 + $0x110] sm:$0xf]
        %v646 = vld [vmem:[%s280 + $0x114] sm:$0xf]
        %v647 = vld [vmem:[%s280 + $0x118] sm:$0xf]
        %v648 = vld [vmem:[%s280 + $0x11c] sm:$0xf]
        %v649 = vld [vmem:[%s280 + $0x120] sm:$0xf]
        %v650 = vld [vmem:[%s280 + $0x124] sm:$0xf]
        %v651 = vld [vmem:[%s280 + $0x128] sm:$0xf]
        %v652 = vld [vmem:[%s280 + $0x12c] sm:$0xf]
        %v653 = vld [vmem:[%s280 + $0x130] sm:$0xf]
        %v654 = vld [vmem:[%s280 + $0x134] sm:$0xf]
        %v655 = vld [vmem:[%s280 + $0x138] sm:$0xf]
        %v656 = vld [vmem:[%s280 + $0x13c] sm:$0xf]
        %v657 = vld [vmem:[%s280 + $0x140] sm:$0xf]
        %v658 = vld [vmem:[%s280 + $0x144] sm:$0xf]
        %v659 = vld [vmem:[%s280 + $0x148] sm:$0xf]
        %v660 = vld [vmem:[%s280 + $0x14c] sm:$0xf]
        %v661 = vld [vmem:[%s280 + $0x150] sm:$0xf]
        %v662 = vld [vmem:[%s280 + $0x154] sm:$0xf]
        %v663 = vld [vmem:[%s280 + $0x158] sm:$0xf]
        %v664 = vld [vmem:[%s280 + $0x15c] sm:$0xf]
        %v665 = vld [vmem:[%s280 + $0x160] sm:$0xf]
        %v666 = vld [vmem:[%s280 + $0x164] sm:$0xf]
        %v667 = vld [vmem:[%s280 + $0x168] sm:$0xf]
        %v668 = vld [vmem:[%s280 + $0x16c] sm:$0xf]
        %v669 = vld [vmem:[%s280 + $0x170] sm:$0xf]
        %v670 = vld [vmem:[%s280 + $0x174] sm:$0xf]
        %v671 = vld [vmem:[%s280 + $0x178] sm:$0xf]
        %v672 = vld [vmem:[%s280 + $0x17c] sm:$0xf]
        %v673 = vld [vmem:[%s280 + $0x180] sm:$0xf]
        %v674 = vld [vmem:[%s280 + $0x184] sm:$0xf]
        %v675 = vld [vmem:[%s280 + $0x188] sm:$0xf]
        %v676 = vld [vmem:[%s280 + $0x18c] sm:$0xf]
        %v677 = vld [vmem:[%s280 + $0x190] sm:$0xf]
        %v678 = vld [vmem:[%s280 + $0x194] sm:$0xf]
        %v679 = vld [vmem:[%s280 + $0x198] sm:$0xf]
        %v680 = vld [vmem:[%s280 + $0x19c] sm:$0xf]
        %v681 = vld [vmem:[%s280 + $0x1a0] sm:$0xf]
        %v682 = vld [vmem:[%s280 + $0x1a4] sm:$0xf]
        %v683 = vld [vmem:[%s280 + $0x1a8] sm:$0xf]
        %v684 = vld [vmem:[%s280 + $0x1ac] sm:$0xf]
        %v685 = vld [vmem:[%s280 + $0x1b0] sm:$0xf]
        %v686 = vld [vmem:[%s280 + $0x1b4] sm:$0xf]
        %v687 = vld [vmem:[%s280 + $0x1b8] sm:$0xf]
        %v688 = vld [vmem:[%s280 + $0x1bc] sm:$0xf]
        %v689 = vld [vmem:[%s280 + $0x1c0] sm:$0xf]
        %v690 = vld [vmem:[%s280 + $0x1c4] sm:$0xf]
        %v691 = vld [vmem:[%s280 + $0x1c8] sm:$0xf]
        %v692 = vld [vmem:[%s280 + $0x1cc] sm:$0xf]
        %v693 = vld [vmem:[%s280 + $0x1d0] sm:$0xf]
        %v694 = vld [vmem:[%s280 + $0x1d4] sm:$0xf]
        %v695 = vld [vmem:[%s280 + $0x1d8] sm:$0xf]
        %v696 = vld [vmem:[%s280 + $0x1dc] sm:$0xf]
        %v697 = vld [vmem:[%s280 + $0x1e0] sm:$0xf]
        %v698 = vld [vmem:[%s280 + $0x1e4] sm:$0xf]
        %v699 = vld [vmem:[%s280 + $0x1e8] sm:$0xf]
        %v700 = vld [vmem:[%s280 + $0x1ec] sm:$0xf]
        %v701 = vld [vmem:[%s280 + $0x1f0] sm:$0xf]
        %v702 = vld [vmem:[%s280 + $0x1f4] sm:$0xf]
        %v703 = vld [vmem:[%s280 + $0x1f8] sm:$0xf]
        %v704 = vld [vmem:[%s280 + $0x1fc] sm:$0xf]
        %v705 = vld [vmem:[%s280 + $0x200] sm:$0xf]
        %v706 = vld [vmem:[%s280 + $0x204] sm:$0xf]
        %v707 = vld [vmem:[%s280 + $0x208] sm:$0xf]
        %v708 = vld [vmem:[%s280 + $0x20c] sm:$0xf]
        %v709 = vld [vmem:[%s280 + $0x210] sm:$0xf]
        %v710 = vld [vmem:[%s280 + $0x214] sm:$0xf]
        %v711 = vld [vmem:[%s280 + $0x218] sm:$0xf]
        %v712 = vld [vmem:[%s280 + $0x21c] sm:$0xf]
        %v713 = vld [vmem:[%s280 + $0x220] sm:$0xf]
        %v714 = vld [vmem:[%s280 + $0x224] sm:$0xf]
        %v715 = vld [vmem:[%s280 + $0x228] sm:$0xf]
        %v716 = vld [vmem:[%s280 + $0x22c] sm:$0xf]
        %v717 = vld [vmem:[%s280 + $0x230] sm:$0xf]
        %v718 = vld [vmem:[%s280 + $0x234] sm:$0xf]
        %v719 = vld [vmem:[%s280 + $0x238] sm:$0xf]
        %v720 = vld [vmem:[%s280 + $0x23c] sm:$0xf]
        %v865 = vunpack.c.l.b16 %v577
        %v866 = vunpack.c.l.b16 %v578
        %v867 = vunpack.c.l.b16 %v579
        %v868 = vunpack.c.l.b16 %v580
        %v869 = vunpack.c.l.b16 %v581
        %v870 = vunpack.c.l.b16 %v582
        %v871 = vunpack.c.l.b16 %v583
        %v872 = vunpack.c.l.b16 %v584
        %v873 = vunpack.c.l.b16 %v585
        %v874 = vunpack.c.l.b16 %v586
        %v875 = vunpack.c.l.b16 %v587
        %v876 = vunpack.c.l.b16 %v588
        %v877 = vunpack.c.l.b16 %v589
        %v878 = vunpack.c.l.b16 %v590
        %v879 = vunpack.c.l.b16 %v591
        %v880 = vunpack.c.l.b16 %v592
        %v881 = vunpack.c.l.b16 %v593
        %v882 = vunpack.c.l.b16 %v594
        %v883 = vunpack.c.l.b16 %v595
        %v884 = vunpack.c.l.b16 %v596
        %v885 = vunpack.c.l.b16 %v597
        %v886 = vunpack.c.l.b16 %v598
        %v887 = vunpack.c.l.b16 %v599
        %v888 = vunpack.c.l.b16 %v600
        %v889 = vunpack.c.l.b16 %v601
        %v890 = vunpack.c.l.b16 %v602
        %v891 = vunpack.c.l.b16 %v603
        %v892 = vunpack.c.l.b16 %v604
        %v893 = vunpack.c.l.b16 %v605
        %v894 = vunpack.c.l.b16 %v606
        %v895 = vunpack.c.l.b16 %v607
        %v896 = vunpack.c.l.b16 %v608
        %v897 = vunpack.c.l.b16 %v609
        %v898 = vunpack.c.l.b16 %v610
        %v899 = vunpack.c.l.b16 %v611
        %v900 = vunpack.c.l.b16 %v612
        %v901 = vunpack.c.l.b16 %v613
        %v902 = vunpack.c.l.b16 %v614
        %v903 = vunpack.c.l.b16 %v615
        %v904 = vunpack.c.l.b16 %v616
        %v905 = vunpack.c.l.b16 %v617
        %v906 = vunpack.c.l.b16 %v618
        %v907 = vunpack.c.l.b16 %v619
        %v908 = vunpack.c.l.b16 %v620
        %v909 = vunpack.c.l.b16 %v621
        %v910 = vunpack.c.l.b16 %v622
        %v911 = vunpack.c.l.b16 %v623
        %v912 = vunpack.c.l.b16 %v624
        %v913 = vunpack.c.l.b16 %v625
        %v914 = vunpack.c.l.b16 %v626
        %v915 = vunpack.c.l.b16 %v627
        %v916 = vunpack.c.l.b16 %v628
        %v917 = vunpack.c.l.b16 %v629
        %v918 = vunpack.c.l.b16 %v630
        %v919 = vunpack.c.l.b16 %v631
        %v920 = vunpack.c.l.b16 %v632
        %v921 = vunpack.c.l.b16 %v633
        %v922 = vunpack.c.l.b16 %v634
        %v923 = vunpack.c.l.b16 %v635
        %v924 = vunpack.c.l.b16 %v636
        %v925 = vunpack.c.l.b16 %v637
        %v926 = vunpack.c.l.b16 %v638
        %v927 = vunpack.c.l.b16 %v639
        %v928 = vunpack.c.l.b16 %v640
        %v929 = vunpack.c.l.b16 %v641
        %v930 = vunpack.c.l.b16 %v642
        %v931 = vunpack.c.l.b16 %v643
        %v932 = vunpack.c.l.b16 %v644
        %v933 = vunpack.c.l.b16 %v645
        %v934 = vunpack.c.l.b16 %v646
        %v935 = vunpack.c.l.b16 %v647
        %v936 = vunpack.c.l.b16 %v648
        %v937 = vunpack.c.l.b16 %v649
        %v938 = vunpack.c.l.b16 %v650
        %v939 = vunpack.c.l.b16 %v651
        %v940 = vunpack.c.l.b16 %v652
        %v941 = vunpack.c.l.b16 %v653
        %v942 = vunpack.c.l.b16 %v654
        %v943 = vunpack.c.l.b16 %v655
        %v944 = vunpack.c.l.b16 %v656
        %v945 = vunpack.c.l.b16 %v657
        %v946 = vunpack.c.l.b16 %v658
        %v947 = vunpack.c.l.b16 %v659
        %v948 = vunpack.c.l.b16 %v660
        %v949 = vunpack.c.l.b16 %v661
        %v950 = vunpack.c.l.b16 %v662
        %v951 = vunpack.c.l.b16 %v663
        %v952 = vunpack.c.l.b16 %v664
        %v953 = vunpack.c.l.b16 %v665
        %v954 = vunpack.c.l.b16 %v666
        %v955 = vunpack.c.l.b16 %v667
        %v956 = vunpack.c.l.b16 %v668
        %v957 = vunpack.c.l.b16 %v669
        %v958 = vunpack.c.l.b16 %v670
        %v959 = vunpack.c.l.b16 %v671
        %v960 = vunpack.c.l.b16 %v672
        %v961 = vunpack.c.l.b16 %v673
        %v962 = vunpack.c.l.b16 %v674
        %v963 = vunpack.c.l.b16 %v675
        %v964 = vunpack.c.l.b16 %v676
        %v965 = vunpack.c.l.b16 %v677
        %v966 = vunpack.c.l.b16 %v678
        %v967 = vunpack.c.l.b16 %v679
        %v968 = vunpack.c.l.b16 %v680
        %v969 = vunpack.c.l.b16 %v681
        %v970 = vunpack.c.l.b16 %v682
        %v971 = vunpack.c.l.b16 %v683
        %v972 = vunpack.c.l.b16 %v684
        %v973 = vunpack.c.l.b16 %v685
        %v974 = vunpack.c.l.b16 %v686
        %v975 = vunpack.c.l.b16 %v687
        %v976 = vunpack.c.l.b16 %v688
        %v977 = vunpack.c.l.b16 %v689
        %v978 = vunpack.c.l.b16 %v690
        %v979 = vunpack.c.l.b16 %v691
        %v980 = vunpack.c.l.b16 %v692
        %v981 = vunpack.c.l.b16 %v693
        %v982 = vunpack.c.l.b16 %v694
        %v983 = vunpack.c.l.b16 %v695
        %v984 = vunpack.c.l.b16 %v696
        %v985 = vunpack.c.l.b16 %v697
        %v986 = vunpack.c.l.b16 %v698
        %v987 = vunpack.c.l.b16 %v699
        %v988 = vunpack.c.l.b16 %v700
        %v989 = vunpack.c.l.b16 %v701
        %v990 = vunpack.c.l.b16 %v702
        %v991 = vunpack.c.l.b16 %v703
        %v992 = vunpack.c.l.b16 %v704
        %v993 = vunpack.c.l.b16 %v705
        %v994 = vunpack.c.l.b16 %v706
        %v995 = vunpack.c.l.b16 %v707
        %v996 = vunpack.c.l.b16 %v708
        %v997 = vunpack.c.l.b16 %v709
        %v998 = vunpack.c.l.b16 %v710
        %v999 = vunpack.c.l.b16 %v711
        %v1000 = vunpack.c.l.b16 %v712
        %v1001 = vunpack.c.l.b16 %v713
        %v1002 = vunpack.c.l.b16 %v714
        %v1003 = vunpack.c.l.b16 %v715
        %v1004 = vunpack.c.l.b16 %v716
        %v1005 = vunpack.c.l.b16 %v717
        %v1006 = vunpack.c.l.b16 %v718
        %v1007 = vunpack.c.l.b16 %v719
        %v1008 = vunpack.c.l.b16 %v720
        %v1009 = vpack.c.b16 %v866, %v865
        %v1010 = vpack.c.b16 %v868, %v867
        %v1011 = vpack.c.b16 %v870, %v869
        %v1012 = vpack.c.b16 %v872, %v871
        %v1013 = vpack.c.b16 %v874, %v873
        %v1014 = vpack.c.b16 %v876, %v875
        %v1015 = vpack.c.b16 %v878, %v877
        %v1016 = vpack.c.b16 %v880, %v879
        %v1017 = vpack.c.b16 %v882, %v881
        %v1018 = vpack.c.b16 %v884, %v883
        %v1019 = vpack.c.b16 %v886, %v885
        %v1020 = vpack.c.b16 %v888, %v887
        %v1021 = vpack.c.b16 %v890, %v889
        %v1022 = vpack.c.b16 %v892, %v891
        %v1023 = vpack.c.b16 %v894, %v893
        %v1024 = vpack.c.b16 %v896, %v895
        %v1025 = vpack.c.b16 %v898, %v897
        %v1026 = vpack.c.b16 %v900, %v899
        %v1027 = vpack.c.b16 %v902, %v901
        %v1028 = vpack.c.b16 %v904, %v903
        %v1029 = vpack.c.b16 %v906, %v905
        %v1030 = vpack.c.b16 %v908, %v907
        %v1031 = vpack.c.b16 %v910, %v909
        %v1032 = vpack.c.b16 %v912, %v911
        %v1033 = vpack.c.b16 %v914, %v913
        %v1034 = vpack.c.b16 %v916, %v915
        %v1035 = vpack.c.b16 %v918, %v917
        %v1036 = vpack.c.b16 %v920, %v919
        %v1037 = vpack.c.b16 %v922, %v921
        %v1038 = vpack.c.b16 %v924, %v923
        %v1039 = vpack.c.b16 %v926, %v925
        %v1040 = vpack.c.b16 %v928, %v927
        %v1041 = vpack.c.b16 %v930, %v929
        %v1042 = vpack.c.b16 %v932, %v931
        %v1043 = vpack.c.b16 %v934, %v933
        %v1044 = vpack.c.b16 %v936, %v935
        %v1045 = vpack.c.b16 %v938, %v937
        %v1046 = vpack.c.b16 %v940, %v939
        %v1047 = vpack.c.b16 %v942, %v941
        %v1048 = vpack.c.b16 %v944, %v943
        %v1049 = vpack.c.b16 %v946, %v945
        %v1050 = vpack.c.b16 %v948, %v947
        %v1051 = vpack.c.b16 %v950, %v949
        %v1052 = vpack.c.b16 %v952, %v951
        %v1053 = vpack.c.b16 %v954, %v953
        %v1054 = vpack.c.b16 %v956, %v955
        %v1055 = vpack.c.b16 %v958, %v957
        %v1056 = vpack.c.b16 %v960, %v959
        %v1057 = vpack.c.b16 %v962, %v961
        %v1058 = vpack.c.b16 %v964, %v963
        %v1059 = vpack.c.b16 %v966, %v965
        %v1060 = vpack.c.b16 %v968, %v967
        %v1061 = vpack.c.b16 %v970, %v969
        %v1062 = vpack.c.b16 %v972, %v971
        %v1063 = vpack.c.b16 %v974, %v973
        %v1064 = vpack.c.b16 %v976, %v975
        %v1065 = vpack.c.b16 %v978, %v977
        %v1066 = vpack.c.b16 %v980, %v979
        %v1067 = vpack.c.b16 %v982, %v981
        %v1068 = vpack.c.b16 %v984, %v983
        %v1069 = vpack.c.b16 %v986, %v985
        %v1070 = vpack.c.b16 %v988, %v987
        %v1071 = vpack.c.b16 %v990, %v989
        %v1072 = vpack.c.b16 %v992, %v991
        %v1073 = vpack.c.b16 %v994, %v993
        %v1074 = vpack.c.b16 %v996, %v995
        %v1075 = vpack.c.b16 %v998, %v997
        %v1076 = vpack.c.b16 %v1000, %v999
        %v1077 = vpack.c.b16 %v1002, %v1001
        %v1078 = vpack.c.b16 %v1004, %v1003
        %v1079 = vpack.c.b16 %v1006, %v1005
        %v1080 = vpack.c.b16 %v1008, %v1007
        %1153 = vmatpush.bf16.msra.mxu0 %v1016
        %1154 = vmatpush.bf16.msra.mxu0 %v1015
        %1155 = vmatpush.bf16.msra.mxu0 %v1014
        %1156 = vmatpush.bf16.msra.mxu0 %v1013
        %1157 = vmatpush.bf16.msra.mxu0 %v1012
        %1158 = vmatpush.bf16.msra.mxu0 %v1011
        %1159 = vmatpush.bf16.msra.mxu0 %v1010
        %1160 = vmatpush.bf16.msra.mxu0 %v1009
        %1161 = vmatmul.bf16.gmra.mxu0 %v566
        %v1162 = vpop.f32.mrf.mxu0
        %v1163 = vadd.f32 0.0, %v1162
        %v1164 = vpop.f32.mrf.mxu0
        %v1165 = vadd.f32 0.0, %v1164
        %1166 = vdwg.mxu0
        %1167 = vmatpush.bf16.msra.mxu0 %v1024
        %1168 = vmatpush.bf16.msra.mxu0 %v1023
        %1169 = vmatpush.bf16.msra.mxu0 %v1022
        %1170 = vmatpush.bf16.msra.mxu0 %v1021
        %1171 = vmatpush.bf16.msra.mxu0 %v1020
        %1172 = vmatpush.bf16.msra.mxu0 %v1019
        %1173 = vmatpush.bf16.msra.mxu0 %v1018
        %1174 = vmatpush.bf16.msra.mxu0 %v1017
        %1175 = vmatmul.bf16.gmra.mxu0 %v567
        %v1176 = vpop.f32.mrf.mxu0
        %v1177 = vadd.f32 %v1163, %v1176
        %v1178 = vpop.f32.mrf.mxu0
        %v1179 = vadd.f32 %v1165, %v1178
        %1180 = vdwg.mxu0
        %1181 = vmatpush.bf16.msra.mxu0 %v1032
        %1182 = vmatpush.bf16.msra.mxu0 %v1031
        %1183 = vmatpush.bf16.msra.mxu0 %v1030
        %1184 = vmatpush.bf16.msra.mxu0 %v1029
        %1185 = vmatpush.bf16.msra.mxu0 %v1028
        %1186 = vmatpush.bf16.msra.mxu0 %v1027
        %1187 = vmatpush.bf16.msra.mxu0 %v1026
        %1188 = vmatpush.bf16.msra.mxu0 %v1025
        %1189 = vmatmul.bf16.gmra.mxu0 %v568
        %v1190 = vpop.f32.mrf.mxu0
        %v1191 = vadd.f32 %v1177, %v1190
        %v1192 = vpop.f32.mrf.mxu0
        %v1193 = vadd.f32 %v1179, %v1192
        %1194 = vdwg.mxu0
        %1195 = vmatpush.bf16.msra.mxu0 %v1040
        %1196 = vmatpush.bf16.msra.mxu0 %v1039
        %1197 = vmatpush.bf16.msra.mxu0 %v1038
        %1198 = vmatpush.bf16.msra.mxu0 %v1037
        %1199 = vmatpush.bf16.msra.mxu0 %v1036
        %1200 = vmatpush.bf16.msra.mxu0 %v1035
        %1201 = vmatpush.bf16.msra.mxu0 %v1034
        %1202 = vmatpush.bf16.msra.mxu0 %v1033
        %1203 = vmatmul.bf16.gmra.mxu0 %v569
        %v1204 = vpop.f32.mrf.mxu0
        %v1205 = vadd.f32 %v1191, %v1204
        %v1206 = vpop.f32.mrf.mxu0
        %v1207 = vadd.f32 %v1193, %v1206
        %1208 = vdwg.mxu0
        %1209 = vmatpush.bf16.msra.mxu0 %v1048
        %1210 = vmatpush.bf16.msra.mxu0 %v1047
        %1211 = vmatpush.bf16.msra.mxu0 %v1046
        %1212 = vmatpush.bf16.msra.mxu0 %v1045
        %1213 = vmatpush.bf16.msra.mxu0 %v1044
        %1214 = vmatpush.bf16.msra.mxu0 %v1043
        %1215 = vmatpush.bf16.msra.mxu0 %v1042
        %1216 = vmatpush.bf16.msra.mxu0 %v1041
        %1217 = vmatmul.bf16.gmra.mxu0 %v570
        %v1218 = vpop.f32.mrf.mxu0
        %v1219 = vadd.f32 %v1205, %v1218
        %v1220 = vpop.f32.mrf.mxu0
        %v1221 = vadd.f32 %v1207, %v1220
        %1222 = vdwg.mxu0
        %1223 = vmatpush.bf16.msra.mxu0 %v1056
        %1224 = vmatpush.bf16.msra.mxu0 %v1055
        %1225 = vmatpush.bf16.msra.mxu0 %v1054
        %1226 = vmatpush.bf16.msra.mxu0 %v1053
        %1227 = vmatpush.bf16.msra.mxu0 %v1052
        %1228 = vmatpush.bf16.msra.mxu0 %v1051
        %1229 = vmatpush.bf16.msra.mxu0 %v1050
        %1230 = vmatpush.bf16.msra.mxu0 %v1049
        %1231 = vmatmul.bf16.gmra.mxu0 %v571
        %v1232 = vpop.f32.mrf.mxu0
        %v1233 = vadd.f32 %v1219, %v1232
        %v1234 = vpop.f32.mrf.mxu0
        %v1235 = vadd.f32 %v1221, %v1234
        %1236 = vdwg.mxu0
        %1237 = vmatpush.bf16.msra.mxu0 %v1064
        %1238 = vmatpush.bf16.msra.mxu0 %v1063
        %1239 = vmatpush.bf16.msra.mxu0 %v1062
        %1240 = vmatpush.bf16.msra.mxu0 %v1061
        %1241 = vmatpush.bf16.msra.mxu0 %v1060
        %1242 = vmatpush.bf16.msra.mxu0 %v1059
        %1243 = vmatpush.bf16.msra.mxu0 %v1058
        %1244 = vmatpush.bf16.msra.mxu0 %v1057
        %1245 = vmatmul.bf16.gmra.mxu0 %v572
        %v1246 = vpop.f32.mrf.mxu0
        %v1247 = vadd.f32 %v1233, %v1246
        %v1248 = vpop.f32.mrf.mxu0
        %v1249 = vadd.f32 %v1235, %v1248
        %1250 = vdwg.mxu0
        %1251 = vmatpush.bf16.msra.mxu0 %v1072
        %1252 = vmatpush.bf16.msra.mxu0 %v1071
        %1253 = vmatpush.bf16.msra.mxu0 %v1070
        %1254 = vmatpush.bf16.msra.mxu0 %v1069
        %1255 = vmatpush.bf16.msra.mxu0 %v1068
        %1256 = vmatpush.bf16.msra.mxu0 %v1067
        %1257 = vmatpush.bf16.msra.mxu0 %v1066
        %1258 = vmatpush.bf16.msra.mxu0 %v1065
        %1259 = vmatmul.bf16.gmra.mxu0 %v573
        %v1260 = vpop.f32.mrf.mxu0
        %v1261 = vadd.f32 %v1247, %v1260
        %v1262 = vpop.f32.mrf.mxu0
        %v1263 = vadd.f32 %v1249, %v1262
        %1264 = vdwg.mxu0
        %1265 = vmatpush.bf16.msra.mxu0 %v1080
        %1266 = vmatpush.bf16.msra.mxu0 %v1079
        %1267 = vmatpush.bf16.msra.mxu0 %v1078
        %1268 = vmatpush.bf16.msra.mxu0 %v1077
        %1269 = vmatpush.bf16.msra.mxu0 %v1076
        %1270 = vmatpush.bf16.msra.mxu0 %v1075
        %1271 = vmatpush.bf16.msra.mxu0 %v1074
        %1272 = vmatpush.bf16.msra.mxu0 %v1073
        %1273 = vmatmul.bf16.gmra.mxu0 %v574
        %v1274 = vpop.f32.mrf.mxu0
        %v1275 = vadd.f32 %v1261, %v1274
        %v1276 = vpop.f32.mrf.mxu0
        %v1277 = vadd.f32 %v1263, %v1276
        %1278 = vdwg.mxu0
        %v1279 = vadd.f32 %v575, %v1275
        %v1280 = vadd.f32 %v576, %v1277
        %1281 = vst [vmem:[#allocation2] sm:$0xff] %v1279
        %1282 = vst [vmem:[#allocation2 + $0x8] sm:$0xff] %v1280
        %p1283 = scmp.eq.s32.totalorder %s24, 1
        // Predicated region
        $region65: #{tpu_custom_call.1} parent=39 // pred_check
          %p1284 = pneg %p1283
        $region66: #{tpu_custom_call.1} parent=39 // pred_check_branch
          %1286 = sbr.rel (%p1284) target = $region68
        $region67: #{tpu_custom_call.1} parent=39 // pred_region
          %v1287 = vld [vmem:[#allocation2] sm:$0xff]
          %v1288 = vld [vmem:[#allocation2 + $0x8] sm:$0xff]
          %v1289 = vld [vmem:[#allocation8] sm:$0xf]
          %v1290 = vld [vmem:[#allocation8 + $0x4] sm:$0xf]
          %v1291 = vld [vmem:[#allocation8 + $0x8] sm:$0xf]
          %v1292 = vld [vmem:[#allocation8 + $0xc] sm:$0xf]
          %v1293 = vld [vmem:[#allocation8 + $0x10] sm:$0xf]
          %v1294 = vld [vmem:[#allocation8 + $0x14] sm:$0xf]
          %v1295 = vld [vmem:[#allocation8 + $0x18] sm:$0xf]
          %v1296 = vld [vmem:[#allocation8 + $0x1c] sm:$0xf]
          %v1297 = vld [vmem:[#allocation8 + $0x20] sm:$0xf]
          %v1298 = vld [vmem:[#allocation8 + $0x24] sm:$0xf]
          %v1299 = vld [vmem:[#allocation8 + $0x28] sm:$0xf]
          %v1300 = vld [vmem:[#allocation8 + $0x2c] sm:$0xf]
          %v1301 = vld [vmem:[#allocation8 + $0x30] sm:$0xf]
          %v1302 = vld [vmem:[#allocation8 + $0x34] sm:$0xf]
          %v1303 = vld [vmem:[#allocation8 + $0x38] sm:$0xf]
          %v1304 = vld [vmem:[#allocation8 + $0x3c] sm:$0xf]
          %v1305 = vld [vmem:[#allocation8 + $0x40] sm:$0xf]
          %v1306 = vld [vmem:[#allocation8 + $0x44] sm:$0xf]
          %v1307 = vld [vmem:[#allocation8 + $0x48] sm:$0xf]
          %v1308 = vld [vmem:[#allocation8 + $0x4c] sm:$0xf]
          %v1309 = vld [vmem:[#allocation8 + $0x50] sm:$0xf]
          %v1310 = vld [vmem:[#allocation8 + $0x54] sm:$0xf]
          %v1311 = vld [vmem:[#allocation8 + $0x58] sm:$0xf]
          %v1312 = vld [vmem:[#allocation8 + $0x5c] sm:$0xf]
          %v1313 = vld [vmem:[#allocation8 + $0x60] sm:$0xf]
          %v1314 = vld [vmem:[#allocation8 + $0x64] sm:$0xf]
          %v1315 = vld [vmem:[#allocation8 + $0x68] sm:$0xf]
          %v1316 = vld [vmem:[#allocation8 + $0x6c] sm:$0xf]
          %v1317 = vld [vmem:[#allocation8 + $0x70] sm:$0xf]
          %v1318 = vld [vmem:[#allocation8 + $0x74] sm:$0xf]
          %v1319 = vld [vmem:[#allocation8 + $0x78] sm:$0xf]
          %v1320 = vld [vmem:[#allocation8 + $0x7c] sm:$0xf]
          %v1321 = vld [vmem:[#allocation8 + $0x80] sm:$0xf]
          %v1322 = vld [vmem:[#allocation8 + $0x84] sm:$0xf]
          %v1323 = vld [vmem:[#allocation8 + $0x88] sm:$0xf]
          %v1324 = vld [vmem:[#allocation8 + $0x8c] sm:$0xf]
          %v1325 = vld [vmem:[#allocation8 + $0x90] sm:$0xf]
          %v1326 = vld [vmem:[#allocation8 + $0x94] sm:$0xf]
          %v1327 = vld [vmem:[#allocation8 + $0x98] sm:$0xf]
          %v1328 = vld [vmem:[#allocation8 + $0x9c] sm:$0xf]
          %v1329 = vld [vmem:[#allocation8 + $0xa0] sm:$0xf]
          %v1330 = vld [vmem:[#allocation8 + $0xa4] sm:$0xf]
          %v1331 = vld [vmem:[#allocation8 + $0xa8] sm:$0xf]
          %v1332 = vld [vmem:[#allocation8 + $0xac] sm:$0xf]
          %v1333 = vld [vmem:[#allocation8 + $0xb0] sm:$0xf]
          %v1334 = vld [vmem:[#allocation8 + $0xb4] sm:$0xf]
          %v1335 = vld [vmem:[#allocation8 + $0xb8] sm:$0xf]
          %v1336 = vld [vmem:[#allocation8 + $0xbc] sm:$0xf]
          %v1337 = vld [vmem:[#allocation8 + $0xc0] sm:$0xf]
          %v1338 = vld [vmem:[#allocation8 + $0xc4] sm:$0xf]
          %v1339 = vld [vmem:[#allocation8 + $0xc8] sm:$0xf]
          %v1340 = vld [vmem:[#allocation8 + $0xcc] sm:$0xf]
          %v1341 = vld [vmem:[#allocation8 + $0xd0] sm:$0xf]
          %v1342 = vld [vmem:[#allocation8 + $0xd4] sm:$0xf]
          %v1343 = vld [vmem:[#allocation8 + $0xd8] sm:$0xf]
          %v1344 = vld [vmem:[#allocation8 + $0xdc] sm:$0xf]
          %v1345 = vld [vmem:[#allocation8 + $0xe0] sm:$0xf]
          %v1346 = vld [vmem:[#allocation8 + $0xe4] sm:$0xf]
          %v1347 = vld [vmem:[#allocation8 + $0xe8] sm:$0xf]
          %v1348 = vld [vmem:[#allocation8 + $0xec] sm:$0xf]
          %v1349 = vld [vmem:[#allocation8 + $0xf0] sm:$0xf]
          %v1350 = vld [vmem:[#allocation8 + $0xf4] sm:$0xf]
          %v1351 = vld [vmem:[#allocation8 + $0xf8] sm:$0xf]
          %v1352 = vld [vmem:[#allocation8 + $0xfc] sm:$0xf]
          %v1353 = vld [vmem:[#allocation8 + $0x100] sm:$0xf]
          %v1354 = vld [vmem:[#allocation8 + $0x104] sm:$0xf]
          %v1355 = vld [vmem:[#allocation8 + $0x108] sm:$0xf]
          %v1356 = vld [vmem:[#allocation8 + $0x10c] sm:$0xf]
          %v1357 = vld [vmem:[#allocation8 + $0x110] sm:$0xf]
          %v1358 = vld [vmem:[#allocation8 + $0x114] sm:$0xf]
          %v1359 = vld [vmem:[#allocation8 + $0x118] sm:$0xf]
          %v1360 = vld [vmem:[#allocation8 + $0x11c] sm:$0xf]
          %v1361 = vld [vmem:[#allocation8 + $0x120] sm:$0xf]
          %v1362 = vld [vmem:[#allocation8 + $0x124] sm:$0xf]
          %v1363 = vld [vmem:[#allocation8 + $0x128] sm:$0xf]
          %v1364 = vld [vmem:[#allocation8 + $0x12c] sm:$0xf]
          %v1365 = vld [vmem:[#allocation8 + $0x130] sm:$0xf]
          %v1366 = vld [vmem:[#allocation8 + $0x134] sm:$0xf]
          %v1367 = vld [vmem:[#allocation8 + $0x138] sm:$0xf]
          %v1368 = vld [vmem:[#allocation8 + $0x13c] sm:$0xf]
          %v1369 = vld [vmem:[#allocation8 + $0x140] sm:$0xf]
          %v1370 = vld [vmem:[#allocation8 + $0x144] sm:$0xf]
          %v1371 = vld [vmem:[#allocation8 + $0x148] sm:$0xf]
          %v1372 = vld [vmem:[#allocation8 + $0x14c] sm:$0xf]
          %v1373 = vld [vmem:[#allocation8 + $0x150] sm:$0xf]
          %v1374 = vld [vmem:[#allocation8 + $0x154] sm:$0xf]
          %v1375 = vld [vmem:[#allocation8 + $0x158] sm:$0xf]
          %v1376 = vld [vmem:[#allocation8 + $0x15c] sm:$0xf]
          %v1377 = vld [vmem:[#allocation8 + $0x160] sm:$0xf]
          %v1378 = vld [vmem:[#allocation8 + $0x164] sm:$0xf]
          %v1379 = vld [vmem:[#allocation8 + $0x168] sm:$0xf]
          %v1380 = vld [vmem:[#allocation8 + $0x16c] sm:$0xf]
          %v1381 = vld [vmem:[#allocation8 + $0x170] sm:$0xf]
          %v1382 = vld [vmem:[#allocation8 + $0x174] sm:$0xf]
          %v1383 = vld [vmem:[#allocation8 + $0x178] sm:$0xf]
          %v1384 = vld [vmem:[#allocation8 + $0x17c] sm:$0xf]
          %v1385 = vld [vmem:[#allocation8 + $0x180] sm:$0xf]
          %v1386 = vld [vmem:[#allocation8 + $0x184] sm:$0xf]
          %v1387 = vld [vmem:[#allocation8 + $0x188] sm:$0xf]
          %v1388 = vld [vmem:[#allocation8 + $0x18c] sm:$0xf]
          %v1389 = vld [vmem:[#allocation8 + $0x190] sm:$0xf]
          %v1390 = vld [vmem:[#allocation8 + $0x194] sm:$0xf]
          %v1391 = vld [vmem:[#allocation8 + $0x198] sm:$0xf]
          %v1392 = vld [vmem:[#allocation8 + $0x19c] sm:$0xf]
          %v1393 = vld [vmem:[#allocation8 + $0x1a0] sm:$0xf]
          %v1394 = vld [vmem:[#allocation8 + $0x1a4] sm:$0xf]
          %v1395 = vld [vmem:[#allocation8 + $0x1a8] sm:$0xf]
          %v1396 = vld [vmem:[#allocation8 + $0x1ac] sm:$0xf]
          %v1397 = vld [vmem:[#allocation8 + $0x1b0] sm:$0xf]
          %v1398 = vld [vmem:[#allocation8 + $0x1b4] sm:$0xf]
          %v1399 = vld [vmem:[#allocation8 + $0x1b8] sm:$0xf]
          %v1400 = vld [vmem:[#allocation8 + $0x1bc] sm:$0xf]
          %v1401 = vld [vmem:[#allocation8 + $0x1c0] sm:$0xf]
          %v1402 = vld [vmem:[#allocation8 + $0x1c4] sm:$0xf]
          %v1403 = vld [vmem:[#allocation8 + $0x1c8] sm:$0xf]
          %v1404 = vld [vmem:[#allocation8 + $0x1cc] sm:$0xf]
          %v1405 = vld [vmem:[#allocation8 + $0x1d0] sm:$0xf]
          %v1406 = vld [vmem:[#allocation8 + $0x1d4] sm:$0xf]
          %v1407 = vld [vmem:[#allocation8 + $0x1d8] sm:$0xf]
          %v1408 = vld [vmem:[#allocation8 + $0x1dc] sm:$0xf]
          %v1409 = vld [vmem:[#allocation8 + $0x1e0] sm:$0xf]
          %v1410 = vld [vmem:[#allocation8 + $0x1e4] sm:$0xf]
          %v1411 = vld [vmem:[#allocation8 + $0x1e8] sm:$0xf]
          %v1412 = vld [vmem:[#allocation8 + $0x1ec] sm:$0xf]
          %v1413 = vld [vmem:[#allocation8 + $0x1f0] sm:$0xf]
          %v1414 = vld [vmem:[#allocation8 + $0x1f4] sm:$0xf]
          %v1415 = vld [vmem:[#allocation8 + $0x1f8] sm:$0xf]
          %v1416 = vld [vmem:[#allocation8 + $0x1fc] sm:$0xf]
          %v1417 = vld [vmem:[#allocation8 + $0x200] sm:$0xf]
          %v1418 = vld [vmem:[#allocation8 + $0x204] sm:$0xf]
          %v1419 = vld [vmem:[#allocation8 + $0x208] sm:$0xf]
          %v1420 = vld [vmem:[#allocation8 + $0x20c] sm:$0xf]
          %v1421 = vld [vmem:[#allocation8 + $0x210] sm:$0xf]
          %v1422 = vld [vmem:[#allocation8 + $0x214] sm:$0xf]
          %v1423 = vld [vmem:[#allocation8 + $0x218] sm:$0xf]
          %v1424 = vld [vmem:[#allocation8 + $0x21c] sm:$0xf]
          %v1425 = vld [vmem:[#allocation8 + $0x220] sm:$0xf]
          %v1426 = vld [vmem:[#allocation8 + $0x224] sm:$0xf]
          %v1427 = vld [vmem:[#allocation8 + $0x228] sm:$0xf]
          %v1428 = vld [vmem:[#allocation8 + $0x22c] sm:$0xf]
          %v1429 = vld [vmem:[#allocation8 + $0x230] sm:$0xf]
          %v1430 = vld [vmem:[#allocation8 + $0x234] sm:$0xf]
          %v1431 = vld [vmem:[#allocation8 + $0x238] sm:$0xf]
          %v1432 = vld [vmem:[#allocation8 + $0x23c] sm:$0xf]
          %v1433 = vsub.f32 0.0, %v1287
          %v1434 = vsub.f32 0.0, %v1288
          %v1435 = vmul.f32 %v1433, 1.442695
          %v1436 = vpow.pop %v1435
          %v1437 = vmul.f32 %v1434, 1.442695
          %v1438 = vpow.pop %v1437
          %v1439 = vadd.f32 %v1436, 1.0
          %v1440 = vadd.f32 %v1438, 1.0
          %v1441 = vrcp.pop %v1439
          %v1442 = vrcp.pop %v1440
          %v1443 = vmul.f32 %v1287, %v1441
          %v1444 = vmul.f32 %v1288, %v1442
          %v1445 = vsub.f32 %v1287, -2.2
          %v1446 = vsub.f32 %v1288, -2.2
          %v1447 = vmul.f32 %v1445, 2.5
          %v1448 = vmul.f32 %v1446, 2.5
          %v1449 = vfloor.f32 %v1447
          %v1450 = vfloor.f32 %v1448
          %v1451 = vsub.f32 %v1447, %v1449
          %v1452 = vsub.f32 %v1448, %v1450
          %v1453 = vmul.f32 %v1451, %v1451
          %v1454 = vmul.f32 %v1452, %v1452
          %v1455 = vmul.f32 %v1453, %v1451
          %v1456 = vmul.f32 %v1454, %v1452
          %v1457 = vmul.f32 %v1455, 0.16666667
          %v1458 = vmul.f32 %v1456, 0.16666667
          %v1459 = vmul.f32 %v1451, 3.0
          %v1460 = vmul.f32 %v1452, 3.0
          %v1461 = vsub.f32 3.0, %v1459
          %v1462 = vsub.f32 3.0, %v1460
          %v1463 = vmul.f32 %v1461, %v1451
          %v1464 = vmul.f32 %v1462, %v1452
          %v1465 = vadd.f32 %v1463, 3.0
          %v1466 = vadd.f32 %v1464, 3.0
          %v1467 = vmul.f32 %v1465, %v1451
          %v1468 = vmul.f32 %v1466, %v1452
          %v1469 = vadd.f32 %v1467, 1.0
          %v1470 = vadd.f32 %v1468, 1.0
          %v1471 = vmul.f32 %v1469, 0.16666667
          %v1472 = vmul.f32 %v1470, 0.16666667
          %v1473 = vsub.f32 %v1459, 6.0
          %v1474 = vsub.f32 %v1460, 6.0
          %v1475 = vmul.f32 %v1473, %v1453
          %v1476 = vmul.f32 %v1474, %v1454
          %v1477 = vadd.f32 %v1475, 4.0
          %v1478 = vadd.f32 %v1476, 4.0
          %v1479 = vmul.f32 %v1477, 0.16666667
          %v1480 = vmul.f32 %v1478, 0.16666667
          %v1481 = vsub.f32 1.0, %v1451
          %v1482 = vsub.f32 1.0, %v1452
          %v1483 = vmul.f32 %v1481, %v1481
          %v1484 = vmul.f32 %v1482, %v1482
          %v1485 = vmul.f32 %v1483, %v1481
          %v1486 = vmul.f32 %v1484, %v1482
          %v1487 = vmul.f32 %v1485, 0.16666667
          %v1488 = vmul.f32 %v1486, 0.16666667
          %vm1489 = vcmp.eq.f32.partialorder %v1449, 0.0
          %vm1490 = vcmp.eq.f32.partialorder %v1450, 0.0
          %v1491 = vsel %vm1489, 1, 0
          %v1492 = vsel %vm1490, 1, 0
          %v1493 = vcvt.s32.f32 %v1491
          %v1494 = vcvt.s32.f32 %v1492
          %vm1495 = vcmp.eq.f32.partialorder %v1449, 1.0
          %vm1496 = vcmp.eq.f32.partialorder %v1450, 1.0
          %v1497 = vsel %vm1495, 1, 0
          %v1498 = vsel %vm1496, 1, 0
          %v1499 = vcvt.s32.f32 %v1497
          %v1500 = vcvt.s32.f32 %v1498
          %vm1501 = vcmp.eq.f32.partialorder %v1449, 2.0
          %vm1502 = vcmp.eq.f32.partialorder %v1450, 2.0
          %v1503 = vsel %vm1501, 1, 0
          %v1504 = vsel %vm1502, 1, 0
          %v1505 = vcvt.s32.f32 %v1503
          %v1506 = vcvt.s32.f32 %v1504
          %vm1507 = vcmp.eq.f32.partialorder %v1449, 3.0
          %vm1508 = vcmp.eq.f32.partialorder %v1450, 3.0
          %v1509 = vsel %vm1507, 1, 0
          %v1510 = vsel %vm1508, 1, 0
          %v1511 = vcvt.s32.f32 %v1509
          %v1512 = vcvt.s32.f32 %v1510
          %vm1513 = vcmp.eq.f32.partialorder %v1449, 4.0
          %vm1514 = vcmp.eq.f32.partialorder %v1450, 4.0
          %v1515 = vsel %vm1513, 1, 0
          %v1516 = vsel %vm1514, 1, 0
          %v1517 = vcvt.s32.f32 %v1515
          %v1518 = vcvt.s32.f32 %v1516
          %vm1519 = vcmp.eq.f32.partialorder %v1449, 5.0
          %vm1520 = vcmp.eq.f32.partialorder %v1450, 5.0
          %v1521 = vsel %vm1519, 1, 0
          %v1522 = vsel %vm1520, 1, 0
          %v1523 = vcvt.s32.f32 %v1521
          %v1524 = vcvt.s32.f32 %v1522
          %vm1525 = vcmp.eq.f32.partialorder %v1449, 6.0
          %vm1526 = vcmp.eq.f32.partialorder %v1450, 6.0
          %v1527 = vsel %vm1525, 1, 0
          %v1528 = vsel %vm1526, 1, 0
          %v1529 = vcvt.s32.f32 %v1527
          %v1530 = vcvt.s32.f32 %v1528
          %vm1531 = vcmp.eq.f32.partialorder %v1449, 7.0
          %vm1532 = vcmp.eq.f32.partialorder %v1450, 7.0
          %v1533 = vsel %vm1531, 1, 0
          %v1534 = vsel %vm1532, 1, 0
          %v1535 = vcvt.s32.f32 %v1533
          %v1536 = vcvt.s32.f32 %v1534
          %vm1537 = vcmp.eq.f32.partialorder %v1449, 8.0
          %vm1538 = vcmp.eq.f32.partialorder %v1450, 8.0
          %v1539 = vsel %vm1537, 1, 0
          %v1540 = vsel %vm1538, 1, 0
          %v1541 = vcvt.s32.f32 %v1539
          %v1542 = vcvt.s32.f32 %v1540
          %vm1543 = vcmp.eq.f32.partialorder %v1449, 9.0
          %vm1544 = vcmp.eq.f32.partialorder %v1450, 9.0
          %v1545 = vsel %vm1543, 1, 0
          %v1546 = vsel %vm1544, 1, 0
          %v1547 = vcvt.s32.f32 %v1545
          %v1548 = vcvt.s32.f32 %v1546
          %vm1549 = vcmp.eq.f32.partialorder %v1449, 10.0
          %vm1550 = vcmp.eq.f32.partialorder %v1450, 10.0
          %v1551 = vsel %vm1549, 1, 0
          %v1552 = vsel %vm1550, 1, 0
          %v1553 = vcvt.s32.f32 %v1551
          %v1554 = vcvt.s32.f32 %v1552
          %v1555 = vmul.f32 %v1493, %v1457
          %v1556 = vmul.f32 %v1494, %v1458
          %v1557 = vmul.f32 %v1499, %v1471
          %v1558 = vmul.f32 %v1500, %v1472
          %v1559 = vadd.f32 %v1555, %v1557
          %v1560 = vadd.f32 %v1556, %v1558
          %v1561 = vmul.f32 %v1505, %v1479
          %v1562 = vmul.f32 %v1506, %v1480
          %v1563 = vadd.f32 %v1559, %v1561
          %v1564 = vadd.f32 %v1560, %v1562
          %v1565 = vmul.f32 %v1511, %v1487
          %v1566 = vmul.f32 %v1512, %v1488
          %v1567 = vadd.f32 %v1563, %v1565
          %v1568 = vadd.f32 %v1564, %v1566
          %v1569 = vmul.f32 %v1499, %v1457
          %v1570 = vmul.f32 %v1500, %v1458
          %v1571 = vmul.f32 %v1505, %v1471
          %v1572 = vmul.f32 %v1506, %v1472
          %v1573 = vadd.f32 %v1569, %v1571
          %v1574 = vadd.f32 %v1570, %v1572
          %v1575 = vmul.f32 %v1511, %v1479
          %v1576 = vmul.f32 %v1512, %v1480
          %v1577 = vadd.f32 %v1573, %v1575
          %v1578 = vadd.f32 %v1574, %v1576
          %v1579 = vmul.f32 %v1517, %v1487
          %v1580 = vmul.f32 %v1518, %v1488
          %v1581 = vadd.f32 %v1577, %v1579
          %v1582 = vadd.f32 %v1578, %v1580
          %v1583 = vmul.f32 %v1505, %v1457
          %v1584 = vmul.f32 %v1506, %v1458
          %v1585 = vmul.f32 %v1511, %v1471
          %v1586 = vmul.f32 %v1512, %v1472
          %v1587 = vadd.f32 %v1583, %v1585
          %v1588 = vadd.f32 %v1584, %v1586
          %v1589 = vmul.f32 %v1517, %v1479
          %v1590 = vmul.f32 %v1518, %v1480
          %v1591 = vadd.f32 %v1587, %v1589
          %v1592 = vadd.f32 %v1588, %v1590
          %v1593 = vmul.f32 %v1523, %v1487
          %v1594 = vmul.f32 %v1524, %v1488
          %v1595 = vadd.f32 %v1591, %v1593
          %v1596 = vadd.f32 %v1592, %v1594
          %v1597 = vmul.f32 %v1511, %v1457
          %v1598 = vmul.f32 %v1512, %v1458
          %v1599 = vmul.f32 %v1517, %v1471
          %v1600 = vmul.f32 %v1518, %v1472
          %v1601 = vadd.f32 %v1597, %v1599
          %v1602 = vadd.f32 %v1598, %v1600
          %v1603 = vmul.f32 %v1523, %v1479
          %v1604 = vmul.f32 %v1524, %v1480
          %v1605 = vadd.f32 %v1601, %v1603
          %v1606 = vadd.f32 %v1602, %v1604
          %v1607 = vmul.f32 %v1529, %v1487
          %v1608 = vmul.f32 %v1530, %v1488
          %v1609 = vadd.f32 %v1605, %v1607
          %v1610 = vadd.f32 %v1606, %v1608
          %v1611 = vmul.f32 %v1517, %v1457
          %v1612 = vmul.f32 %v1518, %v1458
          %v1613 = vmul.f32 %v1523, %v1471
          %v1614 = vmul.f32 %v1524, %v1472
          %v1615 = vadd.f32 %v1611, %v1613
          %v1616 = vadd.f32 %v1612, %v1614
          %v1617 = vmul.f32 %v1529, %v1479
          %v1618 = vmul.f32 %v1530, %v1480
          %v1619 = vadd.f32 %v1615, %v1617
          %v1620 = vadd.f32 %v1616, %v1618
          %v1621 = vmul.f32 %v1535, %v1487
          %v1622 = vmul.f32 %v1536, %v1488
          %v1623 = vadd.f32 %v1619, %v1621
          %v1624 = vadd.f32 %v1620, %v1622
          %v1625 = vmul.f32 %v1523, %v1457
          %v1626 = vmul.f32 %v1524, %v1458
          %v1627 = vmul.f32 %v1529, %v1471
          %v1628 = vmul.f32 %v1530, %v1472
          %v1629 = vadd.f32 %v1625, %v1627
          %v1630 = vadd.f32 %v1626, %v1628
          %v1631 = vmul.f32 %v1535, %v1479
          %v1632 = vmul.f32 %v1536, %v1480
          %v1633 = vadd.f32 %v1629, %v1631
          %v1634 = vadd.f32 %v1630, %v1632
          %v1635 = vmul.f32 %v1541, %v1487
          %v1636 = vmul.f32 %v1542, %v1488
          %v1637 = vadd.f32 %v1633, %v1635
          %v1638 = vadd.f32 %v1634, %v1636
          %v1639 = vmul.f32 %v1529, %v1457
          %v1640 = vmul.f32 %v1530, %v1458
          %v1641 = vmul.f32 %v1535, %v1471
          %v1642 = vmul.f32 %v1536, %v1472
          %v1643 = vadd.f32 %v1639, %v1641
          %v1644 = vadd.f32 %v1640, %v1642
          %v1645 = vmul.f32 %v1541, %v1479
          %v1646 = vmul.f32 %v1542, %v1480
          %v1647 = vadd.f32 %v1643, %v1645
          %v1648 = vadd.f32 %v1644, %v1646
          %v1649 = vmul.f32 %v1547, %v1487
          %v1650 = vmul.f32 %v1548, %v1488
          %v1651 = vadd.f32 %v1647, %v1649
          %v1652 = vadd.f32 %v1648, %v1650
          %v1653 = vmul.f32 %v1535, %v1457
          %v1654 = vmul.f32 %v1536, %v1458
          %v1655 = vmul.f32 %v1541, %v1471
          %v1656 = vmul.f32 %v1542, %v1472
          %v1657 = vadd.f32 %v1653, %v1655
          %v1658 = vadd.f32 %v1654, %v1656
          %v1659 = vmul.f32 %v1547, %v1479
          %v1660 = vmul.f32 %v1548, %v1480
          %v1661 = vadd.f32 %v1657, %v1659
          %v1662 = vadd.f32 %v1658, %v1660
          %v1663 = vmul.f32 %v1553, %v1487
          %v1664 = vmul.f32 %v1554, %v1488
          %v1665 = vadd.f32 %v1661, %v1663
          %v1666 = vadd.f32 %v1662, %v1664
          %v1667 = vpack.c.bf16 %v1444, %v1443
          %v1668 = vpack.c.bf16 %v1568, %v1567
          %v1669 = vpack.c.bf16 %v1582, %v1581
          %v1670 = vpack.c.bf16 %v1596, %v1595
          %v1671 = vpack.c.bf16 %v1610, %v1609
          %v1672 = vpack.c.bf16 %v1624, %v1623
          %v1673 = vpack.c.bf16 %v1638, %v1637
          %v1674 = vpack.c.bf16 %v1652, %v1651
          %v1675 = vpack.c.bf16 %v1666, %v1665
          %v1820 = vunpack.c.l.b16 %v1289
          %v1821 = vunpack.c.l.b16 %v1290
          %v1822 = vunpack.c.l.b16 %v1291
          %v1823 = vunpack.c.l.b16 %v1292
          %v1824 = vunpack.c.l.b16 %v1293
          %v1825 = vunpack.c.l.b16 %v1294
          %v1826 = vunpack.c.l.b16 %v1295
          %v1827 = vunpack.c.l.b16 %v1296
          %v1828 = vunpack.c.l.b16 %v1297
          %v1829 = vunpack.c.l.b16 %v1298
          %v1830 = vunpack.c.l.b16 %v1299
          %v1831 = vunpack.c.l.b16 %v1300
          %v1832 = vunpack.c.l.b16 %v1301
          %v1833 = vunpack.c.l.b16 %v1302
          %v1834 = vunpack.c.l.b16 %v1303
          %v1835 = vunpack.c.l.b16 %v1304
          %v1836 = vunpack.c.l.b16 %v1305
          %v1837 = vunpack.c.l.b16 %v1306
          %v1838 = vunpack.c.l.b16 %v1307
          %v1839 = vunpack.c.l.b16 %v1308
          %v1840 = vunpack.c.l.b16 %v1309
          %v1841 = vunpack.c.l.b16 %v1310
          %v1842 = vunpack.c.l.b16 %v1311
          %v1843 = vunpack.c.l.b16 %v1312
          %v1844 = vunpack.c.l.b16 %v1313
          %v1845 = vunpack.c.l.b16 %v1314
          %v1846 = vunpack.c.l.b16 %v1315
          %v1847 = vunpack.c.l.b16 %v1316
          %v1848 = vunpack.c.l.b16 %v1317
          %v1849 = vunpack.c.l.b16 %v1318
          %v1850 = vunpack.c.l.b16 %v1319
          %v1851 = vunpack.c.l.b16 %v1320
          %v1852 = vunpack.c.l.b16 %v1321
          %v1853 = vunpack.c.l.b16 %v1322
          %v1854 = vunpack.c.l.b16 %v1323
          %v1855 = vunpack.c.l.b16 %v1324
          %v1856 = vunpack.c.l.b16 %v1325
          %v1857 = vunpack.c.l.b16 %v1326
          %v1858 = vunpack.c.l.b16 %v1327
          %v1859 = vunpack.c.l.b16 %v1328
          %v1860 = vunpack.c.l.b16 %v1329
          %v1861 = vunpack.c.l.b16 %v1330
          %v1862 = vunpack.c.l.b16 %v1331
          %v1863 = vunpack.c.l.b16 %v1332
          %v1864 = vunpack.c.l.b16 %v1333
          %v1865 = vunpack.c.l.b16 %v1334
          %v1866 = vunpack.c.l.b16 %v1335
          %v1867 = vunpack.c.l.b16 %v1336
          %v1868 = vunpack.c.l.b16 %v1337
          %v1869 = vunpack.c.l.b16 %v1338
          %v1870 = vunpack.c.l.b16 %v1339
          %v1871 = vunpack.c.l.b16 %v1340
          %v1872 = vunpack.c.l.b16 %v1341
          %v1873 = vunpack.c.l.b16 %v1342
          %v1874 = vunpack.c.l.b16 %v1343
          %v1875 = vunpack.c.l.b16 %v1344
          %v1876 = vunpack.c.l.b16 %v1345
          %v1877 = vunpack.c.l.b16 %v1346
          %v1878 = vunpack.c.l.b16 %v1347
          %v1879 = vunpack.c.l.b16 %v1348
          %v1880 = vunpack.c.l.b16 %v1349
          %v1881 = vunpack.c.l.b16 %v1350
          %v1882 = vunpack.c.l.b16 %v1351
          %v1883 = vunpack.c.l.b16 %v1352
          %v1884 = vunpack.c.l.b16 %v1353
          %v1885 = vunpack.c.l.b16 %v1354
          %v1886 = vunpack.c.l.b16 %v1355
          %v1887 = vunpack.c.l.b16 %v1356
          %v1888 = vunpack.c.l.b16 %v1357
          %v1889 = vunpack.c.l.b16 %v1358
          %v1890 = vunpack.c.l.b16 %v1359
          %v1891 = vunpack.c.l.b16 %v1360
          %v1892 = vunpack.c.l.b16 %v1361
          %v1893 = vunpack.c.l.b16 %v1362
          %v1894 = vunpack.c.l.b16 %v1363
          %v1895 = vunpack.c.l.b16 %v1364
          %v1896 = vunpack.c.l.b16 %v1365
          %v1897 = vunpack.c.l.b16 %v1366
          %v1898 = vunpack.c.l.b16 %v1367
          %v1899 = vunpack.c.l.b16 %v1368
          %v1900 = vunpack.c.l.b16 %v1369
          %v1901 = vunpack.c.l.b16 %v1370
          %v1902 = vunpack.c.l.b16 %v1371
          %v1903 = vunpack.c.l.b16 %v1372
          %v1904 = vunpack.c.l.b16 %v1373
          %v1905 = vunpack.c.l.b16 %v1374
          %v1906 = vunpack.c.l.b16 %v1375
          %v1907 = vunpack.c.l.b16 %v1376
          %v1908 = vunpack.c.l.b16 %v1377
          %v1909 = vunpack.c.l.b16 %v1378
          %v1910 = vunpack.c.l.b16 %v1379
          %v1911 = vunpack.c.l.b16 %v1380
          %v1912 = vunpack.c.l.b16 %v1381
          %v1913 = vunpack.c.l.b16 %v1382
          %v1914 = vunpack.c.l.b16 %v1383
          %v1915 = vunpack.c.l.b16 %v1384
          %v1916 = vunpack.c.l.b16 %v1385
          %v1917 = vunpack.c.l.b16 %v1386
          %v1918 = vunpack.c.l.b16 %v1387
          %v1919 = vunpack.c.l.b16 %v1388
          %v1920 = vunpack.c.l.b16 %v1389
          %v1921 = vunpack.c.l.b16 %v1390
          %v1922 = vunpack.c.l.b16 %v1391
          %v1923 = vunpack.c.l.b16 %v1392
          %v1924 = vunpack.c.l.b16 %v1393
          %v1925 = vunpack.c.l.b16 %v1394
          %v1926 = vunpack.c.l.b16 %v1395
          %v1927 = vunpack.c.l.b16 %v1396
          %v1928 = vunpack.c.l.b16 %v1397
          %v1929 = vunpack.c.l.b16 %v1398
          %v1930 = vunpack.c.l.b16 %v1399
          %v1931 = vunpack.c.l.b16 %v1400
          %v1932 = vunpack.c.l.b16 %v1401
          %v1933 = vunpack.c.l.b16 %v1402
          %v1934 = vunpack.c.l.b16 %v1403
          %v1935 = vunpack.c.l.b16 %v1404
          %v1936 = vunpack.c.l.b16 %v1405
          %v1937 = vunpack.c.l.b16 %v1406
          %v1938 = vunpack.c.l.b16 %v1407
          %v1939 = vunpack.c.l.b16 %v1408
          %v1940 = vunpack.c.l.b16 %v1409
          %v1941 = vunpack.c.l.b16 %v1410
          %v1942 = vunpack.c.l.b16 %v1411
          %v1943 = vunpack.c.l.b16 %v1412
          %v1944 = vunpack.c.l.b16 %v1413
          %v1945 = vunpack.c.l.b16 %v1414
          %v1946 = vunpack.c.l.b16 %v1415
          %v1947 = vunpack.c.l.b16 %v1416
          %v1948 = vunpack.c.l.b16 %v1417
          %v1949 = vunpack.c.l.b16 %v1418
          %v1950 = vunpack.c.l.b16 %v1419
          %v1951 = vunpack.c.l.b16 %v1420
          %v1952 = vunpack.c.l.b16 %v1421
          %v1953 = vunpack.c.l.b16 %v1422
          %v1954 = vunpack.c.l.b16 %v1423
          %v1955 = vunpack.c.l.b16 %v1424
          %v1956 = vunpack.c.l.b16 %v1425
          %v1957 = vunpack.c.l.b16 %v1426
          %v1958 = vunpack.c.l.b16 %v1427
          %v1959 = vunpack.c.l.b16 %v1428
          %v1960 = vunpack.c.l.b16 %v1429
          %v1961 = vunpack.c.l.b16 %v1430
          %v1962 = vunpack.c.l.b16 %v1431
          %v1963 = vunpack.c.l.b16 %v1432
          %v1964 = vpack.c.b16 %v1821, %v1820
          %v1965 = vpack.c.b16 %v1823, %v1822
          %v1966 = vpack.c.b16 %v1825, %v1824
          %v1967 = vpack.c.b16 %v1827, %v1826
          %v1968 = vpack.c.b16 %v1829, %v1828
          %v1969 = vpack.c.b16 %v1831, %v1830
          %v1970 = vpack.c.b16 %v1833, %v1832
          %v1971 = vpack.c.b16 %v1835, %v1834
          %v1972 = vpack.c.b16 %v1837, %v1836
          %v1973 = vpack.c.b16 %v1839, %v1838
          %v1974 = vpack.c.b16 %v1841, %v1840
          %v1975 = vpack.c.b16 %v1843, %v1842
          %v1976 = vpack.c.b16 %v1845, %v1844
          %v1977 = vpack.c.b16 %v1847, %v1846
          %v1978 = vpack.c.b16 %v1849, %v1848
          %v1979 = vpack.c.b16 %v1851, %v1850
          %v1980 = vpack.c.b16 %v1853, %v1852
          %v1981 = vpack.c.b16 %v1855, %v1854
          %v1982 = vpack.c.b16 %v1857, %v1856
          %v1983 = vpack.c.b16 %v1859, %v1858
          %v1984 = vpack.c.b16 %v1861, %v1860
          %v1985 = vpack.c.b16 %v1863, %v1862
          %v1986 = vpack.c.b16 %v1865, %v1864
          %v1987 = vpack.c.b16 %v1867, %v1866
          %v1988 = vpack.c.b16 %v1869, %v1868
          %v1989 = vpack.c.b16 %v1871, %v1870
          %v1990 = vpack.c.b16 %v1873, %v1872
          %v1991 = vpack.c.b16 %v1875, %v1874
          %v1992 = vpack.c.b16 %v1877, %v1876
          %v1993 = vpack.c.b16 %v1879, %v1878
          %v1994 = vpack.c.b16 %v1881, %v1880
          %v1995 = vpack.c.b16 %v1883, %v1882
          %v1996 = vpack.c.b16 %v1885, %v1884
          %v1997 = vpack.c.b16 %v1887, %v1886
          %v1998 = vpack.c.b16 %v1889, %v1888
          %v1999 = vpack.c.b16 %v1891, %v1890
          %v2000 = vpack.c.b16 %v1893, %v1892
          %v2001 = vpack.c.b16 %v1895, %v1894
          %v2002 = vpack.c.b16 %v1897, %v1896
          %v2003 = vpack.c.b16 %v1899, %v1898
          %v2004 = vpack.c.b16 %v1901, %v1900
          %v2005 = vpack.c.b16 %v1903, %v1902
          %v2006 = vpack.c.b16 %v1905, %v1904
          %v2007 = vpack.c.b16 %v1907, %v1906
          %v2008 = vpack.c.b16 %v1909, %v1908
          %v2009 = vpack.c.b16 %v1911, %v1910
          %v2010 = vpack.c.b16 %v1913, %v1912
          %v2011 = vpack.c.b16 %v1915, %v1914
          %v2012 = vpack.c.b16 %v1917, %v1916
          %v2013 = vpack.c.b16 %v1919, %v1918
          %v2014 = vpack.c.b16 %v1921, %v1920
          %v2015 = vpack.c.b16 %v1923, %v1922
          %v2016 = vpack.c.b16 %v1925, %v1924
          %v2017 = vpack.c.b16 %v1927, %v1926
          %v2018 = vpack.c.b16 %v1929, %v1928
          %v2019 = vpack.c.b16 %v1931, %v1930
          %v2020 = vpack.c.b16 %v1933, %v1932
          %v2021 = vpack.c.b16 %v1935, %v1934
          %v2022 = vpack.c.b16 %v1937, %v1936
          %v2023 = vpack.c.b16 %v1939, %v1938
          %v2024 = vpack.c.b16 %v1941, %v1940
          %v2025 = vpack.c.b16 %v1943, %v1942
          %v2026 = vpack.c.b16 %v1945, %v1944
          %v2027 = vpack.c.b16 %v1947, %v1946
          %v2028 = vpack.c.b16 %v1949, %v1948
          %v2029 = vpack.c.b16 %v1951, %v1950
          %v2030 = vpack.c.b16 %v1953, %v1952
          %v2031 = vpack.c.b16 %v1955, %v1954
          %v2032 = vpack.c.b16 %v1957, %v1956
          %v2033 = vpack.c.b16 %v1959, %v1958
          %v2034 = vpack.c.b16 %v1961, %v1960
          %v2035 = vpack.c.b16 %v1963, %v1962
          %2108 = vmatpush.bf16.msra.mxu0 %v1971
          %2109 = vmatpush.bf16.msra.mxu0 %v1970
          %2110 = vmatpush.bf16.msra.mxu0 %v1969
          %2111 = vmatpush.bf16.msra.mxu0 %v1968
          %2112 = vmatpush.bf16.msra.mxu0 %v1967
          %2113 = vmatpush.bf16.msra.mxu0 %v1966
          %2114 = vmatpush.bf16.msra.mxu0 %v1965
          %2115 = vmatpush.bf16.msra.mxu0 %v1964
          %2116 = vmatmul.bf16.gmra.mxu0 %v1667
          %v2117 = vpop.f32.mrf.mxu0
          %v2118 = vadd.f32 0.0, %v2117
          %v2119 = vpop.f32.mrf.mxu0
          %v2120 = vadd.f32 0.0, %v2119
          %2121 = vdwg.mxu0
          %2122 = vmatpush.bf16.msra.mxu0 %v1979
          %2123 = vmatpush.bf16.msra.mxu0 %v1978
          %2124 = vmatpush.bf16.msra.mxu0 %v1977
          %2125 = vmatpush.bf16.msra.mxu0 %v1976
          %2126 = vmatpush.bf16.msra.mxu0 %v1975
          %2127 = vmatpush.bf16.msra.mxu0 %v1974
          %2128 = vmatpush.bf16.msra.mxu0 %v1973
          %2129 = vmatpush.bf16.msra.mxu0 %v1972
          %2130 = vmatmul.bf16.gmra.mxu0 %v1668
          %v2131 = vpop.f32.mrf.mxu0
          %v2132 = vadd.f32 %v2118, %v2131
          %v2133 = vpop.f32.mrf.mxu0
          %v2134 = vadd.f32 %v2120, %v2133
          %2135 = vdwg.mxu0
          %2136 = vmatpush.bf16.msra.mxu0 %v1987
          %2137 = vmatpush.bf16.msra.mxu0 %v1986
          %2138 = vmatpush.bf16.msra.mxu0 %v1985
          %2139 = vmatpush.bf16.msra.mxu0 %v1984
          %2140 = vmatpush.bf16.msra.mxu0 %v1983
          %2141 = vmatpush.bf16.msra.mxu0 %v1982
          %2142 = vmatpush.bf16.msra.mxu0 %v1981
          %2143 = vmatpush.bf16.msra.mxu0 %v1980
          %2144 = vmatmul.bf16.gmra.mxu0 %v1669
          %v2145 = vpop.f32.mrf.mxu0
          %v2146 = vadd.f32 %v2132, %v2145
          %v2147 = vpop.f32.mrf.mxu0
          %v2148 = vadd.f32 %v2134, %v2147
          %2149 = vdwg.mxu0
          %2150 = vmatpush.bf16.msra.mxu0 %v1995
          %2151 = vmatpush.bf16.msra.mxu0 %v1994
          %2152 = vmatpush.bf16.msra.mxu0 %v1993
          %2153 = vmatpush.bf16.msra.mxu0 %v1992
          %2154 = vmatpush.bf16.msra.mxu0 %v1991
          %2155 = vmatpush.bf16.msra.mxu0 %v1990
          %2156 = vmatpush.bf16.msra.mxu0 %v1989
          %2157 = vmatpush.bf16.msra.mxu0 %v1988
          %2158 = vmatmul.bf16.gmra.mxu0 %v1670
          %v2159 = vpop.f32.mrf.mxu0
          %v2160 = vadd.f32 %v2146, %v2159
          %v2161 = vpop.f32.mrf.mxu0
          %v2162 = vadd.f32 %v2148, %v2161
          %2163 = vdwg.mxu0
          %2164 = vmatpush.bf16.msra.mxu0 %v2003
          %2165 = vmatpush.bf16.msra.mxu0 %v2002
          %2166 = vmatpush.bf16.msra.mxu0 %v2001
          %2167 = vmatpush.bf16.msra.mxu0 %v2000
          %2168 = vmatpush.bf16.msra.mxu0 %v1999
          %2169 = vmatpush.bf16.msra.mxu0 %v1998
          %2170 = vmatpush.bf16.msra.mxu0 %v1997
          %2171 = vmatpush.bf16.msra.mxu0 %v1996
          %2172 = vmatmul.bf16.gmra.mxu0 %v1671
          %v2173 = vpop.f32.mrf.mxu0
          %v2174 = vadd.f32 %v2160, %v2173
          %v2175 = vpop.f32.mrf.mxu0
          %v2176 = vadd.f32 %v2162, %v2175
          %2177 = vdwg.mxu0
          %2178 = vmatpush.bf16.msra.mxu0 %v2011
          %2179 = vmatpush.bf16.msra.mxu0 %v2010
          %2180 = vmatpush.bf16.msra.mxu0 %v2009
          %2181 = vmatpush.bf16.msra.mxu0 %v2008
          %2182 = vmatpush.bf16.msra.mxu0 %v2007
          %2183 = vmatpush.bf16.msra.mxu0 %v2006
          %2184 = vmatpush.bf16.msra.mxu0 %v2005
          %2185 = vmatpush.bf16.msra.mxu0 %v2004
          %2186 = vmatmul.bf16.gmra.mxu0 %v1672
          %v2187 = vpop.f32.mrf.mxu0
          %v2188 = vadd.f32 %v2174, %v2187
          %v2189 = vpop.f32.mrf.mxu0
          %v2190 = vadd.f32 %v2176, %v2189
          %2191 = vdwg.mxu0
          %2192 = vmatpush.bf16.msra.mxu0 %v2019
          %2193 = vmatpush.bf16.msra.mxu0 %v2018
          %2194 = vmatpush.bf16.msra.mxu0 %v2017
          %2195 = vmatpush.bf16.msra.mxu0 %v2016
          %2196 = vmatpush.bf16.msra.mxu0 %v2015
          %2197 = vmatpush.bf16.msra.mxu0 %v2014
          %2198 = vmatpush.bf16.msra.mxu0 %v2013
          %2199 = vmatpush.bf16.msra.mxu0 %v2012
          %2200 = vmatmul.bf16.gmra.mxu0 %v1673
          %v2201 = vpop.f32.mrf.mxu0
          %v2202 = vadd.f32 %v2188, %v2201
          %v2203 = vpop.f32.mrf.mxu0
          %v2204 = vadd.f32 %v2190, %v2203
          %2205 = vdwg.mxu0
          %2206 = vmatpush.bf16.msra.mxu0 %v2027
          %2207 = vmatpush.bf16.msra.mxu0 %v2026
          %2208 = vmatpush.bf16.msra.mxu0 %v2025
          %2209 = vmatpush.bf16.msra.mxu0 %v2024
          %2210 = vmatpush.bf16.msra.mxu0 %v2023
          %2211 = vmatpush.bf16.msra.mxu0 %v2022
          %2212 = vmatpush.bf16.msra.mxu0 %v2021
          %2213 = vmatpush.bf16.msra.mxu0 %v2020
          %2214 = vmatmul.bf16.gmra.mxu0 %v1674
          %v2215 = vpop.f32.mrf.mxu0
          %v2216 = vadd.f32 %v2202, %v2215
          %v2217 = vpop.f32.mrf.mxu0
          %v2218 = vadd.f32 %v2204, %v2217
          %2219 = vdwg.mxu0
          %2220 = vmatpush.bf16.msra.mxu0 %v2035
          %2221 = vmatpush.bf16.msra.mxu0 %v2034
          %2222 = vmatpush.bf16.msra.mxu0 %v2033
          %2223 = vmatpush.bf16.msra.mxu0 %v2032
          %2224 = vmatpush.bf16.msra.mxu0 %v2031
          %2225 = vmatpush.bf16.msra.mxu0 %v2030
          %2226 = vmatpush.bf16.msra.mxu0 %v2029
          %2227 = vmatpush.bf16.msra.mxu0 %v2028
          %2228 = vmatmul.bf16.gmra.mxu0 %v1675
          %v2229 = vpop.f32.mrf.mxu0
          %v2230 = vadd.f32 %v2216, %v2229
          %v2231 = vpop.f32.mrf.mxu0
          %v2232 = vadd.f32 %v2218, %v2231
          %2233 = vdwg.mxu0
          %v2234 = vld [vmem:[#allocation9] sm:$0xf]
          %v2235 = vld [vmem:[#allocation9 + $0x4] sm:$0xf]
          %v2236 = vld [vmem:[#allocation9 + $0x8] sm:$0xf]
          %v2237 = vld [vmem:[#allocation9 + $0xc] sm:$0xf]
          %v2238 = vld [vmem:[#allocation9 + $0x10] sm:$0xf]
          %v2239 = vld [vmem:[#allocation9 + $0x14] sm:$0xf]
          %v2240 = vld [vmem:[#allocation9 + $0x18] sm:$0xf]
          %v2241 = vld [vmem:[#allocation9 + $0x1c] sm:$0xf]
          %v2242 = vld [vmem:[#allocation9 + $0x20] sm:$0xf]
          %v2243 = vld [vmem:[#allocation9 + $0x24] sm:$0xf]
          %v2244 = vld [vmem:[#allocation9 + $0x28] sm:$0xf]
          %v2245 = vld [vmem:[#allocation9 + $0x2c] sm:$0xf]
          %v2246 = vld [vmem:[#allocation9 + $0x30] sm:$0xf]
          %v2247 = vld [vmem:[#allocation9 + $0x34] sm:$0xf]
          %v2248 = vld [vmem:[#allocation9 + $0x38] sm:$0xf]
          %v2249 = vld [vmem:[#allocation9 + $0x3c] sm:$0xf]
          %v2250 = vld [vmem:[#allocation9 + $0x40] sm:$0xf]
          %v2251 = vld [vmem:[#allocation9 + $0x44] sm:$0xf]
          %v2252 = vld [vmem:[#allocation9 + $0x48] sm:$0xf]
          %v2253 = vld [vmem:[#allocation9 + $0x4c] sm:$0xf]
          %v2254 = vld [vmem:[#allocation9 + $0x50] sm:$0xf]
          %v2255 = vld [vmem:[#allocation9 + $0x54] sm:$0xf]
          %v2256 = vld [vmem:[#allocation9 + $0x58] sm:$0xf]
          %v2257 = vld [vmem:[#allocation9 + $0x5c] sm:$0xf]
          %v2258 = vld [vmem:[#allocation9 + $0x60] sm:$0xf]
          %v2259 = vld [vmem:[#allocation9 + $0x64] sm:$0xf]
          %v2260 = vld [vmem:[#allocation9 + $0x68] sm:$0xf]
          %v2261 = vld [vmem:[#allocation9 + $0x6c] sm:$0xf]
          %v2262 = vld [vmem:[#allocation9 + $0x70] sm:$0xf]
          %v2263 = vld [vmem:[#allocation9 + $0x74] sm:$0xf]
          %v2264 = vld [vmem:[#allocation9 + $0x78] sm:$0xf]
          %v2265 = vld [vmem:[#allocation9 + $0x7c] sm:$0xf]
          %v2266 = vld [vmem:[#allocation9 + $0x80] sm:$0xf]
          %v2267 = vld [vmem:[#allocation9 + $0x84] sm:$0xf]
          %v2268 = vld [vmem:[#allocation9 + $0x88] sm:$0xf]
          %v2269 = vld [vmem:[#allocation9 + $0x8c] sm:$0xf]
          %v2270 = vld [vmem:[#allocation9 + $0x90] sm:$0xf]
          %v2271 = vld [vmem:[#allocation9 + $0x94] sm:$0xf]
          %v2272 = vld [vmem:[#allocation9 + $0x98] sm:$0xf]
          %v2273 = vld [vmem:[#allocation9 + $0x9c] sm:$0xf]
          %v2274 = vld [vmem:[#allocation9 + $0xa0] sm:$0xf]
          %v2275 = vld [vmem:[#allocation9 + $0xa4] sm:$0xf]
          %v2276 = vld [vmem:[#allocation9 + $0xa8] sm:$0xf]
          %v2277 = vld [vmem:[#allocation9 + $0xac] sm:$0xf]
          %v2278 = vld [vmem:[#allocation9 + $0xb0] sm:$0xf]
          %v2279 = vld [vmem:[#allocation9 + $0xb4] sm:$0xf]
          %v2280 = vld [vmem:[#allocation9 + $0xb8] sm:$0xf]
          %v2281 = vld [vmem:[#allocation9 + $0xbc] sm:$0xf]
          %v2282 = vld [vmem:[#allocation9 + $0xc0] sm:$0xf]
          %v2283 = vld [vmem:[#allocation9 + $0xc4] sm:$0xf]
          %v2284 = vld [vmem:[#allocation9 + $0xc8] sm:$0xf]
          %v2285 = vld [vmem:[#allocation9 + $0xcc] sm:$0xf]
          %v2286 = vld [vmem:[#allocation9 + $0xd0] sm:$0xf]
          %v2287 = vld [vmem:[#allocation9 + $0xd4] sm:$0xf]
          %v2288 = vld [vmem:[#allocation9 + $0xd8] sm:$0xf]
          %v2289 = vld [vmem:[#allocation9 + $0xdc] sm:$0xf]
          %v2290 = vld [vmem:[#allocation9 + $0xe0] sm:$0xf]
          %v2291 = vld [vmem:[#allocation9 + $0xe4] sm:$0xf]
          %v2292 = vld [vmem:[#allocation9 + $0xe8] sm:$0xf]
          %v2293 = vld [vmem:[#allocation9 + $0xec] sm:$0xf]
          %v2294 = vld [vmem:[#allocation9 + $0xf0] sm:$0xf]
          %v2295 = vld [vmem:[#allocation9 + $0xf4] sm:$0xf]
          %v2296 = vld [vmem:[#allocation9 + $0xf8] sm:$0xf]
          %v2297 = vld [vmem:[#allocation9 + $0xfc] sm:$0xf]
          %v2298 = vld [vmem:[#allocation9 + $0x100] sm:$0xf]
          %v2299 = vld [vmem:[#allocation9 + $0x104] sm:$0xf]
          %v2300 = vld [vmem:[#allocation9 + $0x108] sm:$0xf]
          %v2301 = vld [vmem:[#allocation9 + $0x10c] sm:$0xf]
          %v2302 = vld [vmem:[#allocation9 + $0x110] sm:$0xf]
          %v2303 = vld [vmem:[#allocation9 + $0x114] sm:$0xf]
          %v2304 = vld [vmem:[#allocation9 + $0x118] sm:$0xf]
          %v2305 = vld [vmem:[#allocation9 + $0x11c] sm:$0xf]
          %v2306 = vld [vmem:[#allocation9 + $0x120] sm:$0xf]
          %v2307 = vld [vmem:[#allocation9 + $0x124] sm:$0xf]
          %v2308 = vld [vmem:[#allocation9 + $0x128] sm:$0xf]
          %v2309 = vld [vmem:[#allocation9 + $0x12c] sm:$0xf]
          %v2310 = vld [vmem:[#allocation9 + $0x130] sm:$0xf]
          %v2311 = vld [vmem:[#allocation9 + $0x134] sm:$0xf]
          %v2312 = vld [vmem:[#allocation9 + $0x138] sm:$0xf]
          %v2313 = vld [vmem:[#allocation9 + $0x13c] sm:$0xf]
          %v2314 = vld [vmem:[#allocation9 + $0x140] sm:$0xf]
          %v2315 = vld [vmem:[#allocation9 + $0x144] sm:$0xf]
          %v2316 = vld [vmem:[#allocation9 + $0x148] sm:$0xf]
          %v2317 = vld [vmem:[#allocation9 + $0x14c] sm:$0xf]
          %v2318 = vld [vmem:[#allocation9 + $0x150] sm:$0xf]
          %v2319 = vld [vmem:[#allocation9 + $0x154] sm:$0xf]
          %v2320 = vld [vmem:[#allocation9 + $0x158] sm:$0xf]
          %v2321 = vld [vmem:[#allocation9 + $0x15c] sm:$0xf]
          %v2322 = vld [vmem:[#allocation9 + $0x160] sm:$0xf]
          %v2323 = vld [vmem:[#allocation9 + $0x164] sm:$0xf]
          %v2324 = vld [vmem:[#allocation9 + $0x168] sm:$0xf]
          %v2325 = vld [vmem:[#allocation9 + $0x16c] sm:$0xf]
          %v2326 = vld [vmem:[#allocation9 + $0x170] sm:$0xf]
          %v2327 = vld [vmem:[#allocation9 + $0x174] sm:$0xf]
          %v2328 = vld [vmem:[#allocation9 + $0x178] sm:$0xf]
          %v2329 = vld [vmem:[#allocation9 + $0x17c] sm:$0xf]
          %v2330 = vld [vmem:[#allocation9 + $0x180] sm:$0xf]
          %v2331 = vld [vmem:[#allocation9 + $0x184] sm:$0xf]
          %v2332 = vld [vmem:[#allocation9 + $0x188] sm:$0xf]
          %v2333 = vld [vmem:[#allocation9 + $0x18c] sm:$0xf]
          %v2334 = vld [vmem:[#allocation9 + $0x190] sm:$0xf]
          %v2335 = vld [vmem:[#allocation9 + $0x194] sm:$0xf]
          %v2336 = vld [vmem:[#allocation9 + $0x198] sm:$0xf]
          %v2337 = vld [vmem:[#allocation9 + $0x19c] sm:$0xf]
          %v2338 = vld [vmem:[#allocation9 + $0x1a0] sm:$0xf]
          %v2339 = vld [vmem:[#allocation9 + $0x1a4] sm:$0xf]
          %v2340 = vld [vmem:[#allocation9 + $0x1a8] sm:$0xf]
          %v2341 = vld [vmem:[#allocation9 + $0x1ac] sm:$0xf]
          %v2342 = vld [vmem:[#allocation9 + $0x1b0] sm:$0xf]
          %v2343 = vld [vmem:[#allocation9 + $0x1b4] sm:$0xf]
          %v2344 = vld [vmem:[#allocation9 + $0x1b8] sm:$0xf]
          %v2345 = vld [vmem:[#allocation9 + $0x1bc] sm:$0xf]
          %v2346 = vld [vmem:[#allocation9 + $0x1c0] sm:$0xf]
          %v2347 = vld [vmem:[#allocation9 + $0x1c4] sm:$0xf]
          %v2348 = vld [vmem:[#allocation9 + $0x1c8] sm:$0xf]
          %v2349 = vld [vmem:[#allocation9 + $0x1cc] sm:$0xf]
          %v2350 = vld [vmem:[#allocation9 + $0x1d0] sm:$0xf]
          %v2351 = vld [vmem:[#allocation9 + $0x1d4] sm:$0xf]
          %v2352 = vld [vmem:[#allocation9 + $0x1d8] sm:$0xf]
          %v2353 = vld [vmem:[#allocation9 + $0x1dc] sm:$0xf]
          %v2354 = vld [vmem:[#allocation9 + $0x1e0] sm:$0xf]
          %v2355 = vld [vmem:[#allocation9 + $0x1e4] sm:$0xf]
          %v2356 = vld [vmem:[#allocation9 + $0x1e8] sm:$0xf]
          %v2357 = vld [vmem:[#allocation9 + $0x1ec] sm:$0xf]
          %v2358 = vld [vmem:[#allocation9 + $0x1f0] sm:$0xf]
          %v2359 = vld [vmem:[#allocation9 + $0x1f4] sm:$0xf]
          %v2360 = vld [vmem:[#allocation9 + $0x1f8] sm:$0xf]
          %v2361 = vld [vmem:[#allocation9 + $0x1fc] sm:$0xf]
          %v2362 = vld [vmem:[#allocation9 + $0x200] sm:$0xf]
          %v2363 = vld [vmem:[#allocation9 + $0x204] sm:$0xf]
          %v2364 = vld [vmem:[#allocation9 + $0x208] sm:$0xf]
          %v2365 = vld [vmem:[#allocation9 + $0x20c] sm:$0xf]
          %v2366 = vld [vmem:[#allocation9 + $0x210] sm:$0xf]
          %v2367 = vld [vmem:[#allocation9 + $0x214] sm:$0xf]
          %v2368 = vld [vmem:[#allocation9 + $0x218] sm:$0xf]
          %v2369 = vld [vmem:[#allocation9 + $0x21c] sm:$0xf]
          %v2370 = vld [vmem:[#allocation9 + $0x220] sm:$0xf]
          %v2371 = vld [vmem:[#allocation9 + $0x224] sm:$0xf]
          %v2372 = vld [vmem:[#allocation9 + $0x228] sm:$0xf]
          %v2373 = vld [vmem:[#allocation9 + $0x22c] sm:$0xf]
          %v2374 = vld [vmem:[#allocation9 + $0x230] sm:$0xf]
          %v2375 = vld [vmem:[#allocation9 + $0x234] sm:$0xf]
          %v2376 = vld [vmem:[#allocation9 + $0x238] sm:$0xf]
          %v2377 = vld [vmem:[#allocation9 + $0x23c] sm:$0xf]
          %v2378 = vsub.f32 0.0, %v2230
          %v2379 = vsub.f32 0.0, %v2232
          %v2380 = vmul.f32 %v2378, 1.442695
          %v2381 = vpow.pop %v2380
          %v2382 = vmul.f32 %v2379, 1.442695
          %v2383 = vpow.pop %v2382
          %v2384 = vadd.f32 %v2381, 1.0
          %v2385 = vadd.f32 %v2383, 1.0
          %v2386 = vrcp.pop %v2384
          %v2387 = vrcp.pop %v2385
          %v2388 = vmul.f32 %v2230, %v2386
          %v2389 = vmul.f32 %v2232, %v2387
          %v2390 = vsub.f32 %v2230, -2.2
          %v2391 = vsub.f32 %v2232, -2.2
          %v2392 = vmul.f32 %v2390, 2.5
          %v2393 = vmul.f32 %v2391, 2.5
          %v2394 = vfloor.f32 %v2392
          %v2395 = vfloor.f32 %v2393
          %v2396 = vsub.f32 %v2392, %v2394
          %v2397 = vsub.f32 %v2393, %v2395
          %v2398 = vmul.f32 %v2396, %v2396
          %v2399 = vmul.f32 %v2397, %v2397
          %v2400 = vmul.f32 %v2398, %v2396
          %v2401 = vmul.f32 %v2399, %v2397
          %v2402 = vmul.f32 %v2400, 0.16666667
          %v2403 = vmul.f32 %v2401, 0.16666667
          %v2404 = vmul.f32 %v2396, 3.0
          %v2405 = vmul.f32 %v2397, 3.0
          %v2406 = vsub.f32 3.0, %v2404
          %v2407 = vsub.f32 3.0, %v2405
          %v2408 = vmul.f32 %v2406, %v2396
          %v2409 = vmul.f32 %v2407, %v2397
          %v2410 = vadd.f32 %v2408, 3.0
          %v2411 = vadd.f32 %v2409, 3.0
          %v2412 = vmul.f32 %v2410, %v2396
          %v2413 = vmul.f32 %v2411, %v2397
          %v2414 = vadd.f32 %v2412, 1.0
          %v2415 = vadd.f32 %v2413, 1.0
          %v2416 = vmul.f32 %v2414, 0.16666667
          %v2417 = vmul.f32 %v2415, 0.16666667
          %v2418 = vsub.f32 %v2404, 6.0
          %v2419 = vsub.f32 %v2405, 6.0
          %v2420 = vmul.f32 %v2418, %v2398
          %v2421 = vmul.f32 %v2419, %v2399
          %v2422 = vadd.f32 %v2420, 4.0
          %v2423 = vadd.f32 %v2421, 4.0
          %v2424 = vmul.f32 %v2422, 0.16666667
          %v2425 = vmul.f32 %v2423, 0.16666667
          %v2426 = vsub.f32 1.0, %v2396
          %v2427 = vsub.f32 1.0, %v2397
          %v2428 = vmul.f32 %v2426, %v2426
          %v2429 = vmul.f32 %v2427, %v2427
          %v2430 = vmul.f32 %v2428, %v2426
          %v2431 = vmul.f32 %v2429, %v2427
          %v2432 = vmul.f32 %v2430, 0.16666667
          %v2433 = vmul.f32 %v2431, 0.16666667
          %vm2434 = vcmp.eq.f32.partialorder %v2394, 0.0
          %vm2435 = vcmp.eq.f32.partialorder %v2395, 0.0
          %v2436 = vsel %vm2434, 1, 0
          %v2437 = vsel %vm2435, 1, 0
          %v2438 = vcvt.s32.f32 %v2436
          %v2439 = vcvt.s32.f32 %v2437
          %vm2440 = vcmp.eq.f32.partialorder %v2394, 1.0
          %vm2441 = vcmp.eq.f32.partialorder %v2395, 1.0
          %v2442 = vsel %vm2440, 1, 0
          %v2443 = vsel %vm2441, 1, 0
          %v2444 = vcvt.s32.f32 %v2442
          %v2445 = vcvt.s32.f32 %v2443
          %vm2446 = vcmp.eq.f32.partialorder %v2394, 2.0
          %vm2447 = vcmp.eq.f32.partialorder %v2395, 2.0
          %v2448 = vsel %vm2446, 1, 0
          %v2449 = vsel %vm2447, 1, 0
          %v2450 = vcvt.s32.f32 %v2448
          %v2451 = vcvt.s32.f32 %v2449
          %vm2452 = vcmp.eq.f32.partialorder %v2394, 3.0
          %vm2453 = vcmp.eq.f32.partialorder %v2395, 3.0
          %v2454 = vsel %vm2452, 1, 0
          %v2455 = vsel %vm2453, 1, 0
          %v2456 = vcvt.s32.f32 %v2454
          %v2457 = vcvt.s32.f32 %v2455
          %vm2458 = vcmp.eq.f32.partialorder %v2394, 4.0
          %vm2459 = vcmp.eq.f32.partialorder %v2395, 4.0
          %v2460 = vsel %vm2458, 1, 0
          %v2461 = vsel %vm2459, 1, 0
          %v2462 = vcvt.s32.f32 %v2460
          %v2463 = vcvt.s32.f32 %v2461
          %vm2464 = vcmp.eq.f32.partialorder %v2394, 5.0
          %vm2465 = vcmp.eq.f32.partialorder %v2395, 5.0
          %v2466 = vsel %vm2464, 1, 0
          %v2467 = vsel %vm2465, 1, 0
          %v2468 = vcvt.s32.f32 %v2466
          %v2469 = vcvt.s32.f32 %v2467
          %vm2470 = vcmp.eq.f32.partialorder %v2394, 6.0
          %vm2471 = vcmp.eq.f32.partialorder %v2395, 6.0
          %v2472 = vsel %vm2470, 1, 0
          %v2473 = vsel %vm2471, 1, 0
          %v2474 = vcvt.s32.f32 %v2472
          %v2475 = vcvt.s32.f32 %v2473
          %vm2476 = vcmp.eq.f32.partialorder %v2394, 7.0
          %vm2477 = vcmp.eq.f32.partialorder %v2395, 7.0
          %v2478 = vsel %vm2476, 1, 0
          %v2479 = vsel %vm2477, 1, 0
          %v2480 = vcvt.s32.f32 %v2478
          %v2481 = vcvt.s32.f32 %v2479
          %vm2482 = vcmp.eq.f32.partialorder %v2394, 8.0
          %vm2483 = vcmp.eq.f32.partialorder %v2395, 8.0
          %v2484 = vsel %vm2482, 1, 0
          %v2485 = vsel %vm2483, 1, 0
          %v2486 = vcvt.s32.f32 %v2484
          %v2487 = vcvt.s32.f32 %v2485
          %vm2488 = vcmp.eq.f32.partialorder %v2394, 9.0
          %vm2489 = vcmp.eq.f32.partialorder %v2395, 9.0
          %v2490 = vsel %vm2488, 1, 0
          %v2491 = vsel %vm2489, 1, 0
          %v2492 = vcvt.s32.f32 %v2490
          %v2493 = vcvt.s32.f32 %v2491
          %vm2494 = vcmp.eq.f32.partialorder %v2394, 10.0
          %vm2495 = vcmp.eq.f32.partialorder %v2395, 10.0
          %v2496 = vsel %vm2494, 1, 0
          %v2497 = vsel %vm2495, 1, 0
          %v2498 = vcvt.s32.f32 %v2496
          %v2499 = vcvt.s32.f32 %v2497
          %v2500 = vmul.f32 %v2438, %v2402
          %v2501 = vmul.f32 %v2439, %v2403
          %v2502 = vmul.f32 %v2444, %v2416
          %v2503 = vmul.f32 %v2445, %v2417
          %v2504 = vadd.f32 %v2500, %v2502
          %v2505 = vadd.f32 %v2501, %v2503
          %v2506 = vmul.f32 %v2450, %v2424
          %v2507 = vmul.f32 %v2451, %v2425
          %v2508 = vadd.f32 %v2504, %v2506
          %v2509 = vadd.f32 %v2505, %v2507
          %v2510 = vmul.f32 %v2456, %v2432
          %v2511 = vmul.f32 %v2457, %v2433
          %v2512 = vadd.f32 %v2508, %v2510
          %v2513 = vadd.f32 %v2509, %v2511
          %v2514 = vmul.f32 %v2444, %v2402
          %v2515 = vmul.f32 %v2445, %v2403
          %v2516 = vmul.f32 %v2450, %v2416
          %v2517 = vmul.f32 %v2451, %v2417
          %v2518 = vadd.f32 %v2514, %v2516
          %v2519 = vadd.f32 %v2515, %v2517
          %v2520 = vmul.f32 %v2456, %v2424
          %v2521 = vmul.f32 %v2457, %v2425
          %v2522 = vadd.f32 %v2518, %v2520
          %v2523 = vadd.f32 %v2519, %v2521
          %v2524 = vmul.f32 %v2462, %v2432
          %v2525 = vmul.f32 %v2463, %v2433
          %v2526 = vadd.f32 %v2522, %v2524
          %v2527 = vadd.f32 %v2523, %v2525
          %v2528 = vmul.f32 %v2450, %v2402
          %v2529 = vmul.f32 %v2451, %v2403
          %v2530 = vmul.f32 %v2456, %v2416
          %v2531 = vmul.f32 %v2457, %v2417
          %v2532 = vadd.f32 %v2528, %v2530
          %v2533 = vadd.f32 %v2529, %v2531
          %v2534 = vmul.f32 %v2462, %v2424
          %v2535 = vmul.f32 %v2463, %v2425
          %v2536 = vadd.f32 %v2532, %v2534
          %v2537 = vadd.f32 %v2533, %v2535
          %v2538 = vmul.f32 %v2468, %v2432
          %v2539 = vmul.f32 %v2469, %v2433
          %v2540 = vadd.f32 %v2536, %v2538
          %v2541 = vadd.f32 %v2537, %v2539
          %v2542 = vmul.f32 %v2456, %v2402
          %v2543 = vmul.f32 %v2457, %v2403
          %v2544 = vmul.f32 %v2462, %v2416
          %v2545 = vmul.f32 %v2463, %v2417
          %v2546 = vadd.f32 %v2542, %v2544
          %v2547 = vadd.f32 %v2543, %v2545
          %v2548 = vmul.f32 %v2468, %v2424
          %v2549 = vmul.f32 %v2469, %v2425
          %v2550 = vadd.f32 %v2546, %v2548
          %v2551 = vadd.f32 %v2547, %v2549
          %v2552 = vmul.f32 %v2474, %v2432
          %v2553 = vmul.f32 %v2475, %v2433
          %v2554 = vadd.f32 %v2550, %v2552
          %v2555 = vadd.f32 %v2551, %v2553
          %v2556 = vmul.f32 %v2462, %v2402
          %v2557 = vmul.f32 %v2463, %v2403
          %v2558 = vmul.f32 %v2468, %v2416
          %v2559 = vmul.f32 %v2469, %v2417
          %v2560 = vadd.f32 %v2556, %v2558
          %v2561 = vadd.f32 %v2557, %v2559
          %v2562 = vmul.f32 %v2474, %v2424
          %v2563 = vmul.f32 %v2475, %v2425
          %v2564 = vadd.f32 %v2560, %v2562
          %v2565 = vadd.f32 %v2561, %v2563
          %v2566 = vmul.f32 %v2480, %v2432
          %v2567 = vmul.f32 %v2481, %v2433
          %v2568 = vadd.f32 %v2564, %v2566
          %v2569 = vadd.f32 %v2565, %v2567
          %v2570 = vmul.f32 %v2468, %v2402
          %v2571 = vmul.f32 %v2469, %v2403
          %v2572 = vmul.f32 %v2474, %v2416
          %v2573 = vmul.f32 %v2475, %v2417
          %v2574 = vadd.f32 %v2570, %v2572
          %v2575 = vadd.f32 %v2571, %v2573
          %v2576 = vmul.f32 %v2480, %v2424
          %v2577 = vmul.f32 %v2481, %v2425
          %v2578 = vadd.f32 %v2574, %v2576
          %v2579 = vadd.f32 %v2575, %v2577
          %v2580 = vmul.f32 %v2486, %v2432
          %v2581 = vmul.f32 %v2487, %v2433
          %v2582 = vadd.f32 %v2578, %v2580
          %v2583 = vadd.f32 %v2579, %v2581
          %v2584 = vmul.f32 %v2474, %v2402
          %v2585 = vmul.f32 %v2475, %v2403
          %v2586 = vmul.f32 %v2480, %v2416
          %v2587 = vmul.f32 %v2481, %v2417
          %v2588 = vadd.f32 %v2584, %v2586
          %v2589 = vadd.f32 %v2585, %v2587
          %v2590 = vmul.f32 %v2486, %v2424
          %v2591 = vmul.f32 %v2487, %v2425
          %v2592 = vadd.f32 %v2588, %v2590
          %v2593 = vadd.f32 %v2589, %v2591
          %v2594 = vmul.f32 %v2492, %v2432
          %v2595 = vmul.f32 %v2493, %v2433
          %v2596 = vadd.f32 %v2592, %v2594
          %v2597 = vadd.f32 %v2593, %v2595
          %v2598 = vmul.f32 %v2480, %v2402
          %v2599 = vmul.f32 %v2481, %v2403
          %v2600 = vmul.f32 %v2486, %v2416
          %v2601 = vmul.f32 %v2487, %v2417
          %v2602 = vadd.f32 %v2598, %v2600
          %v2603 = vadd.f32 %v2599, %v2601
          %v2604 = vmul.f32 %v2492, %v2424
          %v2605 = vmul.f32 %v2493, %v2425
          %v2606 = vadd.f32 %v2602, %v2604
          %v2607 = vadd.f32 %v2603, %v2605
          %v2608 = vmul.f32 %v2498, %v2432
          %v2609 = vmul.f32 %v2499, %v2433
          %v2610 = vadd.f32 %v2606, %v2608
          %v2611 = vadd.f32 %v2607, %v2609
          %v2612 = vpack.c.bf16 %v2389, %v2388
          %v2613 = vpack.c.bf16 %v2513, %v2512
          %v2614 = vpack.c.bf16 %v2527, %v2526
          %v2615 = vpack.c.bf16 %v2541, %v2540
          %v2616 = vpack.c.bf16 %v2555, %v2554
          %v2617 = vpack.c.bf16 %v2569, %v2568
          %v2618 = vpack.c.bf16 %v2583, %v2582
          %v2619 = vpack.c.bf16 %v2597, %v2596
          %v2620 = vpack.c.bf16 %v2611, %v2610
          %v2765 = vunpack.c.l.b16 %v2234
          %v2766 = vunpack.c.l.b16 %v2235
          %v2767 = vunpack.c.l.b16 %v2236
          %v2768 = vunpack.c.l.b16 %v2237
          %v2769 = vunpack.c.l.b16 %v2238
          %v2770 = vunpack.c.l.b16 %v2239
          %v2771 = vunpack.c.l.b16 %v2240
          %v2772 = vunpack.c.l.b16 %v2241
          %v2773 = vunpack.c.l.b16 %v2242
          %v2774 = vunpack.c.l.b16 %v2243
          %v2775 = vunpack.c.l.b16 %v2244
          %v2776 = vunpack.c.l.b16 %v2245
          %v2777 = vunpack.c.l.b16 %v2246
          %v2778 = vunpack.c.l.b16 %v2247
          %v2779 = vunpack.c.l.b16 %v2248
          %v2780 = vunpack.c.l.b16 %v2249
          %v2781 = vunpack.c.l.b16 %v2250
          %v2782 = vunpack.c.l.b16 %v2251
          %v2783 = vunpack.c.l.b16 %v2252
          %v2784 = vunpack.c.l.b16 %v2253
          %v2785 = vunpack.c.l.b16 %v2254
          %v2786 = vunpack.c.l.b16 %v2255
          %v2787 = vunpack.c.l.b16 %v2256
          %v2788 = vunpack.c.l.b16 %v2257
          %v2789 = vunpack.c.l.b16 %v2258
          %v2790 = vunpack.c.l.b16 %v2259
          %v2791 = vunpack.c.l.b16 %v2260
          %v2792 = vunpack.c.l.b16 %v2261
          %v2793 = vunpack.c.l.b16 %v2262
          %v2794 = vunpack.c.l.b16 %v2263
          %v2795 = vunpack.c.l.b16 %v2264
          %v2796 = vunpack.c.l.b16 %v2265
          %v2797 = vunpack.c.l.b16 %v2266
          %v2798 = vunpack.c.l.b16 %v2267
          %v2799 = vunpack.c.l.b16 %v2268
          %v2800 = vunpack.c.l.b16 %v2269
          %v2801 = vunpack.c.l.b16 %v2270
          %v2802 = vunpack.c.l.b16 %v2271
          %v2803 = vunpack.c.l.b16 %v2272
          %v2804 = vunpack.c.l.b16 %v2273
          %v2805 = vunpack.c.l.b16 %v2274
          %v2806 = vunpack.c.l.b16 %v2275
          %v2807 = vunpack.c.l.b16 %v2276
          %v2808 = vunpack.c.l.b16 %v2277
          %v2809 = vunpack.c.l.b16 %v2278
          %v2810 = vunpack.c.l.b16 %v2279
          %v2811 = vunpack.c.l.b16 %v2280
          %v2812 = vunpack.c.l.b16 %v2281
          %v2813 = vunpack.c.l.b16 %v2282
          %v2814 = vunpack.c.l.b16 %v2283
          %v2815 = vunpack.c.l.b16 %v2284
          %v2816 = vunpack.c.l.b16 %v2285
          %v2817 = vunpack.c.l.b16 %v2286
          %v2818 = vunpack.c.l.b16 %v2287
          %v2819 = vunpack.c.l.b16 %v2288
          %v2820 = vunpack.c.l.b16 %v2289
          %v2821 = vunpack.c.l.b16 %v2290
          %v2822 = vunpack.c.l.b16 %v2291
          %v2823 = vunpack.c.l.b16 %v2292
          %v2824 = vunpack.c.l.b16 %v2293
          %v2825 = vunpack.c.l.b16 %v2294
          %v2826 = vunpack.c.l.b16 %v2295
          %v2827 = vunpack.c.l.b16 %v2296
          %v2828 = vunpack.c.l.b16 %v2297
          %v2829 = vunpack.c.l.b16 %v2298
          %v2830 = vunpack.c.l.b16 %v2299
          %v2831 = vunpack.c.l.b16 %v2300
          %v2832 = vunpack.c.l.b16 %v2301
          %v2833 = vunpack.c.l.b16 %v2302
          %v2834 = vunpack.c.l.b16 %v2303
          %v2835 = vunpack.c.l.b16 %v2304
          %v2836 = vunpack.c.l.b16 %v2305
          %v2837 = vunpack.c.l.b16 %v2306
          %v2838 = vunpack.c.l.b16 %v2307
          %v2839 = vunpack.c.l.b16 %v2308
          %v2840 = vunpack.c.l.b16 %v2309
          %v2841 = vunpack.c.l.b16 %v2310
          %v2842 = vunpack.c.l.b16 %v2311
          %v2843 = vunpack.c.l.b16 %v2312
          %v2844 = vunpack.c.l.b16 %v2313
          %v2845 = vunpack.c.l.b16 %v2314
          %v2846 = vunpack.c.l.b16 %v2315
          %v2847 = vunpack.c.l.b16 %v2316
          %v2848 = vunpack.c.l.b16 %v2317
          %v2849 = vunpack.c.l.b16 %v2318
          %v2850 = vunpack.c.l.b16 %v2319
          %v2851 = vunpack.c.l.b16 %v2320
          %v2852 = vunpack.c.l.b16 %v2321
          %v2853 = vunpack.c.l.b16 %v2322
          %v2854 = vunpack.c.l.b16 %v2323
          %v2855 = vunpack.c.l.b16 %v2324
          %v2856 = vunpack.c.l.b16 %v2325
          %v2857 = vunpack.c.l.b16 %v2326
          %v2858 = vunpack.c.l.b16 %v2327
          %v2859 = vunpack.c.l.b16 %v2328
          %v2860 = vunpack.c.l.b16 %v2329
          %v2861 = vunpack.c.l.b16 %v2330
          %v2862 = vunpack.c.l.b16 %v2331
          %v2863 = vunpack.c.l.b16 %v2332
          %v2864 = vunpack.c.l.b16 %v2333
          %v2865 = vunpack.c.l.b16 %v2334
          %v2866 = vunpack.c.l.b16 %v2335
          %v2867 = vunpack.c.l.b16 %v2336
          %v2868 = vunpack.c.l.b16 %v2337
          %v2869 = vunpack.c.l.b16 %v2338
          %v2870 = vunpack.c.l.b16 %v2339
          %v2871 = vunpack.c.l.b16 %v2340
          %v2872 = vunpack.c.l.b16 %v2341
          %v2873 = vunpack.c.l.b16 %v2342
          %v2874 = vunpack.c.l.b16 %v2343
          %v2875 = vunpack.c.l.b16 %v2344
          %v2876 = vunpack.c.l.b16 %v2345
          %v2877 = vunpack.c.l.b16 %v2346
          %v2878 = vunpack.c.l.b16 %v2347
          %v2879 = vunpack.c.l.b16 %v2348
          %v2880 = vunpack.c.l.b16 %v2349
          %v2881 = vunpack.c.l.b16 %v2350
          %v2882 = vunpack.c.l.b16 %v2351
          %v2883 = vunpack.c.l.b16 %v2352
          %v2884 = vunpack.c.l.b16 %v2353
          %v2885 = vunpack.c.l.b16 %v2354
          %v2886 = vunpack.c.l.b16 %v2355
          %v2887 = vunpack.c.l.b16 %v2356
          %v2888 = vunpack.c.l.b16 %v2357
          %v2889 = vunpack.c.l.b16 %v2358
          %v2890 = vunpack.c.l.b16 %v2359
          %v2891 = vunpack.c.l.b16 %v2360
          %v2892 = vunpack.c.l.b16 %v2361
          %v2893 = vunpack.c.l.b16 %v2362
          %v2894 = vunpack.c.l.b16 %v2363
          %v2895 = vunpack.c.l.b16 %v2364
          %v2896 = vunpack.c.l.b16 %v2365
          %v2897 = vunpack.c.l.b16 %v2366
          %v2898 = vunpack.c.l.b16 %v2367
          %v2899 = vunpack.c.l.b16 %v2368
          %v2900 = vunpack.c.l.b16 %v2369
          %v2901 = vunpack.c.l.b16 %v2370
          %v2902 = vunpack.c.l.b16 %v2371
          %v2903 = vunpack.c.l.b16 %v2372
          %v2904 = vunpack.c.l.b16 %v2373
          %v2905 = vunpack.c.l.b16 %v2374
          %v2906 = vunpack.c.l.b16 %v2375
          %v2907 = vunpack.c.l.b16 %v2376
          %v2908 = vunpack.c.l.b16 %v2377
          %v2909 = vpack.c.b16 %v2766, %v2765
          %v2910 = vpack.c.b16 %v2768, %v2767
          %v2911 = vpack.c.b16 %v2770, %v2769
          %v2912 = vpack.c.b16 %v2772, %v2771
          %v2913 = vpack.c.b16 %v2774, %v2773
          %v2914 = vpack.c.b16 %v2776, %v2775
          %v2915 = vpack.c.b16 %v2778, %v2777
          %v2916 = vpack.c.b16 %v2780, %v2779
          %v2917 = vpack.c.b16 %v2782, %v2781
          %v2918 = vpack.c.b16 %v2784, %v2783
          %v2919 = vpack.c.b16 %v2786, %v2785
          %v2920 = vpack.c.b16 %v2788, %v2787
          %v2921 = vpack.c.b16 %v2790, %v2789
          %v2922 = vpack.c.b16 %v2792, %v2791
          %v2923 = vpack.c.b16 %v2794, %v2793
          %v2924 = vpack.c.b16 %v2796, %v2795
          %v2925 = vpack.c.b16 %v2798, %v2797
          %v2926 = vpack.c.b16 %v2800, %v2799
          %v2927 = vpack.c.b16 %v2802, %v2801
          %v2928 = vpack.c.b16 %v2804, %v2803
          %v2929 = vpack.c.b16 %v2806, %v2805
          %v2930 = vpack.c.b16 %v2808, %v2807
          %v2931 = vpack.c.b16 %v2810, %v2809
          %v2932 = vpack.c.b16 %v2812, %v2811
          %v2933 = vpack.c.b16 %v2814, %v2813
          %v2934 = vpack.c.b16 %v2816, %v2815
          %v2935 = vpack.c.b16 %v2818, %v2817
          %v2936 = vpack.c.b16 %v2820, %v2819
          %v2937 = vpack.c.b16 %v2822, %v2821
          %v2938 = vpack.c.b16 %v2824, %v2823
          %v2939 = vpack.c.b16 %v2826, %v2825
          %v2940 = vpack.c.b16 %v2828, %v2827
          %v2941 = vpack.c.b16 %v2830, %v2829
          %v2942 = vpack.c.b16 %v2832, %v2831
          %v2943 = vpack.c.b16 %v2834, %v2833
          %v2944 = vpack.c.b16 %v2836, %v2835
          %v2945 = vpack.c.b16 %v2838, %v2837
          %v2946 = vpack.c.b16 %v2840, %v2839
          %v2947 = vpack.c.b16 %v2842, %v2841
          %v2948 = vpack.c.b16 %v2844, %v2843
          %v2949 = vpack.c.b16 %v2846, %v2845
          %v2950 = vpack.c.b16 %v2848, %v2847
          %v2951 = vpack.c.b16 %v2850, %v2849
          %v2952 = vpack.c.b16 %v2852, %v2851
          %v2953 = vpack.c.b16 %v2854, %v2853
          %v2954 = vpack.c.b16 %v2856, %v2855
          %v2955 = vpack.c.b16 %v2858, %v2857
          %v2956 = vpack.c.b16 %v2860, %v2859
          %v2957 = vpack.c.b16 %v2862, %v2861
          %v2958 = vpack.c.b16 %v2864, %v2863
          %v2959 = vpack.c.b16 %v2866, %v2865
          %v2960 = vpack.c.b16 %v2868, %v2867
          %v2961 = vpack.c.b16 %v2870, %v2869
          %v2962 = vpack.c.b16 %v2872, %v2871
          %v2963 = vpack.c.b16 %v2874, %v2873
          %v2964 = vpack.c.b16 %v2876, %v2875
          %v2965 = vpack.c.b16 %v2878, %v2877
          %v2966 = vpack.c.b16 %v2880, %v2879
          %v2967 = vpack.c.b16 %v2882, %v2881
          %v2968 = vpack.c.b16 %v2884, %v2883
          %v2969 = vpack.c.b16 %v2886, %v2885
          %v2970 = vpack.c.b16 %v2888, %v2887
          %v2971 = vpack.c.b16 %v2890, %v2889
          %v2972 = vpack.c.b16 %v2892, %v2891
          %v2973 = vpack.c.b16 %v2894, %v2893
          %v2974 = vpack.c.b16 %v2896, %v2895
          %v2975 = vpack.c.b16 %v2898, %v2897
          %v2976 = vpack.c.b16 %v2900, %v2899
          %v2977 = vpack.c.b16 %v2902, %v2901
          %v2978 = vpack.c.b16 %v2904, %v2903
          %v2979 = vpack.c.b16 %v2906, %v2905
          %v2980 = vpack.c.b16 %v2908, %v2907
          %3053 = vmatpush.bf16.msra.mxu0 %v2916
          %3054 = vmatpush.bf16.msra.mxu0 %v2915
          %3055 = vmatpush.bf16.msra.mxu0 %v2914
          %3056 = vmatpush.bf16.msra.mxu0 %v2913
          %3057 = vmatpush.bf16.msra.mxu0 %v2912
          %3058 = vmatpush.bf16.msra.mxu0 %v2911
          %3059 = vmatpush.bf16.msra.mxu0 %v2910
          %3060 = vmatpush.bf16.msra.mxu0 %v2909
          %3061 = vmatmul.bf16.gmra.mxu0 %v2612
          %v3062 = vpop.f32.mrf.mxu0
          %v3063 = vadd.f32 0.0, %v3062
          %v3064 = vpop.f32.mrf.mxu0
          %v3065 = vadd.f32 0.0, %v3064
          %3066 = vdwg.mxu0
          %3067 = vmatpush.bf16.msra.mxu0 %v2924
          %3068 = vmatpush.bf16.msra.mxu0 %v2923
          %3069 = vmatpush.bf16.msra.mxu0 %v2922
          %3070 = vmatpush.bf16.msra.mxu0 %v2921
          %3071 = vmatpush.bf16.msra.mxu0 %v2920
          %3072 = vmatpush.bf16.msra.mxu0 %v2919
          %3073 = vmatpush.bf16.msra.mxu0 %v2918
          %3074 = vmatpush.bf16.msra.mxu0 %v2917
          %3075 = vmatmul.bf16.gmra.mxu0 %v2613
          %v3076 = vpop.f32.mrf.mxu0
          %v3077 = vadd.f32 %v3063, %v3076
          %v3078 = vpop.f32.mrf.mxu0
          %v3079 = vadd.f32 %v3065, %v3078
          %3080 = vdwg.mxu0
          %3081 = vmatpush.bf16.msra.mxu0 %v2932
          %3082 = vmatpush.bf16.msra.mxu0 %v2931
          %3083 = vmatpush.bf16.msra.mxu0 %v2930
          %3084 = vmatpush.bf16.msra.mxu0 %v2929
          %3085 = vmatpush.bf16.msra.mxu0 %v2928
          %3086 = vmatpush.bf16.msra.mxu0 %v2927
          %3087 = vmatpush.bf16.msra.mxu0 %v2926
          %3088 = vmatpush.bf16.msra.mxu0 %v2925
          %3089 = vmatmul.bf16.gmra.mxu0 %v2614
          %v3090 = vpop.f32.mrf.mxu0
          %v3091 = vadd.f32 %v3077, %v3090
          %v3092 = vpop.f32.mrf.mxu0
          %v3093 = vadd.f32 %v3079, %v3092
          %3094 = vdwg.mxu0
          %3095 = vmatpush.bf16.msra.mxu0 %v2940
          %3096 = vmatpush.bf16.msra.mxu0 %v2939
          %3097 = vmatpush.bf16.msra.mxu0 %v2938
          %3098 = vmatpush.bf16.msra.mxu0 %v2937
          %3099 = vmatpush.bf16.msra.mxu0 %v2936
          %3100 = vmatpush.bf16.msra.mxu0 %v2935
          %3101 = vmatpush.bf16.msra.mxu0 %v2934
          %3102 = vmatpush.bf16.msra.mxu0 %v2933
          %3103 = vmatmul.bf16.gmra.mxu0 %v2615
          %v3104 = vpop.f32.mrf.mxu0
          %v3105 = vadd.f32 %v3091, %v3104
          %v3106 = vpop.f32.mrf.mxu0
          %v3107 = vadd.f32 %v3093, %v3106
          %3108 = vdwg.mxu0
          %3109 = vmatpush.bf16.msra.mxu0 %v2948
          %3110 = vmatpush.bf16.msra.mxu0 %v2947
          %3111 = vmatpush.bf16.msra.mxu0 %v2946
          %3112 = vmatpush.bf16.msra.mxu0 %v2945
          %3113 = vmatpush.bf16.msra.mxu0 %v2944
          %3114 = vmatpush.bf16.msra.mxu0 %v2943
          %3115 = vmatpush.bf16.msra.mxu0 %v2942
          %3116 = vmatpush.bf16.msra.mxu0 %v2941
          %3117 = vmatmul.bf16.gmra.mxu0 %v2616
          %v3118 = vpop.f32.mrf.mxu0
          %v3119 = vadd.f32 %v3105, %v3118
          %v3120 = vpop.f32.mrf.mxu0
          %v3121 = vadd.f32 %v3107, %v3120
          %3122 = vdwg.mxu0
          %3123 = vmatpush.bf16.msra.mxu0 %v2956
          %3124 = vmatpush.bf16.msra.mxu0 %v2955
          %3125 = vmatpush.bf16.msra.mxu0 %v2954
          %3126 = vmatpush.bf16.msra.mxu0 %v2953
          %3127 = vmatpush.bf16.msra.mxu0 %v2952
          %3128 = vmatpush.bf16.msra.mxu0 %v2951
          %3129 = vmatpush.bf16.msra.mxu0 %v2950
          %3130 = vmatpush.bf16.msra.mxu0 %v2949
          %3131 = vmatmul.bf16.gmra.mxu0 %v2617
          %v3132 = vpop.f32.mrf.mxu0
          %v3133 = vadd.f32 %v3119, %v3132
          %v3134 = vpop.f32.mrf.mxu0
          %v3135 = vadd.f32 %v3121, %v3134
          %3136 = vdwg.mxu0
          %3137 = vmatpush.bf16.msra.mxu0 %v2964
          %3138 = vmatpush.bf16.msra.mxu0 %v2963
          %3139 = vmatpush.bf16.msra.mxu0 %v2962
          %3140 = vmatpush.bf16.msra.mxu0 %v2961
          %3141 = vmatpush.bf16.msra.mxu0 %v2960
          %3142 = vmatpush.bf16.msra.mxu0 %v2959
          %3143 = vmatpush.bf16.msra.mxu0 %v2958
          %3144 = vmatpush.bf16.msra.mxu0 %v2957
          %3145 = vmatmul.bf16.gmra.mxu0 %v2618
          %v3146 = vpop.f32.mrf.mxu0
          %v3147 = vadd.f32 %v3133, %v3146
          %v3148 = vpop.f32.mrf.mxu0
          %v3149 = vadd.f32 %v3135, %v3148
          %3150 = vdwg.mxu0
          %3151 = vmatpush.bf16.msra.mxu0 %v2972
          %3152 = vmatpush.bf16.msra.mxu0 %v2971
          %3153 = vmatpush.bf16.msra.mxu0 %v2970
          %3154 = vmatpush.bf16.msra.mxu0 %v2969
          %3155 = vmatpush.bf16.msra.mxu0 %v2968
          %3156 = vmatpush.bf16.msra.mxu0 %v2967
          %3157 = vmatpush.bf16.msra.mxu0 %v2966
          %3158 = vmatpush.bf16.msra.mxu0 %v2965
          %3159 = vmatmul.bf16.gmra.mxu0 %v2619
          %v3160 = vpop.f32.mrf.mxu0
          %v3161 = vadd.f32 %v3147, %v3160
          %v3162 = vpop.f32.mrf.mxu0
          %v3163 = vadd.f32 %v3149, %v3162
          %3164 = vdwg.mxu0
          %3165 = vmatpush.bf16.msra.mxu0 %v2980
          %3166 = vmatpush.bf16.msra.mxu0 %v2979
          %3167 = vmatpush.bf16.msra.mxu0 %v2978
          %3168 = vmatpush.bf16.msra.mxu0 %v2977
          %3169 = vmatpush.bf16.msra.mxu0 %v2976
          %3170 = vmatpush.bf16.msra.mxu0 %v2975
          %3171 = vmatpush.bf16.msra.mxu0 %v2974
          %3172 = vmatpush.bf16.msra.mxu0 %v2973
          %3173 = vmatmul.bf16.gmra.mxu0 %v2620
          %v3174 = vpop.f32.mrf.mxu0
          %v3175 = vadd.f32 %v3161, %v3174
          %v3176 = vpop.f32.mrf.mxu0
          %v3177 = vadd.f32 %v3163, %v3176
          %3178 = vdwg.mxu0
          %v3179 = vld [vmem:[#allocation11] sm:$0xf]
          %v3180 = vld [vmem:[#allocation11 + $0x4] sm:$0xf]
          %v3181 = vld [vmem:[#allocation11 + $0x8] sm:$0xf]
          %v3182 = vld [vmem:[#allocation11 + $0xc] sm:$0xf]
          %v3183 = vld [vmem:[#allocation11 + $0x10] sm:$0xf]
          %v3184 = vld [vmem:[#allocation11 + $0x14] sm:$0xf]
          %v3185 = vld [vmem:[#allocation11 + $0x18] sm:$0xf]
          %v3186 = vld [vmem:[#allocation11 + $0x1c] sm:$0xf]
          %v3187 = vld [vmem:[#allocation11 + $0x20] sm:$0xf]
          %v3188 = vld [vmem:[#allocation11 + $0x24] sm:$0xf]
          %v3189 = vld [vmem:[#allocation11 + $0x28] sm:$0xf]
          %v3190 = vld [vmem:[#allocation11 + $0x2c] sm:$0xf]
          %v3191 = vld [vmem:[#allocation11 + $0x30] sm:$0xf]
          %v3192 = vld [vmem:[#allocation11 + $0x34] sm:$0xf]
          %v3193 = vld [vmem:[#allocation11 + $0x38] sm:$0xf]
          %v3194 = vld [vmem:[#allocation11 + $0x3c] sm:$0xf]
          %v3195 = vld [vmem:[#allocation11 + $0x40] sm:$0xf]
          %v3196 = vld [vmem:[#allocation11 + $0x44] sm:$0xf]
          %v3197 = vld [vmem:[#allocation11 + $0x48] sm:$0xf]
          %v3198 = vld [vmem:[#allocation11 + $0x4c] sm:$0xf]
          %v3199 = vld [vmem:[#allocation11 + $0x50] sm:$0xf]
          %v3200 = vld [vmem:[#allocation11 + $0x54] sm:$0xf]
          %v3201 = vld [vmem:[#allocation11 + $0x58] sm:$0xf]
          %v3202 = vld [vmem:[#allocation11 + $0x5c] sm:$0xf]
          %v3203 = vld [vmem:[#allocation11 + $0x60] sm:$0xf]
          %v3204 = vld [vmem:[#allocation11 + $0x64] sm:$0xf]
          %v3205 = vld [vmem:[#allocation11 + $0x68] sm:$0xf]
          %v3206 = vld [vmem:[#allocation11 + $0x6c] sm:$0xf]
          %v3207 = vld [vmem:[#allocation11 + $0x70] sm:$0xf]
          %v3208 = vld [vmem:[#allocation11 + $0x74] sm:$0xf]
          %v3209 = vld [vmem:[#allocation11 + $0x78] sm:$0xf]
          %v3210 = vld [vmem:[#allocation11 + $0x7c] sm:$0xf]
          %v3211 = vld [vmem:[#allocation11 + $0x80] sm:$0xf]
          %v3212 = vld [vmem:[#allocation11 + $0x84] sm:$0xf]
          %v3213 = vld [vmem:[#allocation11 + $0x88] sm:$0xf]
          %v3214 = vld [vmem:[#allocation11 + $0x8c] sm:$0xf]
          %v3215 = vld [vmem:[#allocation11 + $0x90] sm:$0xf]
          %v3216 = vld [vmem:[#allocation11 + $0x94] sm:$0xf]
          %v3217 = vld [vmem:[#allocation11 + $0x98] sm:$0xf]
          %v3218 = vld [vmem:[#allocation11 + $0x9c] sm:$0xf]
          %v3219 = vld [vmem:[#allocation11 + $0xa0] sm:$0xf]
          %v3220 = vld [vmem:[#allocation11 + $0xa4] sm:$0xf]
          %v3221 = vld [vmem:[#allocation11 + $0xa8] sm:$0xf]
          %v3222 = vld [vmem:[#allocation11 + $0xac] sm:$0xf]
          %v3223 = vld [vmem:[#allocation11 + $0xb0] sm:$0xf]
          %v3224 = vld [vmem:[#allocation11 + $0xb4] sm:$0xf]
          %v3225 = vld [vmem:[#allocation11 + $0xb8] sm:$0xf]
          %v3226 = vld [vmem:[#allocation11 + $0xbc] sm:$0xf]
          %v3227 = vld [vmem:[#allocation11 + $0xc0] sm:$0xf]
          %v3228 = vld [vmem:[#allocation11 + $0xc4] sm:$0xf]
          %v3229 = vld [vmem:[#allocation11 + $0xc8] sm:$0xf]
          %v3230 = vld [vmem:[#allocation11 + $0xcc] sm:$0xf]
          %v3231 = vld [vmem:[#allocation11 + $0xd0] sm:$0xf]
          %v3232 = vld [vmem:[#allocation11 + $0xd4] sm:$0xf]
          %v3233 = vld [vmem:[#allocation11 + $0xd8] sm:$0xf]
          %v3234 = vld [vmem:[#allocation11 + $0xdc] sm:$0xf]
          %v3235 = vld [vmem:[#allocation11 + $0xe0] sm:$0xf]
          %v3236 = vld [vmem:[#allocation11 + $0xe4] sm:$0xf]
          %v3237 = vld [vmem:[#allocation11 + $0xe8] sm:$0xf]
          %v3238 = vld [vmem:[#allocation11 + $0xec] sm:$0xf]
          %v3239 = vld [vmem:[#allocation11 + $0xf0] sm:$0xf]
          %v3240 = vld [vmem:[#allocation11 + $0xf4] sm:$0xf]
          %v3241 = vld [vmem:[#allocation11 + $0xf8] sm:$0xf]
          %v3242 = vld [vmem:[#allocation11 + $0xfc] sm:$0xf]
          %v3243 = vld [vmem:[#allocation11 + $0x100] sm:$0xf]
          %v3244 = vld [vmem:[#allocation11 + $0x104] sm:$0xf]
          %v3245 = vld [vmem:[#allocation11 + $0x108] sm:$0xf]
          %v3246 = vld [vmem:[#allocation11 + $0x10c] sm:$0xf]
          %v3247 = vld [vmem:[#allocation11 + $0x110] sm:$0xf]
          %v3248 = vld [vmem:[#allocation11 + $0x114] sm:$0xf]
          %v3249 = vld [vmem:[#allocation11 + $0x118] sm:$0xf]
          %v3250 = vld [vmem:[#allocation11 + $0x11c] sm:$0xf]
          %v3251 = vld [vmem:[#allocation11 + $0x120] sm:$0xf]
          %v3252 = vld [vmem:[#allocation11 + $0x124] sm:$0xf]
          %v3253 = vld [vmem:[#allocation11 + $0x128] sm:$0xf]
          %v3254 = vld [vmem:[#allocation11 + $0x12c] sm:$0xf]
          %v3255 = vld [vmem:[#allocation11 + $0x130] sm:$0xf]
          %v3256 = vld [vmem:[#allocation11 + $0x134] sm:$0xf]
          %v3257 = vld [vmem:[#allocation11 + $0x138] sm:$0xf]
          %v3258 = vld [vmem:[#allocation11 + $0x13c] sm:$0xf]
          %v3259 = vld [vmem:[#allocation11 + $0x140] sm:$0xf]
          %v3260 = vld [vmem:[#allocation11 + $0x144] sm:$0xf]
          %v3261 = vld [vmem:[#allocation11 + $0x148] sm:$0xf]
          %v3262 = vld [vmem:[#allocation11 + $0x14c] sm:$0xf]
          %v3263 = vld [vmem:[#allocation11 + $0x150] sm:$0xf]
          %v3264 = vld [vmem:[#allocation11 + $0x154] sm:$0xf]
          %v3265 = vld [vmem:[#allocation11 + $0x158] sm:$0xf]
          %v3266 = vld [vmem:[#allocation11 + $0x15c] sm:$0xf]
          %v3267 = vld [vmem:[#allocation11 + $0x160] sm:$0xf]
          %v3268 = vld [vmem:[#allocation11 + $0x164] sm:$0xf]
          %v3269 = vld [vmem:[#allocation11 + $0x168] sm:$0xf]
          %v3270 = vld [vmem:[#allocation11 + $0x16c] sm:$0xf]
          %v3271 = vld [vmem:[#allocation11 + $0x170] sm:$0xf]
          %v3272 = vld [vmem:[#allocation11 + $0x174] sm:$0xf]
          %v3273 = vld [vmem:[#allocation11 + $0x178] sm:$0xf]
          %v3274 = vld [vmem:[#allocation11 + $0x17c] sm:$0xf]
          %v3275 = vld [vmem:[#allocation11 + $0x180] sm:$0xf]
          %v3276 = vld [vmem:[#allocation11 + $0x184] sm:$0xf]
          %v3277 = vld [vmem:[#allocation11 + $0x188] sm:$0xf]
          %v3278 = vld [vmem:[#allocation11 + $0x18c] sm:$0xf]
          %v3279 = vld [vmem:[#allocation11 + $0x190] sm:$0xf]
          %v3280 = vld [vmem:[#allocation11 + $0x194] sm:$0xf]
          %v3281 = vld [vmem:[#allocation11 + $0x198] sm:$0xf]
          %v3282 = vld [vmem:[#allocation11 + $0x19c] sm:$0xf]
          %v3283 = vld [vmem:[#allocation11 + $0x1a0] sm:$0xf]
          %v3284 = vld [vmem:[#allocation11 + $0x1a4] sm:$0xf]
          %v3285 = vld [vmem:[#allocation11 + $0x1a8] sm:$0xf]
          %v3286 = vld [vmem:[#allocation11 + $0x1ac] sm:$0xf]
          %v3287 = vld [vmem:[#allocation11 + $0x1b0] sm:$0xf]
          %v3288 = vld [vmem:[#allocation11 + $0x1b4] sm:$0xf]
          %v3289 = vld [vmem:[#allocation11 + $0x1b8] sm:$0xf]
          %v3290 = vld [vmem:[#allocation11 + $0x1bc] sm:$0xf]
          %v3291 = vld [vmem:[#allocation11 + $0x1c0] sm:$0xf]
          %v3292 = vld [vmem:[#allocation11 + $0x1c4] sm:$0xf]
          %v3293 = vld [vmem:[#allocation11 + $0x1c8] sm:$0xf]
          %v3294 = vld [vmem:[#allocation11 + $0x1cc] sm:$0xf]
          %v3295 = vld [vmem:[#allocation11 + $0x1d0] sm:$0xf]
          %v3296 = vld [vmem:[#allocation11 + $0x1d4] sm:$0xf]
          %v3297 = vld [vmem:[#allocation11 + $0x1d8] sm:$0xf]
          %v3298 = vld [vmem:[#allocation11 + $0x1dc] sm:$0xf]
          %v3299 = vld [vmem:[#allocation11 + $0x1e0] sm:$0xf]
          %v3300 = vld [vmem:[#allocation11 + $0x1e4] sm:$0xf]
          %v3301 = vld [vmem:[#allocation11 + $0x1e8] sm:$0xf]
          %v3302 = vld [vmem:[#allocation11 + $0x1ec] sm:$0xf]
          %v3303 = vld [vmem:[#allocation11 + $0x1f0] sm:$0xf]
          %v3304 = vld [vmem:[#allocation11 + $0x1f4] sm:$0xf]
          %v3305 = vld [vmem:[#allocation11 + $0x1f8] sm:$0xf]
          %v3306 = vld [vmem:[#allocation11 + $0x1fc] sm:$0xf]
          %v3307 = vld [vmem:[#allocation11 + $0x200] sm:$0xf]
          %v3308 = vld [vmem:[#allocation11 + $0x204] sm:$0xf]
          %v3309 = vld [vmem:[#allocation11 + $0x208] sm:$0xf]
          %v3310 = vld [vmem:[#allocation11 + $0x20c] sm:$0xf]
          %v3311 = vld [vmem:[#allocation11 + $0x210] sm:$0xf]
          %v3312 = vld [vmem:[#allocation11 + $0x214] sm:$0xf]
          %v3313 = vld [vmem:[#allocation11 + $0x218] sm:$0xf]
          %v3314 = vld [vmem:[#allocation11 + $0x21c] sm:$0xf]
          %v3315 = vld [vmem:[#allocation11 + $0x220] sm:$0xf]
          %v3316 = vld [vmem:[#allocation11 + $0x224] sm:$0xf]
          %v3317 = vld [vmem:[#allocation11 + $0x228] sm:$0xf]
          %v3318 = vld [vmem:[#allocation11 + $0x22c] sm:$0xf]
          %v3319 = vld [vmem:[#allocation11 + $0x230] sm:$0xf]
          %v3320 = vld [vmem:[#allocation11 + $0x234] sm:$0xf]
          %v3321 = vld [vmem:[#allocation11 + $0x238] sm:$0xf]
          %v3322 = vld [vmem:[#allocation11 + $0x23c] sm:$0xf]
          %v3323 = vsub.f32 0.0, %v3175
          %v3324 = vsub.f32 0.0, %v3177
          %v3325 = vmul.f32 %v3323, 1.442695
          %v3326 = vpow.pop %v3325
          %v3327 = vmul.f32 %v3324, 1.442695
          %v3328 = vpow.pop %v3327
          %v3329 = vadd.f32 %v3326, 1.0
          %v3330 = vadd.f32 %v3328, 1.0
          %v3331 = vrcp.pop %v3329
          %v3332 = vrcp.pop %v3330
          %v3333 = vmul.f32 %v3175, %v3331
          %v3334 = vmul.f32 %v3177, %v3332
          %v3335 = vsub.f32 %v3175, -2.2
          %v3336 = vsub.f32 %v3177, -2.2
          %v3337 = vmul.f32 %v3335, 2.5
          %v3338 = vmul.f32 %v3336, 2.5
          %v3339 = vfloor.f32 %v3337
          %v3340 = vfloor.f32 %v3338
          %v3341 = vsub.f32 %v3337, %v3339
          %v3342 = vsub.f32 %v3338, %v3340
          %v3343 = vmul.f32 %v3341, %v3341
          %v3344 = vmul.f32 %v3342, %v3342
          %v3345 = vmul.f32 %v3343, %v3341
          %v3346 = vmul.f32 %v3344, %v3342
          %v3347 = vmul.f32 %v3345, 0.16666667
          %v3348 = vmul.f32 %v3346, 0.16666667
          %v3349 = vmul.f32 %v3341, 3.0
          %v3350 = vmul.f32 %v3342, 3.0
          %v3351 = vsub.f32 3.0, %v3349
          %v3352 = vsub.f32 3.0, %v3350
          %v3353 = vmul.f32 %v3351, %v3341
          %v3354 = vmul.f32 %v3352, %v3342
          %v3355 = vadd.f32 %v3353, 3.0
          %v3356 = vadd.f32 %v3354, 3.0
          %v3357 = vmul.f32 %v3355, %v3341
          %v3358 = vmul.f32 %v3356, %v3342
          %v3359 = vadd.f32 %v3357, 1.0
          %v3360 = vadd.f32 %v3358, 1.0
          %v3361 = vmul.f32 %v3359, 0.16666667
          %v3362 = vmul.f32 %v3360, 0.16666667
          %v3363 = vsub.f32 %v3349, 6.0
          %v3364 = vsub.f32 %v3350, 6.0
          %v3365 = vmul.f32 %v3363, %v3343
          %v3366 = vmul.f32 %v3364, %v3344
          %v3367 = vadd.f32 %v3365, 4.0
          %v3368 = vadd.f32 %v3366, 4.0
          %v3369 = vmul.f32 %v3367, 0.16666667
          %v3370 = vmul.f32 %v3368, 0.16666667
          %v3371 = vsub.f32 1.0, %v3341
          %v3372 = vsub.f32 1.0, %v3342
          %v3373 = vmul.f32 %v3371, %v3371
          %v3374 = vmul.f32 %v3372, %v3372
          %v3375 = vmul.f32 %v3373, %v3371
          %v3376 = vmul.f32 %v3374, %v3372
          %v3377 = vmul.f32 %v3375, 0.16666667
          %v3378 = vmul.f32 %v3376, 0.16666667
          %vm3379 = vcmp.eq.f32.partialorder %v3339, 0.0
          %vm3380 = vcmp.eq.f32.partialorder %v3340, 0.0
          %v3381 = vsel %vm3379, 1, 0
          %v3382 = vsel %vm3380, 1, 0
          %v3383 = vcvt.s32.f32 %v3381
          %v3384 = vcvt.s32.f32 %v3382
          %vm3385 = vcmp.eq.f32.partialorder %v3339, 1.0
          %vm3386 = vcmp.eq.f32.partialorder %v3340, 1.0
          %v3387 = vsel %vm3385, 1, 0
          %v3388 = vsel %vm3386, 1, 0
          %v3389 = vcvt.s32.f32 %v3387
          %v3390 = vcvt.s32.f32 %v3388
          %vm3391 = vcmp.eq.f32.partialorder %v3339, 2.0
          %vm3392 = vcmp.eq.f32.partialorder %v3340, 2.0
          %v3393 = vsel %vm3391, 1, 0
          %v3394 = vsel %vm3392, 1, 0
          %v3395 = vcvt.s32.f32 %v3393
          %v3396 = vcvt.s32.f32 %v3394
          %vm3397 = vcmp.eq.f32.partialorder %v3339, 3.0
          %vm3398 = vcmp.eq.f32.partialorder %v3340, 3.0
          %v3399 = vsel %vm3397, 1, 0
          %v3400 = vsel %vm3398, 1, 0
          %v3401 = vcvt.s32.f32 %v3399
          %v3402 = vcvt.s32.f32 %v3400
          %vm3403 = vcmp.eq.f32.partialorder %v3339, 4.0
          %vm3404 = vcmp.eq.f32.partialorder %v3340, 4.0
          %v3405 = vsel %vm3403, 1, 0
          %v3406 = vsel %vm3404, 1, 0
          %v3407 = vcvt.s32.f32 %v3405
          %v3408 = vcvt.s32.f32 %v3406
          %vm3409 = vcmp.eq.f32.partialorder %v3339, 5.0
          %vm3410 = vcmp.eq.f32.partialorder %v3340, 5.0
          %v3411 = vsel %vm3409, 1, 0
          %v3412 = vsel %vm3410, 1, 0
          %v3413 = vcvt.s32.f32 %v3411
          %v3414 = vcvt.s32.f32 %v3412
          %vm3415 = vcmp.eq.f32.partialorder %v3339, 6.0
          %vm3416 = vcmp.eq.f32.partialorder %v3340, 6.0
          %v3417 = vsel %vm3415, 1, 0
          %v3418 = vsel %vm3416, 1, 0
          %v3419 = vcvt.s32.f32 %v3417
          %v3420 = vcvt.s32.f32 %v3418
          %vm3421 = vcmp.eq.f32.partialorder %v3339, 7.0
          %vm3422 = vcmp.eq.f32.partialorder %v3340, 7.0
          %v3423 = vsel %vm3421, 1, 0
          %v3424 = vsel %vm3422, 1, 0
          %v3425 = vcvt.s32.f32 %v3423
          %v3426 = vcvt.s32.f32 %v3424
          %vm3427 = vcmp.eq.f32.partialorder %v3339, 8.0
          %vm3428 = vcmp.eq.f32.partialorder %v3340, 8.0
          %v3429 = vsel %vm3427, 1, 0
          %v3430 = vsel %vm3428, 1, 0
          %v3431 = vcvt.s32.f32 %v3429
          %v3432 = vcvt.s32.f32 %v3430
          %vm3433 = vcmp.eq.f32.partialorder %v3339, 9.0
          %vm3434 = vcmp.eq.f32.partialorder %v3340, 9.0
          %v3435 = vsel %vm3433, 1, 0
          %v3436 = vsel %vm3434, 1, 0
          %v3437 = vcvt.s32.f32 %v3435
          %v3438 = vcvt.s32.f32 %v3436
          %vm3439 = vcmp.eq.f32.partialorder %v3339, 10.0
          %vm3440 = vcmp.eq.f32.partialorder %v3340, 10.0
          %v3441 = vsel %vm3439, 1, 0
          %v3442 = vsel %vm3440, 1, 0
          %v3443 = vcvt.s32.f32 %v3441
          %v3444 = vcvt.s32.f32 %v3442
          %v3445 = vmul.f32 %v3383, %v3347
          %v3446 = vmul.f32 %v3384, %v3348
          %v3447 = vmul.f32 %v3389, %v3361
          %v3448 = vmul.f32 %v3390, %v3362
          %v3449 = vadd.f32 %v3445, %v3447
          %v3450 = vadd.f32 %v3446, %v3448
          %v3451 = vmul.f32 %v3395, %v3369
          %v3452 = vmul.f32 %v3396, %v3370
          %v3453 = vadd.f32 %v3449, %v3451
          %v3454 = vadd.f32 %v3450, %v3452
          %v3455 = vmul.f32 %v3401, %v3377
          %v3456 = vmul.f32 %v3402, %v3378
          %v3457 = vadd.f32 %v3453, %v3455
          %v3458 = vadd.f32 %v3454, %v3456
          %v3459 = vmul.f32 %v3389, %v3347
          %v3460 = vmul.f32 %v3390, %v3348
          %v3461 = vmul.f32 %v3395, %v3361
          %v3462 = vmul.f32 %v3396, %v3362
          %v3463 = vadd.f32 %v3459, %v3461
          %v3464 = vadd.f32 %v3460, %v3462
          %v3465 = vmul.f32 %v3401, %v3369
          %v3466 = vmul.f32 %v3402, %v3370
          %v3467 = vadd.f32 %v3463, %v3465
          %v3468 = vadd.f32 %v3464, %v3466
          %v3469 = vmul.f32 %v3407, %v3377
          %v3470 = vmul.f32 %v3408, %v3378
          %v3471 = vadd.f32 %v3467, %v3469
          %v3472 = vadd.f32 %v3468, %v3470
          %v3473 = vmul.f32 %v3395, %v3347
          %v3474 = vmul.f32 %v3396, %v3348
          %v3475 = vmul.f32 %v3401, %v3361
          %v3476 = vmul.f32 %v3402, %v3362
          %v3477 = vadd.f32 %v3473, %v3475
          %v3478 = vadd.f32 %v3474, %v3476
          %v3479 = vmul.f32 %v3407, %v3369
          %v3480 = vmul.f32 %v3408, %v3370
          %v3481 = vadd.f32 %v3477, %v3479
          %v3482 = vadd.f32 %v3478, %v3480
          %v3483 = vmul.f32 %v3413, %v3377
          %v3484 = vmul.f32 %v3414, %v3378
          %v3485 = vadd.f32 %v3481, %v3483
          %v3486 = vadd.f32 %v3482, %v3484
          %v3487 = vmul.f32 %v3401, %v3347
          %v3488 = vmul.f32 %v3402, %v3348
          %v3489 = vmul.f32 %v3407, %v3361
          %v3490 = vmul.f32 %v3408, %v3362
          %v3491 = vadd.f32 %v3487, %v3489
          %v3492 = vadd.f32 %v3488, %v3490
          %v3493 = vmul.f32 %v3413, %v3369
          %v3494 = vmul.f32 %v3414, %v3370
          %v3495 = vadd.f32 %v3491, %v3493
          %v3496 = vadd.f32 %v3492, %v3494
          %v3497 = vmul.f32 %v3419, %v3377
          %v3498 = vmul.f32 %v3420, %v3378
          %v3499 = vadd.f32 %v3495, %v3497
          %v3500 = vadd.f32 %v3496, %v3498
          %v3501 = vmul.f32 %v3407, %v3347
          %v3502 = vmul.f32 %v3408, %v3348
          %v3503 = vmul.f32 %v3413, %v3361
          %v3504 = vmul.f32 %v3414, %v3362
          %v3505 = vadd.f32 %v3501, %v3503
          %v3506 = vadd.f32 %v3502, %v3504
          %v3507 = vmul.f32 %v3419, %v3369
          %v3508 = vmul.f32 %v3420, %v3370
          %v3509 = vadd.f32 %v3505, %v3507
          %v3510 = vadd.f32 %v3506, %v3508
          %v3511 = vmul.f32 %v3425, %v3377
          %v3512 = vmul.f32 %v3426, %v3378
          %v3513 = vadd.f32 %v3509, %v3511
          %v3514 = vadd.f32 %v3510, %v3512
          %v3515 = vmul.f32 %v3413, %v3347
          %v3516 = vmul.f32 %v3414, %v3348
          %v3517 = vmul.f32 %v3419, %v3361
          %v3518 = vmul.f32 %v3420, %v3362
          %v3519 = vadd.f32 %v3515, %v3517
          %v3520 = vadd.f32 %v3516, %v3518
          %v3521 = vmul.f32 %v3425, %v3369
          %v3522 = vmul.f32 %v3426, %v3370
          %v3523 = vadd.f32 %v3519, %v3521
          %v3524 = vadd.f32 %v3520, %v3522
          %v3525 = vmul.f32 %v3431, %v3377
          %v3526 = vmul.f32 %v3432, %v3378
          %v3527 = vadd.f32 %v3523, %v3525
          %v3528 = vadd.f32 %v3524, %v3526
          %v3529 = vmul.f32 %v3419, %v3347
          %v3530 = vmul.f32 %v3420, %v3348
          %v3531 = vmul.f32 %v3425, %v3361
          %v3532 = vmul.f32 %v3426, %v3362
          %v3533 = vadd.f32 %v3529, %v3531
          %v3534 = vadd.f32 %v3530, %v3532
          %v3535 = vmul.f32 %v3431, %v3369
          %v3536 = vmul.f32 %v3432, %v3370
          %v3537 = vadd.f32 %v3533, %v3535
          %v3538 = vadd.f32 %v3534, %v3536
          %v3539 = vmul.f32 %v3437, %v3377
          %v3540 = vmul.f32 %v3438, %v3378
          %v3541 = vadd.f32 %v3537, %v3539
          %v3542 = vadd.f32 %v3538, %v3540
          %v3543 = vmul.f32 %v3425, %v3347
          %v3544 = vmul.f32 %v3426, %v3348
          %v3545 = vmul.f32 %v3431, %v3361
          %v3546 = vmul.f32 %v3432, %v3362
          %v3547 = vadd.f32 %v3543, %v3545
          %v3548 = vadd.f32 %v3544, %v3546
          %v3549 = vmul.f32 %v3437, %v3369
          %v3550 = vmul.f32 %v3438, %v3370
          %v3551 = vadd.f32 %v3547, %v3549
          %v3552 = vadd.f32 %v3548, %v3550
          %v3553 = vmul.f32 %v3443, %v3377
          %v3554 = vmul.f32 %v3444, %v3378
          %v3555 = vadd.f32 %v3551, %v3553
          %v3556 = vadd.f32 %v3552, %v3554
          %v3557 = vpack.c.bf16 %v3334, %v3333
          %v3558 = vpack.c.bf16 %v3458, %v3457
          %v3559 = vpack.c.bf16 %v3472, %v3471
          %v3560 = vpack.c.bf16 %v3486, %v3485
          %v3561 = vpack.c.bf16 %v3500, %v3499
          %v3562 = vpack.c.bf16 %v3514, %v3513
          %v3563 = vpack.c.bf16 %v3528, %v3527
          %v3564 = vpack.c.bf16 %v3542, %v3541
          %v3565 = vpack.c.bf16 %v3556, %v3555
          %v3710 = vunpack.c.l.b16 %v3179
          %v3711 = vunpack.c.l.b16 %v3180
          %v3712 = vunpack.c.l.b16 %v3181
          %v3713 = vunpack.c.l.b16 %v3182
          %v3714 = vunpack.c.l.b16 %v3183
          %v3715 = vunpack.c.l.b16 %v3184
          %v3716 = vunpack.c.l.b16 %v3185
          %v3717 = vunpack.c.l.b16 %v3186
          %v3718 = vunpack.c.l.b16 %v3187
          %v3719 = vunpack.c.l.b16 %v3188
          %v3720 = vunpack.c.l.b16 %v3189
          %v3721 = vunpack.c.l.b16 %v3190
          %v3722 = vunpack.c.l.b16 %v3191
          %v3723 = vunpack.c.l.b16 %v3192
          %v3724 = vunpack.c.l.b16 %v3193
          %v3725 = vunpack.c.l.b16 %v3194
          %v3726 = vunpack.c.l.b16 %v3195
          %v3727 = vunpack.c.l.b16 %v3196
          %v3728 = vunpack.c.l.b16 %v3197
          %v3729 = vunpack.c.l.b16 %v3198
          %v3730 = vunpack.c.l.b16 %v3199
          %v3731 = vunpack.c.l.b16 %v3200
          %v3732 = vunpack.c.l.b16 %v3201
          %v3733 = vunpack.c.l.b16 %v3202
          %v3734 = vunpack.c.l.b16 %v3203
          %v3735 = vunpack.c.l.b16 %v3204
          %v3736 = vunpack.c.l.b16 %v3205
          %v3737 = vunpack.c.l.b16 %v3206
          %v3738 = vunpack.c.l.b16 %v3207
          %v3739 = vunpack.c.l.b16 %v3208
          %v3740 = vunpack.c.l.b16 %v3209
          %v3741 = vunpack.c.l.b16 %v3210
          %v3742 = vunpack.c.l.b16 %v3211
          %v3743 = vunpack.c.l.b16 %v3212
          %v3744 = vunpack.c.l.b16 %v3213
          %v3745 = vunpack.c.l.b16 %v3214
          %v3746 = vunpack.c.l.b16 %v3215
          %v3747 = vunpack.c.l.b16 %v3216
          %v3748 = vunpack.c.l.b16 %v3217
          %v3749 = vunpack.c.l.b16 %v3218
          %v3750 = vunpack.c.l.b16 %v3219
          %v3751 = vunpack.c.l.b16 %v3220
          %v3752 = vunpack.c.l.b16 %v3221
          %v3753 = vunpack.c.l.b16 %v3222
          %v3754 = vunpack.c.l.b16 %v3223
          %v3755 = vunpack.c.l.b16 %v3224
          %v3756 = vunpack.c.l.b16 %v3225
          %v3757 = vunpack.c.l.b16 %v3226
          %v3758 = vunpack.c.l.b16 %v3227
          %v3759 = vunpack.c.l.b16 %v3228
          %v3760 = vunpack.c.l.b16 %v3229
          %v3761 = vunpack.c.l.b16 %v3230
          %v3762 = vunpack.c.l.b16 %v3231
          %v3763 = vunpack.c.l.b16 %v3232
          %v3764 = vunpack.c.l.b16 %v3233
          %v3765 = vunpack.c.l.b16 %v3234
          %v3766 = vunpack.c.l.b16 %v3235
          %v3767 = vunpack.c.l.b16 %v3236
          %v3768 = vunpack.c.l.b16 %v3237
          %v3769 = vunpack.c.l.b16 %v3238
          %v3770 = vunpack.c.l.b16 %v3239
          %v3771 = vunpack.c.l.b16 %v3240
          %v3772 = vunpack.c.l.b16 %v3241
          %v3773 = vunpack.c.l.b16 %v3242
          %v3774 = vunpack.c.l.b16 %v3243
          %v3775 = vunpack.c.l.b16 %v3244
          %v3776 = vunpack.c.l.b16 %v3245
          %v3777 = vunpack.c.l.b16 %v3246
          %v3778 = vunpack.c.l.b16 %v3247
          %v3779 = vunpack.c.l.b16 %v3248
          %v3780 = vunpack.c.l.b16 %v3249
          %v3781 = vunpack.c.l.b16 %v3250
          %v3782 = vunpack.c.l.b16 %v3251
          %v3783 = vunpack.c.l.b16 %v3252
          %v3784 = vunpack.c.l.b16 %v3253
          %v3785 = vunpack.c.l.b16 %v3254
          %v3786 = vunpack.c.l.b16 %v3255
          %v3787 = vunpack.c.l.b16 %v3256
          %v3788 = vunpack.c.l.b16 %v3257
          %v3789 = vunpack.c.l.b16 %v3258
          %v3790 = vunpack.c.l.b16 %v3259
          %v3791 = vunpack.c.l.b16 %v3260
          %v3792 = vunpack.c.l.b16 %v3261
          %v3793 = vunpack.c.l.b16 %v3262
          %v3794 = vunpack.c.l.b16 %v3263
          %v3795 = vunpack.c.l.b16 %v3264
          %v3796 = vunpack.c.l.b16 %v3265
          %v3797 = vunpack.c.l.b16 %v3266
          %v3798 = vunpack.c.l.b16 %v3267
          %v3799 = vunpack.c.l.b16 %v3268
          %v3800 = vunpack.c.l.b16 %v3269
          %v3801 = vunpack.c.l.b16 %v3270
          %v3802 = vunpack.c.l.b16 %v3271
          %v3803 = vunpack.c.l.b16 %v3272
          %v3804 = vunpack.c.l.b16 %v3273
          %v3805 = vunpack.c.l.b16 %v3274
          %v3806 = vunpack.c.l.b16 %v3275
          %v3807 = vunpack.c.l.b16 %v3276
          %v3808 = vunpack.c.l.b16 %v3277
          %v3809 = vunpack.c.l.b16 %v3278
          %v3810 = vunpack.c.l.b16 %v3279
          %v3811 = vunpack.c.l.b16 %v3280
          %v3812 = vunpack.c.l.b16 %v3281
          %v3813 = vunpack.c.l.b16 %v3282
          %v3814 = vunpack.c.l.b16 %v3283
          %v3815 = vunpack.c.l.b16 %v3284
          %v3816 = vunpack.c.l.b16 %v3285
          %v3817 = vunpack.c.l.b16 %v3286
          %v3818 = vunpack.c.l.b16 %v3287
          %v3819 = vunpack.c.l.b16 %v3288
          %v3820 = vunpack.c.l.b16 %v3289
          %v3821 = vunpack.c.l.b16 %v3290
          %v3822 = vunpack.c.l.b16 %v3291
          %v3823 = vunpack.c.l.b16 %v3292
          %v3824 = vunpack.c.l.b16 %v3293
          %v3825 = vunpack.c.l.b16 %v3294
          %v3826 = vunpack.c.l.b16 %v3295
          %v3827 = vunpack.c.l.b16 %v3296
          %v3828 = vunpack.c.l.b16 %v3297
          %v3829 = vunpack.c.l.b16 %v3298
          %v3830 = vunpack.c.l.b16 %v3299
          %v3831 = vunpack.c.l.b16 %v3300
          %v3832 = vunpack.c.l.b16 %v3301
          %v3833 = vunpack.c.l.b16 %v3302
          %v3834 = vunpack.c.l.b16 %v3303
          %v3835 = vunpack.c.l.b16 %v3304
          %v3836 = vunpack.c.l.b16 %v3305
          %v3837 = vunpack.c.l.b16 %v3306
          %v3838 = vunpack.c.l.b16 %v3307
          %v3839 = vunpack.c.l.b16 %v3308
          %v3840 = vunpack.c.l.b16 %v3309
          %v3841 = vunpack.c.l.b16 %v3310
          %v3842 = vunpack.c.l.b16 %v3311
          %v3843 = vunpack.c.l.b16 %v3312
          %v3844 = vunpack.c.l.b16 %v3313
          %v3845 = vunpack.c.l.b16 %v3314
          %v3846 = vunpack.c.l.b16 %v3315
          %v3847 = vunpack.c.l.b16 %v3316
          %v3848 = vunpack.c.l.b16 %v3317
          %v3849 = vunpack.c.l.b16 %v3318
          %v3850 = vunpack.c.l.b16 %v3319
          %v3851 = vunpack.c.l.b16 %v3320
          %v3852 = vunpack.c.l.b16 %v3321
          %v3853 = vunpack.c.l.b16 %v3322
          %v3854 = vpack.c.b16 %v3711, %v3710
          %v3855 = vpack.c.b16 %v3713, %v3712
          %v3856 = vpack.c.b16 %v3715, %v3714
          %v3857 = vpack.c.b16 %v3717, %v3716
          %v3858 = vpack.c.b16 %v3719, %v3718
          %v3859 = vpack.c.b16 %v3721, %v3720
          %v3860 = vpack.c.b16 %v3723, %v3722
          %v3861 = vpack.c.b16 %v3725, %v3724
          %v3862 = vpack.c.b16 %v3727, %v3726
          %v3863 = vpack.c.b16 %v3729, %v3728
          %v3864 = vpack.c.b16 %v3731, %v3730
          %v3865 = vpack.c.b16 %v3733, %v3732
          %v3866 = vpack.c.b16 %v3735, %v3734
          %v3867 = vpack.c.b16 %v3737, %v3736
          %v3868 = vpack.c.b16 %v3739, %v3738
          %v3869 = vpack.c.b16 %v3741, %v3740
          %v3870 = vpack.c.b16 %v3743, %v3742
          %v3871 = vpack.c.b16 %v3745, %v3744
          %v3872 = vpack.c.b16 %v3747, %v3746
          %v3873 = vpack.c.b16 %v3749, %v3748
          %v3874 = vpack.c.b16 %v3751, %v3750
          %v3875 = vpack.c.b16 %v3753, %v3752
          %v3876 = vpack.c.b16 %v3755, %v3754
          %v3877 = vpack.c.b16 %v3757, %v3756
          %v3878 = vpack.c.b16 %v3759, %v3758
          %v3879 = vpack.c.b16 %v3761, %v3760
          %v3880 = vpack.c.b16 %v3763, %v3762
          %v3881 = vpack.c.b16 %v3765, %v3764
          %v3882 = vpack.c.b16 %v3767, %v3766
          %v3883 = vpack.c.b16 %v3769, %v3768
          %v3884 = vpack.c.b16 %v3771, %v3770
          %v3885 = vpack.c.b16 %v3773, %v3772
          %v3886 = vpack.c.b16 %v3775, %v3774
          %v3887 = vpack.c.b16 %v3777, %v3776
          %v3888 = vpack.c.b16 %v3779, %v3778
          %v3889 = vpack.c.b16 %v3781, %v3780
          %v3890 = vpack.c.b16 %v3783, %v3782
          %v3891 = vpack.c.b16 %v3785, %v3784
          %v3892 = vpack.c.b16 %v3787, %v3786
          %v3893 = vpack.c.b16 %v3789, %v3788
          %v3894 = vpack.c.b16 %v3791, %v3790
          %v3895 = vpack.c.b16 %v3793, %v3792
          %v3896 = vpack.c.b16 %v3795, %v3794
          %v3897 = vpack.c.b16 %v3797, %v3796
          %v3898 = vpack.c.b16 %v3799, %v3798
          %v3899 = vpack.c.b16 %v3801, %v3800
          %v3900 = vpack.c.b16 %v3803, %v3802
          %v3901 = vpack.c.b16 %v3805, %v3804
          %v3902 = vpack.c.b16 %v3807, %v3806
          %v3903 = vpack.c.b16 %v3809, %v3808
          %v3904 = vpack.c.b16 %v3811, %v3810
          %v3905 = vpack.c.b16 %v3813, %v3812
          %v3906 = vpack.c.b16 %v3815, %v3814
          %v3907 = vpack.c.b16 %v3817, %v3816
          %v3908 = vpack.c.b16 %v3819, %v3818
          %v3909 = vpack.c.b16 %v3821, %v3820
          %v3910 = vpack.c.b16 %v3823, %v3822
          %v3911 = vpack.c.b16 %v3825, %v3824
          %v3912 = vpack.c.b16 %v3827, %v3826
          %v3913 = vpack.c.b16 %v3829, %v3828
          %v3914 = vpack.c.b16 %v3831, %v3830
          %v3915 = vpack.c.b16 %v3833, %v3832
          %v3916 = vpack.c.b16 %v3835, %v3834
          %v3917 = vpack.c.b16 %v3837, %v3836
          %v3918 = vpack.c.b16 %v3839, %v3838
          %v3919 = vpack.c.b16 %v3841, %v3840
          %v3920 = vpack.c.b16 %v3843, %v3842
          %v3921 = vpack.c.b16 %v3845, %v3844
          %v3922 = vpack.c.b16 %v3847, %v3846
          %v3923 = vpack.c.b16 %v3849, %v3848
          %v3924 = vpack.c.b16 %v3851, %v3850
          %v3925 = vpack.c.b16 %v3853, %v3852
          %3998 = vmatpush.bf16.msra.mxu0 %v3861
          %3999 = vmatpush.bf16.msra.mxu0 %v3860
          %4000 = vmatpush.bf16.msra.mxu0 %v3859
          %4001 = vmatpush.bf16.msra.mxu0 %v3858
          %4002 = vmatpush.bf16.msra.mxu0 %v3857
          %4003 = vmatpush.bf16.msra.mxu0 %v3856
          %4004 = vmatpush.bf16.msra.mxu0 %v3855
          %4005 = vmatpush.bf16.msra.mxu0 %v3854
          %4006 = vmatmul.bf16.gmra.mxu0 %v3557
          %v4007 = vpop.f32.mrf.mxu0
          %v4008 = vadd.f32 0.0, %v4007
          %v4009 = vpop.f32.mrf.mxu0
          %v4010 = vadd.f32 0.0, %v4009
          %4011 = vdwg.mxu0
          %4012 = vmatpush.bf16.msra.mxu0 %v3869
          %4013 = vmatpush.bf16.msra.mxu0 %v3868
          %4014 = vmatpush.bf16.msra.mxu0 %v3867
          %4015 = vmatpush.bf16.msra.mxu0 %v3866
          %4016 = vmatpush.bf16.msra.mxu0 %v3865
          %4017 = vmatpush.bf16.msra.mxu0 %v3864
          %4018 = vmatpush.bf16.msra.mxu0 %v3863
          %4019 = vmatpush.bf16.msra.mxu0 %v3862
          %4020 = vmatmul.bf16.gmra.mxu0 %v3558
          %v4021 = vpop.f32.mrf.mxu0
          %v4022 = vadd.f32 %v4008, %v4021
          %v4023 = vpop.f32.mrf.mxu0
          %v4024 = vadd.f32 %v4010, %v4023
          %4025 = vdwg.mxu0
          %4026 = vmatpush.bf16.msra.mxu0 %v3877
          %4027 = vmatpush.bf16.msra.mxu0 %v3876
          %4028 = vmatpush.bf16.msra.mxu0 %v3875
          %4029 = vmatpush.bf16.msra.mxu0 %v3874
          %4030 = vmatpush.bf16.msra.mxu0 %v3873
          %4031 = vmatpush.bf16.msra.mxu0 %v3872
          %4032 = vmatpush.bf16.msra.mxu0 %v3871
          %4033 = vmatpush.bf16.msra.mxu0 %v3870
          %4034 = vmatmul.bf16.gmra.mxu0 %v3559
          %v4035 = vpop.f32.mrf.mxu0
          %v4036 = vadd.f32 %v4022, %v4035
          %v4037 = vpop.f32.mrf.mxu0
          %v4038 = vadd.f32 %v4024, %v4037
          %4039 = vdwg.mxu0
          %4040 = vmatpush.bf16.msra.mxu0 %v3885
          %4041 = vmatpush.bf16.msra.mxu0 %v3884
          %4042 = vmatpush.bf16.msra.mxu0 %v3883
          %4043 = vmatpush.bf16.msra.mxu0 %v3882
          %4044 = vmatpush.bf16.msra.mxu0 %v3881
          %4045 = vmatpush.bf16.msra.mxu0 %v3880
          %4046 = vmatpush.bf16.msra.mxu0 %v3879
          %4047 = vmatpush.bf16.msra.mxu0 %v3878
          %4048 = vmatmul.bf16.gmra.mxu0 %v3560
          %v4049 = vpop.f32.mrf.mxu0
          %v4050 = vadd.f32 %v4036, %v4049
          %v4051 = vpop.f32.mrf.mxu0
          %v4052 = vadd.f32 %v4038, %v4051
          %4053 = vdwg.mxu0
          %4054 = vmatpush.bf16.msra.mxu0 %v3893
          %4055 = vmatpush.bf16.msra.mxu0 %v3892
          %4056 = vmatpush.bf16.msra.mxu0 %v3891
          %4057 = vmatpush.bf16.msra.mxu0 %v3890
          %4058 = vmatpush.bf16.msra.mxu0 %v3889
          %4059 = vmatpush.bf16.msra.mxu0 %v3888
          %4060 = vmatpush.bf16.msra.mxu0 %v3887
          %4061 = vmatpush.bf16.msra.mxu0 %v3886
          %4062 = vmatmul.bf16.gmra.mxu0 %v3561
          %v4063 = vpop.f32.mrf.mxu0
          %v4064 = vadd.f32 %v4050, %v4063
          %v4065 = vpop.f32.mrf.mxu0
          %v4066 = vadd.f32 %v4052, %v4065
          %4067 = vdwg.mxu0
          %4068 = vmatpush.bf16.msra.mxu0 %v3901
          %4069 = vmatpush.bf16.msra.mxu0 %v3900
          %4070 = vmatpush.bf16.msra.mxu0 %v3899
          %4071 = vmatpush.bf16.msra.mxu0 %v3898
          %4072 = vmatpush.bf16.msra.mxu0 %v3897
          %4073 = vmatpush.bf16.msra.mxu0 %v3896
          %4074 = vmatpush.bf16.msra.mxu0 %v3895
          %4075 = vmatpush.bf16.msra.mxu0 %v3894
          %4076 = vmatmul.bf16.gmra.mxu0 %v3562
          %v4077 = vpop.f32.mrf.mxu0
          %v4078 = vadd.f32 %v4064, %v4077
          %v4079 = vpop.f32.mrf.mxu0
          %v4080 = vadd.f32 %v4066, %v4079
          %4081 = vdwg.mxu0
          %4082 = vmatpush.bf16.msra.mxu0 %v3909
          %4083 = vmatpush.bf16.msra.mxu0 %v3908
          %4084 = vmatpush.bf16.msra.mxu0 %v3907
          %4085 = vmatpush.bf16.msra.mxu0 %v3906
          %4086 = vmatpush.bf16.msra.mxu0 %v3905
          %4087 = vmatpush.bf16.msra.mxu0 %v3904
          %4088 = vmatpush.bf16.msra.mxu0 %v3903
          %4089 = vmatpush.bf16.msra.mxu0 %v3902
          %4090 = vmatmul.bf16.gmra.mxu0 %v3563
          %v4091 = vpop.f32.mrf.mxu0
          %v4092 = vadd.f32 %v4078, %v4091
          %v4093 = vpop.f32.mrf.mxu0
          %v4094 = vadd.f32 %v4080, %v4093
          %4095 = vdwg.mxu0
          %4096 = vmatpush.bf16.msra.mxu0 %v3917
          %4097 = vmatpush.bf16.msra.mxu0 %v3916
          %4098 = vmatpush.bf16.msra.mxu0 %v3915
          %4099 = vmatpush.bf16.msra.mxu0 %v3914
          %4100 = vmatpush.bf16.msra.mxu0 %v3913
          %4101 = vmatpush.bf16.msra.mxu0 %v3912
          %4102 = vmatpush.bf16.msra.mxu0 %v3911
          %4103 = vmatpush.bf16.msra.mxu0 %v3910
          %4104 = vmatmul.bf16.gmra.mxu0 %v3564
          %v4105 = vpop.f32.mrf.mxu0
          %v4106 = vadd.f32 %v4092, %v4105
          %v4107 = vpop.f32.mrf.mxu0
          %v4108 = vadd.f32 %v4094, %v4107
          %4109 = vdwg.mxu0
          %4110 = vmatpush.bf16.msra.mxu0 %v3925
          %4111 = vmatpush.bf16.msra.mxu0 %v3924
          %4112 = vmatpush.bf16.msra.mxu0 %v3923
          %4113 = vmatpush.bf16.msra.mxu0 %v3922
          %4114 = vmatpush.bf16.msra.mxu0 %v3921
          %4115 = vmatpush.bf16.msra.mxu0 %v3920
          %4116 = vmatpush.bf16.msra.mxu0 %v3919
          %4117 = vmatpush.bf16.msra.mxu0 %v3918
          %4118 = vmatmul.bf16.gmra.mxu0 %v3565
          %v4119 = vpop.f32.mrf.mxu0
          %v4120 = vadd.f32 %v4106, %v4119
          %v4121 = vpop.f32.mrf.mxu0
          %v4122 = vadd.f32 %v4108, %v4121
          %4123 = vdwg.mxu0
          %4124 = vst [vmem:[#allocation12] sm:$0xff] %v4120
          %4125 = vst [vmem:[#allocation12 + $0x8] sm:$0xff] %v4122
        $region68: #{tpu_custom_call.1} parent=39 // pred_fallthru
          _
        // Predicated region
        $region69: #{tpu_custom_call.1} parent=39 // pred_check
          %p4126 = pneg %p152
        $region70: #{tpu_custom_call.1} parent=39 // pred_check_branch
          %4128 = sbr.rel (%p4126) target = $region72
        $region71: #{tpu_custom_call.1} parent=39 // pred_region
          %4130 = vsyncadd [#allocation5], 0
          %s4131 = sshll.u32 [#allocation12], 4
          %s4132 = int_to_ptr.vmem [resolvable:$true] %s4131
          %s4133 = sshll.u32 %s5, 4
          %s4134 = int_to_ptr.hbm [resolvable:$true] %s4133
          %4139 = dma.vmem_to_hbm [thread:$0]  %s4132, 256, %s4134, [#allocation5], 128, 128, 8
        $region72: #{tpu_custom_call.1} parent=39 // pred_fallthru
          _
        // Predicated region
        $region73: #{tpu_custom_call.1} parent=39 // pred_check
          %p4140 = pneg %p152
        $region74: #{tpu_custom_call.1} parent=39 // pred_check_branch
          %4142 = sbr.rel (%p4140) target = $region76
        $region75: #{tpu_custom_call.1} parent=39 // pred_region
          %4144 = dma.done [#allocation5], 256
        $region76: #{tpu_custom_call.1} parent=39 // pred_fallthru
          _
      $region40: #{tpu_custom_call.1} parent=5 // pred_fallthru
        _
      %p4145 = scmp.le.s32.totalorder 2, %s19
      // Predicated region
      $region77: #{tpu_custom_call.1} parent=5 // pred_check
        %p4146 = pneg %p4145
      $region78: #{tpu_custom_call.1} parent=5 // pred_check_branch
        %4148 = sbr.rel (%p4146) target = $region80
      $region79: #{tpu_custom_call.1} parent=5 // pred_region
        %s4149 = ssub.s32 %s19, 2
      $region80: #{tpu_custom_call.1} parent=5 // pred_fallthru
        _
    $region6: #{tpu_custom_call.1} parent=1 // loop_footer
      %s23 = sadd.s32 1, %s19
    $region7: #{tpu_custom_call.1} parent=1 // loop_footer_branch
      %18 = sbr.rel target = $region3
    $region8: #{tpu_custom_call.1} parent=1 // loop_exit
      _
    %4150 = vsyncpa [#allocation4], 1
    %s4151 = scalar_lea.sflag [#allocation4], 1
    %4152 = vsyncpa %s4151, 1
    %4153 = vsyncpa [#allocation7], 1
    %s4154 = scalar_lea.sflag [#allocation7], 1
    %4155 = vsyncpa %s4154, 1
    %4156 = vsyncpa [#allocation10], 1
    %4157 = vsyncpa [#allocation5], 1
    %s4158 = scalar_lea.sflag [#allocation5], 1
    %4159 = vsyncpa %s4158, 1

// kernel: tpu_custom_call.1
$region0: #{tpu_custom_call.1}
  #allocation0 [shape = 'u32[]', space=smem, size = 0x4, offset = 0x4, fixed_abs, tag = 'smem constant byte address 0x4 - core index']
  #allocation1 [shape = 'u32[72,128]{1,0:T(1,128)}', space=vmem, size = 0x9000, scoped, tag = 'internal scratch']
  #allocation2 [shape = 'f32[16,128]{1,0:T(8,128)}', space=vmem, size = 0x2000, scoped, tag = 'scratch operand']
  %s0 = inlined_call_operand.hbm [shape: f32[16,256], index: 0, kind: input, shape index: {}]
  %s1 = inlined_call_operand.hbm [shape: bf16[2304,128], index: 1, kind: input, shape index: {}]
  %s2 = inlined_call_operand.hbm [shape: bf16[1152,128], index: 2, kind: input, shape index: {}]
  %s3 = inlined_call_operand.hbm [shape: bf16[1152,128], index: 3, kind: input, shape index: {}]
  %s4 = inlined_call_operand.hbm [shape: bf16[1152,128], index: 4, kind: input, shape index: {}]
  %s5 = inlined_call_operand.hbm [shape: f32[16,128], index: 5, kind: output, shape index: {}]
  %s6 = sld [smem:[#allocation0]]
  $region81: #{tpu_custom_call.1} parent=0
    _
  %s8 = ssub.s32 1, %s6
  %s9 = scalar_select 0, %s8, %s6
  $region1: #{tpu_custom_call.1} parent=0
    #allocation3 [shape = 'u8[16384]{0}', space=vmem, size = 0x4000, scoped, tag = 'input window, operand 0']
    #allocation4 [shape = 's32[2]{0}', space=sflag, size = 0x8, scoped, tag = 'scoped memory for tpu_custom_call.1']
    #allocation5 [shape = 's32[2]{0}', space=sflag, size = 0x8, scoped, tag = 'scoped memory for tpu_custom_call.1']
    #allocation6 [shape = 'u8[589824]{0}', space=vmem, size = 0x90000, scoped, tag = 'input window, operand 1']
    #allocation7 [shape = 's32[2]{0}', space=sflag, size = 0x8, scoped, tag = 'scoped memory for tpu_custom_call.1']
    #allocation8 [shape = 'u8[294912]{0}', space=vmem, size = 0x48000, scoped, tag = 'input window, operand 2, single buffered']
    #allocation9 [shape = 'u8[294912]{0}', space=vmem, size = 0x48000, scoped, tag = 'input window, operand 3, single buffered']
    #allocation10 [shape = 's32[1]{0}', space=sflag, size = 0x4, scoped, tag = 'scoped memory for tpu_custom_call.1']
    #allocation11 [shape = 'u8[294912]{0}', space=vmem, size = 0x48000, scoped, tag = 'input window, operand 4, single buffered']
    #allocation12 [shape = 'u8[8192]{0}', space=vmem, size = 0x2000, scoped, tag = 'output window, operand 0, single buffered']
    %10 = vsyncpa [#allocation4], 0
    %s11 = scalar_lea.sflag [#allocation4], 1
    %12 = vsyncpa %s11, 0
    %13 = vsyncpa [#allocation7], 0
    %s14 = scalar_lea.sflag [#allocation7], 1
    %15 = vsyncpa %s14, 0
    %16 = vsyncpa [#allocation10], 0
    %17 = vsyncpa [#allocation5], 0
    loop: start=0, step=1, limit=4
    $region2: #{tpu_custom_call.1} parent=1 // loop_pre_header
      _
    $region3: #{tpu_custom_call.1} parent=1 // loop_header
      %s19 = sphi 0, %s23
      %p20 = scmp.ge.s32.totalorder %s19, 4
      %s29 = sphi 0, %s31
      %s32 = sphi 0, %s29
      %s33 = sphi 0, %s32
      %s49 = sphi 0, %s33
      %s55 = sphi 0, %s57
      %s58 = sphi 0, %s55
      %s59 = sphi 0, %s58
      %s75 = sphi 0, %s59
      %s79 = sphi 0, %s79
      %s81 = sphi 0, %s79
      %s82 = sphi 0, %s81
      %s96 = sphi 0, %s82
      %s100 = sphi 0, %s100
      %s102 = sphi 0, %s100
      %s103 = sphi 0, %s102
      %s117 = sphi 0, %s103
      %s121 = sphi 0, %s121
      %s123 = sphi 0, %s121
      %s124 = sphi 0, %s123
      %s138 = sphi 0, %s124
      %s142 = sphi 0, %s142
      %s144 = sphi 0, %s142
      %s145 = sphi 0, %s144
      %s159 = sphi 0, %s145
    $region4: #{tpu_custom_call.1} parent=1 // loop_header_branch
      %22 = sbr.rel (%p20) target = $region8
    $region5: #{tpu_custom_call.1} parent=1 // loop_body
      %s24 = ssub.s32 %s19, 1
      %s25 = ssub.s32 %s19, 2
      %s26 = sadd.s32 %s19, 1
      %s27 = ssub.s32 %s19, %s26
      %p28 = scmp.eq.s32.totalorder %s27, 0
      %s30 = sadd.s32 %s29, 1
      %s31 = scalar_select %p28, %s29, %s30
      %p34 = pneg %p28
      %p35 = scmp.eq.s32.totalorder %s19, 1
      %p36 = por %p34, %p35
      %p37 = scmp.ne.s32.totalorder %s29, %s32
      %p38 = scmp.eq.s32.totalorder %s19, 0
      %p39 = por %p37, %p38
      %p40 = scmp.ne.s32.totalorder %s29, %s32
      %p41 = scmp.eq.s32.totalorder %s24, 1
      %p42 = por %p40, %p41
      %p43 = scmp.ne.s32.totalorder %s32, %s33
      %p44 = scmp.eq.s32.totalorder %s24, 0
      %p45 = por %p43, %p44
      %p46 = scmp.ne.s32.totalorder %s32, %s33
      %p47 = scmp.eq.s32.totalorder %s25, 1
      %p48 = por %p46, %p47
      %p50 = scmp.ne.s32.totalorder %s33, %s49
      %p51 = scmp.eq.s32.totalorder %s25, 0
      %p52 = por %p50, %p51
      %s53 = ssub.s32 %s19, %s26
      %p54 = scmp.eq.s32.totalorder %s53, 0
      %s56 = sadd.s32 %s55, 1
      %s57 = scalar_select %p54, %s55, %s56
      %p60 = pneg %p54
      %p61 = scmp.eq.s32.totalorder %s19, 1
      %p62 = por %p60, %p61
      %p63 = scmp.ne.s32.totalorder %s55, %s58
      %p64 = scmp.eq.s32.totalorder %s19, 0
      %p65 = por %p63, %p64
      %p66 = scmp.ne.s32.totalorder %s55, %s58
      %p67 = scmp.eq.s32.totalorder %s24, 1
      %p68 = por %p66, %p67
      %p69 = scmp.ne.s32.totalorder %s58, %s59
      %p70 = scmp.eq.s32.totalorder %s24, 0
      %p71 = por %p69, %p70
      %p72 = scmp.ne.s32.totalorder %s58, %s59
      %p73 = scmp.eq.s32.totalorder %s25, 1
      %p74 = por %p72, %p73
      %p76 = scmp.ne.s32.totalorder %s59, %s75
      %p77 = scmp.eq.s32.totalorder %s25, 0
      %p78 = por %p76, %p77
      %s80 = sadd.s32 %s79, 1
      %p83 = scmp.eq.s32.totalorder %s19, 1
      %p84 = scmp.ne.s32.totalorder %s79, %s81
      %p85 = scmp.eq.s32.totalorder %s19, 0
      %p86 = por %p84, %p85
      %p87 = scmp.ne.s32.totalorder %s79, %s81
      %p88 = scmp.eq.s32.totalorder %s24, 1
      %p89 = por %p87, %p88
      %p90 = scmp.ne.s32.totalorder %s81, %s82
      %p91 = scmp.eq.s32.totalorder %s24, 0
      %p92 = por %p90, %p91
      %p93 = scmp.ne.s32.totalorder %s81, %s82
      %p94 = scmp.eq.s32.totalorder %s25, 1
      %p95 = por %p93, %p94
      %p97 = scmp.ne.s32.totalorder %s82, %s96
      %p98 = scmp.eq.s32.totalorder %s25, 0
      %p99 = por %p97, %p98
      %s101 = sadd.s32 %s100, 1
      %p104 = scmp.eq.s32.totalorder %s19, 1
      %p105 = scmp.ne.s32.totalorder %s100, %s102
      %p106 = scmp.eq.s32.totalorder %s19, 0
      %p107 = por %p105, %p106
      %p108 = scmp.ne.s32.totalorder %s100, %s102
      %p109 = scmp.eq.s32.totalorder %s24, 1
      %p110 = por %p108, %p109
      %p111 = scmp.ne.s32.totalorder %s102, %s103
      %p112 = scmp.eq.s32.totalorder %s24, 0
      %p113 = por %p111, %p112
      %p114 = scmp.ne.s32.totalorder %s102, %s103
      %p115 = scmp.eq.s32.totalorder %s25, 1
      %p116 = por %p114, %p115
      %p118 = scmp.ne.s32.totalorder %s103, %s117
      %p119 = scmp.eq.s32.totalorder %s25, 0
      %p120 = por %p118, %p119
      %s122 = sadd.s32 %s121, 1
      %p125 = scmp.eq.s32.totalorder %s19, 1
      %p126 = scmp.ne.s32.totalorder %s121, %s123
      %p127 = scmp.eq.s32.totalorder %s19, 0
      %p128 = por %p126, %p127
      %p129 = scmp.ne.s32.totalorder %s121, %s123
      %p130 = scmp.eq.s32.totalorder %s24, 1
      %p131 = por %p129, %p130
      %p132 = scmp.ne.s32.totalorder %s123, %s124
      %p133 = scmp.eq.s32.totalorder %s24, 0
      %p134 = por %p132, %p133
      %p135 = scmp.ne.s32.totalorder %s123, %s124
      %p136 = scmp.eq.s32.totalorder %s25, 1
      %p137 = por %p135, %p136
      %p139 = scmp.ne.s32.totalorder %s124, %s138
      %p140 = scmp.eq.s32.totalorder %s25, 0
      %p141 = por %p139, %p140
      %s143 = sadd.s32 %s142, 1
      %p146 = scmp.eq.s32.totalorder %s19, 1
      %p147 = scmp.ne.s32.totalorder %s142, %s144
      %p148 = scmp.eq.s32.totalorder %s19, 0
      %p149 = por %p147, %p148
      %p150 = scmp.ne.s32.totalorder %s142, %s144
      %p151 = scmp.eq.s32.totalorder %s24, 1
      %p152 = por %p150, %p151
      %p153 = scmp.ne.s32.totalorder %s144, %s145
      %p154 = scmp.eq.s32.totalorder %s24, 0
      %p155 = por %p153, %p154
      %p156 = scmp.ne.s32.totalorder %s144, %s145
      %p157 = scmp.eq.s32.totalorder %s25, 1
      %p158 = por %p156, %p157
      %p160 = scmp.ne.s32.totalorder %s145, %s159
      %p161 = scmp.eq.s32.totalorder %s25, 0
      %p162 = por %p160, %p161
      %p163 = scmp.le.s32.totalorder 1, %s19
      %p164 = scmp.lt.s32.totalorder %s19, 3
      %p165 = pnand %p163, %p164
      %p166 = pneg %p165
      // Predicated region
      $region9: #{tpu_custom_call.1} parent=5 // pred_check
        _
      $region10: #{tpu_custom_call.1} parent=5 // pred_check_branch
        %168 = sbr.rel (%p165) target = $region12
      $region11: #{tpu_custom_call.1} parent=5 // pred_region
        %s169 = ssub.s32 %s19, 1
        // Predicated region
        $region13: #{tpu_custom_call.1} parent=11 // pred_check
          %p170 = pneg %p92
        $region14: #{tpu_custom_call.1} parent=11 // pred_check_branch
          %172 = sbr.rel (%p170) target = $region16
        $region15: #{tpu_custom_call.1} parent=11 // pred_region
          %174 = vsyncadd [#allocation7], 0
          %s175 = sshll.u32 %s2, 4
          %s176 = int_to_ptr.hbm [resolvable:$true] %s175
          %s177 = sshll.u32 [#allocation8], 4
          %s178 = int_to_ptr.vmem [resolvable:$true] %s177
          %183 = dma.hbm_to_vmem [thread:$0]  %s176, 9216, %s178, [#allocation7], 64, 64, 4
        $region16: #{tpu_custom_call.1} parent=11 // pred_fallthru
          _
        // Predicated region
        $region17: #{tpu_custom_call.1} parent=11 // pred_check
          %p184 = pneg %p113
        $region18: #{tpu_custom_call.1} parent=11 // pred_check_branch
          %186 = sbr.rel (%p184) target = $region20
        $region19: #{tpu_custom_call.1} parent=11 // pred_region
          %188 = vsyncadd [#allocation10], 0
          %s189 = sshll.u32 %s3, 4
          %s190 = int_to_ptr.hbm [resolvable:$true] %s189
          %s191 = sshll.u32 [#allocation9], 4
          %s192 = int_to_ptr.vmem [resolvable:$true] %s191
          %197 = dma.hbm_to_vmem [thread:$0]  %s190, 9216, %s192, [#allocation10], 64, 64, 4
        $region20: #{tpu_custom_call.1} parent=11 // pred_fallthru
          _
        // Predicated region
        $region21: #{tpu_custom_call.1} parent=11 // pred_check
          %p198 = pneg %p134
        $region22: #{tpu_custom_call.1} parent=11 // pred_check_branch
          %200 = sbr.rel (%p198) target = $region24
        $region23: #{tpu_custom_call.1} parent=11 // pred_region
          %202 = vsyncadd [#allocation10], 0
          %s203 = sshll.u32 %s4, 4
          %s204 = int_to_ptr.hbm [resolvable:$true] %s203
          %s205 = sshll.u32 [#allocation11], 4
          %s206 = int_to_ptr.vmem [resolvable:$true] %s205
          %211 = dma.hbm_to_vmem [thread:$0]  %s204, 9216, %s206, [#allocation10], 64, 64, 4
        $region24: #{tpu_custom_call.1} parent=11 // pred_fallthru
          _
      $region12: #{tpu_custom_call.1} parent=5 // pred_fallthru
        _
      %p212 = scmp.lt.s32.totalorder %s19, 2
      // Predicated region
      $region25: #{tpu_custom_call.1} parent=5 // pred_check
        %p213 = pneg %p212
      $region26: #{tpu_custom_call.1} parent=5 // pred_check_branch
        %215 = sbr.rel (%p213) target = $region28
      $region27: #{tpu_custom_call.1} parent=5 // pred_region
        // Predicated region
        $region29: #{tpu_custom_call.1} parent=27 // pred_check
          %p216 = pneg %p39
        $region30: #{tpu_custom_call.1} parent=27 // pred_check_branch
          %218 = sbr.rel (%p216) target = $region32
        $region31: #{tpu_custom_call.1} parent=27 // pred_region
          %s219 = sand.u32 %s29, 1
          %s220 = scalar_lea.sflag [#allocation4], %s219
          %s221 = sand.u32 %s29, 1
          %s222 = smul.addr %s221, 16
          %s223 = scalar_lea.vmem [#allocation3], %s222
          %225 = vsyncadd %s220, 0
          %s226 = smul.addr %s19, 8
          %s227 = scalar_lea.hbm %s0, %s226
          %s228 = sshll.u32 %s227, 4
          %s229 = int_to_ptr.hbm [resolvable:$true] %s228
          %s230 = sshll.u32 %s223, 4
          %s231 = int_to_ptr.vmem [resolvable:$true] %s230
          %236 = dma.hbm_to_vmem [thread:$0]  %s229, 256, %s231, %s220, 256, 128, 8
        $region32: #{tpu_custom_call.1} parent=27 // pred_fallthru
          _
        // Predicated region
        $region33: #{tpu_custom_call.1} parent=27 // pred_check
          %p237 = pneg %p65
        $region34: #{tpu_custom_call.1} parent=27 // pred_check_branch
          %239 = sbr.rel (%p237) target = $region36
        $region35: #{tpu_custom_call.1} parent=27 // pred_region
          %s240 = sand.u32 %s19, 1
          %s241 = scalar_lea.sflag [#allocation7], %s240
          %s242 = sand.u32 %s55, 1
          %s243 = smul.addr %s242, 576
          %s244 = scalar_lea.vmem [#allocation6], %s243
          %s245 = smul.u32 144, %s19
          %247 = vsyncadd %s241, 0
          %s248 = smul.addr %s245, 4
          %s249 = scalar_lea.hbm %s1, %s248
          %s250 = sshll.u32 %s249, 4
          %s251 = int_to_ptr.hbm [resolvable:$true] %s250
          %s252 = sshll.u32 %s244, 4
          %s253 = int_to_ptr.vmem [resolvable:$true] %s252
          %258 = dma.hbm_to_vmem [thread:$0]  %s251, 9216, %s253, %s241, 64, 64, 4
        $region36: #{tpu_custom_call.1} parent=27 // pred_fallthru
          _
      $region28: #{tpu_custom_call.1} parent=5 // pred_fallthru
        _
      %p259 = scmp.le.s32.totalorder 1, %s19
      %p260 = scmp.lt.s32.totalorder %s19, 3
      %p261 = pnand %p259, %p260
      %p262 = pneg %p261
      // Predicated region
      $region37: #{tpu_custom_call.1} parent=5 // pred_check
        _
      $region38: #{tpu_custom_call.1} parent=5 // pred_check_branch
        %264 = sbr.rel (%p261) target = $region40
      $region39: #{tpu_custom_call.1} parent=5 // pred_region
        %s265 = ssub.s32 %s19, 1
        %s266 = sand.u32 %s32, 1
        %s267 = scalar_lea.sflag [#allocation4], %s266
        %s268 = sand.u32 %s32, 1
        %s269 = smul.addr %s268, 16
        %s270 = scalar_lea.vmem [#allocation3], %s269
        // Predicated region
        $region41: #{tpu_custom_call.1} parent=39 // pred_check
          %p271 = pneg %p45
        $region42: #{tpu_custom_call.1} parent=39 // pred_check_branch
          %273 = sbr.rel (%p271) target = $region44
        $region43: #{tpu_custom_call.1} parent=39 // pred_region
          %275 = dma.done %s267, 256
        $region44: #{tpu_custom_call.1} parent=39 // pred_fallthru
          _
        %s276 = sand.u32 %s24, 1
        %s277 = scalar_lea.sflag [#allocation7], %s276
        %s278 = sand.u32 %s58, 1
        %s279 = smul.addr %s278, 576
        %s280 = scalar_lea.vmem [#allocation6], %s279
        // Predicated region
        $region45: #{tpu_custom_call.1} parent=39 // pred_check
          %p281 = pneg %p71
        $region46: #{tpu_custom_call.1} parent=39 // pred_check_branch
          %283 = sbr.rel (%p281) target = $region48
        $region47: #{tpu_custom_call.1} parent=39 // pred_region
          %285 = dma.done %s277, 9216
        $region48: #{tpu_custom_call.1} parent=39 // pred_fallthru
          _
        // Predicated region
        $region49: #{tpu_custom_call.1} parent=39 // pred_check
          %p286 = pneg %p92
        $region50: #{tpu_custom_call.1} parent=39 // pred_check_branch
          %288 = sbr.rel (%p286) target = $region52
        $region51: #{tpu_custom_call.1} parent=39 // pred_region
          %290 = dma.done [#allocation7], 9216
        $region52: #{tpu_custom_call.1} parent=39 // pred_fallthru
          _
        // Predicated region
        $region53: #{tpu_custom_call.1} parent=39 // pred_check
          %p291 = pneg %p113
        $region54: #{tpu_custom_call.1} parent=39 // pred_check_branch
          %293 = sbr.rel (%p291) target = $region56
        $region55: #{tpu_custom_call.1} parent=39 // pred_region
          %295 = dma.done [#allocation10], 9216
        $region56: #{tpu_custom_call.1} parent=39 // pred_fallthru
          _
        // Predicated region
        $region57: #{tpu_custom_call.1} parent=39 // pred_check
          %p296 = pneg %p134
        $region58: #{tpu_custom_call.1} parent=39 // pred_check_branch
          %298 = sbr.rel (%p296) target = $region60
        $region59: #{tpu_custom_call.1} parent=39 // pred_region
          %300 = dma.done [#allocation10], 9216
        $region60: #{tpu_custom_call.1} parent=39 // pred_fallthru
          _
        %s301 = sand.u32 %s32, 1
        %s302 = scalar_lea.sflag [#allocation4], %s301
        %s303 = sand.u32 %s32, 1
        %s304 = smul.addr %s303, 16
        %s305 = scalar_lea.vmem [#allocation3], %s304
        %p306 = pneg %p45
        %p307 = pneg %p42
        %s308 = sand.u32 %s24, 1
        %s309 = scalar_lea.sflag [#allocation7], %s308
        %s310 = sand.u32 %s58, 1
        %s311 = smul.addr %s310, 576
        %s312 = scalar_lea.vmem [#allocation6], %s311
        %p313 = pneg %p71
        %p314 = pneg %p68
        %p315 = pneg %p92
        %p316 = pneg %p89
        %p317 = pneg %p113
        %p318 = pneg %p110
        %p319 = pneg %p134
        %p320 = pneg %p131
        %p321 = pneg %p155
        %p322 = pneg %p152
        %s323 = smul.u32 144, %s24
        %p324 = scmp.eq.s32.totalorder %s24, 0
        // Predicated region
        $region61: #{tpu_custom_call.1} parent=39 // pred_check
          %p325 = pneg %p324
        $region62: #{tpu_custom_call.1} parent=39 // pred_check_branch
          %327 = sbr.rel (%p325) target = $region64
        $region63: #{tpu_custom_call.1} parent=39 // pred_region
          %328 = vst [vmem:[#allocation2] sm:$0xff] 0.0
          %329 = vst [vmem:[#allocation2 + $0x8] sm:$0xff] 0.0
        $region64: #{tpu_custom_call.1} parent=39 // pred_fallthru
          _
        %v330 = vld [vmem:[%s270] sm:$0xff]
        %v331 = vld [vmem:[%s270 + $0x8] sm:$0xff]
        %v332 = vsub.f32 0.0, %v330
        %v333 = vsub.f32 0.0, %v331
        %v334 = vmul.f32 %v332, 1.442695
        %v335 = vpow.pop %v334
        %v336 = vmul.f32 %v333, 1.442695
        %v337 = vpow.pop %v336
        %v338 = vadd.f32 %v335, 1.0
        %v339 = vadd.f32 %v337, 1.0
        %v340 = vrcp.pop %v338
        %v341 = vrcp.pop %v339
        %v342 = vmul.f32 %v330, %v340
        %v343 = vmul.f32 %v331, %v341
        %v344 = vsub.f32 %v330, -2.2
        %v345 = vsub.f32 %v331, -2.2
        %v346 = vmul.f32 %v344, 2.5
        %v347 = vmul.f32 %v345, 2.5
        %v348 = vfloor.f32 %v346
        %v349 = vfloor.f32 %v347
        %v350 = vsub.f32 %v346, %v348
        %v351 = vsub.f32 %v347, %v349
        %v352 = vmul.f32 %v350, %v350
        %v353 = vmul.f32 %v351, %v351
        %v354 = vmul.f32 %v352, %v350
        %v355 = vmul.f32 %v353, %v351
        %v356 = vmul.f32 %v354, 0.16666667
        %v357 = vmul.f32 %v355, 0.16666667
        %v358 = vmul.f32 %v350, 3.0
        %v359 = vmul.f32 %v351, 3.0
        %v360 = vsub.f32 3.0, %v358
        %v361 = vsub.f32 3.0, %v359
        %v362 = vmul.f32 %v360, %v350
        %v363 = vmul.f32 %v361, %v351
        %v364 = vadd.f32 %v362, 3.0
        %v365 = vadd.f32 %v363, 3.0
        %v366 = vmul.f32 %v364, %v350
        %v367 = vmul.f32 %v365, %v351
        %v368 = vadd.f32 %v366, 1.0
        %v369 = vadd.f32 %v367, 1.0
        %v370 = vmul.f32 %v368, 0.16666667
        %v371 = vmul.f32 %v369, 0.16666667
        %v372 = vsub.f32 %v358, 6.0
        %v373 = vsub.f32 %v359, 6.0
        %v374 = vmul.f32 %v372, %v352
        %v375 = vmul.f32 %v373, %v353
        %v376 = vadd.f32 %v374, 4.0
        %v377 = vadd.f32 %v375, 4.0
        %v378 = vmul.f32 %v376, 0.16666667
        %v379 = vmul.f32 %v377, 0.16666667
        %v380 = vsub.f32 1.0, %v350
        %v381 = vsub.f32 1.0, %v351
        %v382 = vmul.f32 %v380, %v380
        %v383 = vmul.f32 %v381, %v381
        %v384 = vmul.f32 %v382, %v380
        %v385 = vmul.f32 %v383, %v381
        %v386 = vmul.f32 %v384, 0.16666667
        %v387 = vmul.f32 %v385, 0.16666667
        %vm388 = vcmp.eq.f32.partialorder %v348, 0.0
        %vm389 = vcmp.eq.f32.partialorder %v349, 0.0
        %v390 = vsel %vm388, 1, 0
        %v391 = vsel %vm389, 1, 0
        %v392 = vcvt.s32.f32 %v390
        %v393 = vcvt.s32.f32 %v391
        %vm394 = vcmp.eq.f32.partialorder %v348, 1.0
        %vm395 = vcmp.eq.f32.partialorder %v349, 1.0
        %v396 = vsel %vm394, 1, 0
        %v397 = vsel %vm395, 1, 0
        %v398 = vcvt.s32.f32 %v396
        %v399 = vcvt.s32.f32 %v397
        %vm400 = vcmp.eq.f32.partialorder %v348, 2.0
        %vm401 = vcmp.eq.f32.partialorder %v349, 2.0
        %v402 = vsel %vm400, 1, 0
        %v403 = vsel %vm401, 1, 0
        %v404 = vcvt.s32.f32 %v402
        %v405 = vcvt.s32.f32 %v403
        %vm406 = vcmp.eq.f32.partialorder %v348, 3.0
        %vm407 = vcmp.eq.f32.partialorder %v349, 3.0
        %v408 = vsel %vm406, 1, 0
        %v409 = vsel %vm407, 1, 0
        %v410 = vcvt.s32.f32 %v408
        %v411 = vcvt.s32.f32 %v409
        %vm412 = vcmp.eq.f32.partialorder %v348, 4.0
        %vm413 = vcmp.eq.f32.partialorder %v349, 4.0
        %v414 = vsel %vm412, 1, 0
        %v415 = vsel %vm413, 1, 0
        %v416 = vcvt.s32.f32 %v414
        %v417 = vcvt.s32.f32 %v415
        %vm418 = vcmp.eq.f32.partialorder %v348, 5.0
        %vm419 = vcmp.eq.f32.partialorder %v349, 5.0
        %v420 = vsel %vm418, 1, 0
        %v421 = vsel %vm419, 1, 0
        %v422 = vcvt.s32.f32 %v420
        %v423 = vcvt.s32.f32 %v421
        %vm424 = vcmp.eq.f32.partialorder %v348, 6.0
        %vm425 = vcmp.eq.f32.partialorder %v349, 6.0
        %v426 = vsel %vm424, 1, 0
        %v427 = vsel %vm425, 1, 0
        %v428 = vcvt.s32.f32 %v426
        %v429 = vcvt.s32.f32 %v427
        %vm430 = vcmp.eq.f32.partialorder %v348, 7.0
        %vm431 = vcmp.eq.f32.partialorder %v349, 7.0
        %v432 = vsel %vm430, 1, 0
        %v433 = vsel %vm431, 1, 0
        %v434 = vcvt.s32.f32 %v432
        %v435 = vcvt.s32.f32 %v433
        %vm436 = vcmp.eq.f32.partialorder %v348, 8.0
        %vm437 = vcmp.eq.f32.partialorder %v349, 8.0
        %v438 = vsel %vm436, 1, 0
        %v439 = vsel %vm437, 1, 0
        %v440 = vcvt.s32.f32 %v438
        %v441 = vcvt.s32.f32 %v439
        %vm442 = vcmp.eq.f32.partialorder %v348, 9.0
        %vm443 = vcmp.eq.f32.partialorder %v349, 9.0
        %v444 = vsel %vm442, 1, 0
        %v445 = vsel %vm443, 1, 0
        %v446 = vcvt.s32.f32 %v444
        %v447 = vcvt.s32.f32 %v445
        %vm448 = vcmp.eq.f32.partialorder %v348, 10.0
        %vm449 = vcmp.eq.f32.partialorder %v349, 10.0
        %v450 = vsel %vm448, 1, 0
        %v451 = vsel %vm449, 1, 0
        %v452 = vcvt.s32.f32 %v450
        %v453 = vcvt.s32.f32 %v451
        %v454 = vmul.f32 %v392, %v356
        %v455 = vmul.f32 %v393, %v357
        %v456 = vmul.f32 %v398, %v370
        %v457 = vmul.f32 %v399, %v371
        %v458 = vadd.f32 %v454, %v456
        %v459 = vadd.f32 %v455, %v457
        %v460 = vmul.f32 %v404, %v378
        %v461 = vmul.f32 %v405, %v379
        %v462 = vadd.f32 %v458, %v460
        %v463 = vadd.f32 %v459, %v461
        %v464 = vmul.f32 %v410, %v386
        %v465 = vmul.f32 %v411, %v387
        %v466 = vadd.f32 %v462, %v464
        %v467 = vadd.f32 %v463, %v465
        %v468 = vmul.f32 %v398, %v356
        %v469 = vmul.f32 %v399, %v357
        %v470 = vmul.f32 %v404, %v370
        %v471 = vmul.f32 %v405, %v371
        %v472 = vadd.f32 %v468, %v470
        %v473 = vadd.f32 %v469, %v471
        %v474 = vmul.f32 %v410, %v378
        %v475 = vmul.f32 %v411, %v379
        %v476 = vadd.f32 %v472, %v474
        %v477 = vadd.f32 %v473, %v475
        %v478 = vmul.f32 %v416, %v386
        %v479 = vmul.f32 %v417, %v387
        %v480 = vadd.f32 %v476, %v478
        %v481 = vadd.f32 %v477, %v479
        %v482 = vmul.f32 %v404, %v356
        %v483 = vmul.f32 %v405, %v357
        %v484 = vmul.f32 %v410, %v370
        %v485 = vmul.f32 %v411, %v371
        %v486 = vadd.f32 %v482, %v484
        %v487 = vadd.f32 %v483, %v485
        %v488 = vmul.f32 %v416, %v378
        %v489 = vmul.f32 %v417, %v379
        %v490 = vadd.f32 %v486, %v488
        %v491 = vadd.f32 %v487, %v489
        %v492 = vmul.f32 %v422, %v386
        %v493 = vmul.f32 %v423, %v387
        %v494 = vadd.f32 %v490, %v492
        %v495 = vadd.f32 %v491, %v493
        %v496 = vmul.f32 %v410, %v356
        %v497 = vmul.f32 %v411, %v357
        %v498 = vmul.f32 %v416, %v370
        %v499 = vmul.f32 %v417, %v371
        %v500 = vadd.f32 %v496, %v498
        %v501 = vadd.f32 %v497, %v499
        %v502 = vmul.f32 %v422, %v378
        %v503 = vmul.f32 %v423, %v379
        %v504 = vadd.f32 %v500, %v502
        %v505 = vadd.f32 %v501, %v503
        %v506 = vmul.f32 %v428, %v386
        %v507 = vmul.f32 %v429, %v387
        %v508 = vadd.f32 %v504, %v506
        %v509 = vadd.f32 %v505, %v507
        %v510 = vmul.f32 %v416, %v356
        %v511 = vmul.f32 %v417, %v357
        %v512 = vmul.f32 %v422, %v370
        %v513 = vmul.f32 %v423, %v371
        %v514 = vadd.f32 %v510, %v512
        %v515 = vadd.f32 %v511, %v513
        %v516 = vmul.f32 %v428, %v378
        %v517 = vmul.f32 %v429, %v379
        %v518 = vadd.f32 %v514, %v516
        %v519 = vadd.f32 %v515, %v517
        %v520 = vmul.f32 %v434, %v386
        %v521 = vmul.f32 %v435, %v387
        %v522 = vadd.f32 %v518, %v520
        %v523 = vadd.f32 %v519, %v521
        %v524 = vmul.f32 %v422, %v356
        %v525 = vmul.f32 %v423, %v357
        %v526 = vmul.f32 %v428, %v370
        %v527 = vmul.f32 %v429, %v371
        %v528 = vadd.f32 %v524, %v526
        %v529 = vadd.f32 %v525, %v527
        %v530 = vmul.f32 %v434, %v378
        %v531 = vmul.f32 %v435, %v379
        %v532 = vadd.f32 %v528, %v530
        %v533 = vadd.f32 %v529, %v531
        %v534 = vmul.f32 %v440, %v386
        %v535 = vmul.f32 %v441, %v387
        %v536 = vadd.f32 %v532, %v534
        %v537 = vadd.f32 %v533, %v535
        %v538 = vmul.f32 %v428, %v356
        %v539 = vmul.f32 %v429, %v357
        %v540 = vmul.f32 %v434, %v370
        %v541 = vmul.f32 %v435, %v371
        %v542 = vadd.f32 %v538, %v540
        %v543 = vadd.f32 %v539, %v541
        %v544 = vmul.f32 %v440, %v378
        %v545 = vmul.f32 %v441, %v379
        %v546 = vadd.f32 %v542, %v544
        %v547 = vadd.f32 %v543, %v545
        %v548 = vmul.f32 %v446, %v386
        %v549 = vmul.f32 %v447, %v387
        %v550 = vadd.f32 %v546, %v548
        %v551 = vadd.f32 %v547, %v549
        %v552 = vmul.f32 %v434, %v356
        %v553 = vmul.f32 %v435, %v357
        %v554 = vmul.f32 %v440, %v370
        %v555 = vmul.f32 %v441, %v371
        %v556 = vadd.f32 %v552, %v554
        %v557 = vadd.f32 %v553, %v555
        %v558 = vmul.f32 %v446, %v378
        %v559 = vmul.f32 %v447, %v379
        %v560 = vadd.f32 %v556, %v558
        %v561 = vadd.f32 %v557, %v559
        %v562 = vmul.f32 %v452, %v386
        %v563 = vmul.f32 %v453, %v387
        %v564 = vadd.f32 %v560, %v562
        %v565 = vadd.f32 %v561, %v563
        %v566 = vpack.c.bf16 %v343, %v342
        %v567 = vpack.c.bf16 %v467, %v466
        %v568 = vpack.c.bf16 %v481, %v480
        %v569 = vpack.c.bf16 %v495, %v494
        %v570 = vpack.c.bf16 %v509, %v508
        %v571 = vpack.c.bf16 %v523, %v522
        %v572 = vpack.c.bf16 %v537, %v536
        %v573 = vpack.c.bf16 %v551, %v550
        %v574 = vpack.c.bf16 %v565, %v564
        %v575 = vld [vmem:[#allocation2] sm:$0xff]
        %v576 = vld [vmem:[#allocation2 + $0x8] sm:$0xff]
        %v577 = vld [vmem:[%s280] sm:$0xf]
        %v578 = vld [vmem:[%s280 + $0x4] sm:$0xf]
        %v579 = vld [vmem:[%s280 + $0x8] sm:$0xf]
        %v580 = vld [vmem:[%s280 + $0xc] sm:$0xf]
        %v581 = vld [vmem:[%s280 + $0x10] sm:$0xf]
        %v582 = vld [vmem:[%s280 + $0x14] sm:$0xf]
        %v583 = vld [vmem:[%s280 + $0x18] sm:$0xf]
        %v584 = vld [vmem:[%s280 + $0x1c] sm:$0xf]
        %v585 = vld [vmem:[%s280 + $0x20] sm:$0xf]
        %v586 = vld [vmem:[%s280 + $0x24] sm:$0xf]
        %v587 = vld [vmem:[%s280 + $0x28] sm:$0xf]
        %v588 = vld [vmem:[%s280 + $0x2c] sm:$0xf]
        %v589 = vld [vmem:[%s280 + $0x30] sm:$0xf]
        %v590 = vld [vmem:[%s280 + $0x34] sm:$0xf]
        %v591 = vld [vmem:[%s280 + $0x38] sm:$0xf]
        %v592 = vld [vmem:[%s280 + $0x3c] sm:$0xf]
        %v593 = vld [vmem:[%s280 + $0x40] sm:$0xf]
        %v594 = vld [vmem:[%s280 + $0x44] sm:$0xf]
        %v595 = vld [vmem:[%s280 + $0x48] sm:$0xf]
        %v596 = vld [vmem:[%s280 + $0x4c] sm:$0xf]
        %v597 = vld [vmem:[%s280 + $0x50] sm:$0xf]
        %v598 = vld [vmem:[%s280 + $0x54] sm:$0xf]
        %v599 = vld [vmem:[%s280 + $0x58] sm:$0xf]
        %v600 = vld [vmem:[%s280 + $0x5c] sm:$0xf]
        %v601 = vld [vmem:[%s280 + $0x60] sm:$0xf]
        %v602 = vld [vmem:[%s280 + $0x64] sm:$0xf]
        %v603 = vld [vmem:[%s280 + $0x68] sm:$0xf]
        %v604 = vld [vmem:[%s280 + $0x6c] sm:$0xf]
        %v605 = vld [vmem:[%s280 + $0x70] sm:$0xf]
        %v606 = vld [vmem:[%s280 + $0x74] sm:$0xf]
        %v607 = vld [vmem:[%s280 + $0x78] sm:$0xf]
        %v608 = vld [vmem:[%s280 + $0x7c] sm:$0xf]
        %v609 = vld [vmem:[%s280 + $0x80] sm:$0xf]
        %v610 = vld [vmem:[%s280 + $0x84] sm:$0xf]
        %v611 = vld [vmem:[%s280 + $0x88] sm:$0xf]
        %v612 = vld [vmem:[%s280 + $0x8c] sm:$0xf]
        %v613 = vld [vmem:[%s280 + $0x90] sm:$0xf]
        %v614 = vld [vmem:[%s280 + $0x94] sm:$0xf]
        %v615 = vld [vmem:[%s280 + $0x98] sm:$0xf]
        %v616 = vld [vmem:[%s280 + $0x9c] sm:$0xf]
        %v617 = vld [vmem:[%s280 + $0xa0] sm:$0xf]
        %v618 = vld [vmem:[%s280 + $0xa4] sm:$0xf]
        %v619 = vld [vmem:[%s280 + $0xa8] sm:$0xf]
        %v620 = vld [vmem:[%s280 + $0xac] sm:$0xf]
        %v621 = vld [vmem:[%s280 + $0xb0] sm:$0xf]
        %v622 = vld [vmem:[%s280 + $0xb4] sm:$0xf]
        %v623 = vld [vmem:[%s280 + $0xb8] sm:$0xf]
        %v624 = vld [vmem:[%s280 + $0xbc] sm:$0xf]
        %v625 = vld [vmem:[%s280 + $0xc0] sm:$0xf]
        %v626 = vld [vmem:[%s280 + $0xc4] sm:$0xf]
        %v627 = vld [vmem:[%s280 + $0xc8] sm:$0xf]
        %v628 = vld [vmem:[%s280 + $0xcc] sm:$0xf]
        %v629 = vld [vmem:[%s280 + $0xd0] sm:$0xf]
        %v630 = vld [vmem:[%s280 + $0xd4] sm:$0xf]
        %v631 = vld [vmem:[%s280 + $0xd8] sm:$0xf]
        %v632 = vld [vmem:[%s280 + $0xdc] sm:$0xf]
        %v633 = vld [vmem:[%s280 + $0xe0] sm:$0xf]
        %v634 = vld [vmem:[%s280 + $0xe4] sm:$0xf]
        %v635 = vld [vmem:[%s280 + $0xe8] sm:$0xf]
        %v636 = vld [vmem:[%s280 + $0xec] sm:$0xf]
        %v637 = vld [vmem:[%s280 + $0xf0] sm:$0xf]
        %v638 = vld [vmem:[%s280 + $0xf4] sm:$0xf]
        %v639 = vld [vmem:[%s280 + $0xf8] sm:$0xf]
        %v640 = vld [vmem:[%s280 + $0xfc] sm:$0xf]
        %v641 = vld [vmem:[%s280 + $0x100] sm:$0xf]
        %v642 = vld [vmem:[%s280 + $0x104] sm:$0xf]
        %v643 = vld [vmem:[%s280 + $0x108] sm:$0xf]
        %v644 = vld [vmem:[%s280 + $0x10c] sm:$0xf]
        %v645 = vld [vmem:[%s280 + $0x110] sm:$0xf]
        %v646 = vld [vmem:[%s280 + $0x114] sm:$0xf]
        %v647 = vld [vmem:[%s280 + $0x118] sm:$0xf]
        %v648 = vld [vmem:[%s280 + $0x11c] sm:$0xf]
        %v649 = vld [vmem:[%s280 + $0x120] sm:$0xf]
        %v650 = vld [vmem:[%s280 + $0x124] sm:$0xf]
        %v651 = vld [vmem:[%s280 + $0x128] sm:$0xf]
        %v652 = vld [vmem:[%s280 + $0x12c] sm:$0xf]
        %v653 = vld [vmem:[%s280 + $0x130] sm:$0xf]
        %v654 = vld [vmem:[%s280 + $0x134] sm:$0xf]
        %v655 = vld [vmem:[%s280 + $0x138] sm:$0xf]
        %v656 = vld [vmem:[%s280 + $0x13c] sm:$0xf]
        %v657 = vld [vmem:[%s280 + $0x140] sm:$0xf]
        %v658 = vld [vmem:[%s280 + $0x144] sm:$0xf]
        %v659 = vld [vmem:[%s280 + $0x148] sm:$0xf]
        %v660 = vld [vmem:[%s280 + $0x14c] sm:$0xf]
        %v661 = vld [vmem:[%s280 + $0x150] sm:$0xf]
        %v662 = vld [vmem:[%s280 + $0x154] sm:$0xf]
        %v663 = vld [vmem:[%s280 + $0x158] sm:$0xf]
        %v664 = vld [vmem:[%s280 + $0x15c] sm:$0xf]
        %v665 = vld [vmem:[%s280 + $0x160] sm:$0xf]
        %v666 = vld [vmem:[%s280 + $0x164] sm:$0xf]
        %v667 = vld [vmem:[%s280 + $0x168] sm:$0xf]
        %v668 = vld [vmem:[%s280 + $0x16c] sm:$0xf]
        %v669 = vld [vmem:[%s280 + $0x170] sm:$0xf]
        %v670 = vld [vmem:[%s280 + $0x174] sm:$0xf]
        %v671 = vld [vmem:[%s280 + $0x178] sm:$0xf]
        %v672 = vld [vmem:[%s280 + $0x17c] sm:$0xf]
        %v673 = vld [vmem:[%s280 + $0x180] sm:$0xf]
        %v674 = vld [vmem:[%s280 + $0x184] sm:$0xf]
        %v675 = vld [vmem:[%s280 + $0x188] sm:$0xf]
        %v676 = vld [vmem:[%s280 + $0x18c] sm:$0xf]
        %v677 = vld [vmem:[%s280 + $0x190] sm:$0xf]
        %v678 = vld [vmem:[%s280 + $0x194] sm:$0xf]
        %v679 = vld [vmem:[%s280 + $0x198] sm:$0xf]
        %v680 = vld [vmem:[%s280 + $0x19c] sm:$0xf]
        %v681 = vld [vmem:[%s280 + $0x1a0] sm:$0xf]
        %v682 = vld [vmem:[%s280 + $0x1a4] sm:$0xf]
        %v683 = vld [vmem:[%s280 + $0x1a8] sm:$0xf]
        %v684 = vld [vmem:[%s280 + $0x1ac] sm:$0xf]
        %v685 = vld [vmem:[%s280 + $0x1b0] sm:$0xf]
        %v686 = vld [vmem:[%s280 + $0x1b4] sm:$0xf]
        %v687 = vld [vmem:[%s280 + $0x1b8] sm:$0xf]
        %v688 = vld [vmem:[%s280 + $0x1bc] sm:$0xf]
        %v689 = vld [vmem:[%s280 + $0x1c0] sm:$0xf]
        %v690 = vld [vmem:[%s280 + $0x1c4] sm:$0xf]
        %v691 = vld [vmem:[%s280 + $0x1c8] sm:$0xf]
        %v692 = vld [vmem:[%s280 + $0x1cc] sm:$0xf]
        %v693 = vld [vmem:[%s280 + $0x1d0] sm:$0xf]
        %v694 = vld [vmem:[%s280 + $0x1d4] sm:$0xf]
        %v695 = vld [vmem:[%s280 + $0x1d8] sm:$0xf]
        %v696 = vld [vmem:[%s280 + $0x1dc] sm:$0xf]
        %v697 = vld [vmem:[%s280 + $0x1e0] sm:$0xf]
        %v698 = vld [vmem:[%s280 + $0x1e4] sm:$0xf]
        %v699 = vld [vmem:[%s280 + $0x1e8] sm:$0xf]
        %v700 = vld [vmem:[%s280 + $0x1ec] sm:$0xf]
        %v701 = vld [vmem:[%s280 + $0x1f0] sm:$0xf]
        %v702 = vld [vmem:[%s280 + $0x1f4] sm:$0xf]
        %v703 = vld [vmem:[%s280 + $0x1f8] sm:$0xf]
        %v704 = vld [vmem:[%s280 + $0x1fc] sm:$0xf]
        %v705 = vld [vmem:[%s280 + $0x200] sm:$0xf]
        %v706 = vld [vmem:[%s280 + $0x204] sm:$0xf]
        %v707 = vld [vmem:[%s280 + $0x208] sm:$0xf]
        %v708 = vld [vmem:[%s280 + $0x20c] sm:$0xf]
        %v709 = vld [vmem:[%s280 + $0x210] sm:$0xf]
        %v710 = vld [vmem:[%s280 + $0x214] sm:$0xf]
        %v711 = vld [vmem:[%s280 + $0x218] sm:$0xf]
        %v712 = vld [vmem:[%s280 + $0x21c] sm:$0xf]
        %v713 = vld [vmem:[%s280 + $0x220] sm:$0xf]
        %v714 = vld [vmem:[%s280 + $0x224] sm:$0xf]
        %v715 = vld [vmem:[%s280 + $0x228] sm:$0xf]
        %v716 = vld [vmem:[%s280 + $0x22c] sm:$0xf]
        %v717 = vld [vmem:[%s280 + $0x230] sm:$0xf]
        %v718 = vld [vmem:[%s280 + $0x234] sm:$0xf]
        %v719 = vld [vmem:[%s280 + $0x238] sm:$0xf]
        %v720 = vld [vmem:[%s280 + $0x23c] sm:$0xf]
        %v865 = vunpack.c.l.b16 %v577
        %v866 = vunpack.c.l.b16 %v578
        %v867 = vunpack.c.l.b16 %v579
        %v868 = vunpack.c.l.b16 %v580
        %v869 = vunpack.c.l.b16 %v581
        %v870 = vunpack.c.l.b16 %v582
        %v871 = vunpack.c.l.b16 %v583
        %v872 = vunpack.c.l.b16 %v584
        %v873 = vunpack.c.l.b16 %v585
        %v874 = vunpack.c.l.b16 %v586
        %v875 = vunpack.c.l.b16 %v587
        %v876 = vunpack.c.l.b16 %v588
        %v877 = vunpack.c.l.b16 %v589
        %v878 = vunpack.c.l.b16 %v590
        %v879 = vunpack.c.l.b16 %v591
        %v880 = vunpack.c.l.b16 %v592
        %v881 = vunpack.c.l.b16 %v593
        %v882 = vunpack.c.l.b16 %v594
        %v883 = vunpack.c.l.b16 %v595
        %v884 = vunpack.c.l.b16 %v596
        %v885 = vunpack.c.l.b16 %v597
        %v886 = vunpack.c.l.b16 %v598
        %v887 = vunpack.c.l.b16 %v599
        %v888 = vunpack.c.l.b16 %v600
        %v889 = vunpack.c.l.b16 %v601
        %v890 = vunpack.c.l.b16 %v602
        %v891 = vunpack.c.l.b16 %v603
        %v892 = vunpack.c.l.b16 %v604
        %v893 = vunpack.c.l.b16 %v605
        %v894 = vunpack.c.l.b16 %v606
        %v895 = vunpack.c.l.b16 %v607
        %v896 = vunpack.c.l.b16 %v608
        %v897 = vunpack.c.l.b16 %v609
        %v898 = vunpack.c.l.b16 %v610
        %v899 = vunpack.c.l.b16 %v611
        %v900 = vunpack.c.l.b16 %v612
        %v901 = vunpack.c.l.b16 %v613
        %v902 = vunpack.c.l.b16 %v614
        %v903 = vunpack.c.l.b16 %v615
        %v904 = vunpack.c.l.b16 %v616
        %v905 = vunpack.c.l.b16 %v617
        %v906 = vunpack.c.l.b16 %v618
        %v907 = vunpack.c.l.b16 %v619
        %v908 = vunpack.c.l.b16 %v620
        %v909 = vunpack.c.l.b16 %v621
        %v910 = vunpack.c.l.b16 %v622
        %v911 = vunpack.c.l.b16 %v623
        %v912 = vunpack.c.l.b16 %v624
        %v913 = vunpack.c.l.b16 %v625
        %v914 = vunpack.c.l.b16 %v626
        %v915 = vunpack.c.l.b16 %v627
        %v916 = vunpack.c.l.b16 %v628
        %v917 = vunpack.c.l.b16 %v629
        %v918 = vunpack.c.l.b16 %v630
        %v919 = vunpack.c.l.b16 %v631
        %v920 = vunpack.c.l.b16 %v632
        %v921 = vunpack.c.l.b16 %v633
        %v922 = vunpack.c.l.b16 %v634
        %v923 = vunpack.c.l.b16 %v635
        %v924 = vunpack.c.l.b16 %v636
        %v925 = vunpack.c.l.b16 %v637
        %v926 = vunpack.c.l.b16 %v638
        %v927 = vunpack.c.l.b16 %v639
        %v928 = vunpack.c.l.b16 %v640
        %v929 = vunpack.c.l.b16 %v641
        %v930 = vunpack.c.l.b16 %v642
        %v931 = vunpack.c.l.b16 %v643
        %v932 = vunpack.c.l.b16 %v644
        %v933 = vunpack.c.l.b16 %v645
        %v934 = vunpack.c.l.b16 %v646
        %v935 = vunpack.c.l.b16 %v647
        %v936 = vunpack.c.l.b16 %v648
        %v937 = vunpack.c.l.b16 %v649
        %v938 = vunpack.c.l.b16 %v650
        %v939 = vunpack.c.l.b16 %v651
        %v940 = vunpack.c.l.b16 %v652
        %v941 = vunpack.c.l.b16 %v653
        %v942 = vunpack.c.l.b16 %v654
        %v943 = vunpack.c.l.b16 %v655
        %v944 = vunpack.c.l.b16 %v656
        %v945 = vunpack.c.l.b16 %v657
        %v946 = vunpack.c.l.b16 %v658
        %v947 = vunpack.c.l.b16 %v659
        %v948 = vunpack.c.l.b16 %v660
        %v949 = vunpack.c.l.b16 %v661
        %v950 = vunpack.c.l.b16 %v662
        %v951 = vunpack.c.l.b16 %v663
        %v952 = vunpack.c.l.b16 %v664
        %v953 = vunpack.c.l.b16 %v665
        %v954 = vunpack.c.l.b16 %v666
        %v955 = vunpack.c.l.b16 %v667
        %v956 = vunpack.c.l.b16 %v668
        %v957 = vunpack.c.l.b16 %v669
        %v958 = vunpack.c.l.b16 %v670
        %v959 = vunpack.c.l.b16 %v671
        %v960 = vunpack.c.l.b16 %v672
        %v961 = vunpack.c.l.b16 %v673
        %v962 = vunpack.c.l.b16 %v674
        %v963 = vunpack.c.l.b16 %v675
        %v964 = vunpack.c.l.b16 %v676
        %v965 = vunpack.c.l.b16 %v677
        %v966 = vunpack.c.l.b16 %v678
        %v967 = vunpack.c.l.b16 %v679
        %v968 = vunpack.c.l.b16 %v680
        %v969 = vunpack.c.l.b16 %v681
        %v970 = vunpack.c.l.b16 %v682
        %v971 = vunpack.c.l.b16 %v683
        %v972 = vunpack.c.l.b16 %v684
        %v973 = vunpack.c.l.b16 %v685
        %v974 = vunpack.c.l.b16 %v686
        %v975 = vunpack.c.l.b16 %v687
        %v976 = vunpack.c.l.b16 %v688
        %v977 = vunpack.c.l.b16 %v689
        %v978 = vunpack.c.l.b16 %v690
        %v979 = vunpack.c.l.b16 %v691
        %v980 = vunpack.c.l.b16 %v692
        %v981 = vunpack.c.l.b16 %v693
        %v982 = vunpack.c.l.b16 %v694
        %v983 = vunpack.c.l.b16 %v695
        %v984 = vunpack.c.l.b16 %v696
        %v985 = vunpack.c.l.b16 %v697
        %v986 = vunpack.c.l.b16 %v698
        %v987 = vunpack.c.l.b16 %v699
        %v988 = vunpack.c.l.b16 %v700
        %v989 = vunpack.c.l.b16 %v701
        %v990 = vunpack.c.l.b16 %v702
        %v991 = vunpack.c.l.b16 %v703
        %v992 = vunpack.c.l.b16 %v704
        %v993 = vunpack.c.l.b16 %v705
        %v994 = vunpack.c.l.b16 %v706
        %v995 = vunpack.c.l.b16 %v707
        %v996 = vunpack.c.l.b16 %v708
        %v997 = vunpack.c.l.b16 %v709
        %v998 = vunpack.c.l.b16 %v710
        %v999 = vunpack.c.l.b16 %v711
        %v1000 = vunpack.c.l.b16 %v712
        %v1001 = vunpack.c.l.b16 %v713
        %v1002 = vunpack.c.l.b16 %v714
        %v1003 = vunpack.c.l.b16 %v715
        %v1004 = vunpack.c.l.b16 %v716
        %v1005 = vunpack.c.l.b16 %v717
        %v1006 = vunpack.c.l.b16 %v718
        %v1007 = vunpack.c.l.b16 %v719
        %v1008 = vunpack.c.l.b16 %v720
        %v1009 = vpack.c.b16 %v866, %v865
        %v1010 = vpack.c.b16 %v868, %v867
        %v1011 = vpack.c.b16 %v870, %v869
        %v1012 = vpack.c.b16 %v872, %v871
        %v1013 = vpack.c.b16 %v874, %v873
        %v1014 = vpack.c.b16 %v876, %v875
        %v1015 = vpack.c.b16 %v878, %v877
        %v1016 = vpack.c.b16 %v880, %v879
        %v1017 = vpack.c.b16 %v882, %v881
        %v1018 = vpack.c.b16 %v884, %v883
        %v1019 = vpack.c.b16 %v886, %v885
        %v1020 = vpack.c.b16 %v888, %v887
        %v1021 = vpack.c.b16 %v890, %v889
        %v1022 = vpack.c.b16 %v892, %v891
        %v1023 = vpack.c.b16 %v894, %v893
        %v1024 = vpack.c.b16 %v896, %v895
        %v1025 = vpack.c.b16 %v898, %v897
        %v1026 = vpack.c.b16 %v900, %v899
        %v1027 = vpack.c.b16 %v902, %v901
        %v1028 = vpack.c.b16 %v904, %v903
        %v1029 = vpack.c.b16 %v906, %v905
        %v1030 = vpack.c.b16 %v908, %v907
        %v1031 = vpack.c.b16 %v910, %v909
        %v1032 = vpack.c.b16 %v912, %v911
        %v1033 = vpack.c.b16 %v914, %v913
        %v1034 = vpack.c.b16 %v916, %v915
        %v1035 = vpack.c.b16 %v918, %v917
        %v1036 = vpack.c.b16 %v920, %v919
        %v1037 = vpack.c.b16 %v922, %v921
        %v1038 = vpack.c.b16 %v924, %v923
        %v1039 = vpack.c.b16 %v926, %v925
        %v1040 = vpack.c.b16 %v928, %v927
        %v1041 = vpack.c.b16 %v930, %v929
        %v1042 = vpack.c.b16 %v932, %v931
        %v1043 = vpack.c.b16 %v934, %v933
        %v1044 = vpack.c.b16 %v936, %v935
        %v1045 = vpack.c.b16 %v938, %v937
        %v1046 = vpack.c.b16 %v940, %v939
        %v1047 = vpack.c.b16 %v942, %v941
        %v1048 = vpack.c.b16 %v944, %v943
        %v1049 = vpack.c.b16 %v946, %v945
        %v1050 = vpack.c.b16 %v948, %v947
        %v1051 = vpack.c.b16 %v950, %v949
        %v1052 = vpack.c.b16 %v952, %v951
        %v1053 = vpack.c.b16 %v954, %v953
        %v1054 = vpack.c.b16 %v956, %v955
        %v1055 = vpack.c.b16 %v958, %v957
        %v1056 = vpack.c.b16 %v960, %v959
        %v1057 = vpack.c.b16 %v962, %v961
        %v1058 = vpack.c.b16 %v964, %v963
        %v1059 = vpack.c.b16 %v966, %v965
        %v1060 = vpack.c.b16 %v968, %v967
        %v1061 = vpack.c.b16 %v970, %v969
        %v1062 = vpack.c.b16 %v972, %v971
        %v1063 = vpack.c.b16 %v974, %v973
        %v1064 = vpack.c.b16 %v976, %v975
        %v1065 = vpack.c.b16 %v978, %v977
        %v1066 = vpack.c.b16 %v980, %v979
        %v1067 = vpack.c.b16 %v982, %v981
        %v1068 = vpack.c.b16 %v984, %v983
        %v1069 = vpack.c.b16 %v986, %v985
        %v1070 = vpack.c.b16 %v988, %v987
        %v1071 = vpack.c.b16 %v990, %v989
        %v1072 = vpack.c.b16 %v992, %v991
        %v1073 = vpack.c.b16 %v994, %v993
        %v1074 = vpack.c.b16 %v996, %v995
        %v1075 = vpack.c.b16 %v998, %v997
        %v1076 = vpack.c.b16 %v1000, %v999
        %v1077 = vpack.c.b16 %v1002, %v1001
        %v1078 = vpack.c.b16 %v1004, %v1003
        %v1079 = vpack.c.b16 %v1006, %v1005
        %v1080 = vpack.c.b16 %v1008, %v1007
        %1153 = vmatpush.bf16.msra.mxu0 %v1016
        %1154 = vmatpush.bf16.msra.mxu0 %v1015
        %1155 = vmatpush.bf16.msra.mxu0 %v1014
        %1156 = vmatpush.bf16.msra.mxu0 %v1013
        %1157 = vmatpush.bf16.msra.mxu0 %v1012
        %1158 = vmatpush.bf16.msra.mxu0 %v1011
        %1159 = vmatpush.bf16.msra.mxu0 %v1010
        %1160 = vmatpush.bf16.msra.mxu0 %v1009
        %1161 = vmatmul.bf16.gmra.mxu0 %v566
        %v1162 = vpop.f32.mrf.mxu0
        %v1163 = vadd.f32 0.0, %v1162
        %v1164 = vpop.f32.mrf.mxu0
        %v1165 = vadd.f32 0.0, %v1164
        %1166 = vdwg.mxu0
        %1167 = vmatpush.bf16.msra.mxu0 %v1024
        %1168 = vmatpush.bf16.msra.mxu0 %v1023
        %1169 = vmatpush.bf16.msra.mxu0 %v1022
        %1170 = vmatpush.bf16.msra.mxu0 %v1021
        %1171 = vmatpush.bf16.msra.mxu0 %v1020
        %1172 = vmatpush.bf16.msra.mxu0 %v1019
        %1173 = vmatpush.bf16.msra.mxu0 %v1018
        %1174 = vmatpush.bf16.msra.mxu0 %v1017
        %1175 = vmatmul.bf16.gmra.mxu0 %v567
        %v1176 = vpop.f32.mrf.mxu0
        %v1177 = vadd.f32 %v1163, %v1176
        %v1178 = vpop.f32.mrf.mxu0
        %v1179 = vadd.f32 %v1165, %v1178
        %1180 = vdwg.mxu0
        %1181 = vmatpush.bf16.msra.mxu0 %v1032
        %1182 = vmatpush.bf16.msra.mxu0 %v1031
        %1183 = vmatpush.bf16.msra.mxu0 %v1030
        %1184 = vmatpush.bf16.msra.mxu0 %v1029
        %1185 = vmatpush.bf16.msra.mxu0 %v1028
        %1186 = vmatpush.bf16.msra.mxu0 %v1027
        %1187 = vmatpush.bf16.msra.mxu0 %v1026
        %1188 = vmatpush.bf16.msra.mxu0 %v1025
        %1189 = vmatmul.bf16.gmra.mxu0 %v568
        %v1190 = vpop.f32.mrf.mxu0
        %v1191 = vadd.f32 %v1177, %v1190
        %v1192 = vpop.f32.mrf.mxu0
        %v1193 = vadd.f32 %v1179, %v1192
        %1194 = vdwg.mxu0
        %1195 = vmatpush.bf16.msra.mxu0 %v1040
        %1196 = vmatpush.bf16.msra.mxu0 %v1039
        %1197 = vmatpush.bf16.msra.mxu0 %v1038
        %1198 = vmatpush.bf16.msra.mxu0 %v1037
        %1199 = vmatpush.bf16.msra.mxu0 %v1036
        %1200 = vmatpush.bf16.msra.mxu0 %v1035
        %1201 = vmatpush.bf16.msra.mxu0 %v1034
        %1202 = vmatpush.bf16.msra.mxu0 %v1033
        %1203 = vmatmul.bf16.gmra.mxu0 %v569
        %v1204 = vpop.f32.mrf.mxu0
        %v1205 = vadd.f32 %v1191, %v1204
        %v1206 = vpop.f32.mrf.mxu0
        %v1207 = vadd.f32 %v1193, %v1206
        %1208 = vdwg.mxu0
        %1209 = vmatpush.bf16.msra.mxu0 %v1048
        %1210 = vmatpush.bf16.msra.mxu0 %v1047
        %1211 = vmatpush.bf16.msra.mxu0 %v1046
        %1212 = vmatpush.bf16.msra.mxu0 %v1045
        %1213 = vmatpush.bf16.msra.mxu0 %v1044
        %1214 = vmatpush.bf16.msra.mxu0 %v1043
        %1215 = vmatpush.bf16.msra.mxu0 %v1042
        %1216 = vmatpush.bf16.msra.mxu0 %v1041
        %1217 = vmatmul.bf16.gmra.mxu0 %v570
        %v1218 = vpop.f32.mrf.mxu0
        %v1219 = vadd.f32 %v1205, %v1218
        %v1220 = vpop.f32.mrf.mxu0
        %v1221 = vadd.f32 %v1207, %v1220
        %1222 = vdwg.mxu0
        %1223 = vmatpush.bf16.msra.mxu0 %v1056
        %1224 = vmatpush.bf16.msra.mxu0 %v1055
        %1225 = vmatpush.bf16.msra.mxu0 %v1054
        %1226 = vmatpush.bf16.msra.mxu0 %v1053
        %1227 = vmatpush.bf16.msra.mxu0 %v1052
        %1228 = vmatpush.bf16.msra.mxu0 %v1051
        %1229 = vmatpush.bf16.msra.mxu0 %v1050
        %1230 = vmatpush.bf16.msra.mxu0 %v1049
        %1231 = vmatmul.bf16.gmra.mxu0 %v571
        %v1232 = vpop.f32.mrf.mxu0
        %v1233 = vadd.f32 %v1219, %v1232
        %v1234 = vpop.f32.mrf.mxu0
        %v1235 = vadd.f32 %v1221, %v1234
        %1236 = vdwg.mxu0
        %1237 = vmatpush.bf16.msra.mxu0 %v1064
        %1238 = vmatpush.bf16.msra.mxu0 %v1063
        %1239 = vmatpush.bf16.msra.mxu0 %v1062
        %1240 = vmatpush.bf16.msra.mxu0 %v1061
        %1241 = vmatpush.bf16.msra.mxu0 %v1060
        %1242 = vmatpush.bf16.msra.mxu0 %v1059
        %1243 = vmatpush.bf16.msra.mxu0 %v1058
        %1244 = vmatpush.bf16.msra.mxu0 %v1057
        %1245 = vmatmul.bf16.gmra.mxu0 %v572
        %v1246 = vpop.f32.mrf.mxu0
        %v1247 = vadd.f32 %v1233, %v1246
        %v1248 = vpop.f32.mrf.mxu0
        %v1249 = vadd.f32 %v1235, %v1248
        %1250 = vdwg.mxu0
        %1251 = vmatpush.bf16.msra.mxu0 %v1072
        %1252 = vmatpush.bf16.msra.mxu0 %v1071
        %1253 = vmatpush.bf16.msra.mxu0 %v1070
        %1254 = vmatpush.bf16.msra.mxu0 %v1069
        %1255 = vmatpush.bf16.msra.mxu0 %v1068
        %1256 = vmatpush.bf16.msra.mxu0 %v1067
        %1257 = vmatpush.bf16.msra.mxu0 %v1066
        %1258 = vmatpush.bf16.msra.mxu0 %v1065
        %1259 = vmatmul.bf16.gmra.mxu0 %v573
        %v1260 = vpop.f32.mrf.mxu0
        %v1261 = vadd.f32 %v1247, %v1260
        %v1262 = vpop.f32.mrf.mxu0
        %v1263 = vadd.f32 %v1249, %v1262
        %1264 = vdwg.mxu0
        %1265 = vmatpush.bf16.msra.mxu0 %v1080
        %1266 = vmatpush.bf16.msra.mxu0 %v1079
        %1267 = vmatpush.bf16.msra.mxu0 %v1078
        %1268 = vmatpush.bf16.msra.mxu0 %v1077
        %1269 = vmatpush.bf16.msra.mxu0 %v1076
        %1270 = vmatpush.bf16.msra.mxu0 %v1075
        %1271 = vmatpush.bf16.msra.mxu0 %v1074
        %1272 = vmatpush.bf16.msra.mxu0 %v1073
        %1273 = vmatmul.bf16.gmra.mxu0 %v574
        %v1274 = vpop.f32.mrf.mxu0
        %v1275 = vadd.f32 %v1261, %v1274
        %v1276 = vpop.f32.mrf.mxu0
        %v1277 = vadd.f32 %v1263, %v1276
        %1278 = vdwg.mxu0
        %v1279 = vadd.f32 %v575, %v1275
        %v1280 = vadd.f32 %v576, %v1277
        %1281 = vst [vmem:[#allocation2] sm:$0xff] %v1279
        %1282 = vst [vmem:[#allocation2 + $0x8] sm:$0xff] %v1280
        %p1283 = scmp.eq.s32.totalorder %s24, 1
        // Predicated region
        $region65: #{tpu_custom_call.1} parent=39 // pred_check
          %p1284 = pneg %p1283
        $region66: #{tpu_custom_call.1} parent=39 // pred_check_branch
          %1286 = sbr.rel (%p1284) target = $region68
        $region67: #{tpu_custom_call.1} parent=39 // pred_region
          %v1287 = vld [vmem:[#allocation2] sm:$0xff]
          %v1288 = vld [vmem:[#allocation2 + $0x8] sm:$0xff]
          %v1289 = vld [vmem:[#allocation8] sm:$0xf]
          %v1290 = vld [vmem:[#allocation8 + $0x4] sm:$0xf]
          %v1291 = vld [vmem:[#allocation8 + $0x8] sm:$0xf]
          %v1292 = vld [vmem:[#allocation8 + $0xc] sm:$0xf]
          %v1293 = vld [vmem:[#allocation8 + $0x10] sm:$0xf]
          %v1294 = vld [vmem:[#allocation8 + $0x14] sm:$0xf]
          %v1295 = vld [vmem:[#allocation8 + $0x18] sm:$0xf]
          %v1296 = vld [vmem:[#allocation8 + $0x1c] sm:$0xf]
          %v1297 = vld [vmem:[#allocation8 + $0x20] sm:$0xf]
          %v1298 = vld [vmem:[#allocation8 + $0x24] sm:$0xf]
          %v1299 = vld [vmem:[#allocation8 + $0x28] sm:$0xf]
          %v1300 = vld [vmem:[#allocation8 + $0x2c] sm:$0xf]
          %v1301 = vld [vmem:[#allocation8 + $0x30] sm:$0xf]
          %v1302 = vld [vmem:[#allocation8 + $0x34] sm:$0xf]
          %v1303 = vld [vmem:[#allocation8 + $0x38] sm:$0xf]
          %v1304 = vld [vmem:[#allocation8 + $0x3c] sm:$0xf]
          %v1305 = vld [vmem:[#allocation8 + $0x40] sm:$0xf]
          %v1306 = vld [vmem:[#allocation8 + $0x44] sm:$0xf]
          %v1307 = vld [vmem:[#allocation8 + $0x48] sm:$0xf]
          %v1308 = vld [vmem:[#allocation8 + $0x4c] sm:$0xf]
          %v1309 = vld [vmem:[#allocation8 + $0x50] sm:$0xf]
          %v1310 = vld [vmem:[#allocation8 + $0x54] sm:$0xf]
          %v1311 = vld [vmem:[#allocation8 + $0x58] sm:$0xf]
          %v1312 = vld [vmem:[#allocation8 + $0x5c] sm:$0xf]
          %v1313 = vld [vmem:[#allocation8 + $0x60] sm:$0xf]
          %v1314 = vld [vmem:[#allocation8 + $0x64] sm:$0xf]
          %v1315 = vld [vmem:[#allocation8 + $0x68] sm:$0xf]
          %v1316 = vld [vmem:[#allocation8 + $0x6c] sm:$0xf]
          %v1317 = vld [vmem:[#allocation8 + $0x70] sm:$0xf]
          %v1318 = vld [vmem:[#allocation8 + $0x74] sm:$0xf]
          %v1319 = vld [vmem:[#allocation8 + $0x78] sm:$0xf]
          %v1320 = vld [vmem:[#allocation8 + $0x7c] sm:$0xf]
          %v1321 = vld [vmem:[#allocation8 + $0x80] sm:$0xf]
          %v1322 = vld [vmem:[#allocation8 + $0x84] sm:$0xf]
          %v1323 = vld [vmem:[#allocation8 + $0x88] sm:$0xf]
          %v1324 = vld [vmem:[#allocation8 + $0x8c] sm:$0xf]
          %v1325 = vld [vmem:[#allocation8 + $0x90] sm:$0xf]
          %v1326 = vld [vmem:[#allocation8 + $0x94] sm:$0xf]
          %v1327 = vld [vmem:[#allocation8 + $0x98] sm:$0xf]
          %v1328 = vld [vmem:[#allocation8 + $0x9c] sm:$0xf]
          %v1329 = vld [vmem:[#allocation8 + $0xa0] sm:$0xf]
          %v1330 = vld [vmem:[#allocation8 + $0xa4] sm:$0xf]
          %v1331 = vld [vmem:[#allocation8 + $0xa8] sm:$0xf]
          %v1332 = vld [vmem:[#allocation8 + $0xac] sm:$0xf]
          %v1333 = vld [vmem:[#allocation8 + $0xb0] sm:$0xf]
          %v1334 = vld [vmem:[#allocation8 + $0xb4] sm:$0xf]
          %v1335 = vld [vmem:[#allocation8 + $0xb8] sm:$0xf]
          %v1336 = vld [vmem:[#allocation8 + $0xbc] sm:$0xf]
          %v1337 = vld [vmem:[#allocation8 + $0xc0] sm:$0xf]
          %v1338 = vld [vmem:[#allocation8 + $0xc4] sm:$0xf]
          %v1339 = vld [vmem:[#allocation8 + $0xc8] sm:$0xf]
          %v1340 = vld [vmem:[#allocation8 + $0xcc] sm:$0xf]
          %v1341 = vld [vmem:[#allocation8 + $0xd0] sm:$0xf]
          %v1342 = vld [vmem:[#allocation8 + $0xd4] sm:$0xf]
          %v1343 = vld [vmem:[#allocation8 + $0xd8] sm:$0xf]
          %v1344 = vld [vmem:[#allocation8 + $0xdc] sm:$0xf]
          %v1345 = vld [vmem:[#allocation8 + $0xe0] sm:$0xf]
          %v1346 = vld [vmem:[#allocation8 + $0xe4] sm:$0xf]
          %v1347 = vld [vmem:[#allocation8 + $0xe8] sm:$0xf]
          %v1348 = vld [vmem:[#allocation8 + $0xec] sm:$0xf]
          %v1349 = vld [vmem:[#allocation8 + $0xf0] sm:$0xf]
          %v1350 = vld [vmem:[#allocation8 + $0xf4] sm:$0xf]
          %v1351 = vld [vmem:[#allocation8 + $0xf8] sm:$0xf]
          %v1352 = vld [vmem:[#allocation8 + $0xfc] sm:$0xf]
          %v1353 = vld [vmem:[#allocation8 + $0x100] sm:$0xf]
          %v1354 = vld [vmem:[#allocation8 + $0x104] sm:$0xf]
          %v1355 = vld [vmem:[#allocation8 + $0x108] sm:$0xf]
          %v1356 = vld [vmem:[#allocation8 + $0x10c] sm:$0xf]
          %v1357 = vld [vmem:[#allocation8 + $0x110] sm:$0xf]
          %v1358 = vld [vmem:[#allocation8 + $0x114] sm:$0xf]
          %v1359 = vld [vmem:[#allocation8 + $0x118] sm:$0xf]
          %v1360 = vld [vmem:[#allocation8 + $0x11c] sm:$0xf]
          %v1361 = vld [vmem:[#allocation8 + $0x120] sm:$0xf]
          %v1362 = vld [vmem:[#allocation8 + $0x124] sm:$0xf]
          %v1363 = vld [vmem:[#allocation8 + $0x128] sm:$0xf]
          %v1364 = vld [vmem:[#allocation8 + $0x12c] sm:$0xf]
          %v1365 = vld [vmem:[#allocation8 + $0x130] sm:$0xf]
          %v1366 = vld [vmem:[#allocation8 + $0x134] sm:$0xf]
          %v1367 = vld [vmem:[#allocation8 + $0x138] sm:$0xf]
          %v1368 = vld [vmem:[#allocation8 + $0x13c] sm:$0xf]
          %v1369 = vld [vmem:[#allocation8 + $0x140] sm:$0xf]
          %v1370 = vld [vmem:[#allocation8 + $0x144] sm:$0xf]
          %v1371 = vld [vmem:[#allocation8 + $0x148] sm:$0xf]
          %v1372 = vld [vmem:[#allocation8 + $0x14c] sm:$0xf]
          %v1373 = vld [vmem:[#allocation8 + $0x150] sm:$0xf]
          %v1374 = vld [vmem:[#allocation8 + $0x154] sm:$0xf]
          %v1375 = vld [vmem:[#allocation8 + $0x158] sm:$0xf]
          %v1376 = vld [vmem:[#allocation8 + $0x15c] sm:$0xf]
          %v1377 = vld [vmem:[#allocation8 + $0x160] sm:$0xf]
          %v1378 = vld [vmem:[#allocation8 + $0x164] sm:$0xf]
          %v1379 = vld [vmem:[#allocation8 + $0x168] sm:$0xf]
          %v1380 = vld [vmem:[#allocation8 + $0x16c] sm:$0xf]
          %v1381 = vld [vmem:[#allocation8 + $0x170] sm:$0xf]
          %v1382 = vld [vmem:[#allocation8 + $0x174] sm:$0xf]
          %v1383 = vld [vmem:[#allocation8 + $0x178] sm:$0xf]
          %v1384 = vld [vmem:[#allocation8 + $0x17c] sm:$0xf]
          %v1385 = vld [vmem:[#allocation8 + $0x180] sm:$0xf]
          %v1386 = vld [vmem:[#allocation8 + $0x184] sm:$0xf]
          %v1387 = vld [vmem:[#allocation8 + $0x188] sm:$0xf]
          %v1388 = vld [vmem:[#allocation8 + $0x18c] sm:$0xf]
          %v1389 = vld [vmem:[#allocation8 + $0x190] sm:$0xf]
          %v1390 = vld [vmem:[#allocation8 + $0x194] sm:$0xf]
          %v1391 = vld [vmem:[#allocation8 + $0x198] sm:$0xf]
          %v1392 = vld [vmem:[#allocation8 + $0x19c] sm:$0xf]
          %v1393 = vld [vmem:[#allocation8 + $0x1a0] sm:$0xf]
          %v1394 = vld [vmem:[#allocation8 + $0x1a4] sm:$0xf]
          %v1395 = vld [vmem:[#allocation8 + $0x1a8] sm:$0xf]
          %v1396 = vld [vmem:[#allocation8 + $0x1ac] sm:$0xf]
          %v1397 = vld [vmem:[#allocation8 + $0x1b0] sm:$0xf]
          %v1398 = vld [vmem:[#allocation8 + $0x1b4] sm:$0xf]
          %v1399 = vld [vmem:[#allocation8 + $0x1b8] sm:$0xf]
          %v1400 = vld [vmem:[#allocation8 + $0x1bc] sm:$0xf]
          %v1401 = vld [vmem:[#allocation8 + $0x1c0] sm:$0xf]
          %v1402 = vld [vmem:[#allocation8 + $0x1c4] sm:$0xf]
          %v1403 = vld [vmem:[#allocation8 + $0x1c8] sm:$0xf]
          %v1404 = vld [vmem:[#allocation8 + $0x1cc] sm:$0xf]
          %v1405 = vld [vmem:[#allocation8 + $0x1d0] sm:$0xf]
          %v1406 = vld [vmem:[#allocation8 + $0x1d4] sm:$0xf]
          %v1407 = vld [vmem:[#allocation8 + $0x1d8] sm:$0xf]
          %v1408 = vld [vmem:[#allocation8 + $0x1dc] sm:$0xf]
          %v1409 = vld [vmem:[#allocation8 + $0x1e0] sm:$0xf]
          %v1410 = vld [vmem:[#allocation8 + $0x1e4] sm:$0xf]
          %v1411 = vld [vmem:[#allocation8 + $0x1e8] sm:$0xf]
          %v1412 = vld [vmem:[#allocation8 + $0x1ec] sm:$0xf]
          %v1413 = vld [vmem:[#allocation8 + $0x1f0] sm:$0xf]
          %v1414 = vld [vmem:[#allocation8 + $0x1f4] sm:$0xf]
          %v1415 = vld [vmem:[#allocation8 + $0x1f8] sm:$0xf]
          %v1416 = vld [vmem:[#allocation8 + $0x1fc] sm:$0xf]
          %v1417 = vld [vmem:[#allocation8 + $0x200] sm:$0xf]
          %v1418 = vld [vmem:[#allocation8 + $0x204] sm:$0xf]
          %v1419 = vld [vmem:[#allocation8 + $0x208] sm:$0xf]
          %v1420 = vld [vmem:[#allocation8 + $0x20c] sm:$0xf]
          %v1421 = vld [vmem:[#allocation8 + $0x210] sm:$0xf]
          %v1422 = vld [vmem:[#allocation8 + $0x214] sm:$0xf]
          %v1423 = vld [vmem:[#allocation8 + $0x218] sm:$0xf]
          %v1424 = vld [vmem:[#allocation8 + $0x21c] sm:$0xf]
          %v1425 = vld [vmem:[#allocation8 + $0x220] sm:$0xf]
          %v1426 = vld [vmem:[#allocation8 + $0x224] sm:$0xf]
          %v1427 = vld [vmem:[#allocation8 + $0x228] sm:$0xf]
          %v1428 = vld [vmem:[#allocation8 + $0x22c] sm:$0xf]
          %v1429 = vld [vmem:[#allocation8 + $0x230] sm:$0xf]
          %v1430 = vld [vmem:[#allocation8 + $0x234] sm:$0xf]
          %v1431 = vld [vmem:[#allocation8 + $0x238] sm:$0xf]
          %v1432 = vld [vmem:[#allocation8 + $0x23c] sm:$0xf]
          %v1433 = vsub.f32 0.0, %v1287
          %v1434 = vsub.f32 0.0, %v1288
          %v1435 = vmul.f32 %v1433, 1.442695
          %v1436 = vpow.pop %v1435
          %v1437 = vmul.f32 %v1434, 1.442695
          %v1438 = vpow.pop %v1437
          %v1439 = vadd.f32 %v1436, 1.0
          %v1440 = vadd.f32 %v1438, 1.0
          %v1441 = vrcp.pop %v1439
          %v1442 = vrcp.pop %v1440
          %v1443 = vmul.f32 %v1287, %v1441
          %v1444 = vmul.f32 %v1288, %v1442
          %v1445 = vsub.f32 %v1287, -2.2
          %v1446 = vsub.f32 %v1288, -2.2
          %v1447 = vmul.f32 %v1445, 2.5
          %v1448 = vmul.f32 %v1446, 2.5
          %v1449 = vfloor.f32 %v1447
          %v1450 = vfloor.f32 %v1448
          %v1451 = vsub.f32 %v1447, %v1449
          %v1452 = vsub.f32 %v1448, %v1450
          %v1453 = vmul.f32 %v1451, %v1451
          %v1454 = vmul.f32 %v1452, %v1452
          %v1455 = vmul.f32 %v1453, %v1451
          %v1456 = vmul.f32 %v1454, %v1452
          %v1457 = vmul.f32 %v1455, 0.16666667
          %v1458 = vmul.f32 %v1456, 0.16666667
          %v1459 = vmul.f32 %v1451, 3.0
          %v1460 = vmul.f32 %v1452, 3.0
          %v1461 = vsub.f32 3.0, %v1459
          %v1462 = vsub.f32 3.0, %v1460
          %v1463 = vmul.f32 %v1461, %v1451
          %v1464 = vmul.f32 %v1462, %v1452
          %v1465 = vadd.f32 %v1463, 3.0
          %v1466 = vadd.f32 %v1464, 3.0
          %v1467 = vmul.f32 %v1465, %v1451
          %v1468 = vmul.f32 %v1466, %v1452
          %v1469 = vadd.f32 %v1467, 1.0
          %v1470 = vadd.f32 %v1468, 1.0
          %v1471 = vmul.f32 %v1469, 0.16666667
          %v1472 = vmul.f32 %v1470, 0.16666667
          %v1473 = vsub.f32 %v1459, 6.0
          %v1474 = vsub.f32 %v1460, 6.0
          %v1475 = vmul.f32 %v1473, %v1453
          %v1476 = vmul.f32 %v1474, %v1454
          %v1477 = vadd.f32 %v1475, 4.0
          %v1478 = vadd.f32 %v1476, 4.0
          %v1479 = vmul.f32 %v1477, 0.16666667
          %v1480 = vmul.f32 %v1478, 0.16666667
          %v1481 = vsub.f32 1.0, %v1451
          %v1482 = vsub.f32 1.0, %v1452
          %v1483 = vmul.f32 %v1481, %v1481
          %v1484 = vmul.f32 %v1482, %v1482
          %v1485 = vmul.f32 %v1483, %v1481
          %v1486 = vmul.f32 %v1484, %v1482
          %v1487 = vmul.f32 %v1485, 0.16666667
          %v1488 = vmul.f32 %v1486, 0.16666667
          %vm1489 = vcmp.eq.f32.partialorder %v1449, 0.0
          %vm1490 = vcmp.eq.f32.partialorder %v1450, 0.0
          %v1491 = vsel %vm1489, 1, 0
          %v1492 = vsel %vm1490, 1, 0
          %v1493 = vcvt.s32.f32 %v1491
          %v1494 = vcvt.s32.f32 %v1492
          %vm1495 = vcmp.eq.f32.partialorder %v1449, 1.0
          %vm1496 = vcmp.eq.f32.partialorder %v1450, 1.0
          %v1497 = vsel %vm1495, 1, 0
          %v1498 = vsel %vm1496, 1, 0
          %v1499 = vcvt.s32.f32 %v1497
          %v1500 = vcvt.s32.f32 %v1498
          %vm1501 = vcmp.eq.f32.partialorder %v1449, 2.0
          %vm1502 = vcmp.eq.f32.partialorder %v1450, 2.0
          %v1503 = vsel %vm1501, 1, 0
          %v1504 = vsel %vm1502, 1, 0
          %v1505 = vcvt.s32.f32 %v1503
          %v1506 = vcvt.s32.f32 %v1504
          %vm1507 = vcmp.eq.f32.partialorder %v1449, 3.0
          %vm1508 = vcmp.eq.f32.partialorder %v1450, 3.0
          %v1509 = vsel %vm1507, 1, 0
          %v1510 = vsel %vm1508, 1, 0
          %v1511 = vcvt.s32.f32 %v1509
          %v1512 = vcvt.s32.f32 %v1510
          %vm1513 = vcmp.eq.f32.partialorder %v1449, 4.0
          %vm1514 = vcmp.eq.f32.partialorder %v1450, 4.0
          %v1515 = vsel %vm1513, 1, 0
          %v1516 = vsel %vm1514, 1, 0
          %v1517 = vcvt.s32.f32 %v1515
          %v1518 = vcvt.s32.f32 %v1516
          %vm1519 = vcmp.eq.f32.partialorder %v1449, 5.0
          %vm1520 = vcmp.eq.f32.partialorder %v1450, 5.0
          %v1521 = vsel %vm1519, 1, 0
          %v1522 = vsel %vm1520, 1, 0
          %v1523 = vcvt.s32.f32 %v1521
          %v1524 = vcvt.s32.f32 %v1522
          %vm1525 = vcmp.eq.f32.partialorder %v1449, 6.0
          %vm1526 = vcmp.eq.f32.partialorder %v1450, 6.0
          %v1527 = vsel %vm1525, 1, 0
          %v1528 = vsel %vm1526, 1, 0
          %v1529 = vcvt.s32.f32 %v1527
          %v1530 = vcvt.s32.f32 %v1528
          %vm1531 = vcmp.eq.f32.partialorder %v1449, 7.0
          %vm1532 = vcmp.eq.f32.partialorder %v1450, 7.0
          %v1533 = vsel %vm1531, 1, 0
          %v1534 = vsel %vm1532, 1, 0
          %v1535 = vcvt.s32.f32 %v1533
          %v1536 = vcvt.s32.f32 %v1534
          %vm1537 = vcmp.eq.f32.partialorder %v1449, 8.0
          %vm1538 = vcmp.eq.f32.partialorder %v1450, 8.0
          %v1539 = vsel %vm1537, 1, 0
          %v1540 = vsel %vm1538, 1, 0
          %v1541 = vcvt.s32.f32 %v1539
          %v1542 = vcvt.s32.f32 %v1540
          %vm1543 = vcmp.eq.f32.partialorder %v1449, 9.0
          %vm1544 = vcmp.eq.f32.partialorder %v1450, 9.0
          %v1545 = vsel %vm1543, 1, 0
          %v1546 = vsel %vm1544, 1, 0
          %v1547 = vcvt.s32.f32 %v1545
          %v1548 = vcvt.s32.f32 %v1546
          %vm1549 = vcmp.eq.f32.partialorder %v1449, 10.0
          %vm1550 = vcmp.eq.f32.partialorder %v1450, 10.0
          %v1551 = vsel %vm1549, 1, 0
          %v1552 = vsel %vm1550, 1, 0
          %v1553 = vcvt.s32.f32 %v1551
          %v1554 = vcvt.s32.f32 %v1552
          %v1555 = vmul.f32 %v1493, %v1457
          %v1556 = vmul.f32 %v1494, %v1458
          %v1557 = vmul.f32 %v1499, %v1471
          %v1558 = vmul.f32 %v1500, %v1472
          %v1559 = vadd.f32 %v1555, %v1557
          %v1560 = vadd.f32 %v1556, %v1558
          %v1561 = vmul.f32 %v1505, %v1479
          %v1562 = vmul.f32 %v1506, %v1480
          %v1563 = vadd.f32 %v1559, %v1561
          %v1564 = vadd.f32 %v1560, %v1562
          %v1565 = vmul.f32 %v1511, %v1487
          %v1566 = vmul.f32 %v1512, %v1488
          %v1567 = vadd.f32 %v1563, %v1565
          %v1568 = vadd.f32 %v1564, %v1566
          %v1569 = vmul.f32 %v1499, %v1457
          %v1570 = vmul.f32 %v1500, %v1458
          %v1571 = vmul.f32 %v1505, %v1471
          %v1572 = vmul.f32 %v1506, %v1472
          %v1573 = vadd.f32 %v1569, %v1571
          %v1574 = vadd.f32 %v1570, %v1572
          %v1575 = vmul.f32 %v1511, %v1479
          %v1576 = vmul.f32 %v1512, %v1480
          %v1577 = vadd.f32 %v1573, %v1575
          %v1578 = vadd.f32 %v1574, %v1576
          %v1579 = vmul.f32 %v1517, %v1487
          %v1580 = vmul.f32 %v1518, %v1488
          %v1581 = vadd.f32 %v1577, %v1579
          %v1582 = vadd.f32 %v1578, %v1580
          %v1583 = vmul.f32 %v1505, %v1457
          %v1584 = vmul.f32 %v1506, %v1458
          %v1585 = vmul.f32 %v1511, %v1471
          %v1586 = vmul.f32 %v1512, %v1472
          %v1587 = vadd.f32 %v1583, %v1585
          %v1588 = vadd.f32 %v1584, %v1586
          %v1589 = vmul.f32 %v1517, %v1479
          %v1590 = vmul.f32 %v1518, %v1480
          %v1591 = vadd.f32 %v1587, %v1589
          %v1592 = vadd.f32 %v1588, %v1590
          %v1593 = vmul.f32 %v1523, %v1487
          %v1594 = vmul.f32 %v1524, %v1488
          %v1595 = vadd.f32 %v1591, %v1593
          %v1596 = vadd.f32 %v1592, %v1594
          %v1597 = vmul.f32 %v1511, %v1457
          %v1598 = vmul.f32 %v1512, %v1458
          %v1599 = vmul.f32 %v1517, %v1471
          %v1600 = vmul.f32 %v1518, %v1472
          %v1601 = vadd.f32 %v1597, %v1599
          %v1602 = vadd.f32 %v1598, %v1600
          %v1603 = vmul.f32 %v1523, %v1479
          %v1604 = vmul.f32 %v1524, %v1480
          %v1605 = vadd.f32 %v1601, %v1603
          %v1606 = vadd.f32 %v1602, %v1604
          %v1607 = vmul.f32 %v1529, %v1487
          %v1608 = vmul.f32 %v1530, %v1488
          %v1609 = vadd.f32 %v1605, %v1607
          %v1610 = vadd.f32 %v1606, %v1608
          %v1611 = vmul.f32 %v1517, %v1457
          %v1612 = vmul.f32 %v1518, %v1458
          %v1613 = vmul.f32 %v1523, %v1471
          %v1614 = vmul.f32 %v1524, %v1472
          %v1615 = vadd.f32 %v1611, %v1613
          %v1616 = vadd.f32 %v1612, %v1614
          %v1617 = vmul.f32 %v1529, %v1479
          %v1618 = vmul.f32 %v1530, %v1480
          %v1619 = vadd.f32 %v1615, %v1617
          %v1620 = vadd.f32 %v1616, %v1618
          %v1621 = vmul.f32 %v1535, %v1487
          %v1622 = vmul.f32 %v1536, %v1488
          %v1623 = vadd.f32 %v1619, %v1621
          %v1624 = vadd.f32 %v1620, %v1622
          %v1625 = vmul.f32 %v1523, %v1457
          %v1626 = vmul.f32 %v1524, %v1458
          %v1627 = vmul.f32 %v1529, %v1471
          %v1628 = vmul.f32 %v1530, %v1472
          %v1629 = vadd.f32 %v1625, %v1627
          %v1630 = vadd.f32 %v1626, %v1628
          %v1631 = vmul.f32 %v1535, %v1479
          %v1632 = vmul.f32 %v1536, %v1480
          %v1633 = vadd.f32 %v1629, %v1631
          %v1634 = vadd.f32 %v1630, %v1632
          %v1635 = vmul.f32 %v1541, %v1487
          %v1636 = vmul.f32 %v1542, %v1488
          %v1637 = vadd.f32 %v1633, %v1635
          %v1638 = vadd.f32 %v1634, %v1636
          %v1639 = vmul.f32 %v1529, %v1457
          %v1640 = vmul.f32 %v1530, %v1458
          %v1641 = vmul.f32 %v1535, %v1471
          %v1642 = vmul.f32 %v1536, %v1472
          %v1643 = vadd.f32 %v1639, %v1641
          %v1644 = vadd.f32 %v1640, %v1642
          %v1645 = vmul.f32 %v1541, %v1479
          %v1646 = vmul.f32 %v1542, %v1480
          %v1647 = vadd.f32 %v1643, %v1645
          %v1648 = vadd.f32 %v1644, %v1646
          %v1649 = vmul.f32 %v1547, %v1487
          %v1650 = vmul.f32 %v1548, %v1488
          %v1651 = vadd.f32 %v1647, %v1649
          %v1652 = vadd.f32 %v1648, %v1650
          %v1653 = vmul.f32 %v1535, %v1457
          %v1654 = vmul.f32 %v1536, %v1458
          %v1655 = vmul.f32 %v1541, %v1471
          %v1656 = vmul.f32 %v1542, %v1472
          %v1657 = vadd.f32 %v1653, %v1655
          %v1658 = vadd.f32 %v1654, %v1656
          %v1659 = vmul.f32 %v1547, %v1479
          %v1660 = vmul.f32 %v1548, %v1480
          %v1661 = vadd.f32 %v1657, %v1659
          %v1662 = vadd.f32 %v1658, %v1660
          %v1663 = vmul.f32 %v1553, %v1487
          %v1664 = vmul.f32 %v1554, %v1488
          %v1665 = vadd.f32 %v1661, %v1663
          %v1666 = vadd.f32 %v1662, %v1664
          %v1667 = vpack.c.bf16 %v1444, %v1443
          %v1668 = vpack.c.bf16 %v1568, %v1567
          %v1669 = vpack.c.bf16 %v1582, %v1581
          %v1670 = vpack.c.bf16 %v1596, %v1595
          %v1671 = vpack.c.bf16 %v1610, %v1609
          %v1672 = vpack.c.bf16 %v1624, %v1623
          %v1673 = vpack.c.bf16 %v1638, %v1637
          %v1674 = vpack.c.bf16 %v1652, %v1651
          %v1675 = vpack.c.bf16 %v1666, %v1665
          %v1820 = vunpack.c.l.b16 %v1289
          %v1821 = vunpack.c.l.b16 %v1290
          %v1822 = vunpack.c.l.b16 %v1291
          %v1823 = vunpack.c.l.b16 %v1292
          %v1824 = vunpack.c.l.b16 %v1293
          %v1825 = vunpack.c.l.b16 %v1294
          %v1826 = vunpack.c.l.b16 %v1295
          %v1827 = vunpack.c.l.b16 %v1296
          %v1828 = vunpack.c.l.b16 %v1297
          %v1829 = vunpack.c.l.b16 %v1298
          %v1830 = vunpack.c.l.b16 %v1299
          %v1831 = vunpack.c.l.b16 %v1300
          %v1832 = vunpack.c.l.b16 %v1301
          %v1833 = vunpack.c.l.b16 %v1302
          %v1834 = vunpack.c.l.b16 %v1303
          %v1835 = vunpack.c.l.b16 %v1304
          %v1836 = vunpack.c.l.b16 %v1305
          %v1837 = vunpack.c.l.b16 %v1306
          %v1838 = vunpack.c.l.b16 %v1307
          %v1839 = vunpack.c.l.b16 %v1308
          %v1840 = vunpack.c.l.b16 %v1309
          %v1841 = vunpack.c.l.b16 %v1310
          %v1842 = vunpack.c.l.b16 %v1311
          %v1843 = vunpack.c.l.b16 %v1312
          %v1844 = vunpack.c.l.b16 %v1313
          %v1845 = vunpack.c.l.b16 %v1314
          %v1846 = vunpack.c.l.b16 %v1315
          %v1847 = vunpack.c.l.b16 %v1316
          %v1848 = vunpack.c.l.b16 %v1317
          %v1849 = vunpack.c.l.b16 %v1318
          %v1850 = vunpack.c.l.b16 %v1319
          %v1851 = vunpack.c.l.b16 %v1320
          %v1852 = vunpack.c.l.b16 %v1321
          %v1853 = vunpack.c.l.b16 %v1322
          %v1854 = vunpack.c.l.b16 %v1323
          %v1855 = vunpack.c.l.b16 %v1324
          %v1856 = vunpack.c.l.b16 %v1325
          %v1857 = vunpack.c.l.b16 %v1326
          %v1858 = vunpack.c.l.b16 %v1327
          %v1859 = vunpack.c.l.b16 %v1328
          %v1860 = vunpack.c.l.b16 %v1329
          %v1861 = vunpack.c.l.b16 %v1330
          %v1862 = vunpack.c.l.b16 %v1331
          %v1863 = vunpack.c.l.b16 %v1332
          %v1864 = vunpack.c.l.b16 %v1333
          %v1865 = vunpack.c.l.b16 %v1334
          %v1866 = vunpack.c.l.b16 %v1335
          %v1867 = vunpack.c.l.b16 %v1336
          %v1868 = vunpack.c.l.b16 %v1337
          %v1869 = vunpack.c.l.b16 %v1338
          %v1870 = vunpack.c.l.b16 %v1339
          %v1871 = vunpack.c.l.b16 %v1340
          %v1872 = vunpack.c.l.b16 %v1341
          %v1873 = vunpack.c.l.b16 %v1342
          %v1874 = vunpack.c.l.b16 %v1343
          %v1875 = vunpack.c.l.b16 %v1344
          %v1876 = vunpack.c.l.b16 %v1345
          %v1877 = vunpack.c.l.b16 %v1346
          %v1878 = vunpack.c.l.b16 %v1347
          %v1879 = vunpack.c.l.b16 %v1348
          %v1880 = vunpack.c.l.b16 %v1349
          %v1881 = vunpack.c.l.b16 %v1350
          %v1882 = vunpack.c.l.b16 %v1351
          %v1883 = vunpack.c.l.b16 %v1352
          %v1884 = vunpack.c.l.b16 %v1353
          %v1885 = vunpack.c.l.b16 %v1354
          %v1886 = vunpack.c.l.b16 %v1355
          %v1887 = vunpack.c.l.b16 %v1356
          %v1888 = vunpack.c.l.b16 %v1357
          %v1889 = vunpack.c.l.b16 %v1358
          %v1890 = vunpack.c.l.b16 %v1359
          %v1891 = vunpack.c.l.b16 %v1360
          %v1892 = vunpack.c.l.b16 %v1361
          %v1893 = vunpack.c.l.b16 %v1362
          %v1894 = vunpack.c.l.b16 %v1363
          %v1895 = vunpack.c.l.b16 %v1364
          %v1896 = vunpack.c.l.b16 %v1365
          %v1897 = vunpack.c.l.b16 %v1366
          %v1898 = vunpack.c.l.b16 %v1367
          %v1899 = vunpack.c.l.b16 %v1368
          %v1900 = vunpack.c.l.b16 %v1369
          %v1901 = vunpack.c.l.b16 %v1370
          %v1902 = vunpack.c.l.b16 %v1371
          %v1903 = vunpack.c.l.b16 %v1372
          %v1904 = vunpack.c.l.b16 %v1373
          %v1905 = vunpack.c.l.b16 %v1374
          %v1906 = vunpack.c.l.b16 %v1375
          %v1907 = vunpack.c.l.b16 %v1376
          %v1908 = vunpack.c.l.b16 %v1377
          %v1909 = vunpack.c.l.b16 %v1378
          %v1910 = vunpack.c.l.b16 %v1379
          %v1911 = vunpack.c.l.b16 %v1380
          %v1912 = vunpack.c.l.b16 %v1381
          %v1913 = vunpack.c.l.b16 %v1382
          %v1914 = vunpack.c.l.b16 %v1383
          %v1915 = vunpack.c.l.b16 %v1384
          %v1916 = vunpack.c.l.b16 %v1385
          %v1917 = vunpack.c.l.b16 %v1386
          %v1918 = vunpack.c.l.b16 %v1387
          %v1919 = vunpack.c.l.b16 %v1388
          %v1920 = vunpack.c.l.b16 %v1389
          %v1921 = vunpack.c.l.b16 %v1390
          %v1922 = vunpack.c.l.b16 %v1391
          %v1923 = vunpack.c.l.b16 %v1392
          %v1924 = vunpack.c.l.b16 %v1393
          %v1925 = vunpack.c.l.b16 %v1394
          %v1926 = vunpack.c.l.b16 %v1395
          %v1927 = vunpack.c.l.b16 %v1396
          %v1928 = vunpack.c.l.b16 %v1397
          %v1929 = vunpack.c.l.b16 %v1398
          %v1930 = vunpack.c.l.b16 %v1399
          %v1931 = vunpack.c.l.b16 %v1400
          %v1932 = vunpack.c.l.b16 %v1401
          %v1933 = vunpack.c.l.b16 %v1402
          %v1934 = vunpack.c.l.b16 %v1403
          %v1935 = vunpack.c.l.b16 %v1404
          %v1936 = vunpack.c.l.b16 %v1405
          %v1937 = vunpack.c.l.b16 %v1406
          %v1938 = vunpack.c.l.b16 %v1407
          %v1939 = vunpack.c.l.b16 %v1408
          %v1940 = vunpack.c.l.b16 %v1409
          %v1941 = vunpack.c.l.b16 %v1410
          %v1942 = vunpack.c.l.b16 %v1411
          %v1943 = vunpack.c.l.b16 %v1412
          %v1944 = vunpack.c.l.b16 %v1413
          %v1945 = vunpack.c.l.b16 %v1414
          %v1946 = vunpack.c.l.b16 %v1415
          %v1947 = vunpack.c.l.b16 %v1416
          %v1948 = vunpack.c.l.b16 %v1417
          %v1949 = vunpack.c.l.b16 %v1418
          %v1950 = vunpack.c.l.b16 %v1419
          %v1951 = vunpack.c.l.b16 %v1420
          %v1952 = vunpack.c.l.b16 %v1421
          %v1953 = vunpack.c.l.b16 %v1422
          %v1954 = vunpack.c.l.b16 %v1423
          %v1955 = vunpack.c.l.b16 %v1424
          %v1956 = vunpack.c.l.b16 %v1425
          %v1957 = vunpack.c.l.b16 %v1426
          %v1958 = vunpack.c.l.b16 %v1427
          %v1959 = vunpack.c.l.b16 %v1428
          %v1960 = vunpack.c.l.b16 %v1429
          %v1961 = vunpack.c.l.b16 %v1430
          %v1962 = vunpack.c.l.b16 %v1431
          %v1963 = vunpack.c.l.b16 %v1432
          %v1964 = vpack.c.b16 %v1821, %v1820
          %v1965 = vpack.c.b16 %v1823, %v1822
          %v1966 = vpack.c.b16 %v1825, %v1824
          %v1967 = vpack.c.b16 %v1827, %v1826
          %v1968 = vpack.c.b16 %v1829, %v1828
          %v1969 = vpack.c.b16 %v1831, %v1830
          %v1970 = vpack.c.b16 %v1833, %v1832
          %v1971 = vpack.c.b16 %v1835, %v1834
          %v1972 = vpack.c.b16 %v1837, %v1836
          %v1973 = vpack.c.b16 %v1839, %v1838
          %v1974 = vpack.c.b16 %v1841, %v1840
          %v1975 = vpack.c.b16 %v1843, %v1842
          %v1976 = vpack.c.b16 %v1845, %v1844
          %v1977 = vpack.c.b16 %v1847, %v1846
          %v1978 = vpack.c.b16 %v1849, %v1848
          %v1979 = vpack.c.b16 %v1851, %v1850
          %v1980 = vpack.c.b16 %v1853, %v1852
          %v1981 = vpack.c.b16 %v1855, %v1854
          %v1982 = vpack.c.b16 %v1857, %v1856
          %v1983 = vpack.c.b16 %v1859, %v1858
          %v1984 = vpack.c.b16 %v1861, %v1860
          %v1985 = vpack.c.b16 %v1863, %v1862
          %v1986 = vpack.c.b16 %v1865, %v1864
          %v1987 = vpack.c.b16 %v1867, %v1866
          %v1988 = vpack.c.b16 %v1869, %v1868
          %v1989 = vpack.c.b16 %v1871, %v1870
          %v1990 = vpack.c.b16 %v1873, %v1872
          %v1991 = vpack.c.b16 %v1875, %v1874
          %v1992 = vpack.c.b16 %v1877, %v1876
          %v1993 = vpack.c.b16 %v1879, %v1878
          %v1994 = vpack.c.b16 %v1881, %v1880
          %v1995 = vpack.c.b16 %v1883, %v1882
          %v1996 = vpack.c.b16 %v1885, %v1884
          %v1997 = vpack.c.b16 %v1887, %v1886
          %v1998 = vpack.c.b16 %v1889, %v1888
          %v1999 = vpack.c.b16 %v1891, %v1890
          %v2000 = vpack.c.b16 %v1893, %v1892
          %v2001 = vpack.c.b16 %v1895, %v1894
          %v2002 = vpack.c.b16 %v1897, %v1896
          %v2003 = vpack.c.b16 %v1899, %v1898
          %v2004 = vpack.c.b16 %v1901, %v1900
          %v2005 = vpack.c.b16 %v1903, %v1902
          %v2006 = vpack.c.b16 %v1905, %v1904
          %v2007 = vpack.c.b16 %v1907, %v1906
          %v2008 = vpack.c.b16 %v1909, %v1908
          %v2009 = vpack.c.b16 %v1911, %v1910
          %v2010 = vpack.c.b16 %v1913, %v1912
          %v2011 = vpack.c.b16 %v1915, %v1914
          %v2012 = vpack.c.b16 %v1917, %v1916
          %v2013 = vpack.c.b16 %v1919, %v1918
          %v2014 = vpack.c.b16 %v1921, %v1920
          %v2015 = vpack.c.b16 %v1923, %v1922
          %v2016 = vpack.c.b16 %v1925, %v1924
          %v2017 = vpack.c.b16 %v1927, %v1926
          %v2018 = vpack.c.b16 %v1929, %v1928
          %v2019 = vpack.c.b16 %v1931, %v1930
          %v2020 = vpack.c.b16 %v1933, %v1932
          %v2021 = vpack.c.b16 %v1935, %v1934
          %v2022 = vpack.c.b16 %v1937, %v1936
          %v2023 = vpack.c.b16 %v1939, %v1938
          %v2024 = vpack.c.b16 %v1941, %v1940
          %v2025 = vpack.c.b16 %v1943, %v1942
          %v2026 = vpack.c.b16 %v1945, %v1944
          %v2027 = vpack.c.b16 %v1947, %v1946
          %v2028 = vpack.c.b16 %v1949, %v1948
          %v2029 = vpack.c.b16 %v1951, %v1950
          %v2030 = vpack.c.b16 %v1953, %v1952
          %v2031 = vpack.c.b16 %v1955, %v1954
          %v2032 = vpack.c.b16 %v1957, %v1956
          %v2033 = vpack.c.b16 %v1959, %v1958
          %v2034 = vpack.c.b16 %v1961, %v1960
          %v2035 = vpack.c.b16 %v1963, %v1962
          %2108 = vmatpush.bf16.msra.mxu0 %v1971
          %2109 = vmatpush.bf16.msra.mxu0 %v1970
          %2110 = vmatpush.bf16.msra.mxu0 %v1969
          %2111 = vmatpush.bf16.msra.mxu0 %v1968
          %2112 = vmatpush.bf16.msra.mxu0 %v1967
          %2113 = vmatpush.bf16.msra.mxu0 %v1966
          %2114 = vmatpush.bf16.msra.mxu0 %v1965
          %2115 = vmatpush.bf16.msra.mxu0 %v1964
          %2116 = vmatmul.bf16.gmra.mxu0 %v1667
          %v2117 = vpop.f32.mrf.mxu0
          %v2118 = vadd.f32 0.0, %v2117
          %v2119 = vpop.f32.mrf.mxu0
          %v2120 = vadd.f32 0.0, %v2119
          %2121 = vdwg.mxu0
          %2122 = vmatpush.bf16.msra.mxu0 %v1979
          %2123 = vmatpush.bf16.msra.mxu0 %v1978
          %2124 = vmatpush.bf16.msra.mxu0 %v1977
          %2125 = vmatpush.bf16.msra.mxu0 %v1976
          %2126 = vmatpush.bf16.msra.mxu0 %v1975
          %2127 = vmatpush.bf16.msra.mxu0 %v1974
          %2128 = vmatpush.bf16.msra.mxu0 %v1973
          %2129 = vmatpush.bf16.msra.mxu0 %v1972
          %2130 = vmatmul.bf16.gmra.mxu0 %v1668
          %v2131 = vpop.f32.mrf.mxu0
          %v2132 = vadd.f32 %v2118, %v2131
          %v2133 = vpop.f32.mrf.mxu0
          %v2134 = vadd.f32 %v2120, %v2133
          %2135 = vdwg.mxu0
          %2136 = vmatpush.bf16.msra.mxu0 %v1987
          %2137 = vmatpush.bf16.msra.mxu0 %v1986
          %2138 = vmatpush.bf16.msra.mxu0 %v1985
          %2139 = vmatpush.bf16.msra.mxu0 %v1984
          %2140 = vmatpush.bf16.msra.mxu0 %v1983
          %2141 = vmatpush.bf16.msra.mxu0 %v1982
          %2142 = vmatpush.bf16.msra.mxu0 %v1981
          %2143 = vmatpush.bf16.msra.mxu0 %v1980
          %2144 = vmatmul.bf16.gmra.mxu0 %v1669
          %v2145 = vpop.f32.mrf.mxu0
          %v2146 = vadd.f32 %v2132, %v2145
          %v2147 = vpop.f32.mrf.mxu0
          %v2148 = vadd.f32 %v2134, %v2147
          %2149 = vdwg.mxu0
          %2150 = vmatpush.bf16.msra.mxu0 %v1995
          %2151 = vmatpush.bf16.msra.mxu0 %v1994
          %2152 = vmatpush.bf16.msra.mxu0 %v1993
          %2153 = vmatpush.bf16.msra.mxu0 %v1992
          %2154 = vmatpush.bf16.msra.mxu0 %v1991
          %2155 = vmatpush.bf16.msra.mxu0 %v1990
          %2156 = vmatpush.bf16.msra.mxu0 %v1989
          %2157 = vmatpush.bf16.msra.mxu0 %v1988
          %2158 = vmatmul.bf16.gmra.mxu0 %v1670
          %v2159 = vpop.f32.mrf.mxu0
          %v2160 = vadd.f32 %v2146, %v2159
          %v2161 = vpop.f32.mrf.mxu0
          %v2162 = vadd.f32 %v2148, %v2161
          %2163 = vdwg.mxu0
          %2164 = vmatpush.bf16.msra.mxu0 %v2003
          %2165 = vmatpush.bf16.msra.mxu0 %v2002
          %2166 = vmatpush.bf16.msra.mxu0 %v2001
          %2167 = vmatpush.bf16.msra.mxu0 %v2000
          %2168 = vmatpush.bf16.msra.mxu0 %v1999
          %2169 = vmatpush.bf16.msra.mxu0 %v1998
          %2170 = vmatpush.bf16.msra.mxu0 %v1997
          %2171 = vmatpush.bf16.msra.mxu0 %v1996
          %2172 = vmatmul.bf16.gmra.mxu0 %v1671
          %v2173 = vpop.f32.mrf.mxu0
          %v2174 = vadd.f32 %v2160, %v2173
          %v2175 = vpop.f32.mrf.mxu0
          %v2176 = vadd.f32 %v2162, %v2175
          %2177 = vdwg.mxu0
          %2178 = vmatpush.bf16.msra.mxu0 %v2011
          %2179 = vmatpush.bf16.msra.mxu0 %v2010
          %2180 = vmatpush.bf16.msra.mxu0 %v2009
          %2181 = vmatpush.bf16.msra.mxu0 %v2008
          %2182 = vmatpush.bf16.msra.mxu0 %v2007
          %2183 = vmatpush.bf16.msra.mxu0 %v2006
          %2184 = vmatpush.bf16.msra.mxu0 %v2005
          %2185 = vmatpush.bf16.msra.mxu0 %v2004
          %2186 = vmatmul.bf16.gmra.mxu0 %v1672
          %v2187 = vpop.f32.mrf.mxu0
          %v2188 = vadd.f32 %v2174, %v2187
          %v2189 = vpop.f32.mrf.mxu0
          %v2190 = vadd.f32 %v2176, %v2189
          %2191 = vdwg.mxu0
          %2192 = vmatpush.bf16.msra.mxu0 %v2019
          %2193 = vmatpush.bf16.msra.mxu0 %v2018
          %2194 = vmatpush.bf16.msra.mxu0 %v2017
          %2195 = vmatpush.bf16.msra.mxu0 %v2016
          %2196 = vmatpush.bf16.msra.mxu0 %v2015
          %2197 = vmatpush.bf16.msra.mxu0 %v2014
          %2198 = vmatpush.bf16.msra.mxu0 %v2013
          %2199 = vmatpush.bf16.msra.mxu0 %v2012
          %2200 = vmatmul.bf16.gmra.mxu0 %v1673
          %v2201 = vpop.f32.mrf.mxu0
          %v2202 = vadd.f32 %v2188, %v2201
          %v2203 = vpop.f32.mrf.mxu0
          %v2204 = vadd.f32 %v2190, %v2203
          %2205 = vdwg.mxu0
          %2206 = vmatpush.bf16.msra.mxu0 %v2027
          %2207 = vmatpush.bf16.msra.mxu0 %v2026
          %2208 = vmatpush.bf16.msra.mxu0 %v2025
          %2209 = vmatpush.bf16.msra.mxu0 %v2024
          %2210 = vmatpush.bf16.msra.mxu0 %v2023
          %2211 = vmatpush.bf16.msra.mxu0 %v2022
          %2212 = vmatpush.bf16.msra.mxu0 %v2021
          %2213 = vmatpush.bf16.msra.mxu0 %v2020
          %2214 = vmatmul.bf16.gmra.mxu0 %v1674
          %v2215 = vpop.f32.mrf.mxu0
          %v2216 = vadd.f32 %v2202, %v2215
          %v2217 = vpop.f32.mrf.mxu0
          %v2218 = vadd.f32 %v2204, %v2217
          %2219 = vdwg.mxu0
          %2220 = vmatpush.bf16.msra.mxu0 %v2035
          %2221 = vmatpush.bf16.msra.mxu0 %v2034
          %2222 = vmatpush.bf16.msra.mxu0 %v2033
          %2223 = vmatpush.bf16.msra.mxu0 %v2032
          %2224 = vmatpush.bf16.msra.mxu0 %v2031
          %2225 = vmatpush.bf16.msra.mxu0 %v2030
          %2226 = vmatpush.bf16.msra.mxu0 %v2029
          %2227 = vmatpush.bf16.msra.mxu0 %v2028
          %2228 = vmatmul.bf16.gmra.mxu0 %v1675
          %v2229 = vpop.f32.mrf.mxu0
          %v2230 = vadd.f32 %v2216, %v2229
          %v2231 = vpop.f32.mrf.mxu0
          %v2232 = vadd.f32 %v2218, %v2231
          %2233 = vdwg.mxu0
          %v2234 = vld [vmem:[#allocation9] sm:$0xf]
          %v2235 = vld [vmem:[#allocation9 + $0x4] sm:$0xf]
          %v2236 = vld [vmem:[#allocation9 + $0x8] sm:$0xf]
          %v2237 = vld [vmem:[#allocation9 + $0xc] sm:$0xf]
          %v2238 = vld [vmem:[#allocation9 + $0x10] sm:$0xf]
          %v2239 = vld [vmem:[#allocation9 + $0x14] sm:$0xf]
          %v2240 = vld [vmem:[#allocation9 + $0x18] sm:$0xf]
          %v2241 = vld [vmem:[#allocation9 + $0x1c] sm:$0xf]
          %v2242 = vld [vmem:[#allocation9 + $0x20] sm:$0xf]
          %v2243 = vld [vmem:[#allocation9 + $0x24] sm:$0xf]
          %v2244 = vld [vmem:[#allocation9 + $0x28] sm:$0xf]
          %v2245 = vld [vmem:[#allocation9 + $0x2c] sm:$0xf]
          %v2246 = vld [vmem:[#allocation9 + $0x30] sm:$0xf]
          %v2247 = vld [vmem:[#allocation9 + $0x34] sm:$0xf]
          %v2248 = vld [vmem:[#allocation9 + $0x38] sm:$0xf]
          %v2249 = vld [vmem:[#allocation9 + $0x3c] sm:$0xf]
          %v2250 = vld [vmem:[#allocation9 + $0x40] sm:$0xf]
          %v2251 = vld [vmem:[#allocation9 + $0x44] sm:$0xf]
          %v2252 = vld [vmem:[#allocation9 + $0x48] sm:$0xf]
          %v2253 = vld [vmem:[#allocation9 + $0x4c] sm:$0xf]
          %v2254 = vld [vmem:[#allocation9 + $0x50] sm:$0xf]
          %v2255 = vld [vmem:[#allocation9 + $0x54] sm:$0xf]
          %v2256 = vld [vmem:[#allocation9 + $0x58] sm:$0xf]
          %v2257 = vld [vmem:[#allocation9 + $0x5c] sm:$0xf]
          %v2258 = vld [vmem:[#allocation9 + $0x60] sm:$0xf]
          %v2259 = vld [vmem:[#allocation9 + $0x64] sm:$0xf]
          %v2260 = vld [vmem:[#allocation9 + $0x68] sm:$0xf]
          %v2261 = vld [vmem:[#allocation9 + $0x6c] sm:$0xf]
          %v2262 = vld [vmem:[#allocation9 + $0x70] sm:$0xf]
          %v2263 = vld [vmem:[#allocation9 + $0x74] sm:$0xf]
          %v2264 = vld [vmem:[#allocation9 + $0x78] sm:$0xf]
          %v2265 = vld [vmem:[#allocation9 + $0x7c] sm:$0xf]
          %v2266 = vld [vmem:[#allocation9 + $0x80] sm:$0xf]
          %v2267 = vld [vmem:[#allocation9 + $0x84] sm:$0xf]
          %v2268 = vld [vmem:[#allocation9 + $0x88] sm:$0xf]
          %v2269 = vld [vmem:[#allocation9 + $0x8c] sm:$0xf]
          %v2270 = vld [vmem:[#allocation9 + $0x90] sm:$0xf]
          %v2271 = vld [vmem:[#allocation9 + $0x94] sm:$0xf]
          %v2272 = vld [vmem:[#allocation9 + $0x98] sm:$0xf]
          %v2273 = vld [vmem:[#allocation9 + $0x9c] sm:$0xf]
          %v2274 = vld [vmem:[#allocation9 + $0xa0] sm:$0xf]
          %v2275 = vld [vmem:[#allocation9 + $0xa4] sm:$0xf]
          %v2276 = vld [vmem:[#allocation9 + $0xa8] sm:$0xf]
          %v2277 = vld [vmem:[#allocation9 + $0xac] sm:$0xf]
          %v2278 = vld [vmem:[#allocation9 + $0xb0] sm:$0xf]
          %v2279 = vld [vmem:[#allocation9 + $0xb4] sm:$0xf]
          %v2280 = vld [vmem:[#allocation9 + $0xb8] sm:$0xf]
          %v2281 = vld [vmem:[#allocation9 + $0xbc] sm:$0xf]
          %v2282 = vld [vmem:[#allocation9 + $0xc0] sm:$0xf]
          %v2283 = vld [vmem:[#allocation9 + $0xc4] sm:$0xf]
          %v2284 = vld [vmem:[#allocation9 + $0xc8] sm:$0xf]
          %v2285 = vld [vmem:[#allocation9 + $0xcc] sm:$0xf]
          %v2286 = vld [vmem:[#allocation9 + $0xd0] sm:$0xf]
          %v2287 = vld [vmem:[#allocation9 + $0xd4] sm:$0xf]
          %v2288 = vld [vmem:[#allocation9 + $0xd8] sm:$0xf]
          %v2289 = vld [vmem:[#allocation9 + $0xdc] sm:$0xf]
          %v2290 = vld [vmem:[#allocation9 + $0xe0] sm:$0xf]
          %v2291 = vld [vmem:[#allocation9 + $0xe4] sm:$0xf]
          %v2292 = vld [vmem:[#allocation9 + $0xe8] sm:$0xf]
          %v2293 = vld [vmem:[#allocation9 + $0xec] sm:$0xf]
          %v2294 = vld [vmem:[#allocation9 + $0xf0] sm:$0xf]
          %v2295 = vld [vmem:[#allocation9 + $0xf4] sm:$0xf]
          %v2296 = vld [vmem:[#allocation9 + $0xf8] sm:$0xf]
          %v2297 = vld [vmem:[#allocation9 + $0xfc] sm:$0xf]
          %v2298 = vld [vmem:[#allocation9 + $0x100] sm:$0xf]
          %v2299 = vld [vmem:[#allocation9 + $0x104] sm:$0xf]
          %v2300 = vld [vmem:[#allocation9 + $0x108] sm:$0xf]
          %v2301 = vld [vmem:[#allocation9 + $0x10c] sm:$0xf]
          %v2302 = vld [vmem:[#allocation9 + $0x110] sm:$0xf]
          %v2303 = vld [vmem:[#allocation9 + $0x114] sm:$0xf]
          %v2304 = vld [vmem:[#allocation9 + $0x118] sm:$0xf]
          %v2305 = vld [vmem:[#allocation9 + $0x11c] sm:$0xf]
          %v2306 = vld [vmem:[#allocation9 + $0x120] sm:$0xf]
          %v2307 = vld [vmem:[#allocation9 + $0x124] sm:$0xf]
          %v2308 = vld [vmem:[#allocation9 + $0x128] sm:$0xf]
          %v2309 = vld [vmem:[#allocation9 + $0x12c] sm:$0xf]
          %v2310 = vld [vmem:[#allocation9 + $0x130] sm:$0xf]
          %v2311 = vld [vmem:[#allocation9 + $0x134] sm:$0xf]
          %v2312 = vld [vmem:[#allocation9 + $0x138] sm:$0xf]
          %v2313 = vld [vmem:[#allocation9 + $0x13c] sm:$0xf]
          %v2314 = vld [vmem:[#allocation9 + $0x140] sm:$0xf]
          %v2315 = vld [vmem:[#allocation9 + $0x144] sm:$0xf]
          %v2316 = vld [vmem:[#allocation9 + $0x148] sm:$0xf]
          %v2317 = vld [vmem:[#allocation9 + $0x14c] sm:$0xf]
          %v2318 = vld [vmem:[#allocation9 + $0x150] sm:$0xf]
          %v2319 = vld [vmem:[#allocation9 + $0x154] sm:$0xf]
          %v2320 = vld [vmem:[#allocation9 + $0x158] sm:$0xf]
          %v2321 = vld [vmem:[#allocation9 + $0x15c] sm:$0xf]
          %v2322 = vld [vmem:[#allocation9 + $0x160] sm:$0xf]
          %v2323 = vld [vmem:[#allocation9 + $0x164] sm:$0xf]
          %v2324 = vld [vmem:[#allocation9 + $0x168] sm:$0xf]
          %v2325 = vld [vmem:[#allocation9 + $0x16c] sm:$0xf]
          %v2326 = vld [vmem:[#allocation9 + $0x170] sm:$0xf]
          %v2327 = vld [vmem:[#allocation9 + $0x174] sm:$0xf]
          %v2328 = vld [vmem:[#allocation9 + $0x178] sm:$0xf]
          %v2329 = vld [vmem:[#allocation9 + $0x17c] sm:$0xf]
          %v2330 = vld [vmem:[#allocation9 + $0x180] sm:$0xf]
          %v2331 = vld [vmem:[#allocation9 + $0x184] sm:$0xf]
          %v2332 = vld [vmem:[#allocation9 + $0x188] sm:$0xf]
          %v2333 = vld [vmem:[#allocation9 + $0x18c] sm:$0xf]
          %v2334 = vld [vmem:[#allocation9 + $0x190] sm:$0xf]
          %v2335 = vld [vmem:[#allocation9 + $0x194] sm:$0xf]
          %v2336 = vld [vmem:[#allocation9 + $0x198] sm:$0xf]
          %v2337 = vld [vmem:[#allocation9 + $0x19c] sm:$0xf]
          %v2338 = vld [vmem:[#allocation9 + $0x1a0] sm:$0xf]
          %v2339 = vld [vmem:[#allocation9 + $0x1a4] sm:$0xf]
          %v2340 = vld [vmem:[#allocation9 + $0x1a8] sm:$0xf]
          %v2341 = vld [vmem:[#allocation9 + $0x1ac] sm:$0xf]
          %v2342 = vld [vmem:[#allocation9 + $0x1b0] sm:$0xf]
          %v2343 = vld [vmem:[#allocation9 + $0x1b4] sm:$0xf]
          %v2344 = vld [vmem:[#allocation9 + $0x1b8] sm:$0xf]
          %v2345 = vld [vmem:[#allocation9 + $0x1bc] sm:$0xf]
          %v2346 = vld [vmem:[#allocation9 + $0x1c0] sm:$0xf]
          %v2347 = vld [vmem:[#allocation9 + $0x1c4] sm:$0xf]
          %v2348 = vld [vmem:[#allocation9 + $0x1c8] sm:$0xf]
          %v2349 = vld [vmem:[#allocation9 + $0x1cc] sm:$0xf]
          %v2350 = vld [vmem:[#allocation9 + $0x1d0] sm:$0xf]
          %v2351 = vld [vmem:[#allocation9 + $0x1d4] sm:$0xf]
          %v2352 = vld [vmem:[#allocation9 + $0x1d8] sm:$0xf]
          %v2353 = vld [vmem:[#allocation9 + $0x1dc] sm:$0xf]
          %v2354 = vld [vmem:[#allocation9 + $0x1e0] sm:$0xf]
          %v2355 = vld [vmem:[#allocation9 + $0x1e4] sm:$0xf]
          %v2356 = vld [vmem:[#allocation9 + $0x1e8] sm:$0xf]
          %v2357 = vld [vmem:[#allocation9 + $0x1ec] sm:$0xf]
          %v2358 = vld [vmem:[#allocation9 + $0x1f0] sm:$0xf]
          %v2359 = vld [vmem:[#allocation9 + $0x1f4] sm:$0xf]
          %v2360 = vld [vmem:[#allocation9 + $0x1f8] sm:$0xf]
          %v2361 = vld [vmem:[#allocation9 + $0x1fc] sm:$0xf]
          %v2362 = vld [vmem:[#allocation9 + $0x200] sm:$0xf]
          %v2363 = vld [vmem:[#allocation9 + $0x204] sm:$0xf]
          %v2364 = vld [vmem:[#allocation9 + $0x208] sm:$0xf]
          %v2365 = vld [vmem:[#allocation9 + $0x20c] sm:$0xf]
          %v2366 = vld [vmem:[#allocation9 + $0x210] sm:$0xf]
          %v2367 = vld [vmem:[#allocation9 + $0x214] sm:$0xf]
          %v2368 = vld [vmem:[#allocation9 + $0x218] sm:$0xf]
          %v2369 = vld [vmem:[#allocation9 + $0x21c] sm:$0xf]
          %v2370 = vld [vmem:[#allocation9 + $0x220] sm:$0xf]
          %v2371 = vld [vmem:[#allocation9 + $0x224] sm:$0xf]
          %v2372 = vld [vmem:[#allocation9 + $0x228] sm:$0xf]
          %v2373 = vld [vmem:[#allocation9 + $0x22c] sm:$0xf]
          %v2374 = vld [vmem:[#allocation9 + $0x230] sm:$0xf]
          %v2375 = vld [vmem:[#allocation9 + $0x234] sm:$0xf]
          %v2376 = vld [vmem:[#allocation9 + $0x238] sm:$0xf]
          %v2377 = vld [vmem:[#allocation9 + $0x23c] sm:$0xf]
          %v2378 = vsub.f32 0.0, %v2230
          %v2379 = vsub.f32 0.0, %v2232
          %v2380 = vmul.f32 %v2378, 1.442695
          %v2381 = vpow.pop %v2380
          %v2382 = vmul.f32 %v2379, 1.442695
          %v2383 = vpow.pop %v2382
          %v2384 = vadd.f32 %v2381, 1.0
          %v2385 = vadd.f32 %v2383, 1.0
          %v2386 = vrcp.pop %v2384
          %v2387 = vrcp.pop %v2385
          %v2388 = vmul.f32 %v2230, %v2386
          %v2389 = vmul.f32 %v2232, %v2387
          %v2390 = vsub.f32 %v2230, -2.2
          %v2391 = vsub.f32 %v2232, -2.2
          %v2392 = vmul.f32 %v2390, 2.5
          %v2393 = vmul.f32 %v2391, 2.5
          %v2394 = vfloor.f32 %v2392
          %v2395 = vfloor.f32 %v2393
          %v2396 = vsub.f32 %v2392, %v2394
          %v2397 = vsub.f32 %v2393, %v2395
          %v2398 = vmul.f32 %v2396, %v2396
          %v2399 = vmul.f32 %v2397, %v2397
          %v2400 = vmul.f32 %v2398, %v2396
          %v2401 = vmul.f32 %v2399, %v2397
          %v2402 = vmul.f32 %v2400, 0.16666667
          %v2403 = vmul.f32 %v2401, 0.16666667
          %v2404 = vmul.f32 %v2396, 3.0
          %v2405 = vmul.f32 %v2397, 3.0
          %v2406 = vsub.f32 3.0, %v2404
          %v2407 = vsub.f32 3.0, %v2405
          %v2408 = vmul.f32 %v2406, %v2396
          %v2409 = vmul.f32 %v2407, %v2397
          %v2410 = vadd.f32 %v2408, 3.0
          %v2411 = vadd.f32 %v2409, 3.0
          %v2412 = vmul.f32 %v2410, %v2396
          %v2413 = vmul.f32 %v2411, %v2397
          %v2414 = vadd.f32 %v2412, 1.0
          %v2415 = vadd.f32 %v2413, 1.0
          %v2416 = vmul.f32 %v2414, 0.16666667
          %v2417 = vmul.f32 %v2415, 0.16666667
          %v2418 = vsub.f32 %v2404, 6.0
          %v2419 = vsub.f32 %v2405, 6.0
          %v2420 = vmul.f32 %v2418, %v2398
          %v2421 = vmul.f32 %v2419, %v2399
          %v2422 = vadd.f32 %v2420, 4.0
          %v2423 = vadd.f32 %v2421, 4.0
          %v2424 = vmul.f32 %v2422, 0.16666667
          %v2425 = vmul.f32 %v2423, 0.16666667
          %v2426 = vsub.f32 1.0, %v2396
          %v2427 = vsub.f32 1.0, %v2397
          %v2428 = vmul.f32 %v2426, %v2426
          %v2429 = vmul.f32 %v2427, %v2427
          %v2430 = vmul.f32 %v2428, %v2426
          %v2431 = vmul.f32 %v2429, %v2427
          %v2432 = vmul.f32 %v2430, 0.16666667
          %v2433 = vmul.f32 %v2431, 0.16666667
          %vm2434 = vcmp.eq.f32.partialorder %v2394, 0.0
          %vm2435 = vcmp.eq.f32.partialorder %v2395, 0.0
          %v2436 = vsel %vm2434, 1, 0
          %v2437 = vsel %vm2435, 1, 0
          %v2438 = vcvt.s32.f32 %v2436
          %v2439 = vcvt.s32.f32 %v2437
          %vm2440 = vcmp.eq.f32.partialorder %v2394, 1.0
          %vm2441 = vcmp.eq.f32.partialorder %v2395, 1.0
          %v2442 = vsel %vm2440, 1, 0
          %v2443 = vsel %vm2441, 1, 0
          %v2444 = vcvt.s32.f32 %v2442
          %v2445 = vcvt.s32.f32 %v2443
          %vm2446 = vcmp.eq.f32.partialorder %v2394, 2.0
          %vm2447 = vcmp.eq.f32.partialorder %v2395, 2.0
          %v2448 = vsel %vm2446, 1, 0
          %v2449 = vsel %vm2447, 1, 0
          %v2450 = vcvt.s32.f32 %v2448
          %v2451 = vcvt.s32.f32 %v2449
          %vm2452 = vcmp.eq.f32.partialorder %v2394, 3.0
          %vm2453 = vcmp.eq.f32.partialorder %v2395, 3.0
          %v2454 = vsel %vm2452, 1, 0
          %v2455 = vsel %vm2453, 1, 0
          %v2456 = vcvt.s32.f32 %v2454
          %v2457 = vcvt.s32.f32 %v2455
          %vm2458 = vcmp.eq.f32.partialorder %v2394, 4.0
          %vm2459 = vcmp.eq.f32.partialorder %v2395, 4.0
          %v2460 = vsel %vm2458, 1, 0
          %v2461 = vsel %vm2459, 1, 0
          %v2462 = vcvt.s32.f32 %v2460
          %v2463 = vcvt.s32.f32 %v2461
          %vm2464 = vcmp.eq.f32.partialorder %v2394, 5.0
          %vm2465 = vcmp.eq.f32.partialorder %v2395, 5.0
          %v2466 = vsel %vm2464, 1, 0
          %v2467 = vsel %vm2465, 1, 0
          %v2468 = vcvt.s32.f32 %v2466
          %v2469 = vcvt.s32.f32 %v2467
          %vm2470 = vcmp.eq.f32.partialorder %v2394, 6.0
          %vm2471 = vcmp.eq.f32.partialorder %v2395, 6.0
          %v2472 = vsel %vm2470, 1, 0
          %v2473 = vsel %vm2471, 1, 0
          %v2474 = vcvt.s32.f32 %v2472
          %v2475 = vcvt.s32.f32 %v2473
          %vm2476 = vcmp.eq.f32.partialorder %v2394, 7.0
          %vm2477 = vcmp.eq.f32.partialorder %v2395, 7.0
          %v2478 = vsel %vm2476, 1, 0
          %v2479 = vsel %vm2477, 1, 0
          %v2480 = vcvt.s32.f32 %v2478
          %v2481 = vcvt.s32.f32 %v2479
          %vm2482 = vcmp.eq.f32.partialorder %v2394, 8.0
          %vm2483 = vcmp.eq.f32.partialorder %v2395, 8.0
          %v2484 = vsel %vm2482, 1, 0
          %v2485 = vsel %vm2483, 1, 0
          %v2486 = vcvt.s32.f32 %v2484
          %v2487 = vcvt.s32.f32 %v2485
          %vm2488 = vcmp.eq.f32.partialorder %v2394, 9.0
          %vm2489 = vcmp.eq.f32.partialorder %v2395, 9.0
          %v2490 = vsel %vm2488, 1, 0
          %v2491 = vsel %vm2489, 1, 0
          %v2492 = vcvt.s32.f32 %v2490
          %v2493 = vcvt.s32.f32 %v2491
          %vm2494 = vcmp.eq.f32.partialorder %v2394, 10.0
          %vm2495 = vcmp.eq.f32.partialorder %v2395, 10.0
          %v2496 = vsel %vm2494, 1, 0
          %v2497 = vsel %vm2495, 1, 0
          %v2498 = vcvt.s32.f32 %v2496
          %v2499 = vcvt.s32.f32 %v2497
          %v2500 = vmul.f32 %v2438, %v2402
          %v2501 = vmul.f32 %v2439, %v2403
          %v2502 = vmul.f32 %v2444, %v2416
          %v2503 = vmul.f32 %v2445, %v2417
          %v2504 = vadd.f32 %v2500, %v2502
          %v2505 = vadd.f32 %v2501, %v2503
          %v2506 = vmul.f32 %v2450, %v2424
          %v2507 = vmul.f32 %v2451, %v2425
          %v2508 = vadd.f32 %v2504, %v2506
          %v2509 = vadd.f32 %v2505, %v2507
          %v2510 = vmul.f32 %v2456, %v2432
          %v2511 = vmul.f32 %v2457, %v2433
          %v2512 = vadd.f32 %v2508, %v2510
          %v2513 = vadd.f32 %v2509, %v2511
          %v2514 = vmul.f32 %v2444, %v2402
          %v2515 = vmul.f32 %v2445, %v2403
          %v2516 = vmul.f32 %v2450, %v2416
          %v2517 = vmul.f32 %v2451, %v2417
          %v2518 = vadd.f32 %v2514, %v2516
          %v2519 = vadd.f32 %v2515, %v2517
          %v2520 = vmul.f32 %v2456, %v2424
          %v2521 = vmul.f32 %v2457, %v2425
          %v2522 = vadd.f32 %v2518, %v2520
          %v2523 = vadd.f32 %v2519, %v2521
          %v2524 = vmul.f32 %v2462, %v2432
          %v2525 = vmul.f32 %v2463, %v2433
          %v2526 = vadd.f32 %v2522, %v2524
          %v2527 = vadd.f32 %v2523, %v2525
          %v2528 = vmul.f32 %v2450, %v2402
          %v2529 = vmul.f32 %v2451, %v2403
          %v2530 = vmul.f32 %v2456, %v2416
          %v2531 = vmul.f32 %v2457, %v2417
          %v2532 = vadd.f32 %v2528, %v2530
          %v2533 = vadd.f32 %v2529, %v2531
          %v2534 = vmul.f32 %v2462, %v2424
          %v2535 = vmul.f32 %v2463, %v2425
          %v2536 = vadd.f32 %v2532, %v2534
          %v2537 = vadd.f32 %v2533, %v2535
          %v2538 = vmul.f32 %v2468, %v2432
          %v2539 = vmul.f32 %v2469, %v2433
          %v2540 = vadd.f32 %v2536, %v2538
          %v2541 = vadd.f32 %v2537, %v2539
          %v2542 = vmul.f32 %v2456, %v2402
          %v2543 = vmul.f32 %v2457, %v2403
          %v2544 = vmul.f32 %v2462, %v2416
          %v2545 = vmul.f32 %v2463, %v2417
          %v2546 = vadd.f32 %v2542, %v2544
          %v2547 = vadd.f32 %v2543, %v2545
          %v2548 = vmul.f32 %v2468, %v2424
          %v2549 = vmul.f32 %v2469, %v2425
          %v2550 = vadd.f32 %v2546, %v2548
          %v2551 = vadd.f32 %v2547, %v2549
          %v2552 = vmul.f32 %v2474, %v2432
          %v2553 = vmul.f32 %v2475, %v2433
          %v2554 = vadd.f32 %v2550, %v2552
          %v2555 = vadd.f32 %v2551, %v2553
          %v2556 = vmul.f32 %v2462, %v2402
          %v2557 = vmul.f32 %v2463, %v2403
          %v2558 = vmul.f32 %v2468, %v2416
          %v2559 = vmul.f32 %v2469, %v2417
          %v2560 = vadd.f32 %v2556, %v2558
          %v2561 = vadd.f32 %v2557, %v2559
          %v2562 = vmul.f32 %v2474, %v2424
          %v2563 = vmul.f32 %v2475, %v2425
          %v2564 = vadd.f32 %v2560, %v2562
          %v2565 = vadd.f32 %v2561, %v2563
          %v2566 = vmul.f32 %v2480, %v2432
          %v2567 = vmul.f32 %v2481, %v2433
          %v2568 = vadd.f32 %v2564, %v2566
          %v2569 = vadd.f32 %v2565, %v2567
          %v2570 = vmul.f32 %v2468, %v2402
          %v2571 = vmul.f32 %v2469, %v2403
          %v2572 = vmul.f32 %v2474, %v2416
          %v2573 = vmul.f32 %v2475, %v2417
          %v2574 = vadd.f32 %v2570, %v2572
          %v2575 = vadd.f32 %v2571, %v2573
          %v2576 = vmul.f32 %v2480, %v2424
          %v2577 = vmul.f32 %v2481, %v2425
          %v2578 = vadd.f32 %v2574, %v2576
          %v2579 = vadd.f32 %v2575, %v2577
          %v2580 = vmul.f32 %v2486, %v2432
          %v2581 = vmul.f32 %v2487, %v2433
          %v2582 = vadd.f32 %v2578, %v2580
          %v2583 = vadd.f32 %v2579, %v2581
          %v2584 = vmul.f32 %v2474, %v2402
          %v2585 = vmul.f32 %v2475, %v2403
          %v2586 = vmul.f32 %v2480, %v2416
          %v2587 = vmul.f32 %v2481, %v2417
          %v2588 = vadd.f32 %v2584, %v2586
          %v2589 = vadd.f32 %v2585, %v2587
          %v2590 = vmul.f32 %v2486, %v2424
          %v2591 = vmul.f32 %v2487, %v2425
          %v2592 = vadd.f32 %v2588, %v2590
          %v2593 = vadd.f32 %v2589, %v2591
          %v2594 = vmul.f32 %v2492, %v2432
          %v2595 = vmul.f32 %v2493, %v2433
          %v2596 = vadd.f32 %v2592, %v2594
          %v2597 = vadd.f32 %v2593, %v2595
          %v2598 = vmul.f32 %v2480, %v2402
          %v2599 = vmul.f32 %v2481, %v2403
          %v2600 = vmul.f32 %v2486, %v2416
          %v2601 = vmul.f32 %v2487, %v2417
          %v2602 = vadd.f32 %v2598, %v2600
          %v2603 = vadd.f32 %v2599, %v2601
          %v2604 = vmul.f32 %v2492, %v2424
          %v2605 = vmul.f32 %v2493, %v2425
          %v2606 = vadd.f32 %v2602, %v2604
          %v2607 = vadd.f32 %v2603, %v2605
          %v2608 = vmul.f32 %v2498, %v2432
          %v2609 = vmul.f32 %v2499, %v2433
          %v2610 = vadd.f32 %v2606, %v2608
          %v2611 = vadd.f32 %v2607, %v2609
          %v2612 = vpack.c.bf16 %v2389, %v2388
          %v2613 = vpack.c.bf16 %v2513, %v2512
          %v2614 = vpack.c.bf16 %v2527, %v2526
          %v2615 = vpack.c.bf16 %v2541, %v2540
          %v2616 = vpack.c.bf16 %v2555, %v2554
          %v2617 = vpack.c.bf16 %v2569, %v2568
          %v2618 = vpack.c.bf16 %v2583, %v2582
          %v2619 = vpack.c.bf16 %v2597, %v2596
          %v2620 = vpack.c.bf16 %v2611, %v2610
          %v2765 = vunpack.c.l.b16 %v2234
          %v2766 = vunpack.c.l.b16 %v2235
          %v2767 = vunpack.c.l.b16 %v2236
          %v2768 = vunpack.c.l.b16 %v2237
          %v2769 = vunpack.c.l.b16 %v2238
          %v2770 = vunpack.c.l.b16 %v2239
          %v2771 = vunpack.c.l.b16 %v2240
          %v2772 = vunpack.c.l.b16 %v2241
          %v2773 = vunpack.c.l.b16 %v2242
          %v2774 = vunpack.c.l.b16 %v2243
          %v2775 = vunpack.c.l.b16 %v2244
          %v2776 = vunpack.c.l.b16 %v2245
          %v2777 = vunpack.c.l.b16 %v2246
          %v2778 = vunpack.c.l.b16 %v2247
          %v2779 = vunpack.c.l.b16 %v2248
          %v2780 = vunpack.c.l.b16 %v2249
          %v2781 = vunpack.c.l.b16 %v2250
          %v2782 = vunpack.c.l.b16 %v2251
          %v2783 = vunpack.c.l.b16 %v2252
          %v2784 = vunpack.c.l.b16 %v2253
          %v2785 = vunpack.c.l.b16 %v2254
          %v2786 = vunpack.c.l.b16 %v2255
          %v2787 = vunpack.c.l.b16 %v2256
          %v2788 = vunpack.c.l.b16 %v2257
          %v2789 = vunpack.c.l.b16 %v2258
          %v2790 = vunpack.c.l.b16 %v2259
          %v2791 = vunpack.c.l.b16 %v2260
          %v2792 = vunpack.c.l.b16 %v2261
          %v2793 = vunpack.c.l.b16 %v2262
          %v2794 = vunpack.c.l.b16 %v2263
          %v2795 = vunpack.c.l.b16 %v2264
          %v2796 = vunpack.c.l.b16 %v2265
          %v2797 = vunpack.c.l.b16 %v2266
          %v2798 = vunpack.c.l.b16 %v2267
          %v2799 = vunpack.c.l.b16 %v2268
          %v2800 = vunpack.c.l.b16 %v2269
          %v2801 = vunpack.c.l.b16 %v2270
          %v2802 = vunpack.c.l.b16 %v2271
          %v2803 = vunpack.c.l.b16 %v2272
          %v2804 = vunpack.c.l.b16 %v2273
          %v2805 = vunpack.c.l.b16 %v2274
          %v2806 = vunpack.c.l.b16 %v2275
          %v2807 = vunpack.c.l.b16 %v2276
          %v2808 = vunpack.c.l.b16 %v2277
          %v2809 = vunpack.c.l.b16 %v2278
          %v2810 = vunpack.c.l.b16 %v2279
          %v2811 = vunpack.c.l.b16 %v2280
          %v2812 = vunpack.c.l.b16 %v2281
          %v2813 = vunpack.c.l.b16 %v2282
          %v2814 = vunpack.c.l.b16 %v2283
          %v2815 = vunpack.c.l.b16 %v2284
          %v2816 = vunpack.c.l.b16 %v2285
          %v2817 = vunpack.c.l.b16 %v2286
          %v2818 = vunpack.c.l.b16 %v2287
          %v2819 = vunpack.c.l.b16 %v2288
          %v2820 = vunpack.c.l.b16 %v2289
          %v2821 = vunpack.c.l.b16 %v2290
          %v2822 = vunpack.c.l.b16 %v2291
          %v2823 = vunpack.c.l.b16 %v2292
          %v2824 = vunpack.c.l.b16 %v2293
          %v2825 = vunpack.c.l.b16 %v2294
          %v2826 = vunpack.c.l.b16 %v2295
          %v2827 = vunpack.c.l.b16 %v2296
          %v2828 = vunpack.c.l.b16 %v2297
          %v2829 = vunpack.c.l.b16 %v2298
          %v2830 = vunpack.c.l.b16 %v2299
          %v2831 = vunpack.c.l.b16 %v2300
          %v2832 = vunpack.c.l.b16 %v2301
          %v2833 = vunpack.c.l.b16 %v2302
          %v2834 = vunpack.c.l.b16 %v2303
          %v2835 = vunpack.c.l.b16 %v2304
          %v2836 = vunpack.c.l.b16 %v2305
          %v2837 = vunpack.c.l.b16 %v2306
          %v2838 = vunpack.c.l.b16 %v2307
          %v2839 = vunpack.c.l.b16 %v2308
          %v2840 = vunpack.c.l.b16 %v2309
          %v2841 = vunpack.c.l.b16 %v2310
          %v2842 = vunpack.c.l.b16 %v2311
          %v2843 = vunpack.c.l.b16 %v2312
          %v2844 = vunpack.c.l.b16 %v2313
          %v2845 = vunpack.c.l.b16 %v2314
          %v2846 = vunpack.c.l.b16 %v2315
          %v2847 = vunpack.c.l.b16 %v2316
          %v2848 = vunpack.c.l.b16 %v2317
          %v2849 = vunpack.c.l.b16 %v2318
          %v2850 = vunpack.c.l.b16 %v2319
          %v2851 = vunpack.c.l.b16 %v2320
          %v2852 = vunpack.c.l.b16 %v2321
          %v2853 = vunpack.c.l.b16 %v2322
          %v2854 = vunpack.c.l.b16 %v2323
          %v2855 = vunpack.c.l.b16 %v2324
          %v2856 = vunpack.c.l.b16 %v2325
          %v2857 = vunpack.c.l.b16 %v2326
          %v2858 = vunpack.c.l.b16 %v2327
          %v2859 = vunpack.c.l.b16 %v2328
          %v2860 = vunpack.c.l.b16 %v2329
          %v2861 = vunpack.c.l.b16 %v2330
          %v2862 = vunpack.c.l.b16 %v2331
          %v2863 = vunpack.c.l.b16 %v2332
          %v2864 = vunpack.c.l.b16 %v2333
          %v2865 = vunpack.c.l.b16 %v2334
          %v2866 = vunpack.c.l.b16 %v2335
          %v2867 = vunpack.c.l.b16 %v2336
          %v2868 = vunpack.c.l.b16 %v2337
          %v2869 = vunpack.c.l.b16 %v2338
          %v2870 = vunpack.c.l.b16 %v2339
          %v2871 = vunpack.c.l.b16 %v2340
          %v2872 = vunpack.c.l.b16 %v2341
          %v2873 = vunpack.c.l.b16 %v2342
          %v2874 = vunpack.c.l.b16 %v2343
          %v2875 = vunpack.c.l.b16 %v2344
          %v2876 = vunpack.c.l.b16 %v2345
          %v2877 = vunpack.c.l.b16 %v2346
          %v2878 = vunpack.c.l.b16 %v2347
          %v2879 = vunpack.c.l.b16 %v2348
          %v2880 = vunpack.c.l.b16 %v2349
          %v2881 = vunpack.c.l.b16 %v2350
          %v2882 = vunpack.c.l.b16 %v2351
          %v2883 = vunpack.c.l.b16 %v2352
          %v2884 = vunpack.c.l.b16 %v2353
          %v2885 = vunpack.c.l.b16 %v2354
          %v2886 = vunpack.c.l.b16 %v2355
          %v2887 = vunpack.c.l.b16 %v2356
          %v2888 = vunpack.c.l.b16 %v2357
          %v2889 = vunpack.c.l.b16 %v2358
          %v2890 = vunpack.c.l.b16 %v2359
          %v2891 = vunpack.c.l.b16 %v2360
          %v2892 = vunpack.c.l.b16 %v2361
          %v2893 = vunpack.c.l.b16 %v2362
          %v2894 = vunpack.c.l.b16 %v2363
          %v2895 = vunpack.c.l.b16 %v2364
          %v2896 = vunpack.c.l.b16 %v2365
          %v2897 = vunpack.c.l.b16 %v2366
          %v2898 = vunpack.c.l.b16 %v2367
          %v2899 = vunpack.c.l.b16 %v2368
          %v2900 = vunpack.c.l.b16 %v2369
          %v2901 = vunpack.c.l.b16 %v2370
          %v2902 = vunpack.c.l.b16 %v2371
          %v2903 = vunpack.c.l.b16 %v2372
          %v2904 = vunpack.c.l.b16 %v2373
          %v2905 = vunpack.c.l.b16 %v2374
          %v2906 = vunpack.c.l.b16 %v2375
          %v2907 = vunpack.c.l.b16 %v2376
          %v2908 = vunpack.c.l.b16 %v2377
          %v2909 = vpack.c.b16 %v2766, %v2765
          %v2910 = vpack.c.b16 %v2768, %v2767
          %v2911 = vpack.c.b16 %v2770, %v2769
          %v2912 = vpack.c.b16 %v2772, %v2771
          %v2913 = vpack.c.b16 %v2774, %v2773
          %v2914 = vpack.c.b16 %v2776, %v2775
          %v2915 = vpack.c.b16 %v2778, %v2777
          %v2916 = vpack.c.b16 %v2780, %v2779
          %v2917 = vpack.c.b16 %v2782, %v2781
          %v2918 = vpack.c.b16 %v2784, %v2783
          %v2919 = vpack.c.b16 %v2786, %v2785
          %v2920 = vpack.c.b16 %v2788, %v2787
          %v2921 = vpack.c.b16 %v2790, %v2789
          %v2922 = vpack.c.b16 %v2792, %v2791
          %v2923 = vpack.c.b16 %v2794, %v2793
          %v2924 = vpack.c.b16 %v2796, %v2795
          %v2925 = vpack.c.b16 %v2798, %v2797
          %v2926 = vpack.c.b16 %v2800, %v2799
          %v2927 = vpack.c.b16 %v2802, %v2801
          %v2928 = vpack.c.b16 %v2804, %v2803
          %v2929 = vpack.c.b16 %v2806, %v2805
          %v2930 = vpack.c.b16 %v2808, %v2807
          %v2931 = vpack.c.b16 %v2810, %v2809
          %v2932 = vpack.c.b16 %v2812, %v2811
          %v2933 = vpack.c.b16 %v2814, %v2813
          %v2934 = vpack.c.b16 %v2816, %v2815
          %v2935 = vpack.c.b16 %v2818, %v2817
          %v2936 = vpack.c.b16 %v2820, %v2819
          %v2937 = vpack.c.b16 %v2822, %v2821
          %v2938 = vpack.c.b16 %v2824, %v2823
          %v2939 = vpack.c.b16 %v2826, %v2825
          %v2940 = vpack.c.b16 %v2828, %v2827
          %v2941 = vpack.c.b16 %v2830, %v2829
          %v2942 = vpack.c.b16 %v2832, %v2831
          %v2943 = vpack.c.b16 %v2834, %v2833
          %v2944 = vpack.c.b16 %v2836, %v2835
          %v2945 = vpack.c.b16 %v2838, %v2837
          %v2946 = vpack.c.b16 %v2840, %v2839
          %v2947 = vpack.c.b16 %v2842, %v2841
          %v2948 = vpack.c.b16 %v2844, %v2843
          %v2949 = vpack.c.b16 %v2846, %v2845
          %v2950 = vpack.c.b16 %v2848, %v2847
          %v2951 = vpack.c.b16 %v2850, %v2849
          %v2952 = vpack.c.b16 %v2852, %v2851
          %v2953 = vpack.c.b16 %v2854, %v2853
          %v2954 = vpack.c.b16 %v2856, %v2855
          %v2955 = vpack.c.b16 %v2858, %v2857
          %v2956 = vpack.c.b16 %v2860, %v2859
          %v2957 = vpack.c.b16 %v2862, %v2861
          %v2958 = vpack.c.b16 %v2864, %v2863
          %v2959 = vpack.c.b16 %v2866, %v2865
          %v2960 = vpack.c.b16 %v2868, %v2867
          %v2961 = vpack.c.b16 %v2870, %v2869
          %v2962 = vpack.c.b16 %v2872, %v2871
          %v2963 = vpack.c.b16 %v2874, %v2873
          %v2964 = vpack.c.b16 %v2876, %v2875
          %v2965 = vpack.c.b16 %v2878, %v2877
          %v2966 = vpack.c.b16 %v2880, %v2879
          %v2967 = vpack.c.b16 %v2882, %v2881
          %v2968 = vpack.c.b16 %v2884, %v2883
          %v2969 = vpack.c.b16 %v2886, %v2885
          %v2970 = vpack.c.b16 %v2888, %v2887
          %v2971 = vpack.c.b16 %v2890, %v2889
          %v2972 = vpack.c.b16 %v2892, %v2891
          %v2973 = vpack.c.b16 %v2894, %v2893
          %v2974 = vpack.c.b16 %v2896, %v2895
          %v2975 = vpack.c.b16 %v2898, %v2897
          %v2976 = vpack.c.b16 %v2900, %v2899
          %v2977 = vpack.c.b16 %v2902, %v2901
          %v2978 = vpack.c.b16 %v2904, %v2903
          %v2979 = vpack.c.b16 %v2906, %v2905
          %v2980 = vpack.c.b16 %v2908, %v2907
          %3053 = vmatpush.bf16.msra.mxu0 %v2916
          %3054 = vmatpush.bf16.msra.mxu0 %v2915
          %3055 = vmatpush.bf16.msra.mxu0 %v2914
          %3056 = vmatpush.bf16.msra.mxu0 %v2913
          %3057 = vmatpush.bf16.msra.mxu0 %v2912
          %3058 = vmatpush.bf16.msra.mxu0 %v2911
          %3059 = vmatpush.bf16.msra.mxu0 %v2910
          %3060 = vmatpush.bf16.msra.mxu0 %v2909
          %3061 = vmatmul.bf16.gmra.mxu0 %v2612
          %v3062 = vpop.f32.mrf.mxu0
          %v3063 = vadd.f32 0.0, %v3062
          %v3064 = vpop.f32.mrf.mxu0
          %v3065 = vadd.f32 0.0, %v3064
          %3066 = vdwg.mxu0
          %3067 = vmatpush.bf16.msra.mxu0 %v2924
          %3068 = vmatpush.bf16.msra.mxu0 %v2923
          %3069 = vmatpush.bf16.msra.mxu0 %v2922
          %3070 = vmatpush.bf16.msra.mxu0 %v2921
          %3071 = vmatpush.bf16.msra.mxu0 %v2920
          %3072 = vmatpush.bf16.msra.mxu0 %v2919
          %3073 = vmatpush.bf16.msra.mxu0 %v2918
          %3074 = vmatpush.bf16.msra.mxu0 %v2917
          %3075 = vmatmul.bf16.gmra.mxu0 %v2613
          %v3076 = vpop.f32.mrf.mxu0
          %v3077 = vadd.f32 %v3063, %v3076
          %v3078 = vpop.f32.mrf.mxu0
          %v3079 = vadd.f32 %v3065, %v3078
          %3080 = vdwg.mxu0
          %3081 = vmatpush.bf16.msra.mxu0 %v2932
          %3082 = vmatpush.bf16.msra.mxu0 %v2931
          %3083 = vmatpush.bf16.msra.mxu0 %v2930
          %3084 = vmatpush.bf16.msra.mxu0 %v2929
          %3085 = vmatpush.bf16.msra.mxu0 %v2928
          %3086 = vmatpush.bf16.msra.mxu0 %v2927
          %3087 = vmatpush.bf16.msra.mxu0 %v2926
          %3088 = vmatpush.bf16.msra.mxu0 %v2925
          %3089 = vmatmul.bf16.gmra.mxu0 %v2614
          %v3090 = vpop.f32.mrf.mxu0
          %v3091 = vadd.f32 %v3077, %v3090
          %v3092 = vpop.f32.mrf.mxu0
          %v3093 = vadd.f32 %v3079, %v3092
          %3094 = vdwg.mxu0
          %3095 = vmatpush.bf16.msra.mxu0 %v2940
          %3096 = vmatpush.bf16.msra.mxu0 %v2939
          %3097 = vmatpush.bf16.msra.mxu0 %v2938
          %3098 = vmatpush.bf16.msra.mxu0 %v2937
          %3099 = vmatpush.bf16.msra.mxu0 %v2936
          %3100 = vmatpush.bf16.msra.mxu0 %v2935
          %3101 = vmatpush.bf16.msra.mxu0 %v2934
          %3102 = vmatpush.bf16.msra.mxu0 %v2933
          %3103 = vmatmul.bf16.gmra.mxu0 %v2615
          %v3104 = vpop.f32.mrf.mxu0
          %v3105 = vadd.f32 %v3091, %v3104
          %v3106 = vpop.f32.mrf.mxu0
          %v3107 = vadd.f32 %v3093, %v3106
          %3108 = vdwg.mxu0
          %3109 = vmatpush.bf16.msra.mxu0 %v2948
          %3110 = vmatpush.bf16.msra.mxu0 %v2947
          %3111 = vmatpush.bf16.msra.mxu0 %v2946
          %3112 = vmatpush.bf16.msra.mxu0 %v2945
          %3113 = vmatpush.bf16.msra.mxu0 %v2944
          %3114 = vmatpush.bf16.msra.mxu0 %v2943
          %3115 = vmatpush.bf16.msra.mxu0 %v2942
          %3116 = vmatpush.bf16.msra.mxu0 %v2941
          %3117 = vmatmul.bf16.gmra.mxu0 %v2616
          %v3118 = vpop.f32.mrf.mxu0
          %v3119 = vadd.f32 %v3105, %v3118
          %v3120 = vpop.f32.mrf.mxu0
          %v3121 = vadd.f32 %v3107, %v3120
          %3122 = vdwg.mxu0
          %3123 = vmatpush.bf16.msra.mxu0 %v2956
          %3124 = vmatpush.bf16.msra.mxu0 %v2955
          %3125 = vmatpush.bf16.msra.mxu0 %v2954
          %3126 = vmatpush.bf16.msra.mxu0 %v2953
          %3127 = vmatpush.bf16.msra.mxu0 %v2952
          %3128 = vmatpush.bf16.msra.mxu0 %v2951
          %3129 = vmatpush.bf16.msra.mxu0 %v2950
          %3130 = vmatpush.bf16.msra.mxu0 %v2949
          %3131 = vmatmul.bf16.gmra.mxu0 %v2617
          %v3132 = vpop.f32.mrf.mxu0
          %v3133 = vadd.f32 %v3119, %v3132
          %v3134 = vpop.f32.mrf.mxu0
          %v3135 = vadd.f32 %v3121, %v3134
          %3136 = vdwg.mxu0
          %3137 = vmatpush.bf16.msra.mxu0 %v2964
          %3138 = vmatpush.bf16.msra.mxu0 %v2963
          %3139 = vmatpush.bf16.msra.mxu0 %v2962
          %3140 = vmatpush.bf16.msra.mxu0 %v2961
          %3141 = vmatpush.bf16.msra.mxu0 %v2960
          %3142 = vmatpush.bf16.msra.mxu0 %v2959
          %3143 = vmatpush.bf16.msra.mxu0 %v2958
          %3144 = vmatpush.bf16.msra.mxu0 %v2957
          %3145 = vmatmul.bf16.gmra.mxu0 %v2618
          %v3146 = vpop.f32.mrf.mxu0
          %v3147 = vadd.f32 %v3133, %v3146
          %v3148 = vpop.f32.mrf.mxu0
          %v3149 = vadd.f32 %v3135, %v3148
          %3150 = vdwg.mxu0
          %3151 = vmatpush.bf16.msra.mxu0 %v2972
          %3152 = vmatpush.bf16.msra.mxu0 %v2971
          %3153 = vmatpush.bf16.msra.mxu0 %v2970
          %3154 = vmatpush.bf16.msra.mxu0 %v2969
          %3155 = vmatpush.bf16.msra.mxu0 %v2968
          %3156 = vmatpush.bf16.msra.mxu0 %v2967
          %3157 = vmatpush.bf16.msra.mxu0 %v2966
          %3158 = vmatpush.bf16.msra.mxu0 %v2965
          %3159 = vmatmul.bf16.gmra.mxu0 %v2619
          %v3160 = vpop.f32.mrf.mxu0
          %v3161 = vadd.f32 %v3147, %v3160
          %v3162 = vpop.f32.mrf.mxu0
          %v3163 = vadd.f32 %v3149, %v3162
          %3164 = vdwg.mxu0
          %3165 = vmatpush.bf16.msra.mxu0 %v2980
          %3166 = vmatpush.bf16.msra.mxu0 %v2979
          %3167 = vmatpush.bf16.msra.mxu0 %v2978
          %3168 = vmatpush.bf16.msra.mxu0 %v2977
          %3169 = vmatpush.bf16.msra.mxu0 %v2976
          %3170 = vmatpush.bf16.msra.mxu0 %v2975
          %3171 = vmatpush.bf16.msra.mxu0 %v2974
          %3172 = vmatpush.bf16.msra.mxu0 %v2973
          %3173 = vmatmul.bf16.gmra.mxu0 %v2620
          %v3174 = vpop.f32.mrf.mxu0
          %v3175 = vadd.f32 %v3161, %v3174
          %v3176 = vpop.f32.mrf.mxu0
          %v3177 = vadd.f32 %v3163, %v3176
          %3178 = vdwg.mxu0
          %v3179 = vld [vmem:[#allocation11] sm:$0xf]
          %v3180 = vld [vmem:[#allocation11 + $0x4] sm:$0xf]
          %v3181 = vld [vmem:[#allocation11 + $0x8] sm:$0xf]
          %v3182 = vld [vmem:[#allocation11 + $0xc] sm:$0xf]
          %v3183 = vld [vmem:[#allocation11 + $0x10] sm:$0xf]
          %v3184 = vld [vmem:[#allocation11 + $0x14] sm:$0xf]
          %v3185 = vld [vmem:[#allocation11 + $0x18] sm:$0xf]
          %v3186 = vld [vmem:[#allocation11 + $0x1c] sm:$0xf]
          %v3187 = vld [vmem:[#allocation11 + $0x20] sm:$0xf]
          %v3188 = vld [vmem:[#allocation11 + $0x24] sm:$0xf]
          %v3189 = vld [vmem:[#allocation11 + $0x28] sm:$0xf]
          %v3190 = vld [vmem:[#allocation11 + $0x2c] sm:$0xf]
          %v3191 = vld [vmem:[#allocation11 + $0x30] sm:$0xf]
          %v3192 = vld [vmem:[#allocation11 + $0x34] sm:$0xf]
          %v3193 = vld [vmem:[#allocation11 + $0x38] sm:$0xf]
          %v3194 = vld [vmem:[#allocation11 + $0x3c] sm:$0xf]
          %v3195 = vld [vmem:[#allocation11 + $0x40] sm:$0xf]
          %v3196 = vld [vmem:[#allocation11 + $0x44] sm:$0xf]
          %v3197 = vld [vmem:[#allocation11 + $0x48] sm:$0xf]
          %v3198 = vld [vmem:[#allocation11 + $0x4c] sm:$0xf]
          %v3199 = vld [vmem:[#allocation11 + $0x50] sm:$0xf]
          %v3200 = vld [vmem:[#allocation11 + $0x54] sm:$0xf]
          %v3201 = vld [vmem:[#allocation11 + $0x58] sm:$0xf]
          %v3202 = vld [vmem:[#allocation11 + $0x5c] sm:$0xf]
          %v3203 = vld [vmem:[#allocation11 + $0x60] sm:$0xf]
          %v3204 = vld [vmem:[#allocation11 + $0x64] sm:$0xf]
          %v3205 = vld [vmem:[#allocation11 + $0x68] sm:$0xf]
          %v3206 = vld [vmem:[#allocation11 + $0x6c] sm:$0xf]
          %v3207 = vld [vmem:[#allocation11 + $0x70] sm:$0xf]
          %v3208 = vld [vmem:[#allocation11 + $0x74] sm:$0xf]
          %v3209 = vld [vmem:[#allocation11 + $0x78] sm:$0xf]
          %v3210 = vld [vmem:[#allocation11 + $0x7c] sm:$0xf]
          %v3211 = vld [vmem:[#allocation11 + $0x80] sm:$0xf]
          %v3212 = vld [vmem:[#allocation11 + $0x84] sm:$0xf]
          %v3213 = vld [vmem:[#allocation11 + $0x88] sm:$0xf]
          %v3214 = vld [vmem:[#allocation11 + $0x8c] sm:$0xf]
          %v3215 = vld [vmem:[#allocation11 + $0x90] sm:$0xf]
          %v3216 = vld [vmem:[#allocation11 + $0x94] sm:$0xf]
          %v3217 = vld [vmem:[#allocation11 + $0x98] sm:$0xf]
          %v3218 = vld [vmem:[#allocation11 + $0x9c] sm:$0xf]
          %v3219 = vld [vmem:[#allocation11 + $0xa0] sm:$0xf]
          %v3220 = vld [vmem:[#allocation11 + $0xa4] sm:$0xf]
          %v3221 = vld [vmem:[#allocation11 + $0xa8] sm:$0xf]
          %v3222 = vld [vmem:[#allocation11 + $0xac] sm:$0xf]
          %v3223 = vld [vmem:[#allocation11 + $0xb0] sm:$0xf]
          %v3224 = vld [vmem:[#allocation11 + $0xb4] sm:$0xf]
          %v3225 = vld [vmem:[#allocation11 + $0xb8] sm:$0xf]
          %v3226 = vld [vmem:[#allocation11 + $0xbc] sm:$0xf]
          %v3227 = vld [vmem:[#allocation11 + $0xc0] sm:$0xf]
          %v3228 = vld [vmem:[#allocation11 + $0xc4] sm:$0xf]
          %v3229 = vld [vmem:[#allocation11 + $0xc8] sm:$0xf]
          %v3230 = vld [vmem:[#allocation11 + $0xcc] sm:$0xf]
          %v3231 = vld [vmem:[#allocation11 + $0xd0] sm:$0xf]
          %v3232 = vld [vmem:[#allocation11 + $0xd4] sm:$0xf]
          %v3233 = vld [vmem:[#allocation11 + $0xd8] sm:$0xf]
          %v3234 = vld [vmem:[#allocation11 + $0xdc] sm:$0xf]
          %v3235 = vld [vmem:[#allocation11 + $0xe0] sm:$0xf]
          %v3236 = vld [vmem:[#allocation11 + $0xe4] sm:$0xf]
          %v3237 = vld [vmem:[#allocation11 + $0xe8] sm:$0xf]
          %v3238 = vld [vmem:[#allocation11 + $0xec] sm:$0xf]
          %v3239 = vld [vmem:[#allocation11 + $0xf0] sm:$0xf]
          %v3240 = vld [vmem:[#allocation11 + $0xf4] sm:$0xf]
          %v3241 = vld [vmem:[#allocation11 + $0xf8] sm:$0xf]
          %v3242 = vld [vmem:[#allocation11 + $0xfc] sm:$0xf]
          %v3243 = vld [vmem:[#allocation11 + $0x100] sm:$0xf]
          %v3244 = vld [vmem:[#allocation11 + $0x104] sm:$0xf]
          %v3245 = vld [vmem:[#allocation11 + $0x108] sm:$0xf]
          %v3246 = vld [vmem:[#allocation11 + $0x10c] sm:$0xf]
          %v3247 = vld [vmem:[#allocation11 + $0x110] sm:$0xf]
          %v3248 = vld [vmem:[#allocation11 + $0x114] sm:$0xf]
          %v3249 = vld [vmem:[#allocation11 + $0x118] sm:$0xf]
          %v3250 = vld [vmem:[#allocation11 + $0x11c] sm:$0xf]
          %v3251 = vld [vmem:[#allocation11 + $0x120] sm:$0xf]
          %v3252 = vld [vmem:[#allocation11 + $0x124] sm:$0xf]
          %v3253 = vld [vmem:[#allocation11 + $0x128] sm:$0xf]
          %v3254 = vld [vmem:[#allocation11 + $0x12c] sm:$0xf]
          %v3255 = vld [vmem:[#allocation11 + $0x130] sm:$0xf]
          %v3256 = vld [vmem:[#allocation11 + $0x134] sm:$0xf]
          %v3257 = vld [vmem:[#allocation11 + $0x138] sm:$0xf]
          %v3258 = vld [vmem:[#allocation11 + $0x13c] sm:$0xf]
          %v3259 = vld [vmem:[#allocation11 + $0x140] sm:$0xf]
          %v3260 = vld [vmem:[#allocation11 + $0x144] sm:$0xf]
          %v3261 = vld [vmem:[#allocation11 + $0x148] sm:$0xf]
          %v3262 = vld [vmem:[#allocation11 + $0x14c] sm:$0xf]
          %v3263 = vld [vmem:[#allocation11 + $0x150] sm:$0xf]
          %v3264 = vld [vmem:[#allocation11 + $0x154] sm:$0xf]
          %v3265 = vld [vmem:[#allocation11 + $0x158] sm:$0xf]
          %v3266 = vld [vmem:[#allocation11 + $0x15c] sm:$0xf]
          %v3267 = vld [vmem:[#allocation11 + $0x160] sm:$0xf]
          %v3268 = vld [vmem:[#allocation11 + $0x164] sm:$0xf]
          %v3269 = vld [vmem:[#allocation11 + $0x168] sm:$0xf]
          %v3270 = vld [vmem:[#allocation11 + $0x16c] sm:$0xf]
          %v3271 = vld [vmem:[#allocation11 + $0x170] sm:$0xf]
          %v3272 = vld [vmem:[#allocation11 + $0x174] sm:$0xf]
          %v3273 = vld [vmem:[#allocation11 + $0x178] sm:$0xf]
          %v3274 = vld [vmem:[#allocation11 + $0x17c] sm:$0xf]
          %v3275 = vld [vmem:[#allocation11 + $0x180] sm:$0xf]
          %v3276 = vld [vmem:[#allocation11 + $0x184] sm:$0xf]
          %v3277 = vld [vmem:[#allocation11 + $0x188] sm:$0xf]
          %v3278 = vld [vmem:[#allocation11 + $0x18c] sm:$0xf]
          %v3279 = vld [vmem:[#allocation11 + $0x190] sm:$0xf]
          %v3280 = vld [vmem:[#allocation11 + $0x194] sm:$0xf]
          %v3281 = vld [vmem:[#allocation11 + $0x198] sm:$0xf]
          %v3282 = vld [vmem:[#allocation11 + $0x19c] sm:$0xf]
          %v3283 = vld [vmem:[#allocation11 + $0x1a0] sm:$0xf]
          %v3284 = vld [vmem:[#allocation11 + $0x1a4] sm:$0xf]
          %v3285 = vld [vmem:[#allocation11 + $0x1a8] sm:$0xf]
          %v3286 = vld [vmem:[#allocation11 + $0x1ac] sm:$0xf]
          %v3287 = vld [vmem:[#allocation11 + $0x1b0] sm:$0xf]
          %v3288 = vld [vmem:[#allocation11 + $0x1b4] sm:$0xf]
          %v3289 = vld [vmem:[#allocation11 + $0x1b8] sm:$0xf]
          %v3290 = vld [vmem:[#allocation11 + $0x1bc] sm:$0xf]
          %v3291 = vld [vmem:[#allocation11 + $0x1c0] sm:$0xf]
          %v3292 = vld [vmem:[#allocation11 + $0x1c4] sm:$0xf]
          %v3293 = vld [vmem:[#allocation11 + $0x1c8] sm:$0xf]
          %v3294 = vld [vmem:[#allocation11 + $0x1cc] sm:$0xf]
          %v3295 = vld [vmem:[#allocation11 + $0x1d0] sm:$0xf]
          %v3296 = vld [vmem:[#allocation11 + $0x1d4] sm:$0xf]
          %v3297 = vld [vmem:[#allocation11 + $0x1d8] sm:$0xf]
          %v3298 = vld [vmem:[#allocation11 + $0x1dc] sm:$0xf]
          %v3299 = vld [vmem:[#allocation11 + $0x1e0] sm:$0xf]
          %v3300 = vld [vmem:[#allocation11 + $0x1e4] sm:$0xf]
          %v3301 = vld [vmem:[#allocation11 + $0x1e8] sm:$0xf]
          %v3302 = vld [vmem:[#allocation11 + $0x1ec] sm:$0xf]
          %v3303 = vld [vmem:[#allocation11 + $0x1f0] sm:$0xf]
          %v3304 = vld [vmem:[#allocation11 + $0x1f4] sm:$0xf]
          %v3305 = vld [vmem:[#allocation11 + $0x1f8] sm:$0xf]
          %v3306 = vld [vmem:[#allocation11 + $0x1fc] sm:$0xf]
          %v3307 = vld [vmem:[#allocation11 + $0x200] sm:$0xf]
          %v3308 = vld [vmem:[#allocation11 + $0x204] sm:$0xf]
          %v3309 = vld [vmem:[#allocation11 + $0x208] sm:$0xf]
          %v3310 = vld [vmem:[#allocation11 + $0x20c] sm:$0xf]
          %v3311 = vld [vmem:[#allocation11 + $0x210] sm:$0xf]
          %v3312 = vld [vmem:[#allocation11 + $0x214] sm:$0xf]
          %v3313 = vld [vmem:[#allocation11 + $0x218] sm:$0xf]
          %v3314 = vld [vmem:[#allocation11 + $0x21c] sm:$0xf]
          %v3315 = vld [vmem:[#allocation11 + $0x220] sm:$0xf]
          %v3316 = vld [vmem:[#allocation11 + $0x224] sm:$0xf]
          %v3317 = vld [vmem:[#allocation11 + $0x228] sm:$0xf]
          %v3318 = vld [vmem:[#allocation11 + $0x22c] sm:$0xf]
          %v3319 = vld [vmem:[#allocation11 + $0x230] sm:$0xf]
          %v3320 = vld [vmem:[#allocation11 + $0x234] sm:$0xf]
          %v3321 = vld [vmem:[#allocation11 + $0x238] sm:$0xf]
          %v3322 = vld [vmem:[#allocation11 + $0x23c] sm:$0xf]
          %v3323 = vsub.f32 0.0, %v3175
          %v3324 = vsub.f32 0.0, %v3177
          %v3325 = vmul.f32 %v3323, 1.442695
          %v3326 = vpow.pop %v3325
          %v3327 = vmul.f32 %v3324, 1.442695
          %v3328 = vpow.pop %v3327
          %v3329 = vadd.f32 %v3326, 1.0
          %v3330 = vadd.f32 %v3328, 1.0
          %v3331 = vrcp.pop %v3329
          %v3332 = vrcp.pop %v3330
          %v3333 = vmul.f32 %v3175, %v3331
          %v3334 = vmul.f32 %v3177, %v3332
          %v3335 = vsub.f32 %v3175, -2.2
          %v3336 = vsub.f32 %v3177, -2.2
          %v3337 = vmul.f32 %v3335, 2.5
          %v3338 = vmul.f32 %v3336, 2.5
          %v3339 = vfloor.f32 %v3337
          %v3340 = vfloor.f32 %v3338
          %v3341 = vsub.f32 %v3337, %v3339
          %v3342 = vsub.f32 %v3338, %v3340
          %v3343 = vmul.f32 %v3341, %v3341
          %v3344 = vmul.f32 %v3342, %v3342
          %v3345 = vmul.f32 %v3343, %v3341
          %v3346 = vmul.f32 %v3344, %v3342
          %v3347 = vmul.f32 %v3345, 0.16666667
          %v3348 = vmul.f32 %v3346, 0.16666667
          %v3349 = vmul.f32 %v3341, 3.0
          %v3350 = vmul.f32 %v3342, 3.0
          %v3351 = vsub.f32 3.0, %v3349
          %v3352 = vsub.f32 3.0, %v3350
          %v3353 = vmul.f32 %v3351, %v3341
          %v3354 = vmul.f32 %v3352, %v3342
          %v3355 = vadd.f32 %v3353, 3.0
          %v3356 = vadd.f32 %v3354, 3.0
          %v3357 = vmul.f32 %v3355, %v3341
          %v3358 = vmul.f32 %v3356, %v3342
          %v3359 = vadd.f32 %v3357, 1.0
          %v3360 = vadd.f32 %v3358, 1.0
          %v3361 = vmul.f32 %v3359, 0.16666667
          %v3362 = vmul.f32 %v3360, 0.16666667
          %v3363 = vsub.f32 %v3349, 6.0
          %v3364 = vsub.f32 %v3350, 6.0
          %v3365 = vmul.f32 %v3363, %v3343
          %v3366 = vmul.f32 %v3364, %v3344
          %v3367 = vadd.f32 %v3365, 4.0
          %v3368 = vadd.f32 %v3366, 4.0
          %v3369 = vmul.f32 %v3367, 0.16666667
          %v3370 = vmul.f32 %v3368, 0.16666667
          %v3371 = vsub.f32 1.0, %v3341
          %v3372 = vsub.f32 1.0, %v3342
          %v3373 = vmul.f32 %v3371, %v3371
          %v3374 = vmul.f32 %v3372, %v3372
          %v3375 = vmul.f32 %v3373, %v3371
          %v3376 = vmul.f32 %v3374, %v3372
          %v3377 = vmul.f32 %v3375, 0.16666667
          %v3378 = vmul.f32 %v3376, 0.16666667
          %vm3379 = vcmp.eq.f32.partialorder %v3339, 0.0
          %vm3380 = vcmp.eq.f32.partialorder %v3340, 0.0
          %v3381 = vsel %vm3379, 1, 0
          %v3382 = vsel %vm3380, 1, 0
          %v3383 = vcvt.s32.f32 %v3381
          %v3384 = vcvt.s32.f32 %v3382
          %vm3385 = vcmp.eq.f32.partialorder %v3339, 1.0
          %vm3386 = vcmp.eq.f32.partialorder %v3340, 1.0
          %v3387 = vsel %vm3385, 1, 0
          %v3388 = vsel %vm3386, 1, 0
          %v3389 = vcvt.s32.f32 %v3387
          %v3390 = vcvt.s32.f32 %v3388
          %vm3391 = vcmp.eq.f32.partialorder %v3339, 2.0
          %vm3392 = vcmp.eq.f32.partialorder %v3340, 2.0
          %v3393 = vsel %vm3391, 1, 0
          %v3394 = vsel %vm3392, 1, 0
          %v3395 = vcvt.s32.f32 %v3393
          %v3396 = vcvt.s32.f32 %v3394
          %vm3397 = vcmp.eq.f32.partialorder %v3339, 3.0
          %vm3398 = vcmp.eq.f32.partialorder %v3340, 3.0
          %v3399 = vsel %vm3397, 1, 0
          %v3400 = vsel %vm3398, 1, 0
          %v3401 = vcvt.s32.f32 %v3399
          %v3402 = vcvt.s32.f32 %v3400
          %vm3403 = vcmp.eq.f32.partialorder %v3339, 4.0
          %vm3404 = vcmp.eq.f32.partialorder %v3340, 4.0
          %v3405 = vsel %vm3403, 1, 0
          %v3406 = vsel %vm3404, 1, 0
          %v3407 = vcvt.s32.f32 %v3405
          %v3408 = vcvt.s32.f32 %v3406
          %vm3409 = vcmp.eq.f32.partialorder %v3339, 5.0
          %vm3410 = vcmp.eq.f32.partialorder %v3340, 5.0
          %v3411 = vsel %vm3409, 1, 0
          %v3412 = vsel %vm3410, 1, 0
          %v3413 = vcvt.s32.f32 %v3411
          %v3414 = vcvt.s32.f32 %v3412
          %vm3415 = vcmp.eq.f32.partialorder %v3339, 6.0
          %vm3416 = vcmp.eq.f32.partialorder %v3340, 6.0
          %v3417 = vsel %vm3415, 1, 0
          %v3418 = vsel %vm3416, 1, 0
          %v3419 = vcvt.s32.f32 %v3417
          %v3420 = vcvt.s32.f32 %v3418
          %vm3421 = vcmp.eq.f32.partialorder %v3339, 7.0
          %vm3422 = vcmp.eq.f32.partialorder %v3340, 7.0
          %v3423 = vsel %vm3421, 1, 0
          %v3424 = vsel %vm3422, 1, 0
          %v3425 = vcvt.s32.f32 %v3423
          %v3426 = vcvt.s32.f32 %v3424
          %vm3427 = vcmp.eq.f32.partialorder %v3339, 8.0
          %vm3428 = vcmp.eq.f32.partialorder %v3340, 8.0
          %v3429 = vsel %vm3427, 1, 0
          %v3430 = vsel %vm3428, 1, 0
          %v3431 = vcvt.s32.f32 %v3429
          %v3432 = vcvt.s32.f32 %v3430
          %vm3433 = vcmp.eq.f32.partialorder %v3339, 9.0
          %vm3434 = vcmp.eq.f32.partialorder %v3340, 9.0
          %v3435 = vsel %vm3433, 1, 0
          %v3436 = vsel %vm3434, 1, 0
          %v3437 = vcvt.s32.f32 %v3435
          %v3438 = vcvt.s32.f32 %v3436
          %vm3439 = vcmp.eq.f32.partialorder %v3339, 10.0
          %vm3440 = vcmp.eq.f32.partialorder %v3340, 10.0
          %v3441 = vsel %vm3439, 1, 0
          %v3442 = vsel %vm3440, 1, 0
          %v3443 = vcvt.s32.f32 %v3441
          %v3444 = vcvt.s32.f32 %v3442
          %v3445 = vmul.f32 %v3383, %v3347
          %v3446 = vmul.f32 %v3384, %v3348
          %v3447 = vmul.f32 %v3389, %v3361
          %v3448 = vmul.f32 %v3390, %v3362
          %v3449 = vadd.f32 %v3445, %v3447
          %v3450 = vadd.f32 %v3446, %v3448
          %v3451 = vmul.f32 %v3395, %v3369
          %v3452 = vmul.f32 %v3396, %v3370
          %v3453 = vadd.f32 %v3449, %v3451
          %v3454 = vadd.f32 %v3450, %v3452
          %v3455 = vmul.f32 %v3401, %v3377
          %v3456 = vmul.f32 %v3402, %v3378
          %v3457 = vadd.f32 %v3453, %v3455
          %v3458 = vadd.f32 %v3454, %v3456
          %v3459 = vmul.f32 %v3389, %v3347
          %v3460 = vmul.f32 %v3390, %v3348
          %v3461 = vmul.f32 %v3395, %v3361
          %v3462 = vmul.f32 %v3396, %v3362
          %v3463 = vadd.f32 %v3459, %v3461
          %v3464 = vadd.f32 %v3460, %v3462
          %v3465 = vmul.f32 %v3401, %v3369
          %v3466 = vmul.f32 %v3402, %v3370
          %v3467 = vadd.f32 %v3463, %v3465
          %v3468 = vadd.f32 %v3464, %v3466
          %v3469 = vmul.f32 %v3407, %v3377
          %v3470 = vmul.f32 %v3408, %v3378
          %v3471 = vadd.f32 %v3467, %v3469
          %v3472 = vadd.f32 %v3468, %v3470
          %v3473 = vmul.f32 %v3395, %v3347
          %v3474 = vmul.f32 %v3396, %v3348
          %v3475 = vmul.f32 %v3401, %v3361
          %v3476 = vmul.f32 %v3402, %v3362
          %v3477 = vadd.f32 %v3473, %v3475
          %v3478 = vadd.f32 %v3474, %v3476
          %v3479 = vmul.f32 %v3407, %v3369
          %v3480 = vmul.f32 %v3408, %v3370
          %v3481 = vadd.f32 %v3477, %v3479
          %v3482 = vadd.f32 %v3478, %v3480
          %v3483 = vmul.f32 %v3413, %v3377
          %v3484 = vmul.f32 %v3414, %v3378
          %v3485 = vadd.f32 %v3481, %v3483
          %v3486 = vadd.f32 %v3482, %v3484
          %v3487 = vmul.f32 %v3401, %v3347
          %v3488 = vmul.f32 %v3402, %v3348
          %v3489 = vmul.f32 %v3407, %v3361
          %v3490 = vmul.f32 %v3408, %v3362
          %v3491 = vadd.f32 %v3487, %v3489
          %v3492 = vadd.f32 %v3488, %v3490
          %v3493 = vmul.f32 %v3413, %v3369
          %v3494 = vmul.f32 %v3414, %v3370
          %v3495 = vadd.f32 %v3491, %v3493
          %v3496 = vadd.f32 %v3492, %v3494
          %v3497 = vmul.f32 %v3419, %v3377
          %v3498 = vmul.f32 %v3420, %v3378
          %v3499 = vadd.f32 %v3495, %v3497
          %v3500 = vadd.f32 %v3496, %v3498
          %v3501 = vmul.f32 %v3407, %v3347
          %v3502 = vmul.f32 %v3408, %v3348
          %v3503 = vmul.f32 %v3413, %v3361
          %v3504 = vmul.f32 %v3414, %v3362
          %v3505 = vadd.f32 %v3501, %v3503
          %v3506 = vadd.f32 %v3502, %v3504
          %v3507 = vmul.f32 %v3419, %v3369
          %v3508 = vmul.f32 %v3420, %v3370
          %v3509 = vadd.f32 %v3505, %v3507
          %v3510 = vadd.f32 %v3506, %v3508
          %v3511 = vmul.f32 %v3425, %v3377
          %v3512 = vmul.f32 %v3426, %v3378
          %v3513 = vadd.f32 %v3509, %v3511
          %v3514 = vadd.f32 %v3510, %v3512
          %v3515 = vmul.f32 %v3413, %v3347
          %v3516 = vmul.f32 %v3414, %v3348
          %v3517 = vmul.f32 %v3419, %v3361
          %v3518 = vmul.f32 %v3420, %v3362
          %v3519 = vadd.f32 %v3515, %v3517
          %v3520 = vadd.f32 %v3516, %v3518
          %v3521 = vmul.f32 %v3425, %v3369
          %v3522 = vmul.f32 %v3426, %v3370
          %v3523 = vadd.f32 %v3519, %v3521
          %v3524 = vadd.f32 %v3520, %v3522
          %v3525 = vmul.f32 %v3431, %v3377
          %v3526 = vmul.f32 %v3432, %v3378
          %v3527 = vadd.f32 %v3523, %v3525
          %v3528 = vadd.f32 %v3524, %v3526
          %v3529 = vmul.f32 %v3419, %v3347
          %v3530 = vmul.f32 %v3420, %v3348
          %v3531 = vmul.f32 %v3425, %v3361
          %v3532 = vmul.f32 %v3426, %v3362
          %v3533 = vadd.f32 %v3529, %v3531
          %v3534 = vadd.f32 %v3530, %v3532
          %v3535 = vmul.f32 %v3431, %v3369
          %v3536 = vmul.f32 %v3432, %v3370
          %v3537 = vadd.f32 %v3533, %v3535
          %v3538 = vadd.f32 %v3534, %v3536
          %v3539 = vmul.f32 %v3437, %v3377
          %v3540 = vmul.f32 %v3438, %v3378
          %v3541 = vadd.f32 %v3537, %v3539
          %v3542 = vadd.f32 %v3538, %v3540
          %v3543 = vmul.f32 %v3425, %v3347
          %v3544 = vmul.f32 %v3426, %v3348
          %v3545 = vmul.f32 %v3431, %v3361
          %v3546 = vmul.f32 %v3432, %v3362
          %v3547 = vadd.f32 %v3543, %v3545
          %v3548 = vadd.f32 %v3544, %v3546
          %v3549 = vmul.f32 %v3437, %v3369
          %v3550 = vmul.f32 %v3438, %v3370
          %v3551 = vadd.f32 %v3547, %v3549
          %v3552 = vadd.f32 %v3548, %v3550
          %v3553 = vmul.f32 %v3443, %v3377
          %v3554 = vmul.f32 %v3444, %v3378
          %v3555 = vadd.f32 %v3551, %v3553
          %v3556 = vadd.f32 %v3552, %v3554
          %v3557 = vpack.c.bf16 %v3334, %v3333
          %v3558 = vpack.c.bf16 %v3458, %v3457
          %v3559 = vpack.c.bf16 %v3472, %v3471
          %v3560 = vpack.c.bf16 %v3486, %v3485
          %v3561 = vpack.c.bf16 %v3500, %v3499
          %v3562 = vpack.c.bf16 %v3514, %v3513
          %v3563 = vpack.c.bf16 %v3528, %v3527
          %v3564 = vpack.c.bf16 %v3542, %v3541
          %v3565 = vpack.c.bf16 %v3556, %v3555
          %v3710 = vunpack.c.l.b16 %v3179
          %v3711 = vunpack.c.l.b16 %v3180
          %v3712 = vunpack.c.l.b16 %v3181
          %v3713 = vunpack.c.l.b16 %v3182
          %v3714 = vunpack.c.l.b16 %v3183
          %v3715 = vunpack.c.l.b16 %v3184
          %v3716 = vunpack.c.l.b16 %v3185
          %v3717 = vunpack.c.l.b16 %v3186
          %v3718 = vunpack.c.l.b16 %v3187
          %v3719 = vunpack.c.l.b16 %v3188
          %v3720 = vunpack.c.l.b16 %v3189
          %v3721 = vunpack.c.l.b16 %v3190
          %v3722 = vunpack.c.l.b16 %v3191
          %v3723 = vunpack.c.l.b16 %v3192
          %v3724 = vunpack.c.l.b16 %v3193
          %v3725 = vunpack.c.l.b16 %v3194
          %v3726 = vunpack.c.l.b16 %v3195
          %v3727 = vunpack.c.l.b16 %v3196
          %v3728 = vunpack.c.l.b16 %v3197
          %v3729 = vunpack.c.l.b16 %v3198
          %v3730 = vunpack.c.l.b16 %v3199
          %v3731 = vunpack.c.l.b16 %v3200
          %v3732 = vunpack.c.l.b16 %v3201
          %v3733 = vunpack.c.l.b16 %v3202
          %v3734 = vunpack.c.l.b16 %v3203
          %v3735 = vunpack.c.l.b16 %v3204
          %v3736 = vunpack.c.l.b16 %v3205
          %v3737 = vunpack.c.l.b16 %v3206
          %v3738 = vunpack.c.l.b16 %v3207
          %v3739 = vunpack.c.l.b16 %v3208
          %v3740 = vunpack.c.l.b16 %v3209
          %v3741 = vunpack.c.l.b16 %v3210
          %v3742 = vunpack.c.l.b16 %v3211
          %v3743 = vunpack.c.l.b16 %v3212
          %v3744 = vunpack.c.l.b16 %v3213
          %v3745 = vunpack.c.l.b16 %v3214
          %v3746 = vunpack.c.l.b16 %v3215
          %v3747 = vunpack.c.l.b16 %v3216
          %v3748 = vunpack.c.l.b16 %v3217
          %v3749 = vunpack.c.l.b16 %v3218
          %v3750 = vunpack.c.l.b16 %v3219
          %v3751 = vunpack.c.l.b16 %v3220
          %v3752 = vunpack.c.l.b16 %v3221
          %v3753 = vunpack.c.l.b16 %v3222
          %v3754 = vunpack.c.l.b16 %v3223
          %v3755 = vunpack.c.l.b16 %v3224
          %v3756 = vunpack.c.l.b16 %v3225
          %v3757 = vunpack.c.l.b16 %v3226
          %v3758 = vunpack.c.l.b16 %v3227
          %v3759 = vunpack.c.l.b16 %v3228
          %v3760 = vunpack.c.l.b16 %v3229
          %v3761 = vunpack.c.l.b16 %v3230
          %v3762 = vunpack.c.l.b16 %v3231
          %v3763 = vunpack.c.l.b16 %v3232
          %v3764 = vunpack.c.l.b16 %v3233
          %v3765 = vunpack.c.l.b16 %v3234
          %v3766 = vunpack.c.l.b16 %v3235
          %v3767 = vunpack.c.l.b16 %v3236
          %v3768 = vunpack.c.l.b16 %v3237
          %v3769 = vunpack.c.l.b16 %v3238
          %v3770 = vunpack.c.l.b16 %v3239
          %v3771 = vunpack.c.l.b16 %v3240
          %v3772 = vunpack.c.l.b16 %v3241
          %v3773 = vunpack.c.l.b16 %v3242
          %v3774 = vunpack.c.l.b16 %v3243
          %v3775 = vunpack.c.l.b16 %v3244
          %v3776 = vunpack.c.l.b16 %v3245
          %v3777 = vunpack.c.l.b16 %v3246
          %v3778 = vunpack.c.l.b16 %v3247
          %v3779 = vunpack.c.l.b16 %v3248
          %v3780 = vunpack.c.l.b16 %v3249
          %v3781 = vunpack.c.l.b16 %v3250
          %v3782 = vunpack.c.l.b16 %v3251
          %v3783 = vunpack.c.l.b16 %v3252
          %v3784 = vunpack.c.l.b16 %v3253
          %v3785 = vunpack.c.l.b16 %v3254
          %v3786 = vunpack.c.l.b16 %v3255
          %v3787 = vunpack.c.l.b16 %v3256
          %v3788 = vunpack.c.l.b16 %v3257
          %v3789 = vunpack.c.l.b16 %v3258
          %v3790 = vunpack.c.l.b16 %v3259
          %v3791 = vunpack.c.l.b16 %v3260
          %v3792 = vunpack.c.l.b16 %v3261
          %v3793 = vunpack.c.l.b16 %v3262
          %v3794 = vunpack.c.l.b16 %v3263
          %v3795 = vunpack.c.l.b16 %v3264
          %v3796 = vunpack.c.l.b16 %v3265
          %v3797 = vunpack.c.l.b16 %v3266
          %v3798 = vunpack.c.l.b16 %v3267
          %v3799 = vunpack.c.l.b16 %v3268
          %v3800 = vunpack.c.l.b16 %v3269
          %v3801 = vunpack.c.l.b16 %v3270
          %v3802 = vunpack.c.l.b16 %v3271
          %v3803 = vunpack.c.l.b16 %v3272
          %v3804 = vunpack.c.l.b16 %v3273
          %v3805 = vunpack.c.l.b16 %v3274
          %v3806 = vunpack.c.l.b16 %v3275
          %v3807 = vunpack.c.l.b16 %v3276
          %v3808 = vunpack.c.l.b16 %v3277
          %v3809 = vunpack.c.l.b16 %v3278
          %v3810 = vunpack.c.l.b16 %v3279
          %v3811 = vunpack.c.l.b16 %v3280
          %v3812 = vunpack.c.l.b16 %v3281
          %v3813 = vunpack.c.l.b16 %v3282
          %v3814 = vunpack.c.l.b16 %v3283
          %v3815 = vunpack.c.l.b16 %v3284
          %v3816 = vunpack.c.l.b16 %v3285
          %v3817 = vunpack.c.l.b16 %v3286
          %v3818 = vunpack.c.l.b16 %v3287
          %v3819 = vunpack.c.l.b16 %v3288
          %v3820 = vunpack.c.l.b16 %v3289
          %v3821 = vunpack.c.l.b16 %v3290
          %v3822 = vunpack.c.l.b16 %v3291
          %v3823 = vunpack.c.l.b16 %v3292
          %v3824 = vunpack.c.l.b16 %v3293
          %v3825 = vunpack.c.l.b16 %v3294
          %v3826 = vunpack.c.l.b16 %v3295
          %v3827 = vunpack.c.l.b16 %v3296
          %v3828 = vunpack.c.l.b16 %v3297
          %v3829 = vunpack.c.l.b16 %v3298
          %v3830 = vunpack.c.l.b16 %v3299
          %v3831 = vunpack.c.l.b16 %v3300
          %v3832 = vunpack.c.l.b16 %v3301
          %v3833 = vunpack.c.l.b16 %v3302
          %v3834 = vunpack.c.l.b16 %v3303
          %v3835 = vunpack.c.l.b16 %v3304
          %v3836 = vunpack.c.l.b16 %v3305
          %v3837 = vunpack.c.l.b16 %v3306
          %v3838 = vunpack.c.l.b16 %v3307
          %v3839 = vunpack.c.l.b16 %v3308
          %v3840 = vunpack.c.l.b16 %v3309
          %v3841 = vunpack.c.l.b16 %v3310
          %v3842 = vunpack.c.l.b16 %v3311
          %v3843 = vunpack.c.l.b16 %v3312
          %v3844 = vunpack.c.l.b16 %v3313
          %v3845 = vunpack.c.l.b16 %v3314
          %v3846 = vunpack.c.l.b16 %v3315
          %v3847 = vunpack.c.l.b16 %v3316
          %v3848 = vunpack.c.l.b16 %v3317
          %v3849 = vunpack.c.l.b16 %v3318
          %v3850 = vunpack.c.l.b16 %v3319
          %v3851 = vunpack.c.l.b16 %v3320
          %v3852 = vunpack.c.l.b16 %v3321
          %v3853 = vunpack.c.l.b16 %v3322
          %v3854 = vpack.c.b16 %v3711, %v3710
          %v3855 = vpack.c.b16 %v3713, %v3712
          %v3856 = vpack.c.b16 %v3715, %v3714
          %v3857 = vpack.c.b16 %v3717, %v3716
          %v3858 = vpack.c.b16 %v3719, %v3718
          %v3859 = vpack.c.b16 %v3721, %v3720
          %v3860 = vpack.c.b16 %v3723, %v3722
          %v3861 = vpack.c.b16 %v3725, %v3724
          %v3862 = vpack.c.b16 %v3727, %v3726
          %v3863 = vpack.c.b16 %v3729, %v3728
          %v3864 = vpack.c.b16 %v3731, %v3730
          %v3865 = vpack.c.b16 %v3733, %v3732
          %v3866 = vpack.c.b16 %v3735, %v3734
          %v3867 = vpack.c.b16 %v3737, %v3736
          %v3868 = vpack.c.b16 %v3739, %v3738
          %v3869 = vpack.c.b16 %v3741, %v3740
          %v3870 = vpack.c.b16 %v3743, %v3742
          %v3871 = vpack.c.b16 %v3745, %v3744
          %v3872 = vpack.c.b16 %v3747, %v3746
          %v3873 = vpack.c.b16 %v3749, %v3748
          %v3874 = vpack.c.b16 %v3751, %v3750
          %v3875 = vpack.c.b16 %v3753, %v3752
          %v3876 = vpack.c.b16 %v3755, %v3754
          %v3877 = vpack.c.b16 %v3757, %v3756
          %v3878 = vpack.c.b16 %v3759, %v3758
          %v3879 = vpack.c.b16 %v3761, %v3760
          %v3880 = vpack.c.b16 %v3763, %v3762
          %v3881 = vpack.c.b16 %v3765, %v3764
          %v3882 = vpack.c.b16 %v3767, %v3766
          %v3883 = vpack.c.b16 %v3769, %v3768
          %v3884 = vpack.c.b16 %v3771, %v3770
          %v3885 = vpack.c.b16 %v3773, %v3772
          %v3886 = vpack.c.b16 %v3775, %v3774
          %v3887 = vpack.c.b16 %v3777, %v3776
          %v3888 = vpack.c.b16 %v3779, %v3778
          %v3889 = vpack.c.b16 %v3781, %v3780
          %v3890 = vpack.c.b16 %v3783, %v3782
          %v3891 = vpack.c.b16 %v3785, %v3784
          %v3892 = vpack.c.b16 %v3787, %v3786
          %v3893 = vpack.c.b16 %v3789, %v3788
          %v3894 = vpack.c.b16 %v3791, %v3790
          %v3895 = vpack.c.b16 %v3793, %v3792
          %v3896 = vpack.c.b16 %v3795, %v3794
          %v3897 = vpack.c.b16 %v3797, %v3796
          %v3898 = vpack.c.b16 %v3799, %v3798
          %v3899 = vpack.c.b16 %v3801, %v3800
          %v3900 = vpack.c.b16 %v3803, %v3802
          %v3901 = vpack.c.b16 %v3805, %v3804
          %v3902 = vpack.c.b16 %v3807, %v3806
          %v3903 = vpack.c.b16 %v3809, %v3808
          %v3904 = vpack.c.b16 %v3811, %v3810
          %v3905 = vpack.c.b16 %v3813, %v3812
          %v3906 = vpack.c.b16 %v3815, %v3814
          %v3907 = vpack.c.b16 %v3817, %v3816
          %v3908 = vpack.c.b16 %v3819, %v3818
          %v3909 = vpack.c.b16 %v3821, %v3820
          %v3910 = vpack.c.b16 %v3823, %v3822
          %v3911 = vpack.c.b16 %v3825, %v3824
          %v3912 = vpack.c.b16 %v3827, %v3826
          %v3913 = vpack.c.b16 %v3829, %v3828
          %v3914 = vpack.c.b16 %v3831, %v3830
          %v3915 = vpack.c.b16 %v3833, %v3832
          %v3916 = vpack.c.b16 %v3835, %v3834
          %v3917 = vpack.c.b16 %v3837, %v3836
          %v3918 = vpack.c.b16 %v3839, %v3838
          %v3919 = vpack.c.b16 %v3841, %v3840
          %v3920 = vpack.c.b16 %v3843, %v3842
          %v3921 = vpack.c.b16 %v3845, %v3844
          %v3922 = vpack.c.b16 %v3847, %v3846
          %v3923 = vpack.c.b16 %v3849, %v3848
          %v3924 = vpack.c.b16 %v3851, %v3850
          %v3925 = vpack.c.b16 %v3853, %v3852
          %3998 = vmatpush.bf16.msra.mxu0 %v3861
          %3999 = vmatpush.bf16.msra.mxu0 %v3860
          %4000 = vmatpush.bf16.msra.mxu0 %v3859
          %4001 = vmatpush.bf16.msra.mxu0 %v3858
          %4002 = vmatpush.bf16.msra.mxu0 %v3857
          %4003 = vmatpush.bf16.msra.mxu0 %v3856
          %4004 = vmatpush.bf16.msra.mxu0 %v3855
          %4005 = vmatpush.bf16.msra.mxu0 %v3854
          %4006 = vmatmul.bf16.gmra.mxu0 %v3557
          %v4007 = vpop.f32.mrf.mxu0
          %v4008 = vadd.f32 0.0, %v4007
          %v4009 = vpop.f32.mrf.mxu0
          %v4010 = vadd.f32 0.0, %v4009
          %4011 = vdwg.mxu0
          %4012 = vmatpush.bf16.msra.mxu0 %v3869
          %4013 = vmatpush.bf16.msra.mxu0 %v3868
          %4014 = vmatpush.bf16.msra.mxu0 %v3867
          %4015 = vmatpush.bf16.msra.mxu0 %v3866
          %4016 = vmatpush.bf16.msra.mxu0 %v3865
          %4017 = vmatpush.bf16.msra.mxu0 %v3864
          %4018 = vmatpush.bf16.msra.mxu0 %v3863
          %4019 = vmatpush.bf16.msra.mxu0 %v3862
          %4020 = vmatmul.bf16.gmra.mxu0 %v3558
          %v4021 = vpop.f32.mrf.mxu0
          %v4022 = vadd.f32 %v4008, %v4021
          %v4023 = vpop.f32.mrf.mxu0
          %v4024 = vadd.f32 %v4010, %v4023
          %4025 = vdwg.mxu0
          %4026 = vmatpush.bf16.msra.mxu0 %v3877
          %4027 = vmatpush.bf16.msra.mxu0 %v3876
          %4028 = vmatpush.bf16.msra.mxu0 %v3875
          %4029 = vmatpush.bf16.msra.mxu0 %v3874
          %4030 = vmatpush.bf16.msra.mxu0 %v3873
          %4031 = vmatpush.bf16.msra.mxu0 %v3872
          %4032 = vmatpush.bf16.msra.mxu0 %v3871
          %4033 = vmatpush.bf16.msra.mxu0 %v3870
          %4034 = vmatmul.bf16.gmra.mxu0 %v3559
          %v4035 = vpop.f32.mrf.mxu0
          %v4036 = vadd.f32 %v4022, %v4035
          %v4037 = vpop.f32.mrf.mxu0
          %v4038 = vadd.f32 %v4024, %v4037
          %4039 = vdwg.mxu0
          %4040 = vmatpush.bf16.msra.mxu0 %v3885
          %4041 = vmatpush.bf16.msra.mxu0 %v3884
          %4042 = vmatpush.bf16.msra.mxu0 %v3883
          %4043 = vmatpush.bf16.msra.mxu0 %v3882
          %4044 = vmatpush.bf16.msra.mxu0 %v3881
          %4045 = vmatpush.bf16.msra.mxu0 %v3880
          %4046 = vmatpush.bf16.msra.mxu0 %v3879
          %4047 = vmatpush.bf16.msra.mxu0 %v3878
          %4048 = vmatmul.bf16.gmra.mxu0 %v3560
          %v4049 = vpop.f32.mrf.mxu0
          %v4050 = vadd.f32 %v4036, %v4049
          %v4051 = vpop.f32.mrf.mxu0
          %v4052 = vadd.f32 %v4038, %v4051
          %4053 = vdwg.mxu0
          %4054 = vmatpush.bf16.msra.mxu0 %v3893
          %4055 = vmatpush.bf16.msra.mxu0 %v3892
          %4056 = vmatpush.bf16.msra.mxu0 %v3891
          %4057 = vmatpush.bf16.msra.mxu0 %v3890
          %4058 = vmatpush.bf16.msra.mxu0 %v3889
          %4059 = vmatpush.bf16.msra.mxu0 %v3888
          %4060 = vmatpush.bf16.msra.mxu0 %v3887
          %4061 = vmatpush.bf16.msra.mxu0 %v3886
          %4062 = vmatmul.bf16.gmra.mxu0 %v3561
          %v4063 = vpop.f32.mrf.mxu0
          %v4064 = vadd.f32 %v4050, %v4063
          %v4065 = vpop.f32.mrf.mxu0
          %v4066 = vadd.f32 %v4052, %v4065
          %4067 = vdwg.mxu0
          %4068 = vmatpush.bf16.msra.mxu0 %v3901
          %4069 = vmatpush.bf16.msra.mxu0 %v3900
          %4070 = vmatpush.bf16.msra.mxu0 %v3899
          %4071 = vmatpush.bf16.msra.mxu0 %v3898
          %4072 = vmatpush.bf16.msra.mxu0 %v3897
          %4073 = vmatpush.bf16.msra.mxu0 %v3896
          %4074 = vmatpush.bf16.msra.mxu0 %v3895
          %4075 = vmatpush.bf16.msra.mxu0 %v3894
          %4076 = vmatmul.bf16.gmra.mxu0 %v3562
          %v4077 = vpop.f32.mrf.mxu0
          %v4078 = vadd.f32 %v4064, %v4077
          %v4079 = vpop.f32.mrf.mxu0
          %v4080 = vadd.f32 %v4066, %v4079
          %4081 = vdwg.mxu0
          %4082 = vmatpush.bf16.msra.mxu0 %v3909
          %4083 = vmatpush.bf16.msra.mxu0 %v3908
          %4084 = vmatpush.bf16.msra.mxu0 %v3907
          %4085 = vmatpush.bf16.msra.mxu0 %v3906
          %4086 = vmatpush.bf16.msra.mxu0 %v3905
          %4087 = vmatpush.bf16.msra.mxu0 %v3904
          %4088 = vmatpush.bf16.msra.mxu0 %v3903
          %4089 = vmatpush.bf16.msra.mxu0 %v3902
          %4090 = vmatmul.bf16.gmra.mxu0 %v3563
          %v4091 = vpop.f32.mrf.mxu0
          %v4092 = vadd.f32 %v4078, %v4091
          %v4093 = vpop.f32.mrf.mxu0
          %v4094 = vadd.f32 %v4080, %v4093
          %4095 = vdwg.mxu0
          %4096 = vmatpush.bf16.msra.mxu0 %v3917
          %4097 = vmatpush.bf16.msra.mxu0 %v3916
          %4098 = vmatpush.bf16.msra.mxu0 %v3915
          %4099 = vmatpush.bf16.msra.mxu0 %v3914
          %4100 = vmatpush.bf16.msra.mxu0 %v3913
          %4101 = vmatpush.bf16.msra.mxu0 %v3912
          %4102 = vmatpush.bf16.msra.mxu0 %v3911
          %4103 = vmatpush.bf16.msra.mxu0 %v3910
          %4104 = vmatmul.bf16.gmra.mxu0 %v3564
          %v4105 = vpop.f32.mrf.mxu0
          %v4106 = vadd.f32 %v4092, %v4105
          %v4107 = vpop.f32.mrf.mxu0
          %v4108 = vadd.f32 %v4094, %v4107
          %4109 = vdwg.mxu0
          %4110 = vmatpush.bf16.msra.mxu0 %v3925
          %4111 = vmatpush.bf16.msra.mxu0 %v3924
          %4112 = vmatpush.bf16.msra.mxu0 %v3923
          %4113 = vmatpush.bf16.msra.mxu0 %v3922
          %4114 = vmatpush.bf16.msra.mxu0 %v3921
          %4115 = vmatpush.bf16.msra.mxu0 %v3920
          %4116 = vmatpush.bf16.msra.mxu0 %v3919
          %4117 = vmatpush.bf16.msra.mxu0 %v3918
          %4118 = vmatmul.bf16.gmra.mxu0 %v3565
          %v4119 = vpop.f32.mrf.mxu0
          %v4120 = vadd.f32 %v4106, %v4119
          %v4121 = vpop.f32.mrf.mxu0
          %v4122 = vadd.f32 %v4108, %v4121
          %4123 = vdwg.mxu0
          %4124 = vst [vmem:[#allocation12] sm:$0xff] %v4120
          %4125 = vst [vmem:[#allocation12 + $0x8] sm:$0xff] %v4122
        $region68: #{tpu_custom_call.1} parent=39 // pred_fallthru
          _
        // Predicated region
        $region69: #{tpu_custom_call.1} parent=39 // pred_check
          %p4126 = pneg %p152
        $region70: #{tpu_custom_call.1} parent=39 // pred_check_branch
          %4128 = sbr.rel (%p4126) target = $region72
        $region71: #{tpu_custom_call.1} parent=39 // pred_region
          %4130 = vsyncadd [#allocation5], 0
          %s4131 = sshll.u32 [#allocation12], 4
          %s4132 = int_to_ptr.vmem [resolvable:$true] %s4131
          %s4133 = sshll.u32 %s5, 4
          %s4134 = int_to_ptr.hbm [resolvable:$true] %s4133
          %4139 = dma.vmem_to_hbm [thread:$0]  %s4132, 256, %s4134, [#allocation5], 128, 128, 8
        $region72: #{tpu_custom_call.1} parent=39 // pred_fallthru
          _
        // Predicated region
        $region73: #{tpu_custom_call.1} parent=39 // pred_check
          %p4140 = pneg %p152
        $region74: #{tpu_custom_call.1} parent=39 // pred_check_branch
          %4142 = sbr.rel (%p4140) target = $region76
        $region75: #{tpu_custom_call.1} parent=39 // pred_region
          %4144 = dma.done [#allocation5], 256
        $region76: #{tpu_custom_call.1} parent=39 // pred_fallthru
          _
      $region40: #{tpu_custom_call.1} parent=5 // pred_fallthru
        _
      %p4145 = scmp.le.s32.totalorder 2, %s19
      // Predicated region
      $region77: #{tpu_custom_call.1} parent=5 // pred_check
        %p4146 = pneg %p4145
      $region78: #{tpu_custom_call.1} parent=5 // pred_check_branch
        %4148 = sbr.rel (%p4146) target = $region80
      $region79: #{tpu_custom_call.1} parent=5 // pred_region
        %s4149 = ssub.s32 %s19, 2
      $region80: #{tpu_custom_call.1} parent=5 // pred_fallthru
        _
    $region6: #{tpu_custom_call.1} parent=1 // loop_footer
      %s23 = sadd.s32 1, %s19
    $region7: #{tpu_custom_call.1} parent=1 // loop_footer_branch
      %18 = sbr.rel target = $region3
    $region8: #{tpu_custom_call.1} parent=1 // loop_exit
      _
    %4150 = vsyncpa [#allocation4], 1
    %s4151 = scalar_lea.sflag [#allocation4], 1
    %4152 = vsyncpa %s4151, 1
    %4153 = vsyncpa [#allocation7], 1
    %s4154 = scalar_lea.sflag [#allocation7], 1
    %4155 = vsyncpa %s4154, 1
    %4156 = vsyncpa [#allocation10], 1
    %4157 = vsyncpa [#allocation5], 1
    %s4158 = scalar_lea.sflag [#allocation5], 1
    %4159 = vsyncpa %s4158, 1

</llo_original>
